<compile_context>
chip_gen: v7x
topology: tpu7x:2x2x1
jax: 0.10.0
libtpu: 0.0.40
codegen_flags: <defaults>
</compile_context>

<pallas_src>
import functools
import math

import numpy as np
import jax
import jax.numpy as jnp
from jax.experimental import pallas as pl
from jax.experimental.pallas import tpu as pltpu

# ----------------------------- model config ---------------------------------
OBS_DIM = 11
ACTION_DIM = 4
OBS_EMB = 16          # observ_embedding_size
ACT_EMB = 8           # action_embedding_size
REW_EMB = 8           # reward embedding size
H = 32                # rnn_hidden_size
DQN_LAYERS = (64, 64)
POLICY_LAYERS = (64, 64)
GAMMA = 0.99
ALPHA = 0.1           # fixed SAC entropy coefficient
LOG_STD_MIN, LOG_STD_MAX = -20.0, 2.0
LOG_2PI = math.log(2.0 * math.pi)
GRU_IN = ACT_EMB + REW_EMB + OBS_EMB   # 32, per-net input order [a_e | r_e | o_e]

LANES = 128
GW = 3 * LANES        # 384: fused gate groups [r | z | n], 128 lanes each

# data operand lane layout (lane 18 is a constant 1.0 so biases ride in weights)
L_ACT, L_REW, L_OBS, L_DONE, L_MASK, L_ONE = 0, 4, 5, 16, 17, 18


# --------------------------- raw parameter builders ---------------------------
def _linear(key, fan_in, fan_out):
    k1, k2 = jax.random.split(key)
    lim = 1.0 / math.sqrt(fan_in)
    return {
        "W": np.asarray(jax.random.uniform(k1, (fan_in, fan_out), jnp.float32, -lim, lim)),
        "b": np.asarray(jax.random.uniform(k2, (fan_out,), jnp.float32, -lim, lim)),
    }


def _gru(key, in_dim, hidden):
    ks = jax.random.split(key, 4)
    lim = 1.0 / math.sqrt(hidden)
    u = lambda k, s: np.asarray(jax.random.uniform(k, s, jnp.float32, -lim, lim))
    return {
        "wi": {"W": u(ks[0], (in_dim, 3 * hidden)), "b": u(ks[1], (3 * hidden,))},
        "wh": {"W": u(ks[2], (hidden, 3 * hidden)), "b": u(ks[3], (3 * hidden,))},
    }


def make_actor_params(key):
    ks = jax.random.split(key, 8)
    gru = _gru(ks[3], GRU_IN, H)
    return {
        "act_emb": _linear(ks[0], ACTION_DIM, ACT_EMB),
        "rew_emb": _linear(ks[1], 1, REW_EMB),
        "obs_emb": _linear(ks[2], OBS_DIM, OBS_EMB),
        "gru_wi": gru["wi"],
        "gru_wh": gru["wh"],
        "fc1": _linear(ks[4], H, POLICY_LAYERS[0]),
        "fc2": _linear(ks[5], POLICY_LAYERS[0], POLICY_LAYERS[1]),
        "mean": _linear(ks[6], POLICY_LAYERS[1], ACTION_DIM),
        "log_std": _linear(ks[7], POLICY_LAYERS[1], ACTION_DIM),
    }


def make_critic_params(key):
    ks = jax.random.split(key, 12)
    gru = _gru(ks[3], GRU_IN, H)
    in_q = H + OBS_EMB + ACT_EMB   # joint = [h | o_e | a_e] = 56
    return {
        "act_emb": _linear(ks[0], ACTION_DIM, ACT_EMB),
        "rew_emb": _linear(ks[1], 1, REW_EMB),
        "obs_emb": _linear(ks[2], OBS_DIM, OBS_EMB),
        "gru_wi": gru["wi"],
        "gru_wh": gru["wh"],
        "cur_obs_emb": _linear(ks[4], OBS_DIM, OBS_EMB),
        "cur_act_emb": _linear(ks[5], ACTION_DIM, ACT_EMB),
        "qf1_fc1": _linear(ks[6], in_q, DQN_LAYERS[0]),
        "qf1_fc2": _linear(ks[7], DQN_LAYERS[0], DQN_LAYERS[1]),
        "qf1_out": _linear(ks[8], DQN_LAYERS[1], 1),
        "qf2_fc1": _linear(ks[9], in_q, DQN_LAYERS[0]),
        "qf2_fc2": _linear(ks[10], DQN_LAYERS[0], DQN_LAYERS[1]),
        "qf2_out": _linear(ks[11], DQN_LAYERS[1], 1),
    }


# ------------------------------ operand packing --------------------------------
def build_operands(actor, critic, ctgt):
    """Pack all parameters into 3 f32 operands:
         heads  (rows, 128): every per-head weight block, 8-row aligned,
                             128 weight rows (+1 bias row where needed)
         gru_wi (136, 384):  fused x-side GRU weight  (row 128 = bias)
         gru_wh (136, 384):  fused h-side GRU weight  (row 128 = bias)
    """
    nets = (actor, critic, ctgt)
    blocks = {}

    def blk(name, rows):
        a = np.zeros((rows, LANES), np.float32)
        blocks[name] = a
        return a

    # fused GRU input embeddings: data (N,128) @ emb -> lanes [net0|net1|net2] (96 used)
    emb = blk("emb", 128)
    for i, net in enumerate(nets):
        c = 32 * i
        emb[L_ACT:L_ACT + ACTION_DIM, c:c + 8] = net["act_emb"]["W"]
        emb[L_REW, c + 8:c + 16] = net["rew_emb"]["W"][0]
        emb[L_OBS:L_OBS + OBS_DIM, c + 16:c + 32] = net["obs_emb"]["W"]
        emb[L_ONE, c:c + 8] = net["act_emb"]["b"]
        emb[L_ONE, c + 8:c + 16] = net["rew_emb"]["b"]
        emb[L_ONE, c + 16:c + 32] = net["obs_emb"]["b"]

    # actor head
    a1 = blk("a_fc1", 136)
    a1[0:H, 0:64] = actor["fc1"]["W"]
    a1[128, 0:64] = actor["fc1"]["b"]
    a2 = blk("a_fc2", 136)
    a2[0:64, 0:64] = actor["fc2"]["W"]
    a2[128, 0:64] = actor["fc2"]["b"]
    ml = blk("a_ml", 136)          # mean & log_std fused: lanes 0:4 / 4:8
    ml[0:64, 0:4] = actor["mean"]["W"]
    ml[128, 0:4] = actor["mean"]["b"]
    ml[0:64, 4:8] = actor["log_std"]["W"]
    ml[128, 4:8] = actor["log_std"]["b"]

    # current-step embedders: live critic -> lanes 0:24, target critic -> lanes 24:48
    co = blk("c_cur_o", 128)       # consumed by the data operand (obs part + ones lane)
    co[L_OBS:L_OBS + OBS_DIM, 0:16] = critic["cur_obs_emb"]["W"]
    co[L_OBS:L_OBS + OBS_DIM, 24:40] = ctgt["cur_obs_emb"]["W"]
    co[L_ONE, 0:16] = critic["cur_obs_emb"]["b"]
    co[L_ONE, 16:24] = critic["cur_act_emb"]["b"]
    co[L_ONE, 24:40] = ctgt["cur_obs_emb"]["b"]
    co[L_ONE, 40:48] = ctgt["cur_act_emb"]["b"]
    ca = blk("c_cur_a", 128)       # consumed by tanh(mean|log_std): rows 0:4 used
    ca[0:ACTION_DIM, 16:24] = critic["cur_act_emb"]["W"]
    ca[0:ACTION_DIM, 40:48] = ctgt["cur_act_emb"]["W"]
    cp = blk("c_pred", 128)        # consumed by data[B:] (real actions a[1:])
    cp[L_ACT:L_ACT + ACTION_DIM, 16:24] = critic["cur_act_emb"]["W"]
    cp[L_ONE, 16:24] = critic["cur_act_emb"]["b"]

    # lane-packed q-heads (qf1 -> lanes 0:64, qf2 -> lanes 64:128)
    def q_head(net, pfx, h_row, o_row, a_row, split):
        q1, q2 = net["qf1_fc1"], net["qf2_fc1"]
        qh = blk(pfx + "_q_h", 136)
        qh[h_row:h_row + H, 0:64] = q1["W"][0:H]
        qh[h_row:h_row + H, 64:128] = q2["W"][0:H]
        qh[128, 0:64] = q1["b"]
        qh[128, 64:128] = q2["b"]
        qo = blk(pfx + "_q_o", 128)
        qa = blk(pfx + "_q_a", 128) if split else qo
        qo[o_row:o_row + OBS_EMB, 0:64] = q1["W"][H:H + OBS_EMB]
        qo[o_row:o_row + OBS_EMB, 64:128] = q2["W"][H:H + OBS_EMB]
        qa[a_row:a_row + ACT_EMB, 0:64] = q1["W"][H + OBS_EMB:]
        qa[a_row:a_row + ACT_EMB, 64:128] = q2["W"][H + OBS_EMB:]
        f2 = blk(pfx + "_q_fc2", 136)
        f2[0:64, 0:64] = net["qf1_fc2"]["W"]
        f2[128, 0:64] = net["qf1_fc2"]["b"]
        f2[64:128, 64:128] = net["qf2_fc2"]["W"]
        f2[128, 64:128] = net["qf2_fc2"]["b"]
        qout = blk(pfx + "_q_out", 136)
        qout[0:64, 0] = net["qf1_out"]["W"][:, 0]
        qout[128, 0] = net["qf1_out"]["b"][0]
        qout[64:128, 1] = net["qf2_out"]["W"][:, 0]
        qout[128, 1] = net["qf2_out"]["b"][0]

    # live critic: h_c = h_full lanes 32:64, oe/ae = cur lanes 0:16 / 16:24
    q_head(critic, "c", h_row=32, o_row=0, a_row=16, split=True)
    # target critic: h_g = lanes 64:96, oe/ae = cur lanes 24:40 / 40:48
    q_head(ctgt, "t", h_row=64, o_row=24, a_row=40, split=False)

    offs, row, parts = {}, 0, []
    for name, a in blocks.items():
        offs[name] = row
        row += a.shape[0]
        parts.append(a)
    heads = np.concatenate(parts, axis=0)

    # fused GRU weights: gate groups [r | z | n], each padded to 128 lanes,
    # within a group the 3 nets occupy lanes [0:32 | 32:64 | 64:96]
    wi_f = np.zeros((136, GW), np.float32)
    wh_f = np.zeros((136, GW), np.float32)
    for i, net in enumerate(nets):
        Wi, bi = net["gru_wi"]["W"], net["gru_wi"]["b"]
        Wh, bh = net["gru_wh"]["W"], net["gru_wh"]["b"]
        for g in range(3):
            dst = slice(LANES * g + 32 * i, LANES * g + 32 * i + 32)
            src = slice(32 * g, 32 * g + 32)
            wi_f[32 * i:32 * i + 32, dst] = Wi[:, src]
            wi_f[128, dst] = bi[src]
            wh_f[32 * i:32 * i + 32, dst] = Wh[:, src]
            wh_f[128, dst] = bh[src]

    return heads, offs, wi_f, wh_f


# ------------------------------- the kernel -----------------------------------
def sac_rnn_kernel(off, T, B,
                   data_ref, heads_ref, wi_ref, wh_ref,
                   out_s_ref, out_td_ref,
                   xi_ref, h_ref, h1_ref):
    T1 = T + 1
    N = T1 * B
    M = T * B

    def w(name):
        o = off[name]
        return heads_ref[o:o + 128, :]

    def wb(name):
        o = off[name]
        return heads_ref[o:o + 128, :], heads_ref[o + 128:o + 129, :]

    dot = lambda a, b: jnp.dot(a, b, preferred_element_type=jnp.float32)

    data = data_ref[...]                                   # (N, 128)

    # ---- phase 0: fused embeddings + x-side GRU projection (2 matmuls) ----
    emb_all = jax.nn.relu(dot(data, w("emb")))             # (N,128): lanes 0:96 = [a_e r_e o_e] x 3 nets
    xi_ref[...] = dot(emb_all, wi_ref[0:128, :]) + wi_ref[128:129, :]   # (N, 384)

    # ---- phase 1: fused 3-net GRU recurrence, statically unrolled ----
    wh = wh_ref[0:128, :]
    bh = wh_ref[128:129, :]
    h_all = jnp.zeros((B, LANES), jnp.float32)             # lanes [h_a | h_c | h_g | 0]
    for t in range(T1):
        lo = t * B
        gi = xi_ref[lo:lo + B, :]                          # (B, 384)
        gh = dot(h_all, wh) + bh                           # (B, 384)
        rz = jax.nn.sigmoid(gi[:, 0:256] + gh[:, 0:256])
        r = rz[:, 0:128]
        z = rz[:, 128:256]
        n = jnp.tanh(gi[:, 256:384] + r * gh[:, 256:384])
        h_all = (1.0 - z) * n + z * h_all
        h_ref[lo:lo + B, :] = h_all
    h_full = h_ref[...]                                    # (N, 128)

    # ---- phase 2: actor head (3 matmuls) ----
    wa1, ba1 = wb("a_fc1")
    z1 = jax.nn.relu(dot(h_full, wa1) + ba1)
    wa2, ba2 = wb("a_fc2")
    z2 = jax.nn.relu(dot(z1, wa2) + ba2)
    wml, bml = wb("a_ml")
    ml = dot(z2, wml) + bml                                # lanes 0:4 mean, 4:8 log_std
    tanh_ml = jnp.tanh(ml)
    new_act = tanh_ml[:, 0:ACTION_DIM]                     # deterministic tanh(mean) action
    log_std = jnp.clip(ml[:, ACTION_DIM:2 * ACTION_DIM], LOG_STD_MIN, LOG_STD_MAX)
    logp = jnp.sum(-log_std - 0.5 * LOG_2PI
                   - jnp.log(1.0 - new_act * new_act + 1e-6),
                   axis=-1, keepdims=True)                 # (N, 1)

    # ---- current-step embeddings for live + target critics (3 matmuls) ----
    cur = jax.nn.relu(dot(data, w("c_cur_o")) + dot(tanh_ml, w("c_cur_a")))
    # cur lanes: 0:16 oe_live | 16:24 ae_live(new_act) | 24:40 oe_tgt | 40:48 ae_tgt
    pred = jax.nn.relu(dot(data[B:], w("c_pred")))         # lanes 16:24 = ae(actions[1:])

    # ---- target critic: both Q heads lane-packed (4 matmuls) ----
    wth, bth = wb("t_q_h")
    h1_t = jax.nn.relu(dot(h_full, wth) + dot(cur, w("t_q_o")) + bth)
    wtf2, btf2 = wb("t_q_fc2")
    h2_t = jax.nn.relu(dot(h1_t, wtf2) + btf2)
    wto, bto = wb("t_q_out")
    q_t = dot(h2_t, wto) + bto                             # col 0 = q1_target, col 1 = q2_target
    min_next_q = jnp.minimum(q_t[:, 0:1], q_t[:, 1:2]) - ALPHA * logp
    r_all = data[:, L_REW:L_REW + 1]
    d_all = data[:, L_DONE:L_DONE + 1]
    q_target_full = r_all + (1.0 - d_all) * GAMMA * min_next_q        # (N, 1)

    # ---- live critic: actor-loss Q (N rows) + Q predictions (M rows), shared fc1/fc2 ----
    wch, bc1 = wb("c_q_h")
    acc = dot(h_full, wch) + dot(cur, w("c_q_o")) + bc1    # shared h / o_e fc1 partial (N, 128)
    wca = w("c_q_a")
    h1_ref[0:N, :] = jax.nn.relu(acc + dot(cur, wca))            # rows 0:N   -> new actions
    h1_ref[N:N + M, :] = jax.nn.relu(acc[:M] + dot(pred, wca))   # rows N:N+M -> real actions[1:]
    h1 = h1_ref[...]
    wcf2, bcf2 = wb("c_q_fc2")
    h2 = jax.nn.relu(dot(h1, wcf2) + bcf2)
    wco, bco = wb("c_q_out")
    q = dot(h2, wco) + bco                                 # (N+M, 128): col0 = q1, col1 = q2
    policy_full = ALPHA * logp - jnp.minimum(q[:N, 0:1], q[:N, 1:2])   # (N, 1)

    # ---- masked losses / stats ----
    masks = data[B:, L_MASK:L_MASK + 1]                    # (M, 1)
    num_valid = jnp.maximum(jnp.sum(masks), 1.0)
    q_target = q_target_full[B:] * masks
    d1 = q[N:, 0:1] * masks - q_target
    d2 = q[N:, 1:2] * masks - q_target
    qf1_loss = jnp.sum(d1 * d1) / num_valid
    qf2_loss = jnp.sum(d2 * d2) / num_valid
    policy_loss = jnp.sum(policy_full[:M] * masks) / num_valid
    current_log_probs = jnp.sum(logp[:M] * masks) / num_valid

    abs_td = 0.5 * (jnp.abs(d1) + jnp.abs(d2))             # (M, 1)
    out_td_ref[...] = jnp.mean(abs_td.reshape(T, B, 1), axis=0)

    out_s_ref[0] = qf1_loss
    out_s_ref[1] = qf2_loss
    out_s_ref[2] = policy_loss
    out_s_ref[3] = current_log_probs


# ------------------------------- host wrapper ----------------------------------
def run_forward(heads, offs, wi_f, wh_f, actions, rewards, observs, dones, masks):
    T1, B, _ = actions.shape
    T = T1 - 1
    N = T1 * B
    M = T * B
    assert masks.shape == (T, B, 1)

    # host-side packing of the five tiny data tensors into one lane-dense operand
    data = np.zeros((N, LANES), np.float32)
    data[:, L_ACT:L_ACT + ACTION_DIM] = np.asarray(actions).reshape(N, ACTION_DIM)
    data[:, L_REW] = np.asarray(rewards).reshape(N)
    data[:, L_OBS:L_OBS + OBS_DIM] = np.asarray(observs).reshape(N, OBS_DIM)
    data[:, L_DONE] = np.asarray(dones).reshape(N)
    data[B:, L_MASK] = np.asarray(masks).reshape(M)
    data[:, L_ONE] = 1.0     # constant-one lane: biases ride in weight row 18

    kernel = functools.partial(sac_rnn_kernel, offs, T, B)
    vmem = pl.BlockSpec(memory_space=pltpu.MemorySpace.VMEM)
    smem = pl.BlockSpec(memory_space=pltpu.MemorySpace.SMEM)

    fn = pl.pallas_call(
        kernel,
        out_shape=(
            jax.ShapeDtypeStruct((4,), jnp.float32),     # qf1, qf2, policy, logp
            jax.ShapeDtypeStruct((B, 1), jnp.float32),   # avg |TD error| per batch element
        ),
        in_specs=[vmem] * 4,
        out_specs=(smem, vmem),
        scratch_shapes=[
            pltpu.VMEM((N, GW), jnp.float32),            # x-side GRU projections
            pltpu.VMEM((N, LANES), jnp.float32),         # hidden history [h_a | h_c | h_g]
            pltpu.VMEM((N + M, LANES), jnp.float32),     # staged fc1 acts of both live-Q calls
        ],
        cost_estimate=pl.CostEstimate(flops=60_000_000, transcendentals=40_000,
                                      bytes_accessed=2_000_000),
    )
    scalars, avg_abs_td = fn(jnp.asarray(data), jnp.asarray(heads),
                             jnp.asarray(wi_f), jnp.asarray(wh_f))
    return {
        "qf1_loss": scalars[0],
        "qf2_loss": scalars[1],
        "policy_loss": scalars[2],
        "current_log_probs": scalars[3],
        "avg_abs_td_errors": avg_abs_td,
    }


# ----------------------------------- main ---------------------------------------
if __name__ == "__main__":
    key = jax.random.PRNGKey(0)
    k_params, k_data = jax.random.split(key)
    ka, kc = jax.random.split(k_params)

    actor_raw = make_actor_params(ka)
    critic_raw = make_critic_params(kc)
    ctgt_raw = jax.tree_util.tree_map(np.copy, critic_raw)   # deepcopy -> target starts identical

    heads, offs, wi_f, wh_f = build_operands(actor_raw, critic_raw, ctgt_raw)

    # B = 8 keeps every per-step scratch slice (8,128)-tile aligned (perf review).
    T, B = 8, 8
    kd = jax.random.split(k_data, 6)
    obs = jax.random.normal(kd[0], (T, B, OBS_DIM), jnp.float32)
    obs2 = jax.random.normal(kd[1], (T, B, OBS_DIM), jnp.float32)
    act = jnp.tanh(jax.random.normal(kd[2], (T, B, ACTION_DIM), jnp.float32))
    rew = jax.random.normal(kd[3], (T, B, 1), jnp.float32)
    term = (jax.random.uniform(kd[4], (T, B, 1)) < 0.05).astype(jnp.float32)
    mask = (jax.random.uniform(kd[5], (T, B, 1)) < 0.9).astype(jnp.float32)

    # mirror ModelFreeOffPolicy_Separate_RNN.update(): prepend t=0 zero action /
    # reward / done and the initial observation -> (T+1, B, dim) sequences.
    observs = jnp.concatenate([obs[:1], obs2], axis=0)
    actions = jnp.concatenate([jnp.zeros((1, B, ACTION_DIM), jnp.float32), act], axis=0)
    rewards = jnp.concatenate([jnp.zeros((1, B, 1), jnp.float32), rew], axis=0)
    dones = jnp.concatenate([jnp.zeros((1, B, 1), jnp.float32), term], axis=0)

    out = run_forward(heads, offs, wi_f, wh_f,
                      actions, rewards, observs, dones, mask)
    out = jax.block_until_ready(out)

    assert all(bool(jnp.all(jnp.isfinite(v)))
               for v in jax.tree_util.tree_leaves(out)), "non-finite output"
    print("KERNEL_OK")
</pallas_src>

<mosaic_0001>
module attributes {stable_mosaic.version = 11 : i64} {
  func.func @sac_rnn_kernel(%arg0: memref<72x128xf32, #tpu.memory_space<vmem>>, %arg1: memref<2120x128xf32, #tpu.memory_space<vmem>>, %arg2: memref<136x384xf32, #tpu.memory_space<vmem>>, %arg3: memref<136x384xf32, #tpu.memory_space<vmem>>, %arg4: memref<4xf32, #tpu.memory_space<smem>>, %arg5: memref<8x1xf32, #tpu.memory_space<vmem>>, %arg6: memref<72x384xf32, #tpu.memory_space<vmem>>, %arg7: memref<72x128xf32, #tpu.memory_space<vmem>>, %arg8: memref<136x128xf32, #tpu.memory_space<vmem>>) attributes {dimension_semantics = [], scalar_prefetch = 0 : i64, scratch_operands = 3 : i64, tpu.core_type = #tpu.core_type<tc>} {
    %c0 = arith.constant 0 : index
    %c0_0 = arith.constant 0 : index
    %0 = vector.load %arg0[%c0, %c0_0] : memref<72x128xf32, #tpu.memory_space<vmem>>, vector<72x128xf32>
    %c0_1 = arith.constant 0 : index
    %c0_2 = arith.constant 0 : index
    %1 = vector.load %arg1[%c0_1, %c0_2] : memref<2120x128xf32, #tpu.memory_space<vmem>>, vector<128x128xf32>
    %cst = arith.constant dense<0.000000e+00> : vector<72x128xf32>
    %2 = tpu.matmul %0, %1, %cst {dimension_numbers = #tpu.dot_dimension_numbers<[1], [0], [0], [1], [0, 0, 1, 1], [], []>} : vector<72x128xf32>, vector<128x128xf32>, vector<72x128xf32> -> vector<72x128xf32>
    %cst_3 = arith.constant 0.000000e+00 : f32
    %3 = vector.broadcast %cst_3 : f32 to vector<72x128xf32>
    %4 = arith.maximumf %2, %3 : vector<72x128xf32>
    %c0_4 = arith.constant 0 : index
    %c0_5 = arith.constant 0 : index
    %5 = vector.load %arg2[%c0_4, %c0_5] : memref<136x384xf32, #tpu.memory_space<vmem>>, vector<128x384xf32>
    %cst_6 = arith.constant dense<0.000000e+00> : vector<72x384xf32>
    %6 = tpu.matmul %4, %5, %cst_6 {dimension_numbers = #tpu.dot_dimension_numbers<[1], [0], [0], [1], [0, 0, 1, 1], [], []>} : vector<72x128xf32>, vector<128x384xf32>, vector<72x384xf32> -> vector<72x384xf32>
    %c128 = arith.constant 128 : index
    %c0_7 = arith.constant 0 : index
    %7 = vector.load %arg2[%c128, %c0_7] : memref<136x384xf32, #tpu.memory_space<vmem>>, vector<1x384xf32>
    %8 = vector.broadcast %7 : vector<1x384xf32> to vector<72x384xf32>
    %9 = arith.addf %6, %8 : vector<72x384xf32>
    %c0_8 = arith.constant 0 : index
    %c0_9 = arith.constant 0 : index
    %10 = vector.load %arg6[%c0_8, %c0_9] : memref<72x384xf32, #tpu.memory_space<vmem>>, vector<72x384xf32>
    tpu.vector_store %arg6[%c0_8, %c0_9], %9 {strides = array<i32>} : memref<72x384xf32, #tpu.memory_space<vmem>>, vector<72x384xf32>,
    %c0_10 = arith.constant 0 : index
    %c0_11 = arith.constant 0 : index
    %11 = vector.load %arg3[%c0_10, %c0_11] : memref<136x384xf32, #tpu.memory_space<vmem>>, vector<128x384xf32>
    %c128_12 = arith.constant 128 : index
    %c0_13 = arith.constant 0 : index
    %12 = vector.load %arg3[%c128_12, %c0_13] : memref<136x384xf32, #tpu.memory_space<vmem>>, vector<1x384xf32>
    %cst_14 = arith.constant 0.000000e+00 : f32
    %13 = vector.broadcast %cst_14 : f32 to vector<8x128xf32>
    %c0_15 = arith.constant 0 : index
    %c0_16 = arith.constant 0 : index
    %14 = vector.load %arg6[%c0_15, %c0_16] : memref<72x384xf32, #tpu.memory_space<vmem>>, vector<8x384xf32>
    %cst_17 = arith.constant dense<0.000000e+00> : vector<8x384xf32>
    %15 = tpu.matmul %13, %11, %cst_17 {dimension_numbers = #tpu.dot_dimension_numbers<[1], [0], [0], [1], [0, 0, 1, 1], [], []>} : vector<8x128xf32>, vector<128x384xf32>, vector<8x384xf32> -> vector<8x384xf32>
    %16 = vector.broadcast %12 : vector<1x384xf32> to vector<8x384xf32>
    %17 = arith.addf %15, %16 : vector<8x384xf32>
    %18 = vector.extract_strided_slice %14 {offsets = [0, 0], sizes = [8, 256], strides = [1, 1]} : vector<8x384xf32> to vector<8x256xf32>
    %19 = vector.extract_strided_slice %17 {offsets = [0, 0], sizes = [8, 256], strides = [1, 1]} : vector<8x384xf32> to vector<8x256xf32>
    %20 = arith.addf %18, %19 : vector<8x256xf32>
    %21 = arith.negf %20 : vector<8x256xf32>
    %22 = math.exp %21 : vector<8x256xf32>
    %cst_18 = arith.constant 1.000000e+00 : f32
    %23 = vector.broadcast %cst_18 : f32 to vector<8x256xf32>
    %24 = arith.addf %23, %22 : vector<8x256xf32>
    %25 = arith.divf %23, %24 : vector<8x256xf32>
    %26 = vector.extract_strided_slice %25 {offsets = [0, 0], sizes = [8, 128], strides = [1, 1]} : vector<8x256xf32> to vector<8x128xf32>
    %27 = vector.extract_strided_slice %25 {offsets = [0, 128], sizes = [8, 128], strides = [1, 1]} : vector<8x256xf32> to vector<8x128xf32>
    %28 = vector.extract_strided_slice %14 {offsets = [0, 256], sizes = [8, 128], strides = [1, 1]} : vector<8x384xf32> to vector<8x128xf32>
    %29 = vector.extract_strided_slice %17 {offsets = [0, 256], sizes = [8, 128], strides = [1, 1]} : vector<8x384xf32> to vector<8x128xf32>
    %30 = arith.mulf %26, %29 : vector<8x128xf32>
    %31 = arith.addf %28, %30 : vector<8x128xf32>
    %32 = math.tanh %31 : vector<8x128xf32>
    %cst_19 = arith.constant 1.000000e+00 : f32
    %33 = vector.broadcast %cst_19 : f32 to vector<8x128xf32>
    %34 = arith.subf %33, %27 : vector<8x128xf32>
    %35 = arith.mulf %34, %32 : vector<8x128xf32>
    %36 = arith.mulf %27, %13 : vector<8x128xf32>
    %37 = arith.addf %35, %36 : vector<8x128xf32>
    %c0_20 = arith.constant 0 : index
    %c0_21 = arith.constant 0 : index
    %38 = vector.load %arg7[%c0_20, %c0_21] : memref<72x128xf32, #tpu.memory_space<vmem>>, vector<8x128xf32>
    tpu.vector_store %arg7[%c0_20, %c0_21], %37 {strides = array<i32>} : memref<72x128xf32, #tpu.memory_space<vmem>>, vector<8x128xf32>,
    %c8 = arith.constant 8 : index
    %c0_22 = arith.constant 0 : index
    %39 = vector.load %arg6[%c8, %c0_22] : memref<72x384xf32, #tpu.memory_space<vmem>>, vector<8x384xf32>
    %cst_23 = arith.constant dense<0.000000e+00> : vector<8x384xf32>
    %40 = tpu.matmul %37, %11, %cst_23 {dimension_numbers = #tpu.dot_dimension_numbers<[1], [0], [0], [1], [0, 0, 1, 1], [], []>} : vector<8x128xf32>, vector<128x384xf32>, vector<8x384xf32> -> vector<8x384xf32>
    %41 = vector.broadcast %12 : vector<1x384xf32> to vector<8x384xf32>
    %42 = arith.addf %40, %41 : vector<8x384xf32>
    %43 = vector.extract_strided_slice %39 {offsets = [0, 0], sizes = [8, 256], strides = [1, 1]} : vector<8x384xf32> to vector<8x256xf32>
    %44 = vector.extract_strided_slice %42 {offsets = [0, 0], sizes = [8, 256], strides = [1, 1]} : vector<8x384xf32> to vector<8x256xf32>
    %45 = arith.addf %43, %44 : vector<8x256xf32>
    %46 = arith.negf %45 : vector<8x256xf32>
    %47 = math.exp %46 : vector<8x256xf32>
    %cst_24 = arith.constant 1.000000e+00 : f32
    %48 = vector.broadcast %cst_24 : f32 to vector<8x256xf32>
    %49 = arith.addf %48, %47 : vector<8x256xf32>
    %50 = arith.divf %48, %49 : vector<8x256xf32>
    %51 = vector.extract_strided_slice %50 {offsets = [0, 0], sizes = [8, 128], strides = [1, 1]} : vector<8x256xf32> to vector<8x128xf32>
    %52 = vector.extract_strided_slice %50 {offsets = [0, 128], sizes = [8, 128], strides = [1, 1]} : vector<8x256xf32> to vector<8x128xf32>
    %53 = vector.extract_strided_slice %39 {offsets = [0, 256], sizes = [8, 128], strides = [1, 1]} : vector<8x384xf32> to vector<8x128xf32>
    %54 = vector.extract_strided_slice %42 {offsets = [0, 256], sizes = [8, 128], strides = [1, 1]} : vector<8x384xf32> to vector<8x128xf32>
    %55 = arith.mulf %51, %54 : vector<8x128xf32>
    %56 = arith.addf %53, %55 : vector<8x128xf32>
    %57 = math.tanh %56 : vector<8x128xf32>
    %cst_25 = arith.constant 1.000000e+00 : f32
    %58 = vector.broadcast %cst_25 : f32 to vector<8x128xf32>
    %59 = arith.subf %58, %52 : vector<8x128xf32>
    %60 = arith.mulf %59, %57 : vector<8x128xf32>
    %61 = arith.mulf %52, %37 : vector<8x128xf32>
    %62 = arith.addf %60, %61 : vector<8x128xf32>
    %c8_26 = arith.constant 8 : index
    %c0_27 = arith.constant 0 : index
    %63 = vector.load %arg7[%c8_26, %c0_27] : memref<72x128xf32, #tpu.memory_space<vmem>>, vector<8x128xf32>
    tpu.vector_store %arg7[%c8_26, %c0_27], %62 {strides = array<i32>} : memref<72x128xf32, #tpu.memory_space<vmem>>, vector<8x128xf32>,
    %c16 = arith.constant 16 : index
    %c0_28 = arith.constant 0 : index
    %64 = vector.load %arg6[%c16, %c0_28] : memref<72x384xf32, #tpu.memory_space<vmem>>, vector<8x384xf32>
    %cst_29 = arith.constant dense<0.000000e+00> : vector<8x384xf32>
    %65 = tpu.matmul %62, %11, %cst_29 {dimension_numbers = #tpu.dot_dimension_numbers<[1], [0], [0], [1], [0, 0, 1, 1], [], []>} : vector<8x128xf32>, vector<128x384xf32>, vector<8x384xf32> -> vector<8x384xf32>
    %66 = vector.broadcast %12 : vector<1x384xf32> to vector<8x384xf32>
    %67 = arith.addf %65, %66 : vector<8x384xf32>
    %68 = vector.extract_strided_slice %64 {offsets = [0, 0], sizes = [8, 256], strides = [1, 1]} : vector<8x384xf32> to vector<8x256xf32>
    %69 = vector.extract_strided_slice %67 {offsets = [0, 0], sizes = [8, 256], strides = [1, 1]} : vector<8x384xf32> to vector<8x256xf32>
    %70 = arith.addf %68, %69 : vector<8x256xf32>
    %71 = arith.negf %70 : vector<8x256xf32>
    %72 = math.exp %71 : vector<8x256xf32>
    %cst_30 = arith.constant 1.000000e+00 : f32
    %73 = vector.broadcast %cst_30 : f32 to vector<8x256xf32>
    %74 = arith.addf %73, %72 : vector<8x256xf32>
    %75 = arith.divf %73, %74 : vector<8x256xf32>
    %76 = vector.extract_strided_slice %75 {offsets = [0, 0], sizes = [8, 128], strides = [1, 1]} : vector<8x256xf32> to vector<8x128xf32>
    %77 = vector.extract_strided_slice %75 {offsets = [0, 128], sizes = [8, 128], strides = [1, 1]} : vector<8x256xf32> to vector<8x128xf32>
    %78 = vector.extract_strided_slice %64 {offsets = [0, 256], sizes = [8, 128], strides = [1, 1]} : vector<8x384xf32> to vector<8x128xf32>
    %79 = vector.extract_strided_slice %67 {offsets = [0, 256], sizes = [8, 128], strides = [1, 1]} : vector<8x384xf32> to vector<8x128xf32>
    %80 = arith.mulf %76, %79 : vector<8x128xf32>
    %81 = arith.addf %78, %80 : vector<8x128xf32>
    %82 = math.tanh %81 : vector<8x128xf32>
    %cst_31 = arith.constant 1.000000e+00 : f32
    %83 = vector.broadcast %cst_31 : f32 to vector<8x128xf32>
    %84 = arith.subf %83, %77 : vector<8x128xf32>
    %85 = arith.mulf %84, %82 : vector<8x128xf32>
    %86 = arith.mulf %77, %62 : vector<8x128xf32>
    %87 = arith.addf %85, %86 : vector<8x128xf32>
    %c16_32 = arith.constant 16 : index
    %c0_33 = arith.constant 0 : index
    %88 = vector.load %arg7[%c16_32, %c0_33] : memref<72x128xf32, #tpu.memory_space<vmem>>, vector<8x128xf32>
    tpu.vector_store %arg7[%c16_32, %c0_33], %87 {strides = array<i32>} : memref<72x128xf32, #tpu.memory_space<vmem>>, vector<8x128xf32>,
    %c24 = arith.constant 24 : index
    %c0_34 = arith.constant 0 : index
    %89 = vector.load %arg6[%c24, %c0_34] : memref<72x384xf32, #tpu.memory_space<vmem>>, vector<8x384xf32>
    %cst_35 = arith.constant dense<0.000000e+00> : vector<8x384xf32>
    %90 = tpu.matmul %87, %11, %cst_35 {dimension_numbers = #tpu.dot_dimension_numbers<[1], [0], [0], [1], [0, 0, 1, 1], [], []>} : vector<8x128xf32>, vector<128x384xf32>, vector<8x384xf32> -> vector<8x384xf32>
    %91 = vector.broadcast %12 : vector<1x384xf32> to vector<8x384xf32>
    %92 = arith.addf %90, %91 : vector<8x384xf32>
    %93 = vector.extract_strided_slice %89 {offsets = [0, 0], sizes = [8, 256], strides = [1, 1]} : vector<8x384xf32> to vector<8x256xf32>
    %94 = vector.extract_strided_slice %92 {offsets = [0, 0], sizes = [8, 256], strides = [1, 1]} : vector<8x384xf32> to vector<8x256xf32>
    %95 = arith.addf %93, %94 : vector<8x256xf32>
    %96 = arith.negf %95 : vector<8x256xf32>
    %97 = math.exp %96 : vector<8x256xf32>
    %cst_36 = arith.constant 1.000000e+00 : f32
    %98 = vector.broadcast %cst_36 : f32 to vector<8x256xf32>
    %99 = arith.addf %98, %97 : vector<8x256xf32>
    %100 = arith.divf %98, %99 : vector<8x256xf32>
    %101 = vector.extract_strided_slice %100 {offsets = [0, 0], sizes = [8, 128], strides = [1, 1]} : vector<8x256xf32> to vector<8x128xf32>
    %102 = vector.extract_strided_slice %100 {offsets = [0, 128], sizes = [8, 128], strides = [1, 1]} : vector<8x256xf32> to vector<8x128xf32>
    %103 = vector.extract_strided_slice %89 {offsets = [0, 256], sizes = [8, 128], strides = [1, 1]} : vector<8x384xf32> to vector<8x128xf32>
    %104 = vector.extract_strided_slice %92 {offsets = [0, 256], sizes = [8, 128], strides = [1, 1]} : vector<8x384xf32> to vector<8x128xf32>
    %105 = arith.mulf %101, %104 : vector<8x128xf32>
    %106 = arith.addf %103, %105 : vector<8x128xf32>
    %107 = math.tanh %106 : vector<8x128xf32>
    %cst_37 = arith.constant 1.000000e+00 : f32
    %108 = vector.broadcast %cst_37 : f32 to vector<8x128xf32>
    %109 = arith.subf %108, %102 : vector<8x128xf32>
    %110 = arith.mulf %109, %107 : vector<8x128xf32>
    %111 = arith.mulf %102, %87 : vector<8x128xf32>
    %112 = arith.addf %110, %111 : vector<8x128xf32>
    %c24_38 = arith.constant 24 : index
    %c0_39 = arith.constant 0 : index
    %113 = vector.load %arg7[%c24_38, %c0_39] : memref<72x128xf32, #tpu.memory_space<vmem>>, vector<8x128xf32>
    tpu.vector_store %arg7[%c24_38, %c0_39], %112 {strides = array<i32>} : memref<72x128xf32, #tpu.memory_space<vmem>>, vector<8x128xf32>,
    %c32 = arith.constant 32 : index
    %c0_40 = arith.constant 0 : index
    %114 = vector.load %arg6[%c32, %c0_40] : memref<72x384xf32, #tpu.memory_space<vmem>>, vector<8x384xf32>
    %cst_41 = arith.constant dense<0.000000e+00> : vector<8x384xf32>
    %115 = tpu.matmul %112, %11, %cst_41 {dimension_numbers = #tpu.dot_dimension_numbers<[1], [0], [0], [1], [0, 0, 1, 1], [], []>} : vector<8x128xf32>, vector<128x384xf32>, vector<8x384xf32> -> vector<8x384xf32>
    %116 = vector.broadcast %12 : vector<1x384xf32> to vector<8x384xf32>
    %117 = arith.addf %115, %116 : vector<8x384xf32>
    %118 = vector.extract_strided_slice %114 {offsets = [0, 0], sizes = [8, 256], strides = [1, 1]} : vector<8x384xf32> to vector<8x256xf32>
    %119 = vector.extract_strided_slice %117 {offsets = [0, 0], sizes = [8, 256], strides = [1, 1]} : vector<8x384xf32> to vector<8x256xf32>
    %120 = arith.addf %118, %119 : vector<8x256xf32>
    %121 = arith.negf %120 : vector<8x256xf32>
    %122 = math.exp %121 : vector<8x256xf32>
    %cst_42 = arith.constant 1.000000e+00 : f32
    %123 = vector.broadcast %cst_42 : f32 to vector<8x256xf32>
    %124 = arith.addf %123, %122 : vector<8x256xf32>
    %125 = arith.divf %123, %124 : vector<8x256xf32>
    %126 = vector.extract_strided_slice %125 {offsets = [0, 0], sizes = [8, 128], strides = [1, 1]} : vector<8x256xf32> to vector<8x128xf32>
    %127 = vector.extract_strided_slice %125 {offsets = [0, 128], sizes = [8, 128], strides = [1, 1]} : vector<8x256xf32> to vector<8x128xf32>
    %128 = vector.extract_strided_slice %114 {offsets = [0, 256], sizes = [8, 128], strides = [1, 1]} : vector<8x384xf32> to vector<8x128xf32>
    %129 = vector.extract_strided_slice %117 {offsets = [0, 256], sizes = [8, 128], strides = [1, 1]} : vector<8x384xf32> to vector<8x128xf32>
    %130 = arith.mulf %126, %129 : vector<8x128xf32>
    %131 = arith.addf %128, %130 : vector<8x128xf32>
    %132 = math.tanh %131 : vector<8x128xf32>
    %cst_43 = arith.constant 1.000000e+00 : f32
    %133 = vector.broadcast %cst_43 : f32 to vector<8x128xf32>
    %134 = arith.subf %133, %127 : vector<8x128xf32>
    %135 = arith.mulf %134, %132 : vector<8x128xf32>
    %136 = arith.mulf %127, %112 : vector<8x128xf32>
    %137 = arith.addf %135, %136 : vector<8x128xf32>
    %c32_44 = arith.constant 32 : index
    %c0_45 = arith.constant 0 : index
    %138 = vector.load %arg7[%c32_44, %c0_45] : memref<72x128xf32, #tpu.memory_space<vmem>>, vector<8x128xf32>
    tpu.vector_store %arg7[%c32_44, %c0_45], %137 {strides = array<i32>} : memref<72x128xf32, #tpu.memory_space<vmem>>, vector<8x128xf32>,
    %c40 = arith.constant 40 : index
    %c0_46 = arith.constant 0 : index
    %139 = vector.load %arg6[%c40, %c0_46] : memref<72x384xf32, #tpu.memory_space<vmem>>, vector<8x384xf32>
    %cst_47 = arith.constant dense<0.000000e+00> : vector<8x384xf32>
    %140 = tpu.matmul %137, %11, %cst_47 {dimension_numbers = #tpu.dot_dimension_numbers<[1], [0], [0], [1], [0, 0, 1, 1], [], []>} : vector<8x128xf32>, vector<128x384xf32>, vector<8x384xf32> -> vector<8x384xf32>
    %141 = vector.broadcast %12 : vector<1x384xf32> to vector<8x384xf32>
    %142 = arith.addf %140, %141 : vector<8x384xf32>
    %143 = vector.extract_strided_slice %139 {offsets = [0, 0], sizes = [8, 256], strides = [1, 1]} : vector<8x384xf32> to vector<8x256xf32>
    %144 = vector.extract_strided_slice %142 {offsets = [0, 0], sizes = [8, 256], strides = [1, 1]} : vector<8x384xf32> to vector<8x256xf32>
    %145 = arith.addf %143, %144 : vector<8x256xf32>
    %146 = arith.negf %145 : vector<8x256xf32>
    %147 = math.exp %146 : vector<8x256xf32>
    %cst_48 = arith.constant 1.000000e+00 : f32
    %148 = vector.broadcast %cst_48 : f32 to vector<8x256xf32>
    %149 = arith.addf %148, %147 : vector<8x256xf32>
    %150 = arith.divf %148, %149 : vector<8x256xf32>
    %151 = vector.extract_strided_slice %150 {offsets = [0, 0], sizes = [8, 128], strides = [1, 1]} : vector<8x256xf32> to vector<8x128xf32>
    %152 = vector.extract_strided_slice %150 {offsets = [0, 128], sizes = [8, 128], strides = [1, 1]} : vector<8x256xf32> to vector<8x128xf32>
    %153 = vector.extract_strided_slice %139 {offsets = [0, 256], sizes = [8, 128], strides = [1, 1]} : vector<8x384xf32> to vector<8x128xf32>
    %154 = vector.extract_strided_slice %142 {offsets = [0, 256], sizes = [8, 128], strides = [1, 1]} : vector<8x384xf32> to vector<8x128xf32>
    %155 = arith.mulf %151, %154 : vector<8x128xf32>
    %156 = arith.addf %153, %155 : vector<8x128xf32>
    %157 = math.tanh %156 : vector<8x128xf32>
    %cst_49 = arith.constant 1.000000e+00 : f32
    %158 = vector.broadcast %cst_49 : f32 to vector<8x128xf32>
    %159 = arith.subf %158, %152 : vector<8x128xf32>
    %160 = arith.mulf %159, %157 : vector<8x128xf32>
    %161 = arith.mulf %152, %137 : vector<8x128xf32>
    %162 = arith.addf %160, %161 : vector<8x128xf32>
    %c40_50 = arith.constant 40 : index
    %c0_51 = arith.constant 0 : index
    %163 = vector.load %arg7[%c40_50, %c0_51] : memref<72x128xf32, #tpu.memory_space<vmem>>, vector<8x128xf32>
    tpu.vector_store %arg7[%c40_50, %c0_51], %162 {strides = array<i32>} : memref<72x128xf32, #tpu.memory_space<vmem>>, vector<8x128xf32>,
    %c48 = arith.constant 48 : index
    %c0_52 = arith.constant 0 : index
    %164 = vector.load %arg6[%c48, %c0_52] : memref<72x384xf32, #tpu.memory_space<vmem>>, vector<8x384xf32>
    %cst_53 = arith.constant dense<0.000000e+00> : vector<8x384xf32>
    %165 = tpu.matmul %162, %11, %cst_53 {dimension_numbers = #tpu.dot_dimension_numbers<[1], [0], [0], [1], [0, 0, 1, 1], [], []>} : vector<8x128xf32>, vector<128x384xf32>, vector<8x384xf32> -> vector<8x384xf32>
    %166 = vector.broadcast %12 : vector<1x384xf32> to vector<8x384xf32>
    %167 = arith.addf %165, %166 : vector<8x384xf32>
    %168 = vector.extract_strided_slice %164 {offsets = [0, 0], sizes = [8, 256], strides = [1, 1]} : vector<8x384xf32> to vector<8x256xf32>
    %169 = vector.extract_strided_slice %167 {offsets = [0, 0], sizes = [8, 256], strides = [1, 1]} : vector<8x384xf32> to vector<8x256xf32>
    %170 = arith.addf %168, %169 : vector<8x256xf32>
    %171 = arith.negf %170 : vector<8x256xf32>
    %172 = math.exp %171 : vector<8x256xf32>
    %cst_54 = arith.constant 1.000000e+00 : f32
    %173 = vector.broadcast %cst_54 : f32 to vector<8x256xf32>
    %174 = arith.addf %173, %172 : vector<8x256xf32>
    %175 = arith.divf %173, %174 : vector<8x256xf32>
    %176 = vector.extract_strided_slice %175 {offsets = [0, 0], sizes = [8, 128], strides = [1, 1]} : vector<8x256xf32> to vector<8x128xf32>
    %177 = vector.extract_strided_slice %175 {offsets = [0, 128], sizes = [8, 128], strides = [1, 1]} : vector<8x256xf32> to vector<8x128xf32>
    %178 = vector.extract_strided_slice %164 {offsets = [0, 256], sizes = [8, 128], strides = [1, 1]} : vector<8x384xf32> to vector<8x128xf32>
    %179 = vector.extract_strided_slice %167 {offsets = [0, 256], sizes = [8, 128], strides = [1, 1]} : vector<8x384xf32> to vector<8x128xf32>
    %180 = arith.mulf %176, %179 : vector<8x128xf32>
    %181 = arith.addf %178, %180 : vector<8x128xf32>
    %182 = math.tanh %181 : vector<8x128xf32>
    %cst_55 = arith.constant 1.000000e+00 : f32
    %183 = vector.broadcast %cst_55 : f32 to vector<8x128xf32>
    %184 = arith.subf %183, %177 : vector<8x128xf32>
    %185 = arith.mulf %184, %182 : vector<8x128xf32>
    %186 = arith.mulf %177, %162 : vector<8x128xf32>
    %187 = arith.addf %185, %186 : vector<8x128xf32>
    %c48_56 = arith.constant 48 : index
    %c0_57 = arith.constant 0 : index
    %188 = vector.load %arg7[%c48_56, %c0_57] : memref<72x128xf32, #tpu.memory_space<vmem>>, vector<8x128xf32>
    tpu.vector_store %arg7[%c48_56, %c0_57], %187 {strides = array<i32>} : memref<72x128xf32, #tpu.memory_space<vmem>>, vector<8x128xf32>,
    %c56 = arith.constant 56 : index
    %c0_58 = arith.constant 0 : index
    %189 = vector.load %arg6[%c56, %c0_58] : memref<72x384xf32, #tpu.memory_space<vmem>>, vector<8x384xf32>
    %cst_59 = arith.constant dense<0.000000e+00> : vector<8x384xf32>
    %190 = tpu.matmul %187, %11, %cst_59 {dimension_numbers = #tpu.dot_dimension_numbers<[1], [0], [0], [1], [0, 0, 1, 1], [], []>} : vector<8x128xf32>, vector<128x384xf32>, vector<8x384xf32> -> vector<8x384xf32>
    %191 = vector.broadcast %12 : vector<1x384xf32> to vector<8x384xf32>
    %192 = arith.addf %190, %191 : vector<8x384xf32>
    %193 = vector.extract_strided_slice %189 {offsets = [0, 0], sizes = [8, 256], strides = [1, 1]} : vector<8x384xf32> to vector<8x256xf32>
    %194 = vector.extract_strided_slice %192 {offsets = [0, 0], sizes = [8, 256], strides = [1, 1]} : vector<8x384xf32> to vector<8x256xf32>
    %195 = arith.addf %193, %194 : vector<8x256xf32>
    %196 = arith.negf %195 : vector<8x256xf32>
    %197 = math.exp %196 : vector<8x256xf32>
    %cst_60 = arith.constant 1.000000e+00 : f32
    %198 = vector.broadcast %cst_60 : f32 to vector<8x256xf32>
    %199 = arith.addf %198, %197 : vector<8x256xf32>
    %200 = arith.divf %198, %199 : vector<8x256xf32>
    %201 = vector.extract_strided_slice %200 {offsets = [0, 0], sizes = [8, 128], strides = [1, 1]} : vector<8x256xf32> to vector<8x128xf32>
    %202 = vector.extract_strided_slice %200 {offsets = [0, 128], sizes = [8, 128], strides = [1, 1]} : vector<8x256xf32> to vector<8x128xf32>
    %203 = vector.extract_strided_slice %189 {offsets = [0, 256], sizes = [8, 128], strides = [1, 1]} : vector<8x384xf32> to vector<8x128xf32>
    %204 = vector.extract_strided_slice %192 {offsets = [0, 256], sizes = [8, 128], strides = [1, 1]} : vector<8x384xf32> to vector<8x128xf32>
    %205 = arith.mulf %201, %204 : vector<8x128xf32>
    %206 = arith.addf %203, %205 : vector<8x128xf32>
    %207 = math.tanh %206 : vector<8x128xf32>
    %cst_61 = arith.constant 1.000000e+00 : f32
    %208 = vector.broadcast %cst_61 : f32 to vector<8x128xf32>
    %209 = arith.subf %208, %202 : vector<8x128xf32>
    %210 = arith.mulf %209, %207 : vector<8x128xf32>
    %211 = arith.mulf %202, %187 : vector<8x128xf32>
    %212 = arith.addf %210, %211 : vector<8x128xf32>
    %c56_62 = arith.constant 56 : index
    %c0_63 = arith.constant 0 : index
    %213 = vector.load %arg7[%c56_62, %c0_63] : memref<72x128xf32, #tpu.memory_space<vmem>>, vector<8x128xf32>
    tpu.vector_store %arg7[%c56_62, %c0_63], %212 {strides = array<i32>} : memref<72x128xf32, #tpu.memory_space<vmem>>, vector<8x128xf32>,
    %c64 = arith.constant 64 : index
    %c0_64 = arith.constant 0 : index
    %214 = vector.load %arg6[%c64, %c0_64] : memref<72x384xf32, #tpu.memory_space<vmem>>, vector<8x384xf32>
    %cst_65 = arith.constant dense<0.000000e+00> : vector<8x384xf32>
    %215 = tpu.matmul %212, %11, %cst_65 {dimension_numbers = #tpu.dot_dimension_numbers<[1], [0], [0], [1], [0, 0, 1, 1], [], []>} : vector<8x128xf32>, vector<128x384xf32>, vector<8x384xf32> -> vector<8x384xf32>
    %216 = vector.broadcast %12 : vector<1x384xf32> to vector<8x384xf32>
    %217 = arith.addf %215, %216 : vector<8x384xf32>
    %218 = vector.extract_strided_slice %214 {offsets = [0, 0], sizes = [8, 256], strides = [1, 1]} : vector<8x384xf32> to vector<8x256xf32>
    %219 = vector.extract_strided_slice %217 {offsets = [0, 0], sizes = [8, 256], strides = [1, 1]} : vector<8x384xf32> to vector<8x256xf32>
    %220 = arith.addf %218, %219 : vector<8x256xf32>
    %221 = arith.negf %220 : vector<8x256xf32>
    %222 = math.exp %221 : vector<8x256xf32>
    %cst_66 = arith.constant 1.000000e+00 : f32
    %223 = vector.broadcast %cst_66 : f32 to vector<8x256xf32>
    %224 = arith.addf %223, %222 : vector<8x256xf32>
    %225 = arith.divf %223, %224 : vector<8x256xf32>
    %226 = vector.extract_strided_slice %225 {offsets = [0, 0], sizes = [8, 128], strides = [1, 1]} : vector<8x256xf32> to vector<8x128xf32>
    %227 = vector.extract_strided_slice %225 {offsets = [0, 128], sizes = [8, 128], strides = [1, 1]} : vector<8x256xf32> to vector<8x128xf32>
    %228 = vector.extract_strided_slice %214 {offsets = [0, 256], sizes = [8, 128], strides = [1, 1]} : vector<8x384xf32> to vector<8x128xf32>
    %229 = vector.extract_strided_slice %217 {offsets = [0, 256], sizes = [8, 128], strides = [1, 1]} : vector<8x384xf32> to vector<8x128xf32>
    %230 = arith.mulf %226, %229 : vector<8x128xf32>
    %231 = arith.addf %228, %230 : vector<8x128xf32>
    %232 = math.tanh %231 : vector<8x128xf32>
    %cst_67 = arith.constant 1.000000e+00 : f32
    %233 = vector.broadcast %cst_67 : f32 to vector<8x128xf32>
    %234 = arith.subf %233, %227 : vector<8x128xf32>
    %235 = arith.mulf %234, %232 : vector<8x128xf32>
    %236 = arith.mulf %227, %212 : vector<8x128xf32>
    %237 = arith.addf %235, %236 : vector<8x128xf32>
    %c64_68 = arith.constant 64 : index
    %c0_69 = arith.constant 0 : index
    %238 = vector.load %arg7[%c64_68, %c0_69] : memref<72x128xf32, #tpu.memory_space<vmem>>, vector<8x128xf32>
    tpu.vector_store %arg7[%c64_68, %c0_69], %237 {strides = array<i32>} : memref<72x128xf32, #tpu.memory_space<vmem>>, vector<8x128xf32>,
    %c0_70 = arith.constant 0 : index
    %c0_71 = arith.constant 0 : index
    %239 = vector.load %arg7[%c0_70, %c0_71] : memref<72x128xf32, #tpu.memory_space<vmem>>, vector<72x128xf32>
    %c128_72 = arith.constant 128 : index
    %c0_73 = arith.constant 0 : index
    %240 = vector.load %arg1[%c128_72, %c0_73] : memref<2120x128xf32, #tpu.memory_space<vmem>>, vector<128x128xf32>
    %c256 = arith.constant 256 : index
    %c0_74 = arith.constant 0 : index
    %241 = vector.load %arg1[%c256, %c0_74] : memref<2120x128xf32, #tpu.memory_space<vmem>>, vector<1x128xf32>
    %cst_75 = arith.constant dense<0.000000e+00> : vector<72x128xf32>
    %242 = tpu.matmul %239, %240, %cst_75 {dimension_numbers = #tpu.dot_dimension_numbers<[1], [0], [0], [1], [0, 0, 1, 1], [], []>} : vector<72x128xf32>, vector<128x128xf32>, vector<72x128xf32> -> vector<72x128xf32>
    %243 = vector.broadcast %241 : vector<1x128xf32> to vector<72x128xf32>
    %244 = arith.addf %242, %243 : vector<72x128xf32>
    %cst_76 = arith.constant 0.000000e+00 : f32
    %245 = vector.broadcast %cst_76 : f32 to vector<72x128xf32>
    %246 = arith.maximumf %244, %245 : vector<72x128xf32>
    %c264 = arith.constant 264 : index
    %c0_77 = arith.constant 0 : index
    %247 = vector.load %arg1[%c264, %c0_77] : memref<2120x128xf32, #tpu.memory_space<vmem>>, vector<128x128xf32>
    %c392 = arith.constant 392 : index
    %c0_78 = arith.constant 0 : index
    %248 = vector.load %arg1[%c392, %c0_78] : memref<2120x128xf32, #tpu.memory_space<vmem>>, vector<1x128xf32>
    %cst_79 = arith.constant dense<0.000000e+00> : vector<72x128xf32>
    %249 = tpu.matmul %246, %247, %cst_79 {dimension_numbers = #tpu.dot_dimension_numbers<[1], [0], [0], [1], [0, 0, 1, 1], [], []>} : vector<72x128xf32>, vector<128x128xf32>, vector<72x128xf32> -> vector<72x128xf32>
    %250 = vector.broadcast %248 : vector<1x128xf32> to vector<72x128xf32>
    %251 = arith.addf %249, %250 : vector<72x128xf32>
    %cst_80 = arith.constant 0.000000e+00 : f32
    %252 = vector.broadcast %cst_80 : f32 to vector<72x128xf32>
    %253 = arith.maximumf %251, %252 : vector<72x128xf32>
    %c400 = arith.constant 400 : index
    %c0_81 = arith.constant 0 : index
    %254 = vector.load %arg1[%c400, %c0_81] : memref<2120x128xf32, #tpu.memory_space<vmem>>, vector<128x128xf32>
    %c528 = arith.constant 528 : index
    %c0_82 = arith.constant 0 : index
    %255 = vector.load %arg1[%c528, %c0_82] : memref<2120x128xf32, #tpu.memory_space<vmem>>, vector<1x128xf32>
    %cst_83 = arith.constant dense<0.000000e+00> : vector<72x128xf32>
    %256 = tpu.matmul %253, %254, %cst_83 {dimension_numbers = #tpu.dot_dimension_numbers<[1], [0], [0], [1], [0, 0, 1, 1], [], []>} : vector<72x128xf32>, vector<128x128xf32>, vector<72x128xf32> -> vector<72x128xf32>
    %257 = vector.broadcast %255 : vector<1x128xf32> to vector<72x128xf32>
    %258 = arith.addf %256, %257 : vector<72x128xf32>
    %259 = math.tanh %258 : vector<72x128xf32>
    %260 = vector.extract_strided_slice %259 {offsets = [0, 0], sizes = [72, 4], strides = [1, 1]} : vector<72x128xf32> to vector<72x4xf32>
    %261 = vector.extract_strided_slice %258 {offsets = [0, 4], sizes = [72, 4], strides = [1, 1]} : vector<72x128xf32> to vector<72x4xf32>
    %cst_84 = arith.constant -2.000000e+01 : f32
    %cst_85 = arith.constant 2.000000e+00 : f32
    %262 = vector.broadcast %cst_84 : f32 to vector<72x4xf32>
    %263 = arith.maximumf %262, %261 : vector<72x4xf32>
    %264 = vector.broadcast %cst_85 : f32 to vector<72x4xf32>
    %265 = arith.minimumf %264, %263 : vector<72x4xf32>
    %cst_86 = arith.constant 0.000000e+00 : f32
    %266 = vector.broadcast %cst_86 : f32 to vector<72x4xf32>
    %267 = arith.subf %266, %265 : vector<72x4xf32>
    %cst_87 = arith.constant 0.918938517 : f32
    %268 = vector.broadcast %cst_87 : f32 to vector<72x4xf32>
    %269 = arith.subf %267, %268 : vector<72x4xf32>
    %270 = arith.mulf %260, %260 : vector<72x4xf32>
    %cst_88 = arith.constant 1.000000e+00 : f32
    %271 = vector.broadcast %cst_88 : f32 to vector<72x4xf32>
    %272 = arith.subf %271, %270 : vector<72x4xf32>
    %cst_89 = arith.constant 9.99999997E-7 : f32
    %273 = vector.broadcast %cst_89 : f32 to vector<72x4xf32>
    %274 = arith.addf %272, %273 : vector<72x4xf32>
    %275 = math.log %274 : vector<72x4xf32>
    %276 = arith.subf %269, %275 : vector<72x4xf32>
    %cst_90 = arith.constant dense<0.000000e+00> : vector<72xf32>
    %277 = vector.multi_reduction <add>, %276, %cst_90 [1] : vector<72x4xf32> to vector<72xf32>
    %278 = vector.shape_cast %277 : vector<72xf32> to vector<72x1xf32>
    %c536 = arith.constant 536 : index
    %c0_91 = arith.constant 0 : index
    %279 = vector.load %arg1[%c536, %c0_91] : memref<2120x128xf32, #tpu.memory_space<vmem>>, vector<128x128xf32>
    %cst_92 = arith.constant dense<0.000000e+00> : vector<72x128xf32>
    %280 = tpu.matmul %0, %279, %cst_92 {dimension_numbers = #tpu.dot_dimension_numbers<[1], [0], [0], [1], [0, 0, 1, 1], [], []>} : vector<72x128xf32>, vector<128x128xf32>, vector<72x128xf32> -> vector<72x128xf32>
    %c664 = arith.constant 664 : index
    %c0_93 = arith.constant 0 : index
    %281 = vector.load %arg1[%c664, %c0_93] : memref<2120x128xf32, #tpu.memory_space<vmem>>, vector<128x128xf32>
    %cst_94 = arith.constant dense<0.000000e+00> : vector<72x128xf32>
    %282 = tpu.matmul %259, %281, %cst_94 {dimension_numbers = #tpu.dot_dimension_numbers<[1], [0], [0], [1], [0, 0, 1, 1], [], []>} : vector<72x128xf32>, vector<128x128xf32>, vector<72x128xf32> -> vector<72x128xf32>
    %283 = arith.addf %280, %282 : vector<72x128xf32>
    %cst_95 = arith.constant 0.000000e+00 : f32
    %284 = vector.broadcast %cst_95 : f32 to vector<72x128xf32>
    %285 = arith.maximumf %283, %284 : vector<72x128xf32>
    %286 = vector.extract_strided_slice %0 {offsets = [8, 0], sizes = [64, 128], strides = [1, 1]} : vector<72x128xf32> to vector<64x128xf32>
    %c792 = arith.constant 792 : index
    %c0_96 = arith.constant 0 : index
    %287 = vector.load %arg1[%c792, %c0_96] : memref<2120x128xf32, #tpu.memory_space<vmem>>, vector<128x128xf32>
    %cst_97 = arith.constant dense<0.000000e+00> : vector<64x128xf32>
    %288 = tpu.matmul %286, %287, %cst_97 {dimension_numbers = #tpu.dot_dimension_numbers<[1], [0], [0], [1], [0, 0, 1, 1], [], []>} : vector<64x128xf32>, vector<128x128xf32>, vector<64x128xf32> -> vector<64x128xf32>
    %cst_98 = arith.constant 0.000000e+00 : f32
    %289 = vector.broadcast %cst_98 : f32 to vector<64x128xf32>
    %290 = arith.maximumf %288, %289 : vector<64x128xf32>
    %c1584 = arith.constant 1584 : index
    %c0_99 = arith.constant 0 : index
    %291 = vector.load %arg1[%c1584, %c0_99] : memref<2120x128xf32, #tpu.memory_space<vmem>>, vector<128x128xf32>
    %c1712 = arith.constant 1712 : index
    %c0_100 = arith.constant 0 : index
    %292 = vector.load %arg1[%c1712, %c0_100] : memref<2120x128xf32, #tpu.memory_space<vmem>>, vector<1x128xf32>
    %cst_101 = arith.constant dense<0.000000e+00> : vector<72x128xf32>
    %293 = tpu.matmul %239, %291, %cst_101 {dimension_numbers = #tpu.dot_dimension_numbers<[1], [0], [0], [1], [0, 0, 1, 1], [], []>} : vector<72x128xf32>, vector<128x128xf32>, vector<72x128xf32> -> vector<72x128xf32>
    %c1720 = arith.constant 1720 : index
    %c0_102 = arith.constant 0 : index
    %294 = vector.load %arg1[%c1720, %c0_102] : memref<2120x128xf32, #tpu.memory_space<vmem>>, vector<128x128xf32>
    %cst_103 = arith.constant dense<0.000000e+00> : vector<72x128xf32>
    %295 = tpu.matmul %285, %294, %cst_103 {dimension_numbers = #tpu.dot_dimension_numbers<[1], [0], [0], [1], [0, 0, 1, 1], [], []>} : vector<72x128xf32>, vector<128x128xf32>, vector<72x128xf32> -> vector<72x128xf32>
    %296 = arith.addf %293, %295 : vector<72x128xf32>
    %297 = vector.broadcast %292 : vector<1x128xf32> to vector<72x128xf32>
    %298 = arith.addf %296, %297 : vector<72x128xf32>
    %cst_104 = arith.constant 0.000000e+00 : f32
    %299 = vector.broadcast %cst_104 : f32 to vector<72x128xf32>
    %300 = arith.maximumf %298, %299 : vector<72x128xf32>
    %c1848 = arith.constant 1848 : index
    %c0_105 = arith.constant 0 : index
    %301 = vector.load %arg1[%c1848, %c0_105] : memref<2120x128xf32, #tpu.memory_space<vmem>>, vector<128x128xf32>
    %c1976 = arith.constant 1976 : index
    %c0_106 = arith.constant 0 : index
    %302 = vector.load %arg1[%c1976, %c0_106] : memref<2120x128xf32, #tpu.memory_space<vmem>>, vector<1x128xf32>
    %cst_107 = arith.constant dense<0.000000e+00> : vector<72x128xf32>
    %303 = tpu.matmul %300, %301, %cst_107 {dimension_numbers = #tpu.dot_dimension_numbers<[1], [0], [0], [1], [0, 0, 1, 1], [], []>} : vector<72x128xf32>, vector<128x128xf32>, vector<72x128xf32> -> vector<72x128xf32>
    %304 = vector.broadcast %302 : vector<1x128xf32> to vector<72x128xf32>
    %305 = arith.addf %303, %304 : vector<72x128xf32>
    %cst_108 = arith.constant 0.000000e+00 : f32
    %306 = vector.broadcast %cst_108 : f32 to vector<72x128xf32>
    %307 = arith.maximumf %305, %306 : vector<72x128xf32>
    %c1984 = arith.constant 1984 : index
    %c0_109 = arith.constant 0 : index
    %308 = vector.load %arg1[%c1984, %c0_109] : memref<2120x128xf32, #tpu.memory_space<vmem>>, vector<128x128xf32>
    %c2112 = arith.constant 2112 : index
    %c0_110 = arith.constant 0 : index
    %309 = vector.load %arg1[%c2112, %c0_110] : memref<2120x128xf32, #tpu.memory_space<vmem>>, vector<1x128xf32>
    %cst_111 = arith.constant dense<0.000000e+00> : vector<72x128xf32>
    %310 = tpu.matmul %307, %308, %cst_111 {dimension_numbers = #tpu.dot_dimension_numbers<[1], [0], [0], [1], [0, 0, 1, 1], [], []>} : vector<72x128xf32>, vector<128x128xf32>, vector<72x128xf32> -> vector<72x128xf32>
    %311 = vector.broadcast %309 : vector<1x128xf32> to vector<72x128xf32>
    %312 = arith.addf %310, %311 : vector<72x128xf32>
    %313 = vector.extract_strided_slice %312 {offsets = [0, 0], sizes = [72, 1], strides = [1, 1]} : vector<72x128xf32> to vector<72x1xf32>
    %314 = vector.extract_strided_slice %312 {offsets = [0, 1], sizes = [72, 1], strides = [1, 1]} : vector<72x128xf32> to vector<72x1xf32>
    %315 = arith.minimumf %313, %314 : vector<72x1xf32>
    %cst_112 = arith.constant 1.000000e-01 : f32
    %316 = vector.broadcast %cst_112 : f32 to vector<72x1xf32>
    %317 = arith.mulf %316, %278 : vector<72x1xf32>
    %318 = arith.subf %315, %317 : vector<72x1xf32>
    %319 = vector.extract_strided_slice %0 {offsets = [0, 4], sizes = [72, 1], strides = [1, 1]} : vector<72x128xf32> to vector<72x1xf32>
    %320 = vector.extract_strided_slice %0 {offsets = [0, 16], sizes = [72, 1], strides = [1, 1]} : vector<72x128xf32> to vector<72x1xf32>
    %cst_113 = arith.constant 1.000000e+00 : f32
    %321 = vector.broadcast %cst_113 : f32 to vector<72x1xf32>
    %322 = arith.subf %321, %320 : vector<72x1xf32>
    %cst_114 = arith.constant 9.900000e-01 : f32
    %323 = vector.broadcast %cst_114 : f32 to vector<72x1xf32>
    %324 = arith.mulf %322, %323 : vector<72x1xf32>
    %325 = arith.mulf %324, %318 : vector<72x1xf32>
    %326 = arith.addf %319, %325 : vector<72x1xf32>
    %c920 = arith.constant 920 : index
    %c0_115 = arith.constant 0 : index
    %327 = vector.load %arg1[%c920, %c0_115] : memref<2120x128xf32, #tpu.memory_space<vmem>>, vector<128x128xf32>
    %c1048 = arith.constant 1048 : index
    %c0_116 = arith.constant 0 : index
    %328 = vector.load %arg1[%c1048, %c0_116] : memref<2120x128xf32, #tpu.memory_space<vmem>>, vector<1x128xf32>
    %cst_117 = arith.constant dense<0.000000e+00> : vector<72x128xf32>
    %329 = tpu.matmul %239, %327, %cst_117 {dimension_numbers = #tpu.dot_dimension_numbers<[1], [0], [0], [1], [0, 0, 1, 1], [], []>} : vector<72x128xf32>, vector<128x128xf32>, vector<72x128xf32> -> vector<72x128xf32>
    %c1056 = arith.constant 1056 : index
    %c0_118 = arith.constant 0 : index
    %330 = vector.load %arg1[%c1056, %c0_118] : memref<2120x128xf32, #tpu.memory_space<vmem>>, vector<128x128xf32>
    %cst_119 = arith.constant dense<0.000000e+00> : vector<72x128xf32>
    %331 = tpu.matmul %285, %330, %cst_119 {dimension_numbers = #tpu.dot_dimension_numbers<[1], [0], [0], [1], [0, 0, 1, 1], [], []>} : vector<72x128xf32>, vector<128x128xf32>, vector<72x128xf32> -> vector<72x128xf32>
    %332 = arith.addf %329, %331 : vector<72x128xf32>
    %333 = vector.broadcast %328 : vector<1x128xf32> to vector<72x128xf32>
    %334 = arith.addf %332, %333 : vector<72x128xf32>
    %c1184 = arith.constant 1184 : index
    %c0_120 = arith.constant 0 : index
    %335 = vector.load %arg1[%c1184, %c0_120] : memref<2120x128xf32, #tpu.memory_space<vmem>>, vector<128x128xf32>
    %cst_121 = arith.constant dense<0.000000e+00> : vector<72x128xf32>
    %336 = tpu.matmul %285, %335, %cst_121 {dimension_numbers = #tpu.dot_dimension_numbers<[1], [0], [0], [1], [0, 0, 1, 1], [], []>} : vector<72x128xf32>, vector<128x128xf32>, vector<72x128xf32> -> vector<72x128xf32>
    %337 = arith.addf %334, %336 : vector<72x128xf32>
    %cst_122 = arith.constant 0.000000e+00 : f32
    %338 = vector.broadcast %cst_122 : f32 to vector<72x128xf32>
    %339 = arith.maximumf %337, %338 : vector<72x128xf32>
    %c0_123 = arith.constant 0 : index
    %c0_124 = arith.constant 0 : index
    %340 = vector.load %arg8[%c0_123, %c0_124] : memref<136x128xf32, #tpu.memory_space<vmem>>, vector<72x128xf32>
    tpu.vector_store %arg8[%c0_123, %c0_124], %339 {strides = array<i32>} : memref<136x128xf32, #tpu.memory_space<vmem>>, vector<72x128xf32>,
    %341 = vector.extract_strided_slice %334 {offsets = [0, 0], sizes = [64, 128], strides = [1, 1]} : vector<72x128xf32> to vector<64x128xf32>
    %cst_125 = arith.constant dense<0.000000e+00> : vector<64x128xf32>
    %342 = tpu.matmul %290, %335, %cst_125 {dimension_numbers = #tpu.dot_dimension_numbers<[1], [0], [0], [1], [0, 0, 1, 1], [], []>} : vector<64x128xf32>, vector<128x128xf32>, vector<64x128xf32> -> vector<64x128xf32>
    %343 = arith.addf %341, %342 : vector<64x128xf32>
    %cst_126 = arith.constant 0.000000e+00 : f32
    %344 = vector.broadcast %cst_126 : f32 to vector<64x128xf32>
    %345 = arith.maximumf %343, %344 : vector<64x128xf32>
    %c72 = arith.constant 72 : index
    %c0_127 = arith.constant 0 : index
    %346 = vector.load %arg8[%c72, %c0_127] : memref<136x128xf32, #tpu.memory_space<vmem>>, vector<64x128xf32>
    tpu.vector_store %arg8[%c72, %c0_127], %345 {strides = array<i32>} : memref<136x128xf32, #tpu.memory_space<vmem>>, vector<64x128xf32>,
    %c0_128 = arith.constant 0 : index
    %c0_129 = arith.constant 0 : index
    %347 = vector.load %arg8[%c0_128, %c0_129] : memref<136x128xf32, #tpu.memory_space<vmem>>, vector<136x128xf32>
    %c1312 = arith.constant 1312 : index
    %c0_130 = arith.constant 0 : index
    %348 = vector.load %arg1[%c1312, %c0_130] : memref<2120x128xf32, #tpu.memory_space<vmem>>, vector<128x128xf32>
    %c1440 = arith.constant 1440 : index
    %c0_131 = arith.constant 0 : index
    %349 = vector.load %arg1[%c1440, %c0_131] : memref<2120x128xf32, #tpu.memory_space<vmem>>, vector<1x128xf32>
    %cst_132 = arith.constant dense<0.000000e+00> : vector<136x128xf32>
    %350 = tpu.matmul %347, %348, %cst_132 {dimension_numbers = #tpu.dot_dimension_numbers<[1], [0], [0], [1], [0, 0, 1, 1], [], []>} : vector<136x128xf32>, vector<128x128xf32>, vector<136x128xf32> -> vector<136x128xf32>
    %351 = vector.broadcast %349 : vector<1x128xf32> to vector<136x128xf32>
    %352 = arith.addf %350, %351 : vector<136x128xf32>
    %cst_133 = arith.constant 0.000000e+00 : f32
    %353 = vector.broadcast %cst_133 : f32 to vector<136x128xf32>
    %354 = arith.maximumf %352, %353 : vector<136x128xf32>
    %c1448 = arith.constant 1448 : index
    %c0_134 = arith.constant 0 : index
    %355 = vector.load %arg1[%c1448, %c0_134] : memref<2120x128xf32, #tpu.memory_space<vmem>>, vector<128x128xf32>
    %c1576 = arith.constant 1576 : index
    %c0_135 = arith.constant 0 : index
    %356 = vector.load %arg1[%c1576, %c0_135] : memref<2120x128xf32, #tpu.memory_space<vmem>>, vector<1x128xf32>
    %cst_136 = arith.constant dense<0.000000e+00> : vector<136x128xf32>
    %357 = tpu.matmul %354, %355, %cst_136 {dimension_numbers = #tpu.dot_dimension_numbers<[1], [0], [0], [1], [0, 0, 1, 1], [], []>} : vector<136x128xf32>, vector<128x128xf32>, vector<136x128xf32> -> vector<136x128xf32>
    %358 = vector.broadcast %356 : vector<1x128xf32> to vector<136x128xf32>
    %359 = arith.addf %357, %358 : vector<136x128xf32>
    %cst_137 = arith.constant 1.000000e-01 : f32
    %360 = vector.broadcast %cst_137 : f32 to vector<72x1xf32>
    %361 = arith.mulf %360, %278 : vector<72x1xf32>
    %362 = vector.extract_strided_slice %359 {offsets = [0, 0], sizes = [72, 1], strides = [1, 1]} : vector<136x128xf32> to vector<72x1xf32>
    %363 = vector.extract_strided_slice %359 {offsets = [0, 1], sizes = [72, 1], strides = [1, 1]} : vector<136x128xf32> to vector<72x1xf32>
    %364 = arith.minimumf %362, %363 : vector<72x1xf32>
    %365 = arith.subf %361, %364 : vector<72x1xf32>
    %366 = vector.extract_strided_slice %0 {offsets = [8, 17], sizes = [64, 1], strides = [1, 1]} : vector<72x128xf32> to vector<64x1xf32>
    %367 = vector.shape_cast %366 : vector<64x1xf32> to vector<1x64x1xf32>
    %cst_138 = arith.constant dense<0.000000e+00> : vector<1xf32>
    %368 = vector.multi_reduction <add>, %367, %cst_138 [1, 2] : vector<1x64x1xf32> to vector<1xf32>
    %369 = vector.shape_cast %368 : vector<1xf32> to vector<1x1x1xf32>
    %370 = vector.extract %369[0, 0, 0] : f32 from vector<1x1x1xf32>
    %cst_139 = arith.constant 1.000000e+00 : f32
    %371 = arith.maximumf %370, %cst_139 : f32
    %372 = vector.extract_strided_slice %326 {offsets = [8, 0], sizes = [64, 1], strides = [1, 1]} : vector<72x1xf32> to vector<64x1xf32>
    %373 = arith.mulf %372, %366 : vector<64x1xf32>
    %374 = vector.extract_strided_slice %359 {offsets = [72, 0], sizes = [64, 1], strides = [1, 1]} : vector<136x128xf32> to vector<64x1xf32>
    %375 = arith.mulf %374, %366 : vector<64x1xf32>
    %376 = arith.subf %375, %373 : vector<64x1xf32>
    %377 = vector.extract_strided_slice %359 {offsets = [72, 1], sizes = [64, 1], strides = [1, 1]} : vector<136x128xf32> to vector<64x1xf32>
    %378 = arith.mulf %377, %366 : vector<64x1xf32>
    %379 = arith.subf %378, %373 : vector<64x1xf32>
    %380 = arith.mulf %376, %376 : vector<64x1xf32>
    %381 = vector.shape_cast %380 : vector<64x1xf32> to vector<1x64x1xf32>
    %cst_140 = arith.constant dense<0.000000e+00> : vector<1xf32>
    %382 = vector.multi_reduction <add>, %381, %cst_140 [1, 2] : vector<1x64x1xf32> to vector<1xf32>
    %383 = vector.shape_cast %382 : vector<1xf32> to vector<1x1x1xf32>
    %384 = vector.extract %383[0, 0, 0] : f32 from vector<1x1x1xf32>
    %385 = arith.divf %384, %371 : f32
    %386 = arith.mulf %379, %379 : vector<64x1xf32>
    %387 = vector.shape_cast %386 : vector<64x1xf32> to vector<1x64x1xf32>
    %cst_141 = arith.constant dense<0.000000e+00> : vector<1xf32>
    %388 = vector.multi_reduction <add>, %387, %cst_141 [1, 2] : vector<1x64x1xf32> to vector<1xf32>
    %389 = vector.shape_cast %388 : vector<1xf32> to vector<1x1x1xf32>
    %390 = vector.extract %389[0, 0, 0] : f32 from vector<1x1x1xf32>
    %391 = arith.divf %390, %371 : f32
    %392 = vector.extract_strided_slice %365 {offsets = [0, 0], sizes = [64, 1], strides = [1, 1]} : vector<72x1xf32> to vector<64x1xf32>
    %393 = arith.mulf %392, %366 : vector<64x1xf32>
    %394 = vector.shape_cast %393 : vector<64x1xf32> to vector<1x64x1xf32>
    %cst_142 = arith.constant dense<0.000000e+00> : vector<1xf32>
    %395 = vector.multi_reduction <add>, %394, %cst_142 [1, 2] : vector<1x64x1xf32> to vector<1xf32>
    %396 = vector.shape_cast %395 : vector<1xf32> to vector<1x1x1xf32>
    %397 = vector.extract %396[0, 0, 0] : f32 from vector<1x1x1xf32>
    %398 = arith.divf %397, %371 : f32
    %399 = vector.extract_strided_slice %278 {offsets = [0, 0], sizes = [64, 1], strides = [1, 1]} : vector<72x1xf32> to vector<64x1xf32>
    %400 = arith.mulf %399, %366 : vector<64x1xf32>
    %401 = vector.shape_cast %400 : vector<64x1xf32> to vector<1x64x1xf32>
    %cst_143 = arith.constant dense<0.000000e+00> : vector<1xf32>
    %402 = vector.multi_reduction <add>, %401, %cst_143 [1, 2] : vector<1x64x1xf32> to vector<1xf32>
    %403 = vector.shape_cast %402 : vector<1xf32> to vector<1x1x1xf32>
    %404 = vector.extract %403[0, 0, 0] : f32 from vector<1x1x1xf32>
    %405 = arith.divf %404, %371 : f32
    %406 = math.absf %376 : vector<64x1xf32>
    %407 = math.absf %379 : vector<64x1xf32>
    %408 = arith.addf %406, %407 : vector<64x1xf32>
    %cst_144 = arith.constant 5.000000e-01 : f32
    %409 = vector.broadcast %cst_144 : f32 to vector<64x1xf32>
    %410 = arith.mulf %409, %408 : vector<64x1xf32>
    %411 = vector.shape_cast %410 : vector<64x1xf32> to vector<8x8x1xf32>
    %cst_145 = arith.constant dense<0.000000e+00> : vector<8x1xf32>
    %412 = vector.multi_reduction <add>, %411, %cst_145 [0] : vector<8x8x1xf32> to vector<8x1xf32>
    %cst_146 = arith.constant 8.000000e+00 : f32
    %413 = vector.broadcast %cst_146 : f32 to vector<8x1xf32>
    %414 = arith.divf %412, %413 : vector<8x1xf32>
    %c0_147 = arith.constant 0 : index
    %c0_148 = arith.constant 0 : index
    %415 = vector.load %arg5[%c0_147, %c0_148] : memref<8x1xf32, #tpu.memory_space<vmem>>, vector<8x1xf32>
    tpu.vector_store %arg5[%c0_147, %c0_148], %414 {strides = array<i32>} : memref<8x1xf32, #tpu.memory_space<vmem>>, vector<8x1xf32>,
    %c0_149 = arith.constant 0 : index
    %416 = memref.load %arg4[%c0_149] : memref<4xf32, #tpu.memory_space<smem>>
    memref.store %385, %arg4[%c0_149] : memref<4xf32, #tpu.memory_space<smem>>
    %c1 = arith.constant 1 : index
    %417 = memref.load %arg4[%c1] : memref<4xf32, #tpu.memory_space<smem>>
    memref.store %391, %arg4[%c1] : memref<4xf32, #tpu.memory_space<smem>>
    %c2 = arith.constant 2 : index
    %418 = memref.load %arg4[%c2] : memref<4xf32, #tpu.memory_space<smem>>
    memref.store %398, %arg4[%c2] : memref<4xf32, #tpu.memory_space<smem>>
    %c3 = arith.constant 3 : index
    %419 = memref.load %arg4[%c3] : memref<4xf32, #tpu.memory_space<smem>>
    memref.store %405, %arg4[%c3] : memref<4xf32, #tpu.memory_space<smem>>
    return
  }
}

</mosaic_0001>

<llo_original>
// kernel: tpu_custom_call.1
$region0: #{tpu_custom_call.1}
  #allocation0 [shape = 'u32[]', space=smem, size = 0x4, offset = 0x4, fixed_abs, tag = 'smem constant byte address 0x4 - core index']
  #allocation1 [shape = 'u32[144,128]{1,0:T(1,128)}', space=vmem, size = 0x12000, scoped, tag = 'internal scratch']
  #allocation2 [shape = 'f32[72,384]{1,0:T(8,128)}', space=vmem, size = 0x1b000, scoped, tag = 'scratch operand']
  #allocation3 [shape = 'f32[72,128]{1,0:T(8,128)}', space=vmem, size = 0x9000, scoped, tag = 'scratch operand']
  #allocation4 [shape = 'f32[136,128]{1,0:T(8,128)}', space=vmem, size = 0x11000, scoped, tag = 'scratch operand']
  %s0 = inlined_call_operand.hbm [shape: f32[72,128], index: 0, kind: input, shape index: {}]
  %s1 = inlined_call_operand.hbm [shape: f32[2120,128], index: 1, kind: input, shape index: {}]
  %s2 = inlined_call_operand.hbm [shape: f32[136,384], index: 2, kind: input, shape index: {}]
  %s3 = inlined_call_operand.hbm [shape: f32[136,384], index: 3, kind: input, shape index: {}]
  %s4 = inlined_call_operand.hbm [shape: f32[4], index: 4, kind: output, shape index: {0}]
  %s5 = inlined_call_operand.vmem [shape: f32[8,1], index: 5, kind: output, shape index: {1}]
  %6 = xla_tuple %s4, %s5
  %s7 = sld [smem:[#allocation0]]
  $region50: #{tpu_custom_call.1} parent=0
    _
  %s9 = ssub.s32 1, %s7
  %s10 = scalar_select 0, %s9, %s7
  $region1: #{tpu_custom_call.1} parent=0
    #allocation5 [shape = 'u8[36864]{0}', space=vmem, size = 0x9000, scoped, tag = 'input window, operand 0, single buffered']
    #allocation6 [shape = 's32[1]{0}', space=sflag, size = 0x4, scoped, tag = 'scoped memory for tpu_custom_call.1']
    #allocation7 [shape = 's32[1]{0}', space=sflag, size = 0x4, scoped, tag = 'scoped memory for tpu_custom_call.1']
    #allocation8 [shape = 'u8[1085440]{0}', space=vmem, size = 0x109000, scoped, tag = 'input window, operand 1, single buffered']
    #allocation9 [shape = 's32[1]{0}', space=sflag, size = 0x4, scoped, tag = 'scoped memory for tpu_custom_call.1']
    #allocation10 [shape = 'u8[208896]{0}', space=vmem, size = 0x33000, scoped, tag = 'input window, operand 2, single buffered']
    #allocation11 [shape = 'u8[208896]{0}', space=vmem, size = 0x33000, scoped, tag = 'input window, operand 3, single buffered']
    #allocation12 [shape = 's32[1]{0}', space=sflag, size = 0x4, scoped, tag = 'scoped memory for tpu_custom_call.1']
    #allocation13 [shape = 'u8[512]{0}', space=smem, size = 0x200, scoped, tag = 'output window, operand 0, single buffered']
    %11 = vsyncpa [#allocation6], 0
    %12 = vsyncpa [#allocation9], 0
    %13 = vsyncpa [#allocation12], 0
    %14 = vsyncpa [#allocation7], 0
    // Predicated region
    $region2: #{tpu_custom_call.1} parent=1 // pred_check
      _
    $region3: #{tpu_custom_call.1} parent=1 // pred_check_branch
      %16 = sbr.rel (0) target = $region5
    $region4: #{tpu_custom_call.1} parent=1 // pred_region
      %s18 = ssub.s32 1152, 1152
      %19 = vsyncadd [#allocation6], %s18
      %s20 = sshll.u32 [#allocation5], 4
      %s21 = int_to_ptr.vmem [resolvable:$true] %s20
      %26 = dma.hbm_to_vmem [thread:$0]  %s0, 1152, %s21, [#allocation6], 128, 128, 8
    $region5: #{tpu_custom_call.1} parent=1 // pred_fallthru
      _
    // Predicated region
    $region6: #{tpu_custom_call.1} parent=1 // pred_check
      _
    $region7: #{tpu_custom_call.1} parent=1 // pred_check_branch
      %28 = sbr.rel (0) target = $region9
    $region8: #{tpu_custom_call.1} parent=1 // pred_region
      %s30 = ssub.s32 33920, 33920
      %31 = vsyncadd [#allocation9], %s30
      %s32 = sshll.u32 [#allocation8], 4
      %s33 = int_to_ptr.vmem [resolvable:$true] %s32
      %38 = dma.hbm_to_vmem [thread:$0]  %s1, 33920, %s33, [#allocation9], 128, 128, 8
    $region9: #{tpu_custom_call.1} parent=1 // pred_fallthru
      _
    // Predicated region
    $region10: #{tpu_custom_call.1} parent=1 // pred_check
      _
    $region11: #{tpu_custom_call.1} parent=1 // pred_check_branch
      %40 = sbr.rel (0) target = $region13
    $region12: #{tpu_custom_call.1} parent=1 // pred_region
      %s42 = ssub.s32 6528, 6528
      %43 = vsyncadd [#allocation9], %s42
      %s44 = sshll.u32 [#allocation10], 4
      %s45 = int_to_ptr.vmem [resolvable:$true] %s44
      %50 = dma.hbm_to_vmem [thread:$0]  %s2, 6528, %s45, [#allocation9], 384, 384, 24
    $region13: #{tpu_custom_call.1} parent=1 // pred_fallthru
      _
    // Predicated region
    $region14: #{tpu_custom_call.1} parent=1 // pred_check
      _
    $region15: #{tpu_custom_call.1} parent=1 // pred_check_branch
      %52 = sbr.rel (0) target = $region17
    $region16: #{tpu_custom_call.1} parent=1 // pred_region
      %s54 = ssub.s32 6528, 6528
      %55 = vsyncadd [#allocation12], %s54
      %s56 = sshll.u32 [#allocation11], 4
      %s57 = int_to_ptr.vmem [resolvable:$true] %s56
      %62 = dma.hbm_to_vmem [thread:$0]  %s3, 6528, %s57, [#allocation12], 384, 384, 24
    $region17: #{tpu_custom_call.1} parent=1 // pred_fallthru
      _
    // Predicated region
    $region18: #{tpu_custom_call.1} parent=1 // pred_check
      _
    $region19: #{tpu_custom_call.1} parent=1 // pred_check_branch
      %64 = sbr.rel (0) target = $region21
    $region20: #{tpu_custom_call.1} parent=1 // pred_region
      %65 = dma.done [#allocation6], 1152
    $region21: #{tpu_custom_call.1} parent=1 // pred_fallthru
      _
    // Predicated region
    $region22: #{tpu_custom_call.1} parent=1 // pred_check
      _
    $region23: #{tpu_custom_call.1} parent=1 // pred_check_branch
      %67 = sbr.rel (0) target = $region25
    $region24: #{tpu_custom_call.1} parent=1 // pred_region
      %68 = dma.done [#allocation9], 33920
    $region25: #{tpu_custom_call.1} parent=1 // pred_fallthru
      _
    // Predicated region
    $region26: #{tpu_custom_call.1} parent=1 // pred_check
      _
    $region27: #{tpu_custom_call.1} parent=1 // pred_check_branch
      %70 = sbr.rel (0) target = $region29
    $region28: #{tpu_custom_call.1} parent=1 // pred_region
      %71 = dma.done [#allocation9], 6528
    $region29: #{tpu_custom_call.1} parent=1 // pred_fallthru
      _
    // Predicated region
    $region30: #{tpu_custom_call.1} parent=1 // pred_check
      _
    $region31: #{tpu_custom_call.1} parent=1 // pred_check_branch
      %73 = sbr.rel (0) target = $region33
    $region32: #{tpu_custom_call.1} parent=1 // pred_region
      %74 = dma.done [#allocation12], 6528
    $region33: #{tpu_custom_call.1} parent=1 // pred_fallthru
      _
    %v75 = vld [vmem:[#allocation5] sm:$0xff]
    %v76 = vld [vmem:[#allocation5 + $0x8] sm:$0xff]
    %v77 = vld [vmem:[#allocation5 + $0x10] sm:$0xff]
    %v78 = vld [vmem:[#allocation5 + $0x18] sm:$0xff]
    %v79 = vld [vmem:[#allocation5 + $0x20] sm:$0xff]
    %v80 = vld [vmem:[#allocation5 + $0x28] sm:$0xff]
    %v81 = vld [vmem:[#allocation5 + $0x30] sm:$0xff]
    %v82 = vld [vmem:[#allocation5 + $0x38] sm:$0xff]
    %v83 = vld [vmem:[#allocation5 + $0x40] sm:$0xff]
    %v84 = vld [vmem:[#allocation8] sm:$0xff]
    %v85 = vld [vmem:[#allocation8 + $0x8] sm:$0xff]
    %v86 = vld [vmem:[#allocation8 + $0x10] sm:$0xff]
    %v87 = vld [vmem:[#allocation8 + $0x18] sm:$0xff]
    %v88 = vld [vmem:[#allocation8 + $0x20] sm:$0xff]
    %v89 = vld [vmem:[#allocation8 + $0x28] sm:$0xff]
    %v90 = vld [vmem:[#allocation8 + $0x30] sm:$0xff]
    %v91 = vld [vmem:[#allocation8 + $0x38] sm:$0xff]
    %v92 = vld [vmem:[#allocation8 + $0x40] sm:$0xff]
    %v93 = vld [vmem:[#allocation8 + $0x48] sm:$0xff]
    %v94 = vld [vmem:[#allocation8 + $0x50] sm:$0xff]
    %v95 = vld [vmem:[#allocation8 + $0x58] sm:$0xff]
    %v96 = vld [vmem:[#allocation8 + $0x60] sm:$0xff]
    %v97 = vld [vmem:[#allocation8 + $0x68] sm:$0xff]
    %v98 = vld [vmem:[#allocation8 + $0x70] sm:$0xff]
    %v99 = vld [vmem:[#allocation8 + $0x78] sm:$0xff]
    %100 = vmatprep.subr.mxu0 0.0
    %101 = vmatpush1.msra.mxu0 %v84
    %102 = vmatprep.subr.mxu0 0.0
    %103 = vmatpush1.msra.mxu0 %v85
    %104 = vmatprep.subr.mxu0 0.0
    %105 = vmatpush1.msra.mxu0 %v86
    %106 = vmatprep.subr.mxu0 0.0
    %107 = vmatpush1.msra.mxu0 %v87
    %108 = vmatprep.subr.mxu0 0.0
    %109 = vmatpush1.msra.mxu0 %v88
    %110 = vmatprep.subr.mxu0 0.0
    %111 = vmatpush1.msra.mxu0 %v89
    %112 = vmatprep.subr.mxu0 0.0
    %113 = vmatpush1.msra.mxu0 %v90
    %114 = vmatprep.subr.mxu0 0.0
    %115 = vmatpush1.msra.mxu0 %v91
    %116 = vmatprep.subr.mxu0 0.0
    %117 = vmatpush1.msra.mxu0 %v92
    %118 = vmatprep.subr.mxu0 0.0
    %119 = vmatpush1.msra.mxu0 %v93
    %120 = vmatprep.subr.mxu0 0.0
    %121 = vmatpush1.msra.mxu0 %v94
    %122 = vmatprep.subr.mxu0 0.0
    %123 = vmatpush1.msra.mxu0 %v95
    %124 = vmatprep.subr.mxu0 0.0
    %125 = vmatpush1.msra.mxu0 %v96
    %126 = vmatprep.subr.mxu0 0.0
    %127 = vmatpush1.msra.mxu0 %v97
    %128 = vmatprep.subr.mxu0 0.0
    %129 = vmatpush1.msra.mxu0 %v98
    %130 = vmatprep.subr.mxu0 0.0
    %131 = vmatpush1.msra.mxu0 %v99
    %132 = vmatprep.subr.mxu0 0.0
    %133 = vmatpush1.msra.mxu0 0.0
    %134 = vmatprep.subr.mxu0 0.0
    %135 = vmatpush1.msra.mxu0 0.0
    %136 = vmatprep.subr.mxu0 0.0
    %137 = vmatpush1.msra.mxu0 0.0
    %138 = vmatprep.subr.mxu0 0.0
    %139 = vmatpush1.msra.mxu0 0.0
    %140 = vmatprep.subr.mxu0 0.0
    %141 = vmatpush1.msra.mxu0 0.0
    %142 = vmatprep.subr.mxu0 0.0
    %143 = vmatpush1.msra.mxu0 0.0
    %144 = vmatprep.subr.mxu0 0.0
    %145 = vmatpush1.msra.mxu0 0.0
    %146 = vmatprep.subr.mxu0 0.0
    %147 = vmatpush1.msra.mxu0 0.0
    %148 = vmatprep.subr.mxu0 0.0
    %149 = vmatpush1.msra.mxu0 0.0
    %150 = vmatprep.subr.mxu0 0.0
    %151 = vmatpush1.msra.mxu0 0.0
    %152 = vmatprep.subr.mxu0 0.0
    %153 = vmatpush1.msra.mxu0 0.0
    %154 = vmatprep.subr.mxu0 0.0
    %155 = vmatpush1.msra.mxu0 0.0
    %156 = vmatprep.subr.mxu0 0.0
    %157 = vmatpush1.msra.mxu0 0.0
    %158 = vmatprep.subr.mxu0 0.0
    %159 = vmatpush1.msra.mxu0 0.0
    %160 = vmatprep.subr.mxu0 0.0
    %161 = vmatpush1.msra.mxu0 0.0
    %162 = vmatprep.subr.mxu0 0.0
    %163 = vmatpush1.msra.mxu0 0.0
    %164 = vmatprep.mubr.f32.mxu0 0.0
    %165 = vmatmul.mubr.f32.gmra.mrb[0].mxu0 %v75
    %v166 = vpop.f32.mrb[0].mxu0
    %v167 = vadd.f32 0.0, %v166
    %v168 = vpop.f32.mrb[0].mxu0
    %169 = vmatprep.mubr.f32.mxu0 0.0
    %170 = vmatmul.mubr.f32.gmra.mrb[0].mxu0 %v76
    %v171 = vpop.f32.mrb[0].mxu0
    %v172 = vadd.f32 0.0, %v171
    %v173 = vpop.f32.mrb[0].mxu0
    %174 = vmatprep.mubr.f32.mxu0 0.0
    %175 = vmatmul.mubr.f32.gmra.mrb[0].mxu0 %v77
    %v176 = vpop.f32.mrb[0].mxu0
    %v177 = vadd.f32 0.0, %v176
    %v178 = vpop.f32.mrb[0].mxu0
    %179 = vmatprep.mubr.f32.mxu0 0.0
    %180 = vmatmul.mubr.f32.gmra.mrb[0].mxu0 %v78
    %v181 = vpop.f32.mrb[0].mxu0
    %v182 = vadd.f32 0.0, %v181
    %v183 = vpop.f32.mrb[0].mxu0
    %184 = vmatprep.mubr.f32.mxu0 0.0
    %185 = vmatmul.mubr.f32.gmra.mrb[0].mxu0 %v79
    %v186 = vpop.f32.mrb[0].mxu0
    %v187 = vadd.f32 0.0, %v186
    %v188 = vpop.f32.mrb[0].mxu0
    %189 = vmatprep.mubr.f32.mxu0 0.0
    %190 = vmatmul.mubr.f32.gmra.mrb[0].mxu0 %v80
    %v191 = vpop.f32.mrb[0].mxu0
    %v192 = vadd.f32 0.0, %v191
    %v193 = vpop.f32.mrb[0].mxu0
    %194 = vmatprep.mubr.f32.mxu0 0.0
    %195 = vmatmul.mubr.f32.gmra.mrb[0].mxu0 %v81
    %v196 = vpop.f32.mrb[0].mxu0
    %v197 = vadd.f32 0.0, %v196
    %v198 = vpop.f32.mrb[0].mxu0
    %199 = vmatprep.mubr.f32.mxu0 0.0
    %200 = vmatmul.mubr.f32.gmra.mrb[0].mxu0 %v82
    %v201 = vpop.f32.mrb[0].mxu0
    %v202 = vadd.f32 0.0, %v201
    %v203 = vpop.f32.mrb[0].mxu0
    %204 = vmatprep.mubr.f32.mxu0 0.0
    %205 = vmatmul.mubr.f32.gmra.mrb[0].mxu0 %v83
    %v206 = vpop.f32.mrb[0].mxu0
    %v207 = vadd.f32 0.0, %v206
    %v208 = vpop.f32.mrb[0].mxu0
    %209 = vdwg.mxu0
    %v210 = vmax.f32 %v167, 0.0
    %v211 = vmax.f32 %v172, 0.0
    %v212 = vmax.f32 %v177, 0.0
    %v213 = vmax.f32 %v182, 0.0
    %v214 = vmax.f32 %v187, 0.0
    %v215 = vmax.f32 %v192, 0.0
    %v216 = vmax.f32 %v197, 0.0
    %v217 = vmax.f32 %v202, 0.0
    %v218 = vmax.f32 %v207, 0.0
    %v219 = vld [vmem:[#allocation10] sm:$0xff]
    %v220 = vld [vmem:[#allocation10 + $0x8] sm:$0xff]
    %v221 = vld [vmem:[#allocation10 + $0x10] sm:$0xff]
    %v222 = vld [vmem:[#allocation10 + $0x18] sm:$0xff]
    %v223 = vld [vmem:[#allocation10 + $0x20] sm:$0xff]
    %v224 = vld [vmem:[#allocation10 + $0x28] sm:$0xff]
    %v225 = vld [vmem:[#allocation10 + $0x30] sm:$0xff]
    %v226 = vld [vmem:[#allocation10 + $0x38] sm:$0xff]
    %v227 = vld [vmem:[#allocation10 + $0x40] sm:$0xff]
    %v228 = vld [vmem:[#allocation10 + $0x48] sm:$0xff]
    %v229 = vld [vmem:[#allocation10 + $0x50] sm:$0xff]
    %v230 = vld [vmem:[#allocation10 + $0x58] sm:$0xff]
    %v231 = vld [vmem:[#allocation10 + $0x60] sm:$0xff]
    %v232 = vld [vmem:[#allocation10 + $0x68] sm:$0xff]
    %v233 = vld [vmem:[#allocation10 + $0x70] sm:$0xff]
    %v234 = vld [vmem:[#allocation10 + $0x78] sm:$0xff]
    %v235 = vld [vmem:[#allocation10 + $0x80] sm:$0xff]
    %v236 = vld [vmem:[#allocation10 + $0x88] sm:$0xff]
    %v237 = vld [vmem:[#allocation10 + $0x90] sm:$0xff]
    %v238 = vld [vmem:[#allocation10 + $0x98] sm:$0xff]
    %v239 = vld [vmem:[#allocation10 + $0xa0] sm:$0xff]
    %v240 = vld [vmem:[#allocation10 + $0xa8] sm:$0xff]
    %v241 = vld [vmem:[#allocation10 + $0xb0] sm:$0xff]
    %v242 = vld [vmem:[#allocation10 + $0xb8] sm:$0xff]
    %v243 = vld [vmem:[#allocation10 + $0xc0] sm:$0xff]
    %v244 = vld [vmem:[#allocation10 + $0xc8] sm:$0xff]
    %v245 = vld [vmem:[#allocation10 + $0xd0] sm:$0xff]
    %v246 = vld [vmem:[#allocation10 + $0xd8] sm:$0xff]
    %v247 = vld [vmem:[#allocation10 + $0xe0] sm:$0xff]
    %v248 = vld [vmem:[#allocation10 + $0xe8] sm:$0xff]
    %v249 = vld [vmem:[#allocation10 + $0xf0] sm:$0xff]
    %v250 = vld [vmem:[#allocation10 + $0xf8] sm:$0xff]
    %v251 = vld [vmem:[#allocation10 + $0x100] sm:$0xff]
    %v252 = vld [vmem:[#allocation10 + $0x108] sm:$0xff]
    %v253 = vld [vmem:[#allocation10 + $0x110] sm:$0xff]
    %v254 = vld [vmem:[#allocation10 + $0x118] sm:$0xff]
    %v255 = vld [vmem:[#allocation10 + $0x120] sm:$0xff]
    %v256 = vld [vmem:[#allocation10 + $0x128] sm:$0xff]
    %v257 = vld [vmem:[#allocation10 + $0x130] sm:$0xff]
    %v258 = vld [vmem:[#allocation10 + $0x138] sm:$0xff]
    %v259 = vld [vmem:[#allocation10 + $0x140] sm:$0xff]
    %v260 = vld [vmem:[#allocation10 + $0x148] sm:$0xff]
    %v261 = vld [vmem:[#allocation10 + $0x150] sm:$0xff]
    %v262 = vld [vmem:[#allocation10 + $0x158] sm:$0xff]
    %v263 = vld [vmem:[#allocation10 + $0x160] sm:$0xff]
    %v264 = vld [vmem:[#allocation10 + $0x168] sm:$0xff]
    %v265 = vld [vmem:[#allocation10 + $0x170] sm:$0xff]
    %v266 = vld [vmem:[#allocation10 + $0x178] sm:$0xff]
    %s267 = scalar_lea.vmem [#allocation10], 384
    %v268 = vld [vmem:[%s267] ss:$8 sm:$0x7]
    %v270 = vlaneseq
    %v271 = vshrl.u32 %v270, 7
    %v272 = vsub.s32 0, %v271
    %v273 = vrot.slane %v268, %v272
    %v274 = vlaneseq
    %v275 = vshrl.u32 %v274, 7
    %v276 = vsub.s32 1, %v275
    %v277 = vrot.slane %v268, %v276
    %v278 = vlaneseq
    %v279 = vshrl.u32 %v278, 7
    %v280 = vsub.s32 2, %v279
    %v281 = vrot.slane %v268, %v280
    %285 = vmatprep.subr.mxu0 %v220
    %286 = vmatpush1.msra.mxu0 %v219
    %287 = vmatprep.subr.mxu0 %v223
    %288 = vmatpush1.msra.mxu0 %v222
    %289 = vmatprep.subr.mxu0 %v226
    %290 = vmatpush1.msra.mxu0 %v225
    %291 = vmatprep.subr.mxu0 %v229
    %292 = vmatpush1.msra.mxu0 %v228
    %293 = vmatprep.subr.mxu0 %v232
    %294 = vmatpush1.msra.mxu0 %v231
    %295 = vmatprep.subr.mxu0 %v235
    %296 = vmatpush1.msra.mxu0 %v234
    %297 = vmatprep.subr.mxu0 %v238
    %298 = vmatpush1.msra.mxu0 %v237
    %299 = vmatprep.subr.mxu0 %v241
    %300 = vmatpush1.msra.mxu0 %v240
    %301 = vmatprep.subr.mxu0 %v244
    %302 = vmatpush1.msra.mxu0 %v243
    %303 = vmatprep.subr.mxu0 %v247
    %304 = vmatpush1.msra.mxu0 %v246
    %305 = vmatprep.subr.mxu0 %v250
    %306 = vmatpush1.msra.mxu0 %v249
    %307 = vmatprep.subr.mxu0 %v253
    %308 = vmatpush1.msra.mxu0 %v252
    %309 = vmatprep.subr.mxu0 %v256
    %310 = vmatpush1.msra.mxu0 %v255
    %311 = vmatprep.subr.mxu0 %v259
    %312 = vmatpush1.msra.mxu0 %v258
    %313 = vmatprep.subr.mxu0 %v262
    %314 = vmatpush1.msra.mxu0 %v261
    %315 = vmatprep.subr.mxu0 %v265
    %316 = vmatpush1.msra.mxu0 %v264
    %317 = vmatprep.subr.mxu0 0.0
    %318 = vmatpush1.msra.mxu0 0.0
    %319 = vmatprep.subr.mxu0 0.0
    %320 = vmatpush1.msra.mxu0 0.0
    %321 = vmatprep.subr.mxu0 0.0
    %322 = vmatpush1.msra.mxu0 0.0
    %323 = vmatprep.subr.mxu0 0.0
    %324 = vmatpush1.msra.mxu0 0.0
    %325 = vmatprep.subr.mxu0 0.0
    %326 = vmatpush1.msra.mxu0 0.0
    %327 = vmatprep.subr.mxu0 0.0
    %328 = vmatpush1.msra.mxu0 0.0
    %329 = vmatprep.subr.mxu0 0.0
    %330 = vmatpush1.msra.mxu0 0.0
    %331 = vmatprep.subr.mxu0 0.0
    %332 = vmatpush1.msra.mxu0 0.0
    %333 = vmatprep.subr.mxu0 0.0
    %334 = vmatpush1.msra.mxu0 0.0
    %335 = vmatprep.subr.mxu0 0.0
    %336 = vmatpush1.msra.mxu0 0.0
    %337 = vmatprep.subr.mxu0 0.0
    %338 = vmatpush1.msra.mxu0 0.0
    %339 = vmatprep.subr.mxu0 0.0
    %340 = vmatpush1.msra.mxu0 0.0
    %341 = vmatprep.subr.mxu0 0.0
    %342 = vmatpush1.msra.mxu0 0.0
    %343 = vmatprep.subr.mxu0 0.0
    %344 = vmatpush1.msra.mxu0 0.0
    %345 = vmatprep.subr.mxu0 0.0
    %346 = vmatpush1.msra.mxu0 0.0
    %347 = vmatprep.subr.mxu0 0.0
    %348 = vmatpush1.msra.mxu0 0.0
    %349 = vmatprep.mubr.f32.mxu0 0.0
    %350 = vmatmul.mubr.f32.gmra.mrb[0].mxu0 %v210
    %v351 = vpop.f32.mrb[0].mxu0
    %v352 = vadd.f32 %v273, %v351
    %v353 = vpop.f32.mrb[0].mxu0
    %v354 = vadd.f32 %v277, %v353
    %355 = vmatprep.mubr.f32.mxu0 0.0
    %356 = vmatmul.mubr.f32.gmra.mrb[0].mxu0 %v211
    %v357 = vpop.f32.mrb[0].mxu0
    %v358 = vadd.f32 %v273, %v357
    %v359 = vpop.f32.mrb[0].mxu0
    %v360 = vadd.f32 %v277, %v359
    %361 = vmatprep.mubr.f32.mxu0 0.0
    %362 = vmatmul.mubr.f32.gmra.mrb[0].mxu0 %v212
    %v363 = vpop.f32.mrb[0].mxu0
    %v364 = vadd.f32 %v273, %v363
    %v365 = vpop.f32.mrb[0].mxu0
    %v366 = vadd.f32 %v277, %v365
    %367 = vmatprep.mubr.f32.mxu0 0.0
    %368 = vmatmul.mubr.f32.gmra.mrb[0].mxu0 %v213
    %v369 = vpop.f32.mrb[0].mxu0
    %v370 = vadd.f32 %v273, %v369
    %v371 = vpop.f32.mrb[0].mxu0
    %v372 = vadd.f32 %v277, %v371
    %373 = vmatprep.mubr.f32.mxu0 0.0
    %374 = vmatmul.mubr.f32.gmra.mrb[0].mxu0 %v214
    %v375 = vpop.f32.mrb[0].mxu0
    %v376 = vadd.f32 %v273, %v375
    %v377 = vpop.f32.mrb[0].mxu0
    %v378 = vadd.f32 %v277, %v377
    %379 = vmatprep.mubr.f32.mxu0 0.0
    %380 = vmatmul.mubr.f32.gmra.mrb[0].mxu0 %v215
    %v381 = vpop.f32.mrb[0].mxu0
    %v382 = vadd.f32 %v273, %v381
    %v383 = vpop.f32.mrb[0].mxu0
    %v384 = vadd.f32 %v277, %v383
    %385 = vmatprep.mubr.f32.mxu0 0.0
    %386 = vmatmul.mubr.f32.gmra.mrb[0].mxu0 %v216
    %v387 = vpop.f32.mrb[0].mxu0
    %v388 = vadd.f32 %v273, %v387
    %v389 = vpop.f32.mrb[0].mxu0
    %v390 = vadd.f32 %v277, %v389
    %391 = vmatprep.mubr.f32.mxu0 0.0
    %392 = vmatmul.mubr.f32.gmra.mrb[0].mxu0 %v217
    %v393 = vpop.f32.mrb[0].mxu0
    %v394 = vadd.f32 %v273, %v393
    %v395 = vpop.f32.mrb[0].mxu0
    %v396 = vadd.f32 %v277, %v395
    %397 = vmatprep.mubr.f32.mxu0 0.0
    %398 = vmatmul.mubr.f32.gmra.mrb[0].mxu0 %v218
    %v399 = vpop.f32.mrb[0].mxu0
    %v400 = vadd.f32 %v273, %v399
    %v401 = vpop.f32.mrb[0].mxu0
    %v402 = vadd.f32 %v277, %v401
    %403 = vdwg.mxu0
    %404 = vmatprep.subr.mxu0 0.0
    %405 = vmatpush1.msra.mxu0 %v221
    %406 = vmatprep.subr.mxu0 0.0
    %407 = vmatpush1.msra.mxu0 %v224
    %408 = vmatprep.subr.mxu0 0.0
    %409 = vmatpush1.msra.mxu0 %v227
    %410 = vmatprep.subr.mxu0 0.0
    %411 = vmatpush1.msra.mxu0 %v230
    %412 = vmatprep.subr.mxu0 0.0
    %413 = vmatpush1.msra.mxu0 %v233
    %414 = vmatprep.subr.mxu0 0.0
    %415 = vmatpush1.msra.mxu0 %v236
    %416 = vmatprep.subr.mxu0 0.0
    %417 = vmatpush1.msra.mxu0 %v239
    %418 = vmatprep.subr.mxu0 0.0
    %419 = vmatpush1.msra.mxu0 %v242
    %420 = vmatprep.subr.mxu0 0.0
    %421 = vmatpush1.msra.mxu0 %v245
    %422 = vmatprep.subr.mxu0 0.0
    %423 = vmatpush1.msra.mxu0 %v248
    %424 = vmatprep.subr.mxu0 0.0
    %425 = vmatpush1.msra.mxu0 %v251
    %426 = vmatprep.subr.mxu0 0.0
    %427 = vmatpush1.msra.mxu0 %v254
    %428 = vmatprep.subr.mxu0 0.0
    %429 = vmatpush1.msra.mxu0 %v257
    %430 = vmatprep.subr.mxu0 0.0
    %431 = vmatpush1.msra.mxu0 %v260
    %432 = vmatprep.subr.mxu0 0.0
    %433 = vmatpush1.msra.mxu0 %v263
    %434 = vmatprep.subr.mxu0 0.0
    %435 = vmatpush1.msra.mxu0 %v266
    %436 = vmatprep.subr.mxu0 0.0
    %437 = vmatpush1.msra.mxu0 0.0
    %438 = vmatprep.subr.mxu0 0.0
    %439 = vmatpush1.msra.mxu0 0.0
    %440 = vmatprep.subr.mxu0 0.0
    %441 = vmatpush1.msra.mxu0 0.0
    %442 = vmatprep.subr.mxu0 0.0
    %443 = vmatpush1.msra.mxu0 0.0
    %444 = vmatprep.subr.mxu0 0.0
    %445 = vmatpush1.msra.mxu0 0.0
    %446 = vmatprep.subr.mxu0 0.0
    %447 = vmatpush1.msra.mxu0 0.0
    %448 = vmatprep.subr.mxu0 0.0
    %449 = vmatpush1.msra.mxu0 0.0
    %450 = vmatprep.subr.mxu0 0.0
    %451 = vmatpush1.msra.mxu0 0.0
    %452 = vmatprep.subr.mxu0 0.0
    %453 = vmatpush1.msra.mxu0 0.0
    %454 = vmatprep.subr.mxu0 0.0
    %455 = vmatpush1.msra.mxu0 0.0
    %456 = vmatprep.subr.mxu0 0.0
    %457 = vmatpush1.msra.mxu0 0.0
    %458 = vmatprep.subr.mxu0 0.0
    %459 = vmatpush1.msra.mxu0 0.0
    %460 = vmatprep.subr.mxu0 0.0
    %461 = vmatpush1.msra.mxu0 0.0
    %462 = vmatprep.subr.mxu0 0.0
    %463 = vmatpush1.msra.mxu0 0.0
    %464 = vmatprep.subr.mxu0 0.0
    %465 = vmatpush1.msra.mxu0 0.0
    %466 = vmatprep.subr.mxu0 0.0
    %467 = vmatpush1.msra.mxu0 0.0
    %468 = vmatprep.mubr.f32.mxu0 0.0
    %469 = vmatmul.mubr.f32.gmra.mrb[0].mxu0 %v210
    %v470 = vpop.f32.mrb[0].mxu0
    %v471 = vadd.f32 %v281, %v470
    %v472 = vpop.f32.mrb[0].mxu0
    %473 = vmatprep.mubr.f32.mxu0 0.0
    %474 = vmatmul.mubr.f32.gmra.mrb[0].mxu0 %v211
    %v475 = vpop.f32.mrb[0].mxu0
    %v476 = vadd.f32 %v281, %v475
    %v477 = vpop.f32.mrb[0].mxu0
    %478 = vmatprep.mubr.f32.mxu0 0.0
    %479 = vmatmul.mubr.f32.gmra.mrb[0].mxu0 %v212
    %v480 = vpop.f32.mrb[0].mxu0
    %v481 = vadd.f32 %v281, %v480
    %v482 = vpop.f32.mrb[0].mxu0
    %483 = vmatprep.mubr.f32.mxu0 0.0
    %484 = vmatmul.mubr.f32.gmra.mrb[0].mxu0 %v213
    %v485 = vpop.f32.mrb[0].mxu0
    %v486 = vadd.f32 %v281, %v485
    %v487 = vpop.f32.mrb[0].mxu0
    %488 = vmatprep.mubr.f32.mxu0 0.0
    %489 = vmatmul.mubr.f32.gmra.mrb[0].mxu0 %v214
    %v490 = vpop.f32.mrb[0].mxu0
    %v491 = vadd.f32 %v281, %v490
    %v492 = vpop.f32.mrb[0].mxu0
    %493 = vmatprep.mubr.f32.mxu0 0.0
    %494 = vmatmul.mubr.f32.gmra.mrb[0].mxu0 %v215
    %v495 = vpop.f32.mrb[0].mxu0
    %v496 = vadd.f32 %v281, %v495
    %v497 = vpop.f32.mrb[0].mxu0
    %498 = vmatprep.mubr.f32.mxu0 0.0
    %499 = vmatmul.mubr.f32.gmra.mrb[0].mxu0 %v216
    %v500 = vpop.f32.mrb[0].mxu0
    %v501 = vadd.f32 %v281, %v500
    %v502 = vpop.f32.mrb[0].mxu0
    %503 = vmatprep.mubr.f32.mxu0 0.0
    %504 = vmatmul.mubr.f32.gmra.mrb[0].mxu0 %v217
    %v505 = vpop.f32.mrb[0].mxu0
    %v506 = vadd.f32 %v281, %v505
    %v507 = vpop.f32.mrb[0].mxu0
    %508 = vmatprep.mubr.f32.mxu0 0.0
    %509 = vmatmul.mubr.f32.gmra.mrb[0].mxu0 %v218
    %v510 = vpop.f32.mrb[0].mxu0
    %v511 = vadd.f32 %v281, %v510
    %v512 = vpop.f32.mrb[0].mxu0
    %513 = vdwg.mxu0
    %514 = vst [vmem:[#allocation2] sm:$0xff] %v352
    %515 = vst [vmem:[#allocation2 + $0x8] sm:$0xff] %v354
    %516 = vst [vmem:[#allocation2 + $0x10] sm:$0xff] %v471
    %517 = vst [vmem:[#allocation2 + $0x18] sm:$0xff] %v358
    %518 = vst [vmem:[#allocation2 + $0x20] sm:$0xff] %v360
    %519 = vst [vmem:[#allocation2 + $0x28] sm:$0xff] %v476
    %520 = vst [vmem:[#allocation2 + $0x30] sm:$0xff] %v364
    %521 = vst [vmem:[#allocation2 + $0x38] sm:$0xff] %v366
    %522 = vst [vmem:[#allocation2 + $0x40] sm:$0xff] %v481
    %523 = vst [vmem:[#allocation2 + $0x48] sm:$0xff] %v370
    %524 = vst [vmem:[#allocation2 + $0x50] sm:$0xff] %v372
    %525 = vst [vmem:[#allocation2 + $0x58] sm:$0xff] %v486
    %526 = vst [vmem:[#allocation2 + $0x60] sm:$0xff] %v376
    %527 = vst [vmem:[#allocation2 + $0x68] sm:$0xff] %v378
    %528 = vst [vmem:[#allocation2 + $0x70] sm:$0xff] %v491
    %529 = vst [vmem:[#allocation2 + $0x78] sm:$0xff] %v382
    %530 = vst [vmem:[#allocation2 + $0x80] sm:$0xff] %v384
    %531 = vst [vmem:[#allocation2 + $0x88] sm:$0xff] %v496
    %532 = vst [vmem:[#allocation2 + $0x90] sm:$0xff] %v388
    %533 = vst [vmem:[#allocation2 + $0x98] sm:$0xff] %v390
    %534 = vst [vmem:[#allocation2 + $0xa0] sm:$0xff] %v501
    %535 = vst [vmem:[#allocation2 + $0xa8] sm:$0xff] %v394
    %536 = vst [vmem:[#allocation2 + $0xb0] sm:$0xff] %v396
    %537 = vst [vmem:[#allocation2 + $0xb8] sm:$0xff] %v506
    %538 = vst [vmem:[#allocation2 + $0xc0] sm:$0xff] %v400
    %539 = vst [vmem:[#allocation2 + $0xc8] sm:$0xff] %v402
    %540 = vst [vmem:[#allocation2 + $0xd0] sm:$0xff] %v511
    %v541 = vld [vmem:[#allocation11] sm:$0xff]
    %v542 = vld [vmem:[#allocation11 + $0x8] sm:$0xff]
    %v543 = vld [vmem:[#allocation11 + $0x10] sm:$0xff]
    %v544 = vld [vmem:[#allocation11 + $0x18] sm:$0xff]
    %v545 = vld [vmem:[#allocation11 + $0x20] sm:$0xff]
    %v546 = vld [vmem:[#allocation11 + $0x28] sm:$0xff]
    %v547 = vld [vmem:[#allocation11 + $0x30] sm:$0xff]
    %v548 = vld [vmem:[#allocation11 + $0x38] sm:$0xff]
    %v549 = vld [vmem:[#allocation11 + $0x40] sm:$0xff]
    %v550 = vld [vmem:[#allocation11 + $0x48] sm:$0xff]
    %v551 = vld [vmem:[#allocation11 + $0x50] sm:$0xff]
    %v552 = vld [vmem:[#allocation11 + $0x58] sm:$0xff]
    %v553 = vld [vmem:[#allocation11 + $0x60] sm:$0xff]
    %v554 = vld [vmem:[#allocation11 + $0x68] sm:$0xff]
    %v555 = vld [vmem:[#allocation11 + $0x70] sm:$0xff]
    %v556 = vld [vmem:[#allocation11 + $0x78] sm:$0xff]
    %v557 = vld [vmem:[#allocation11 + $0x80] sm:$0xff]
    %v558 = vld [vmem:[#allocation11 + $0x88] sm:$0xff]
    %v559 = vld [vmem:[#allocation11 + $0x90] sm:$0xff]
    %v560 = vld [vmem:[#allocation11 + $0x98] sm:$0xff]
    %v561 = vld [vmem:[#allocation11 + $0xa0] sm:$0xff]
    %v562 = vld [vmem:[#allocation11 + $0xa8] sm:$0xff]
    %v563 = vld [vmem:[#allocation11 + $0xb0] sm:$0xff]
    %v564 = vld [vmem:[#allocation11 + $0xb8] sm:$0xff]
    %v565 = vld [vmem:[#allocation11 + $0xc0] sm:$0xff]
    %v566 = vld [vmem:[#allocation11 + $0xc8] sm:$0xff]
    %v567 = vld [vmem:[#allocation11 + $0xd0] sm:$0xff]
    %v568 = vld [vmem:[#allocation11 + $0xd8] sm:$0xff]
    %v569 = vld [vmem:[#allocation11 + $0xe0] sm:$0xff]
    %v570 = vld [vmem:[#allocation11 + $0xe8] sm:$0xff]
    %v571 = vld [vmem:[#allocation11 + $0xf0] sm:$0xff]
    %v572 = vld [vmem:[#allocation11 + $0xf8] sm:$0xff]
    %v573 = vld [vmem:[#allocation11 + $0x100] sm:$0xff]
    %v574 = vld [vmem:[#allocation11 + $0x108] sm:$0xff]
    %v575 = vld [vmem:[#allocation11 + $0x110] sm:$0xff]
    %v576 = vld [vmem:[#allocation11 + $0x118] sm:$0xff]
    %v577 = vld [vmem:[#allocation11 + $0x120] sm:$0xff]
    %v578 = vld [vmem:[#allocation11 + $0x128] sm:$0xff]
    %v579 = vld [vmem:[#allocation11 + $0x130] sm:$0xff]
    %v580 = vld [vmem:[#allocation11 + $0x138] sm:$0xff]
    %v581 = vld [vmem:[#allocation11 + $0x140] sm:$0xff]
    %v582 = vld [vmem:[#allocation11 + $0x148] sm:$0xff]
    %v583 = vld [vmem:[#allocation11 + $0x150] sm:$0xff]
    %v584 = vld [vmem:[#allocation11 + $0x158] sm:$0xff]
    %v585 = vld [vmem:[#allocation11 + $0x160] sm:$0xff]
    %v586 = vld [vmem:[#allocation11 + $0x168] sm:$0xff]
    %v587 = vld [vmem:[#allocation11 + $0x170] sm:$0xff]
    %v588 = vld [vmem:[#allocation11 + $0x178] sm:$0xff]
    %s589 = scalar_lea.vmem [#allocation11], 384
    %v590 = vld [vmem:[%s589] ss:$8 sm:$0x7]
    %v591 = vld [vmem:[#allocation2] sm:$0xff]
    %v592 = vld [vmem:[#allocation2 + $0x8] sm:$0xff]
    %v593 = vld [vmem:[#allocation2 + $0x10] sm:$0xff]
    %v595 = vlaneseq
    %v596 = vshrl.u32 %v595, 7
    %v597 = vsub.s32 0, %v596
    %v598 = vrot.slane %v590, %v597
    %v599 = vlaneseq
    %v600 = vshrl.u32 %v599, 7
    %v601 = vsub.s32 1, %v600
    %v602 = vrot.slane %v590, %v601
    %v603 = vlaneseq
    %v604 = vshrl.u32 %v603, 7
    %v605 = vsub.s32 2, %v604
    %v606 = vrot.slane %v590, %v605
    %610 = vmatprep.subr.mxu0 %v542
    %611 = vmatpush1.msra.mxu0 %v541
    %612 = vmatprep.subr.mxu0 %v545
    %613 = vmatpush1.msra.mxu0 %v544
    %614 = vmatprep.subr.mxu0 %v548
    %615 = vmatpush1.msra.mxu0 %v547
    %616 = vmatprep.subr.mxu0 %v551
    %617 = vmatpush1.msra.mxu0 %v550
    %618 = vmatprep.subr.mxu0 %v554
    %619 = vmatpush1.msra.mxu0 %v553
    %620 = vmatprep.subr.mxu0 %v557
    %621 = vmatpush1.msra.mxu0 %v556
    %622 = vmatprep.subr.mxu0 %v560
    %623 = vmatpush1.msra.mxu0 %v559
    %624 = vmatprep.subr.mxu0 %v563
    %625 = vmatpush1.msra.mxu0 %v562
    %626 = vmatprep.subr.mxu0 %v566
    %627 = vmatpush1.msra.mxu0 %v565
    %628 = vmatprep.subr.mxu0 %v569
    %629 = vmatpush1.msra.mxu0 %v568
    %630 = vmatprep.subr.mxu0 %v572
    %631 = vmatpush1.msra.mxu0 %v571
    %632 = vmatprep.subr.mxu0 %v575
    %633 = vmatpush1.msra.mxu0 %v574
    %634 = vmatprep.subr.mxu0 %v578
    %635 = vmatpush1.msra.mxu0 %v577
    %636 = vmatprep.subr.mxu0 %v581
    %637 = vmatpush1.msra.mxu0 %v580
    %638 = vmatprep.subr.mxu0 %v584
    %639 = vmatpush1.msra.mxu0 %v583
    %640 = vmatprep.subr.mxu0 %v587
    %641 = vmatpush1.msra.mxu0 %v586
    %642 = vmatprep.subr.mxu0 0.0
    %643 = vmatpush1.msra.mxu0 0.0
    %644 = vmatprep.subr.mxu0 0.0
    %645 = vmatpush1.msra.mxu0 0.0
    %646 = vmatprep.subr.mxu0 0.0
    %647 = vmatpush1.msra.mxu0 0.0
    %648 = vmatprep.subr.mxu0 0.0
    %649 = vmatpush1.msra.mxu0 0.0
    %650 = vmatprep.subr.mxu0 0.0
    %651 = vmatpush1.msra.mxu0 0.0
    %652 = vmatprep.subr.mxu0 0.0
    %653 = vmatpush1.msra.mxu0 0.0
    %654 = vmatprep.subr.mxu0 0.0
    %655 = vmatpush1.msra.mxu0 0.0
    %656 = vmatprep.subr.mxu0 0.0
    %657 = vmatpush1.msra.mxu0 0.0
    %658 = vmatprep.subr.mxu0 0.0
    %659 = vmatpush1.msra.mxu0 0.0
    %660 = vmatprep.subr.mxu0 0.0
    %661 = vmatpush1.msra.mxu0 0.0
    %662 = vmatprep.subr.mxu0 0.0
    %663 = vmatpush1.msra.mxu0 0.0
    %664 = vmatprep.subr.mxu0 0.0
    %665 = vmatpush1.msra.mxu0 0.0
    %666 = vmatprep.subr.mxu0 0.0
    %667 = vmatpush1.msra.mxu0 0.0
    %668 = vmatprep.subr.mxu0 0.0
    %669 = vmatpush1.msra.mxu0 0.0
    %670 = vmatprep.subr.mxu0 0.0
    %671 = vmatpush1.msra.mxu0 0.0
    %672 = vmatprep.subr.mxu0 0.0
    %673 = vmatpush1.msra.mxu0 0.0
    %674 = vmatprep.mubr.f32.mxu0 0.0
    %675 = vmatmul.mubr.f32.gmra.mrb[0].mxu0 0.0
    %v676 = vpop.f32.mrb[0].mxu0
    %v677 = vadd.f32 %v598, %v676
    %v678 = vpop.f32.mrb[0].mxu0
    %v679 = vadd.f32 %v602, %v678
    %680 = vdwg.mxu0
    %681 = vmatprep.subr.mxu0 0.0
    %682 = vmatpush1.msra.mxu0 %v543
    %683 = vmatprep.subr.mxu0 0.0
    %684 = vmatpush1.msra.mxu0 %v546
    %685 = vmatprep.subr.mxu0 0.0
    %686 = vmatpush1.msra.mxu0 %v549
    %687 = vmatprep.subr.mxu0 0.0
    %688 = vmatpush1.msra.mxu0 %v552
    %689 = vmatprep.subr.mxu0 0.0
    %690 = vmatpush1.msra.mxu0 %v555
    %691 = vmatprep.subr.mxu0 0.0
    %692 = vmatpush1.msra.mxu0 %v558
    %693 = vmatprep.subr.mxu0 0.0
    %694 = vmatpush1.msra.mxu0 %v561
    %695 = vmatprep.subr.mxu0 0.0
    %696 = vmatpush1.msra.mxu0 %v564
    %697 = vmatprep.subr.mxu0 0.0
    %698 = vmatpush1.msra.mxu0 %v567
    %699 = vmatprep.subr.mxu0 0.0
    %700 = vmatpush1.msra.mxu0 %v570
    %701 = vmatprep.subr.mxu0 0.0
    %702 = vmatpush1.msra.mxu0 %v573
    %703 = vmatprep.subr.mxu0 0.0
    %704 = vmatpush1.msra.mxu0 %v576
    %705 = vmatprep.subr.mxu0 0.0
    %706 = vmatpush1.msra.mxu0 %v579
    %707 = vmatprep.subr.mxu0 0.0
    %708 = vmatpush1.msra.mxu0 %v582
    %709 = vmatprep.subr.mxu0 0.0
    %710 = vmatpush1.msra.mxu0 %v585
    %711 = vmatprep.subr.mxu0 0.0
    %712 = vmatpush1.msra.mxu0 %v588
    %713 = vmatprep.subr.mxu0 0.0
    %714 = vmatpush1.msra.mxu0 0.0
    %715 = vmatprep.subr.mxu0 0.0
    %716 = vmatpush1.msra.mxu0 0.0
    %717 = vmatprep.subr.mxu0 0.0
    %718 = vmatpush1.msra.mxu0 0.0
    %719 = vmatprep.subr.mxu0 0.0
    %720 = vmatpush1.msra.mxu0 0.0
    %721 = vmatprep.subr.mxu0 0.0
    %722 = vmatpush1.msra.mxu0 0.0
    %723 = vmatprep.subr.mxu0 0.0
    %724 = vmatpush1.msra.mxu0 0.0
    %725 = vmatprep.subr.mxu0 0.0
    %726 = vmatpush1.msra.mxu0 0.0
    %727 = vmatprep.subr.mxu0 0.0
    %728 = vmatpush1.msra.mxu0 0.0
    %729 = vmatprep.subr.mxu0 0.0
    %730 = vmatpush1.msra.mxu0 0.0
    %731 = vmatprep.subr.mxu0 0.0
    %732 = vmatpush1.msra.mxu0 0.0
    %733 = vmatprep.subr.mxu0 0.0
    %734 = vmatpush1.msra.mxu0 0.0
    %735 = vmatprep.subr.mxu0 0.0
    %736 = vmatpush1.msra.mxu0 0.0
    %737 = vmatprep.subr.mxu0 0.0
    %738 = vmatpush1.msra.mxu0 0.0
    %739 = vmatprep.subr.mxu0 0.0
    %740 = vmatpush1.msra.mxu0 0.0
    %741 = vmatprep.subr.mxu0 0.0
    %742 = vmatpush1.msra.mxu0 0.0
    %743 = vmatprep.subr.mxu0 0.0
    %744 = vmatpush1.msra.mxu0 0.0
    %745 = vmatprep.mubr.f32.mxu0 0.0
    %746 = vmatmul.mubr.f32.gmra.mrb[0].mxu0 0.0
    %v747 = vpop.f32.mrb[0].mxu0
    %v748 = vadd.f32 %v606, %v747
    %v749 = vpop.f32.mrb[0].mxu0
    %750 = vdwg.mxu0
    %v751 = vadd.f32 %v591, %v677
    %v752 = vadd.f32 %v592, %v679
    %v753 = vxor.u32 %v751, 2147483648
    %v754 = vxor.u32 %v752, 2147483648
    %v755 = vmul.f32 %v753, 1.442695
    %v756 = vpow.pop %v755
    %v757 = vmul.f32 %v754, 1.442695
    %v758 = vpow.pop %v757
    %v759 = vadd.f32 %v756, 1.0
    %v760 = vadd.f32 %v758, 1.0
    %v761 = vrcp.pop %v759
    %v762 = vmul.f32 1.0, %v761
    %v763 = vrcp.pop %v760
    %v764 = vmul.f32 1.0, %v763
    %v765 = vmul.f32 %v762, %v748
    %v766 = vadd.f32 %v593, %v765
    %v767 = vtanh.pop %v766
    %v768 = vsub.f32 1.0, %v764
    %v769 = vmul.f32 %v768, %v767
    %v770 = vmul.f32 %v764, 0.0
    %v771 = vadd.f32 %v769, %v770
    %772 = vst [vmem:[#allocation3] sm:$0xff] %v771
    %v773 = vld [vmem:[#allocation2 + $0x18] sm:$0xff]
    %v774 = vld [vmem:[#allocation2 + $0x20] sm:$0xff]
    %v775 = vld [vmem:[#allocation2 + $0x28] sm:$0xff]
    %776 = vmatprep.subr.mxu0 %v542
    %777 = vmatpush1.msra.mxu0 %v541
    %778 = vmatprep.subr.mxu0 %v545
    %779 = vmatpush1.msra.mxu0 %v544
    %780 = vmatprep.subr.mxu0 %v548
    %781 = vmatpush1.msra.mxu0 %v547
    %782 = vmatprep.subr.mxu0 %v551
    %783 = vmatpush1.msra.mxu0 %v550
    %784 = vmatprep.subr.mxu0 %v554
    %785 = vmatpush1.msra.mxu0 %v553
    %786 = vmatprep.subr.mxu0 %v557
    %787 = vmatpush1.msra.mxu0 %v556
    %788 = vmatprep.subr.mxu0 %v560
    %789 = vmatpush1.msra.mxu0 %v559
    %790 = vmatprep.subr.mxu0 %v563
    %791 = vmatpush1.msra.mxu0 %v562
    %792 = vmatprep.subr.mxu0 %v566
    %793 = vmatpush1.msra.mxu0 %v565
    %794 = vmatprep.subr.mxu0 %v569
    %795 = vmatpush1.msra.mxu0 %v568
    %796 = vmatprep.subr.mxu0 %v572
    %797 = vmatpush1.msra.mxu0 %v571
    %798 = vmatprep.subr.mxu0 %v575
    %799 = vmatpush1.msra.mxu0 %v574
    %800 = vmatprep.subr.mxu0 %v578
    %801 = vmatpush1.msra.mxu0 %v577
    %802 = vmatprep.subr.mxu0 %v581
    %803 = vmatpush1.msra.mxu0 %v580
    %804 = vmatprep.subr.mxu0 %v584
    %805 = vmatpush1.msra.mxu0 %v583
    %806 = vmatprep.subr.mxu0 %v587
    %807 = vmatpush1.msra.mxu0 %v586
    %808 = vmatprep.subr.mxu0 0.0
    %809 = vmatpush1.msra.mxu0 0.0
    %810 = vmatprep.subr.mxu0 0.0
    %811 = vmatpush1.msra.mxu0 0.0
    %812 = vmatprep.subr.mxu0 0.0
    %813 = vmatpush1.msra.mxu0 0.0
    %814 = vmatprep.subr.mxu0 0.0
    %815 = vmatpush1.msra.mxu0 0.0
    %816 = vmatprep.subr.mxu0 0.0
    %817 = vmatpush1.msra.mxu0 0.0
    %818 = vmatprep.subr.mxu0 0.0
    %819 = vmatpush1.msra.mxu0 0.0
    %820 = vmatprep.subr.mxu0 0.0
    %821 = vmatpush1.msra.mxu0 0.0
    %822 = vmatprep.subr.mxu0 0.0
    %823 = vmatpush1.msra.mxu0 0.0
    %824 = vmatprep.subr.mxu0 0.0
    %825 = vmatpush1.msra.mxu0 0.0
    %826 = vmatprep.subr.mxu0 0.0
    %827 = vmatpush1.msra.mxu0 0.0
    %828 = vmatprep.subr.mxu0 0.0
    %829 = vmatpush1.msra.mxu0 0.0
    %830 = vmatprep.subr.mxu0 0.0
    %831 = vmatpush1.msra.mxu0 0.0
    %832 = vmatprep.subr.mxu0 0.0
    %833 = vmatpush1.msra.mxu0 0.0
    %834 = vmatprep.subr.mxu0 0.0
    %835 = vmatpush1.msra.mxu0 0.0
    %836 = vmatprep.subr.mxu0 0.0
    %837 = vmatpush1.msra.mxu0 0.0
    %838 = vmatprep.subr.mxu0 0.0
    %839 = vmatpush1.msra.mxu0 0.0
    %840 = vmatprep.mubr.f32.mxu0 0.0
    %841 = vmatmul.mubr.f32.gmra.mrb[0].mxu0 %v771
    %v842 = vpop.f32.mrb[0].mxu0
    %v843 = vadd.f32 %v598, %v842
    %v844 = vpop.f32.mrb[0].mxu0
    %v845 = vadd.f32 %v602, %v844
    %846 = vdwg.mxu0
    %847 = vmatprep.subr.mxu0 0.0
    %848 = vmatpush1.msra.mxu0 %v543
    %849 = vmatprep.subr.mxu0 0.0
    %850 = vmatpush1.msra.mxu0 %v546
    %851 = vmatprep.subr.mxu0 0.0
    %852 = vmatpush1.msra.mxu0 %v549
    %853 = vmatprep.subr.mxu0 0.0
    %854 = vmatpush1.msra.mxu0 %v552
    %855 = vmatprep.subr.mxu0 0.0
    %856 = vmatpush1.msra.mxu0 %v555
    %857 = vmatprep.subr.mxu0 0.0
    %858 = vmatpush1.msra.mxu0 %v558
    %859 = vmatprep.subr.mxu0 0.0
    %860 = vmatpush1.msra.mxu0 %v561
    %861 = vmatprep.subr.mxu0 0.0
    %862 = vmatpush1.msra.mxu0 %v564
    %863 = vmatprep.subr.mxu0 0.0
    %864 = vmatpush1.msra.mxu0 %v567
    %865 = vmatprep.subr.mxu0 0.0
    %866 = vmatpush1.msra.mxu0 %v570
    %867 = vmatprep.subr.mxu0 0.0
    %868 = vmatpush1.msra.mxu0 %v573
    %869 = vmatprep.subr.mxu0 0.0
    %870 = vmatpush1.msra.mxu0 %v576
    %871 = vmatprep.subr.mxu0 0.0
    %872 = vmatpush1.msra.mxu0 %v579
    %873 = vmatprep.subr.mxu0 0.0
    %874 = vmatpush1.msra.mxu0 %v582
    %875 = vmatprep.subr.mxu0 0.0
    %876 = vmatpush1.msra.mxu0 %v585
    %877 = vmatprep.subr.mxu0 0.0
    %878 = vmatpush1.msra.mxu0 %v588
    %879 = vmatprep.subr.mxu0 0.0
    %880 = vmatpush1.msra.mxu0 0.0
    %881 = vmatprep.subr.mxu0 0.0
    %882 = vmatpush1.msra.mxu0 0.0
    %883 = vmatprep.subr.mxu0 0.0
    %884 = vmatpush1.msra.mxu0 0.0
    %885 = vmatprep.subr.mxu0 0.0
    %886 = vmatpush1.msra.mxu0 0.0
    %887 = vmatprep.subr.mxu0 0.0
    %888 = vmatpush1.msra.mxu0 0.0
    %889 = vmatprep.subr.mxu0 0.0
    %890 = vmatpush1.msra.mxu0 0.0
    %891 = vmatprep.subr.mxu0 0.0
    %892 = vmatpush1.msra.mxu0 0.0
    %893 = vmatprep.subr.mxu0 0.0
    %894 = vmatpush1.msra.mxu0 0.0
    %895 = vmatprep.subr.mxu0 0.0
    %896 = vmatpush1.msra.mxu0 0.0
    %897 = vmatprep.subr.mxu0 0.0
    %898 = vmatpush1.msra.mxu0 0.0
    %899 = vmatprep.subr.mxu0 0.0
    %900 = vmatpush1.msra.mxu0 0.0
    %901 = vmatprep.subr.mxu0 0.0
    %902 = vmatpush1.msra.mxu0 0.0
    %903 = vmatprep.subr.mxu0 0.0
    %904 = vmatpush1.msra.mxu0 0.0
    %905 = vmatprep.subr.mxu0 0.0
    %906 = vmatpush1.msra.mxu0 0.0
    %907 = vmatprep.subr.mxu0 0.0
    %908 = vmatpush1.msra.mxu0 0.0
    %909 = vmatprep.subr.mxu0 0.0
    %910 = vmatpush1.msra.mxu0 0.0
    %911 = vmatprep.mubr.f32.mxu0 0.0
    %912 = vmatmul.mubr.f32.gmra.mrb[0].mxu0 %v771
    %v913 = vpop.f32.mrb[0].mxu0
    %v914 = vadd.f32 %v606, %v913
    %v915 = vpop.f32.mrb[0].mxu0
    %916 = vdwg.mxu0
    %v917 = vadd.f32 %v773, %v843
    %v918 = vadd.f32 %v774, %v845
    %v919 = vxor.u32 %v917, 2147483648
    %v920 = vxor.u32 %v918, 2147483648
    %v921 = vmul.f32 %v919, 1.442695
    %v922 = vpow.pop %v921
    %v923 = vmul.f32 %v920, 1.442695
    %v924 = vpow.pop %v923
    %v925 = vadd.f32 %v922, 1.0
    %v926 = vadd.f32 %v924, 1.0
    %v927 = vrcp.pop %v925
    %v928 = vmul.f32 1.0, %v927
    %v929 = vrcp.pop %v926
    %v930 = vmul.f32 1.0, %v929
    %v931 = vmul.f32 %v928, %v914
    %v932 = vadd.f32 %v775, %v931
    %v933 = vtanh.pop %v932
    %v934 = vsub.f32 1.0, %v930
    %v935 = vmul.f32 %v934, %v933
    %v936 = vmul.f32 %v930, %v771
    %v937 = vadd.f32 %v935, %v936
    %938 = vst [vmem:[#allocation3 + $0x8] sm:$0xff] %v937
    %v939 = vld [vmem:[#allocation2 + $0x30] sm:$0xff]
    %v940 = vld [vmem:[#allocation2 + $0x38] sm:$0xff]
    %v941 = vld [vmem:[#allocation2 + $0x40] sm:$0xff]
    %942 = vmatprep.subr.mxu0 %v542
    %943 = vmatpush1.msra.mxu0 %v541
    %944 = vmatprep.subr.mxu0 %v545
    %945 = vmatpush1.msra.mxu0 %v544
    %946 = vmatprep.subr.mxu0 %v548
    %947 = vmatpush1.msra.mxu0 %v547
    %948 = vmatprep.subr.mxu0 %v551
    %949 = vmatpush1.msra.mxu0 %v550
    %950 = vmatprep.subr.mxu0 %v554
    %951 = vmatpush1.msra.mxu0 %v553
    %952 = vmatprep.subr.mxu0 %v557
    %953 = vmatpush1.msra.mxu0 %v556
    %954 = vmatprep.subr.mxu0 %v560
    %955 = vmatpush1.msra.mxu0 %v559
    %956 = vmatprep.subr.mxu0 %v563
    %957 = vmatpush1.msra.mxu0 %v562
    %958 = vmatprep.subr.mxu0 %v566
    %959 = vmatpush1.msra.mxu0 %v565
    %960 = vmatprep.subr.mxu0 %v569
    %961 = vmatpush1.msra.mxu0 %v568
    %962 = vmatprep.subr.mxu0 %v572
    %963 = vmatpush1.msra.mxu0 %v571
    %964 = vmatprep.subr.mxu0 %v575
    %965 = vmatpush1.msra.mxu0 %v574
    %966 = vmatprep.subr.mxu0 %v578
    %967 = vmatpush1.msra.mxu0 %v577
    %968 = vmatprep.subr.mxu0 %v581
    %969 = vmatpush1.msra.mxu0 %v580
    %970 = vmatprep.subr.mxu0 %v584
    %971 = vmatpush1.msra.mxu0 %v583
    %972 = vmatprep.subr.mxu0 %v587
    %973 = vmatpush1.msra.mxu0 %v586
    %974 = vmatprep.subr.mxu0 0.0
    %975 = vmatpush1.msra.mxu0 0.0
    %976 = vmatprep.subr.mxu0 0.0
    %977 = vmatpush1.msra.mxu0 0.0
    %978 = vmatprep.subr.mxu0 0.0
    %979 = vmatpush1.msra.mxu0 0.0
    %980 = vmatprep.subr.mxu0 0.0
    %981 = vmatpush1.msra.mxu0 0.0
    %982 = vmatprep.subr.mxu0 0.0
    %983 = vmatpush1.msra.mxu0 0.0
    %984 = vmatprep.subr.mxu0 0.0
    %985 = vmatpush1.msra.mxu0 0.0
    %986 = vmatprep.subr.mxu0 0.0
    %987 = vmatpush1.msra.mxu0 0.0
    %988 = vmatprep.subr.mxu0 0.0
    %989 = vmatpush1.msra.mxu0 0.0
    %990 = vmatprep.subr.mxu0 0.0
    %991 = vmatpush1.msra.mxu0 0.0
    %992 = vmatprep.subr.mxu0 0.0
    %993 = vmatpush1.msra.mxu0 0.0
    %994 = vmatprep.subr.mxu0 0.0
    %995 = vmatpush1.msra.mxu0 0.0
    %996 = vmatprep.subr.mxu0 0.0
    %997 = vmatpush1.msra.mxu0 0.0
    %998 = vmatprep.subr.mxu0 0.0
    %999 = vmatpush1.msra.mxu0 0.0
    %1000 = vmatprep.subr.mxu0 0.0
    %1001 = vmatpush1.msra.mxu0 0.0
    %1002 = vmatprep.subr.mxu0 0.0
    %1003 = vmatpush1.msra.mxu0 0.0
    %1004 = vmatprep.subr.mxu0 0.0
    %1005 = vmatpush1.msra.mxu0 0.0
    %1006 = vmatprep.mubr.f32.mxu0 0.0
    %1007 = vmatmul.mubr.f32.gmra.mrb[0].mxu0 %v937
    %v1008 = vpop.f32.mrb[0].mxu0
    %v1009 = vadd.f32 %v598, %v1008
    %v1010 = vpop.f32.mrb[0].mxu0
    %v1011 = vadd.f32 %v602, %v1010
    %1012 = vdwg.mxu0
    %1013 = vmatprep.subr.mxu0 0.0
    %1014 = vmatpush1.msra.mxu0 %v543
    %1015 = vmatprep.subr.mxu0 0.0
    %1016 = vmatpush1.msra.mxu0 %v546
    %1017 = vmatprep.subr.mxu0 0.0
    %1018 = vmatpush1.msra.mxu0 %v549
    %1019 = vmatprep.subr.mxu0 0.0
    %1020 = vmatpush1.msra.mxu0 %v552
    %1021 = vmatprep.subr.mxu0 0.0
    %1022 = vmatpush1.msra.mxu0 %v555
    %1023 = vmatprep.subr.mxu0 0.0
    %1024 = vmatpush1.msra.mxu0 %v558
    %1025 = vmatprep.subr.mxu0 0.0
    %1026 = vmatpush1.msra.mxu0 %v561
    %1027 = vmatprep.subr.mxu0 0.0
    %1028 = vmatpush1.msra.mxu0 %v564
    %1029 = vmatprep.subr.mxu0 0.0
    %1030 = vmatpush1.msra.mxu0 %v567
    %1031 = vmatprep.subr.mxu0 0.0
    %1032 = vmatpush1.msra.mxu0 %v570
    %1033 = vmatprep.subr.mxu0 0.0
    %1034 = vmatpush1.msra.mxu0 %v573
    %1035 = vmatprep.subr.mxu0 0.0
    %1036 = vmatpush1.msra.mxu0 %v576
    %1037 = vmatprep.subr.mxu0 0.0
    %1038 = vmatpush1.msra.mxu0 %v579
    %1039 = vmatprep.subr.mxu0 0.0
    %1040 = vmatpush1.msra.mxu0 %v582
    %1041 = vmatprep.subr.mxu0 0.0
    %1042 = vmatpush1.msra.mxu0 %v585
    %1043 = vmatprep.subr.mxu0 0.0
    %1044 = vmatpush1.msra.mxu0 %v588
    %1045 = vmatprep.subr.mxu0 0.0
    %1046 = vmatpush1.msra.mxu0 0.0
    %1047 = vmatprep.subr.mxu0 0.0
    %1048 = vmatpush1.msra.mxu0 0.0
    %1049 = vmatprep.subr.mxu0 0.0
    %1050 = vmatpush1.msra.mxu0 0.0
    %1051 = vmatprep.subr.mxu0 0.0
    %1052 = vmatpush1.msra.mxu0 0.0
    %1053 = vmatprep.subr.mxu0 0.0
    %1054 = vmatpush1.msra.mxu0 0.0
    %1055 = vmatprep.subr.mxu0 0.0
    %1056 = vmatpush1.msra.mxu0 0.0
    %1057 = vmatprep.subr.mxu0 0.0
    %1058 = vmatpush1.msra.mxu0 0.0
    %1059 = vmatprep.subr.mxu0 0.0
    %1060 = vmatpush1.msra.mxu0 0.0
    %1061 = vmatprep.subr.mxu0 0.0
    %1062 = vmatpush1.msra.mxu0 0.0
    %1063 = vmatprep.subr.mxu0 0.0
    %1064 = vmatpush1.msra.mxu0 0.0
    %1065 = vmatprep.subr.mxu0 0.0
    %1066 = vmatpush1.msra.mxu0 0.0
    %1067 = vmatprep.subr.mxu0 0.0
    %1068 = vmatpush1.msra.mxu0 0.0
    %1069 = vmatprep.subr.mxu0 0.0
    %1070 = vmatpush1.msra.mxu0 0.0
    %1071 = vmatprep.subr.mxu0 0.0
    %1072 = vmatpush1.msra.mxu0 0.0
    %1073 = vmatprep.subr.mxu0 0.0
    %1074 = vmatpush1.msra.mxu0 0.0
    %1075 = vmatprep.subr.mxu0 0.0
    %1076 = vmatpush1.msra.mxu0 0.0
    %1077 = vmatprep.mubr.f32.mxu0 0.0
    %1078 = vmatmul.mubr.f32.gmra.mrb[0].mxu0 %v937
    %v1079 = vpop.f32.mrb[0].mxu0
    %v1080 = vadd.f32 %v606, %v1079
    %v1081 = vpop.f32.mrb[0].mxu0
    %1082 = vdwg.mxu0
    %v1083 = vadd.f32 %v939, %v1009
    %v1084 = vadd.f32 %v940, %v1011
    %v1085 = vxor.u32 %v1083, 2147483648
    %v1086 = vxor.u32 %v1084, 2147483648
    %v1087 = vmul.f32 %v1085, 1.442695
    %v1088 = vpow.pop %v1087
    %v1089 = vmul.f32 %v1086, 1.442695
    %v1090 = vpow.pop %v1089
    %v1091 = vadd.f32 %v1088, 1.0
    %v1092 = vadd.f32 %v1090, 1.0
    %v1093 = vrcp.pop %v1091
    %v1094 = vmul.f32 1.0, %v1093
    %v1095 = vrcp.pop %v1092
    %v1096 = vmul.f32 1.0, %v1095
    %v1097 = vmul.f32 %v1094, %v1080
    %v1098 = vadd.f32 %v941, %v1097
    %v1099 = vtanh.pop %v1098
    %v1100 = vsub.f32 1.0, %v1096
    %v1101 = vmul.f32 %v1100, %v1099
    %v1102 = vmul.f32 %v1096, %v937
    %v1103 = vadd.f32 %v1101, %v1102
    %1104 = vst [vmem:[#allocation3 + $0x10] sm:$0xff] %v1103
    %v1105 = vld [vmem:[#allocation2 + $0x48] sm:$0xff]
    %v1106 = vld [vmem:[#allocation2 + $0x50] sm:$0xff]
    %v1107 = vld [vmem:[#allocation2 + $0x58] sm:$0xff]
    %1108 = vmatprep.subr.mxu0 %v542
    %1109 = vmatpush1.msra.mxu0 %v541
    %1110 = vmatprep.subr.mxu0 %v545
    %1111 = vmatpush1.msra.mxu0 %v544
    %1112 = vmatprep.subr.mxu0 %v548
    %1113 = vmatpush1.msra.mxu0 %v547
    %1114 = vmatprep.subr.mxu0 %v551
    %1115 = vmatpush1.msra.mxu0 %v550
    %1116 = vmatprep.subr.mxu0 %v554
    %1117 = vmatpush1.msra.mxu0 %v553
    %1118 = vmatprep.subr.mxu0 %v557
    %1119 = vmatpush1.msra.mxu0 %v556
    %1120 = vmatprep.subr.mxu0 %v560
    %1121 = vmatpush1.msra.mxu0 %v559
    %1122 = vmatprep.subr.mxu0 %v563
    %1123 = vmatpush1.msra.mxu0 %v562
    %1124 = vmatprep.subr.mxu0 %v566
    %1125 = vmatpush1.msra.mxu0 %v565
    %1126 = vmatprep.subr.mxu0 %v569
    %1127 = vmatpush1.msra.mxu0 %v568
    %1128 = vmatprep.subr.mxu0 %v572
    %1129 = vmatpush1.msra.mxu0 %v571
    %1130 = vmatprep.subr.mxu0 %v575
    %1131 = vmatpush1.msra.mxu0 %v574
    %1132 = vmatprep.subr.mxu0 %v578
    %1133 = vmatpush1.msra.mxu0 %v577
    %1134 = vmatprep.subr.mxu0 %v581
    %1135 = vmatpush1.msra.mxu0 %v580
    %1136 = vmatprep.subr.mxu0 %v584
    %1137 = vmatpush1.msra.mxu0 %v583
    %1138 = vmatprep.subr.mxu0 %v587
    %1139 = vmatpush1.msra.mxu0 %v586
    %1140 = vmatprep.subr.mxu0 0.0
    %1141 = vmatpush1.msra.mxu0 0.0
    %1142 = vmatprep.subr.mxu0 0.0
    %1143 = vmatpush1.msra.mxu0 0.0
    %1144 = vmatprep.subr.mxu0 0.0
    %1145 = vmatpush1.msra.mxu0 0.0
    %1146 = vmatprep.subr.mxu0 0.0
    %1147 = vmatpush1.msra.mxu0 0.0
    %1148 = vmatprep.subr.mxu0 0.0
    %1149 = vmatpush1.msra.mxu0 0.0
    %1150 = vmatprep.subr.mxu0 0.0
    %1151 = vmatpush1.msra.mxu0 0.0
    %1152 = vmatprep.subr.mxu0 0.0
    %1153 = vmatpush1.msra.mxu0 0.0
    %1154 = vmatprep.subr.mxu0 0.0
    %1155 = vmatpush1.msra.mxu0 0.0
    %1156 = vmatprep.subr.mxu0 0.0
    %1157 = vmatpush1.msra.mxu0 0.0
    %1158 = vmatprep.subr.mxu0 0.0
    %1159 = vmatpush1.msra.mxu0 0.0
    %1160 = vmatprep.subr.mxu0 0.0
    %1161 = vmatpush1.msra.mxu0 0.0
    %1162 = vmatprep.subr.mxu0 0.0
    %1163 = vmatpush1.msra.mxu0 0.0
    %1164 = vmatprep.subr.mxu0 0.0
    %1165 = vmatpush1.msra.mxu0 0.0
    %1166 = vmatprep.subr.mxu0 0.0
    %1167 = vmatpush1.msra.mxu0 0.0
    %1168 = vmatprep.subr.mxu0 0.0
    %1169 = vmatpush1.msra.mxu0 0.0
    %1170 = vmatprep.subr.mxu0 0.0
    %1171 = vmatpush1.msra.mxu0 0.0
    %1172 = vmatprep.mubr.f32.mxu0 0.0
    %1173 = vmatmul.mubr.f32.gmra.mrb[0].mxu0 %v1103
    %v1174 = vpop.f32.mrb[0].mxu0
    %v1175 = vadd.f32 %v598, %v1174
    %v1176 = vpop.f32.mrb[0].mxu0
    %v1177 = vadd.f32 %v602, %v1176
    %1178 = vdwg.mxu0
    %1179 = vmatprep.subr.mxu0 0.0
    %1180 = vmatpush1.msra.mxu0 %v543
    %1181 = vmatprep.subr.mxu0 0.0
    %1182 = vmatpush1.msra.mxu0 %v546
    %1183 = vmatprep.subr.mxu0 0.0
    %1184 = vmatpush1.msra.mxu0 %v549
    %1185 = vmatprep.subr.mxu0 0.0
    %1186 = vmatpush1.msra.mxu0 %v552
    %1187 = vmatprep.subr.mxu0 0.0
    %1188 = vmatpush1.msra.mxu0 %v555
    %1189 = vmatprep.subr.mxu0 0.0
    %1190 = vmatpush1.msra.mxu0 %v558
    %1191 = vmatprep.subr.mxu0 0.0
    %1192 = vmatpush1.msra.mxu0 %v561
    %1193 = vmatprep.subr.mxu0 0.0
    %1194 = vmatpush1.msra.mxu0 %v564
    %1195 = vmatprep.subr.mxu0 0.0
    %1196 = vmatpush1.msra.mxu0 %v567
    %1197 = vmatprep.subr.mxu0 0.0
    %1198 = vmatpush1.msra.mxu0 %v570
    %1199 = vmatprep.subr.mxu0 0.0
    %1200 = vmatpush1.msra.mxu0 %v573
    %1201 = vmatprep.subr.mxu0 0.0
    %1202 = vmatpush1.msra.mxu0 %v576
    %1203 = vmatprep.subr.mxu0 0.0
    %1204 = vmatpush1.msra.mxu0 %v579
    %1205 = vmatprep.subr.mxu0 0.0
    %1206 = vmatpush1.msra.mxu0 %v582
    %1207 = vmatprep.subr.mxu0 0.0
    %1208 = vmatpush1.msra.mxu0 %v585
    %1209 = vmatprep.subr.mxu0 0.0
    %1210 = vmatpush1.msra.mxu0 %v588
    %1211 = vmatprep.subr.mxu0 0.0
    %1212 = vmatpush1.msra.mxu0 0.0
    %1213 = vmatprep.subr.mxu0 0.0
    %1214 = vmatpush1.msra.mxu0 0.0
    %1215 = vmatprep.subr.mxu0 0.0
    %1216 = vmatpush1.msra.mxu0 0.0
    %1217 = vmatprep.subr.mxu0 0.0
    %1218 = vmatpush1.msra.mxu0 0.0
    %1219 = vmatprep.subr.mxu0 0.0
    %1220 = vmatpush1.msra.mxu0 0.0
    %1221 = vmatprep.subr.mxu0 0.0
    %1222 = vmatpush1.msra.mxu0 0.0
    %1223 = vmatprep.subr.mxu0 0.0
    %1224 = vmatpush1.msra.mxu0 0.0
    %1225 = vmatprep.subr.mxu0 0.0
    %1226 = vmatpush1.msra.mxu0 0.0
    %1227 = vmatprep.subr.mxu0 0.0
    %1228 = vmatpush1.msra.mxu0 0.0
    %1229 = vmatprep.subr.mxu0 0.0
    %1230 = vmatpush1.msra.mxu0 0.0
    %1231 = vmatprep.subr.mxu0 0.0
    %1232 = vmatpush1.msra.mxu0 0.0
    %1233 = vmatprep.subr.mxu0 0.0
    %1234 = vmatpush1.msra.mxu0 0.0
    %1235 = vmatprep.subr.mxu0 0.0
    %1236 = vmatpush1.msra.mxu0 0.0
    %1237 = vmatprep.subr.mxu0 0.0
    %1238 = vmatpush1.msra.mxu0 0.0
    %1239 = vmatprep.subr.mxu0 0.0
    %1240 = vmatpush1.msra.mxu0 0.0
    %1241 = vmatprep.subr.mxu0 0.0
    %1242 = vmatpush1.msra.mxu0 0.0
    %1243 = vmatprep.mubr.f32.mxu0 0.0
    %1244 = vmatmul.mubr.f32.gmra.mrb[0].mxu0 %v1103
    %v1245 = vpop.f32.mrb[0].mxu0
    %v1246 = vadd.f32 %v606, %v1245
    %v1247 = vpop.f32.mrb[0].mxu0
    %1248 = vdwg.mxu0
    %v1249 = vadd.f32 %v1105, %v1175
    %v1250 = vadd.f32 %v1106, %v1177
    %v1251 = vxor.u32 %v1249, 2147483648
    %v1252 = vxor.u32 %v1250, 2147483648
    %v1253 = vmul.f32 %v1251, 1.442695
    %v1254 = vpow.pop %v1253
    %v1255 = vmul.f32 %v1252, 1.442695
    %v1256 = vpow.pop %v1255
    %v1257 = vadd.f32 %v1254, 1.0
    %v1258 = vadd.f32 %v1256, 1.0
    %v1259 = vrcp.pop %v1257
    %v1260 = vmul.f32 1.0, %v1259
    %v1261 = vrcp.pop %v1258
    %v1262 = vmul.f32 1.0, %v1261
    %v1263 = vmul.f32 %v1260, %v1246
    %v1264 = vadd.f32 %v1107, %v1263
    %v1265 = vtanh.pop %v1264
    %v1266 = vsub.f32 1.0, %v1262
    %v1267 = vmul.f32 %v1266, %v1265
    %v1268 = vmul.f32 %v1262, %v1103
    %v1269 = vadd.f32 %v1267, %v1268
    %1270 = vst [vmem:[#allocation3 + $0x18] sm:$0xff] %v1269
    %v1271 = vld [vmem:[#allocation2 + $0x60] sm:$0xff]
    %v1272 = vld [vmem:[#allocation2 + $0x68] sm:$0xff]
    %v1273 = vld [vmem:[#allocation2 + $0x70] sm:$0xff]
    %1274 = vmatprep.subr.mxu0 %v542
    %1275 = vmatpush1.msra.mxu0 %v541
    %1276 = vmatprep.subr.mxu0 %v545
    %1277 = vmatpush1.msra.mxu0 %v544
    %1278 = vmatprep.subr.mxu0 %v548
    %1279 = vmatpush1.msra.mxu0 %v547
    %1280 = vmatprep.subr.mxu0 %v551
    %1281 = vmatpush1.msra.mxu0 %v550
    %1282 = vmatprep.subr.mxu0 %v554
    %1283 = vmatpush1.msra.mxu0 %v553
    %1284 = vmatprep.subr.mxu0 %v557
    %1285 = vmatpush1.msra.mxu0 %v556
    %1286 = vmatprep.subr.mxu0 %v560
    %1287 = vmatpush1.msra.mxu0 %v559
    %1288 = vmatprep.subr.mxu0 %v563
    %1289 = vmatpush1.msra.mxu0 %v562
    %1290 = vmatprep.subr.mxu0 %v566
    %1291 = vmatpush1.msra.mxu0 %v565
    %1292 = vmatprep.subr.mxu0 %v569
    %1293 = vmatpush1.msra.mxu0 %v568
    %1294 = vmatprep.subr.mxu0 %v572
    %1295 = vmatpush1.msra.mxu0 %v571
    %1296 = vmatprep.subr.mxu0 %v575
    %1297 = vmatpush1.msra.mxu0 %v574
    %1298 = vmatprep.subr.mxu0 %v578
    %1299 = vmatpush1.msra.mxu0 %v577
    %1300 = vmatprep.subr.mxu0 %v581
    %1301 = vmatpush1.msra.mxu0 %v580
    %1302 = vmatprep.subr.mxu0 %v584
    %1303 = vmatpush1.msra.mxu0 %v583
    %1304 = vmatprep.subr.mxu0 %v587
    %1305 = vmatpush1.msra.mxu0 %v586
    %1306 = vmatprep.subr.mxu0 0.0
    %1307 = vmatpush1.msra.mxu0 0.0
    %1308 = vmatprep.subr.mxu0 0.0
    %1309 = vmatpush1.msra.mxu0 0.0
    %1310 = vmatprep.subr.mxu0 0.0
    %1311 = vmatpush1.msra.mxu0 0.0
    %1312 = vmatprep.subr.mxu0 0.0
    %1313 = vmatpush1.msra.mxu0 0.0
    %1314 = vmatprep.subr.mxu0 0.0
    %1315 = vmatpush1.msra.mxu0 0.0
    %1316 = vmatprep.subr.mxu0 0.0
    %1317 = vmatpush1.msra.mxu0 0.0
    %1318 = vmatprep.subr.mxu0 0.0
    %1319 = vmatpush1.msra.mxu0 0.0
    %1320 = vmatprep.subr.mxu0 0.0
    %1321 = vmatpush1.msra.mxu0 0.0
    %1322 = vmatprep.subr.mxu0 0.0
    %1323 = vmatpush1.msra.mxu0 0.0
    %1324 = vmatprep.subr.mxu0 0.0
    %1325 = vmatpush1.msra.mxu0 0.0
    %1326 = vmatprep.subr.mxu0 0.0
    %1327 = vmatpush1.msra.mxu0 0.0
    %1328 = vmatprep.subr.mxu0 0.0
    %1329 = vmatpush1.msra.mxu0 0.0
    %1330 = vmatprep.subr.mxu0 0.0
    %1331 = vmatpush1.msra.mxu0 0.0
    %1332 = vmatprep.subr.mxu0 0.0
    %1333 = vmatpush1.msra.mxu0 0.0
    %1334 = vmatprep.subr.mxu0 0.0
    %1335 = vmatpush1.msra.mxu0 0.0
    %1336 = vmatprep.subr.mxu0 0.0
    %1337 = vmatpush1.msra.mxu0 0.0
    %1338 = vmatprep.mubr.f32.mxu0 0.0
    %1339 = vmatmul.mubr.f32.gmra.mrb[0].mxu0 %v1269
    %v1340 = vpop.f32.mrb[0].mxu0
    %v1341 = vadd.f32 %v598, %v1340
    %v1342 = vpop.f32.mrb[0].mxu0
    %v1343 = vadd.f32 %v602, %v1342
    %1344 = vdwg.mxu0
    %1345 = vmatprep.subr.mxu0 0.0
    %1346 = vmatpush1.msra.mxu0 %v543
    %1347 = vmatprep.subr.mxu0 0.0
    %1348 = vmatpush1.msra.mxu0 %v546
    %1349 = vmatprep.subr.mxu0 0.0
    %1350 = vmatpush1.msra.mxu0 %v549
    %1351 = vmatprep.subr.mxu0 0.0
    %1352 = vmatpush1.msra.mxu0 %v552
    %1353 = vmatprep.subr.mxu0 0.0
    %1354 = vmatpush1.msra.mxu0 %v555
    %1355 = vmatprep.subr.mxu0 0.0
    %1356 = vmatpush1.msra.mxu0 %v558
    %1357 = vmatprep.subr.mxu0 0.0
    %1358 = vmatpush1.msra.mxu0 %v561
    %1359 = vmatprep.subr.mxu0 0.0
    %1360 = vmatpush1.msra.mxu0 %v564
    %1361 = vmatprep.subr.mxu0 0.0
    %1362 = vmatpush1.msra.mxu0 %v567
    %1363 = vmatprep.subr.mxu0 0.0
    %1364 = vmatpush1.msra.mxu0 %v570
    %1365 = vmatprep.subr.mxu0 0.0
    %1366 = vmatpush1.msra.mxu0 %v573
    %1367 = vmatprep.subr.mxu0 0.0
    %1368 = vmatpush1.msra.mxu0 %v576
    %1369 = vmatprep.subr.mxu0 0.0
    %1370 = vmatpush1.msra.mxu0 %v579
    %1371 = vmatprep.subr.mxu0 0.0
    %1372 = vmatpush1.msra.mxu0 %v582
    %1373 = vmatprep.subr.mxu0 0.0
    %1374 = vmatpush1.msra.mxu0 %v585
    %1375 = vmatprep.subr.mxu0 0.0
    %1376 = vmatpush1.msra.mxu0 %v588
    %1377 = vmatprep.subr.mxu0 0.0
    %1378 = vmatpush1.msra.mxu0 0.0
    %1379 = vmatprep.subr.mxu0 0.0
    %1380 = vmatpush1.msra.mxu0 0.0
    %1381 = vmatprep.subr.mxu0 0.0
    %1382 = vmatpush1.msra.mxu0 0.0
    %1383 = vmatprep.subr.mxu0 0.0
    %1384 = vmatpush1.msra.mxu0 0.0
    %1385 = vmatprep.subr.mxu0 0.0
    %1386 = vmatpush1.msra.mxu0 0.0
    %1387 = vmatprep.subr.mxu0 0.0
    %1388 = vmatpush1.msra.mxu0 0.0
    %1389 = vmatprep.subr.mxu0 0.0
    %1390 = vmatpush1.msra.mxu0 0.0
    %1391 = vmatprep.subr.mxu0 0.0
    %1392 = vmatpush1.msra.mxu0 0.0
    %1393 = vmatprep.subr.mxu0 0.0
    %1394 = vmatpush1.msra.mxu0 0.0
    %1395 = vmatprep.subr.mxu0 0.0
    %1396 = vmatpush1.msra.mxu0 0.0
    %1397 = vmatprep.subr.mxu0 0.0
    %1398 = vmatpush1.msra.mxu0 0.0
    %1399 = vmatprep.subr.mxu0 0.0
    %1400 = vmatpush1.msra.mxu0 0.0
    %1401 = vmatprep.subr.mxu0 0.0
    %1402 = vmatpush1.msra.mxu0 0.0
    %1403 = vmatprep.subr.mxu0 0.0
    %1404 = vmatpush1.msra.mxu0 0.0
    %1405 = vmatprep.subr.mxu0 0.0
    %1406 = vmatpush1.msra.mxu0 0.0
    %1407 = vmatprep.subr.mxu0 0.0
    %1408 = vmatpush1.msra.mxu0 0.0
    %1409 = vmatprep.mubr.f32.mxu0 0.0
    %1410 = vmatmul.mubr.f32.gmra.mrb[0].mxu0 %v1269
    %v1411 = vpop.f32.mrb[0].mxu0
    %v1412 = vadd.f32 %v606, %v1411
    %v1413 = vpop.f32.mrb[0].mxu0
    %1414 = vdwg.mxu0
    %v1415 = vadd.f32 %v1271, %v1341
    %v1416 = vadd.f32 %v1272, %v1343
    %v1417 = vxor.u32 %v1415, 2147483648
    %v1418 = vxor.u32 %v1416, 2147483648
    %v1419 = vmul.f32 %v1417, 1.442695
    %v1420 = vpow.pop %v1419
    %v1421 = vmul.f32 %v1418, 1.442695
    %v1422 = vpow.pop %v1421
    %v1423 = vadd.f32 %v1420, 1.0
    %v1424 = vadd.f32 %v1422, 1.0
    %v1425 = vrcp.pop %v1423
    %v1426 = vmul.f32 1.0, %v1425
    %v1427 = vrcp.pop %v1424
    %v1428 = vmul.f32 1.0, %v1427
    %v1429 = vmul.f32 %v1426, %v1412
    %v1430 = vadd.f32 %v1273, %v1429
    %v1431 = vtanh.pop %v1430
    %v1432 = vsub.f32 1.0, %v1428
    %v1433 = vmul.f32 %v1432, %v1431
    %v1434 = vmul.f32 %v1428, %v1269
    %v1435 = vadd.f32 %v1433, %v1434
    %1436 = vst [vmem:[#allocation3 + $0x20] sm:$0xff] %v1435
    %v1437 = vld [vmem:[#allocation2 + $0x78] sm:$0xff]
    %v1438 = vld [vmem:[#allocation2 + $0x80] sm:$0xff]
    %v1439 = vld [vmem:[#allocation2 + $0x88] sm:$0xff]
    %1440 = vmatprep.subr.mxu0 %v542
    %1441 = vmatpush1.msra.mxu0 %v541
    %1442 = vmatprep.subr.mxu0 %v545
    %1443 = vmatpush1.msra.mxu0 %v544
    %1444 = vmatprep.subr.mxu0 %v548
    %1445 = vmatpush1.msra.mxu0 %v547
    %1446 = vmatprep.subr.mxu0 %v551
    %1447 = vmatpush1.msra.mxu0 %v550
    %1448 = vmatprep.subr.mxu0 %v554
    %1449 = vmatpush1.msra.mxu0 %v553
    %1450 = vmatprep.subr.mxu0 %v557
    %1451 = vmatpush1.msra.mxu0 %v556
    %1452 = vmatprep.subr.mxu0 %v560
    %1453 = vmatpush1.msra.mxu0 %v559
    %1454 = vmatprep.subr.mxu0 %v563
    %1455 = vmatpush1.msra.mxu0 %v562
    %1456 = vmatprep.subr.mxu0 %v566
    %1457 = vmatpush1.msra.mxu0 %v565
    %1458 = vmatprep.subr.mxu0 %v569
    %1459 = vmatpush1.msra.mxu0 %v568
    %1460 = vmatprep.subr.mxu0 %v572
    %1461 = vmatpush1.msra.mxu0 %v571
    %1462 = vmatprep.subr.mxu0 %v575
    %1463 = vmatpush1.msra.mxu0 %v574
    %1464 = vmatprep.subr.mxu0 %v578
    %1465 = vmatpush1.msra.mxu0 %v577
    %1466 = vmatprep.subr.mxu0 %v581
    %1467 = vmatpush1.msra.mxu0 %v580
    %1468 = vmatprep.subr.mxu0 %v584
    %1469 = vmatpush1.msra.mxu0 %v583
    %1470 = vmatprep.subr.mxu0 %v587
    %1471 = vmatpush1.msra.mxu0 %v586
    %1472 = vmatprep.subr.mxu0 0.0
    %1473 = vmatpush1.msra.mxu0 0.0
    %1474 = vmatprep.subr.mxu0 0.0
    %1475 = vmatpush1.msra.mxu0 0.0
    %1476 = vmatprep.subr.mxu0 0.0
    %1477 = vmatpush1.msra.mxu0 0.0
    %1478 = vmatprep.subr.mxu0 0.0
    %1479 = vmatpush1.msra.mxu0 0.0
    %1480 = vmatprep.subr.mxu0 0.0
    %1481 = vmatpush1.msra.mxu0 0.0
    %1482 = vmatprep.subr.mxu0 0.0
    %1483 = vmatpush1.msra.mxu0 0.0
    %1484 = vmatprep.subr.mxu0 0.0
    %1485 = vmatpush1.msra.mxu0 0.0
    %1486 = vmatprep.subr.mxu0 0.0
    %1487 = vmatpush1.msra.mxu0 0.0
    %1488 = vmatprep.subr.mxu0 0.0
    %1489 = vmatpush1.msra.mxu0 0.0
    %1490 = vmatprep.subr.mxu0 0.0
    %1491 = vmatpush1.msra.mxu0 0.0
    %1492 = vmatprep.subr.mxu0 0.0
    %1493 = vmatpush1.msra.mxu0 0.0
    %1494 = vmatprep.subr.mxu0 0.0
    %1495 = vmatpush1.msra.mxu0 0.0
    %1496 = vmatprep.subr.mxu0 0.0
    %1497 = vmatpush1.msra.mxu0 0.0
    %1498 = vmatprep.subr.mxu0 0.0
    %1499 = vmatpush1.msra.mxu0 0.0
    %1500 = vmatprep.subr.mxu0 0.0
    %1501 = vmatpush1.msra.mxu0 0.0
    %1502 = vmatprep.subr.mxu0 0.0
    %1503 = vmatpush1.msra.mxu0 0.0
    %1504 = vmatprep.mubr.f32.mxu0 0.0
    %1505 = vmatmul.mubr.f32.gmra.mrb[0].mxu0 %v1435
    %v1506 = vpop.f32.mrb[0].mxu0
    %v1507 = vadd.f32 %v598, %v1506
    %v1508 = vpop.f32.mrb[0].mxu0
    %v1509 = vadd.f32 %v602, %v1508
    %1510 = vdwg.mxu0
    %1511 = vmatprep.subr.mxu0 0.0
    %1512 = vmatpush1.msra.mxu0 %v543
    %1513 = vmatprep.subr.mxu0 0.0
    %1514 = vmatpush1.msra.mxu0 %v546
    %1515 = vmatprep.subr.mxu0 0.0
    %1516 = vmatpush1.msra.mxu0 %v549
    %1517 = vmatprep.subr.mxu0 0.0
    %1518 = vmatpush1.msra.mxu0 %v552
    %1519 = vmatprep.subr.mxu0 0.0
    %1520 = vmatpush1.msra.mxu0 %v555
    %1521 = vmatprep.subr.mxu0 0.0
    %1522 = vmatpush1.msra.mxu0 %v558
    %1523 = vmatprep.subr.mxu0 0.0
    %1524 = vmatpush1.msra.mxu0 %v561
    %1525 = vmatprep.subr.mxu0 0.0
    %1526 = vmatpush1.msra.mxu0 %v564
    %1527 = vmatprep.subr.mxu0 0.0
    %1528 = vmatpush1.msra.mxu0 %v567
    %1529 = vmatprep.subr.mxu0 0.0
    %1530 = vmatpush1.msra.mxu0 %v570
    %1531 = vmatprep.subr.mxu0 0.0
    %1532 = vmatpush1.msra.mxu0 %v573
    %1533 = vmatprep.subr.mxu0 0.0
    %1534 = vmatpush1.msra.mxu0 %v576
    %1535 = vmatprep.subr.mxu0 0.0
    %1536 = vmatpush1.msra.mxu0 %v579
    %1537 = vmatprep.subr.mxu0 0.0
    %1538 = vmatpush1.msra.mxu0 %v582
    %1539 = vmatprep.subr.mxu0 0.0
    %1540 = vmatpush1.msra.mxu0 %v585
    %1541 = vmatprep.subr.mxu0 0.0
    %1542 = vmatpush1.msra.mxu0 %v588
    %1543 = vmatprep.subr.mxu0 0.0
    %1544 = vmatpush1.msra.mxu0 0.0
    %1545 = vmatprep.subr.mxu0 0.0
    %1546 = vmatpush1.msra.mxu0 0.0
    %1547 = vmatprep.subr.mxu0 0.0
    %1548 = vmatpush1.msra.mxu0 0.0
    %1549 = vmatprep.subr.mxu0 0.0
    %1550 = vmatpush1.msra.mxu0 0.0
    %1551 = vmatprep.subr.mxu0 0.0
    %1552 = vmatpush1.msra.mxu0 0.0
    %1553 = vmatprep.subr.mxu0 0.0
    %1554 = vmatpush1.msra.mxu0 0.0
    %1555 = vmatprep.subr.mxu0 0.0
    %1556 = vmatpush1.msra.mxu0 0.0
    %1557 = vmatprep.subr.mxu0 0.0
    %1558 = vmatpush1.msra.mxu0 0.0
    %1559 = vmatprep.subr.mxu0 0.0
    %1560 = vmatpush1.msra.mxu0 0.0
    %1561 = vmatprep.subr.mxu0 0.0
    %1562 = vmatpush1.msra.mxu0 0.0
    %1563 = vmatprep.subr.mxu0 0.0
    %1564 = vmatpush1.msra.mxu0 0.0
    %1565 = vmatprep.subr.mxu0 0.0
    %1566 = vmatpush1.msra.mxu0 0.0
    %1567 = vmatprep.subr.mxu0 0.0
    %1568 = vmatpush1.msra.mxu0 0.0
    %1569 = vmatprep.subr.mxu0 0.0
    %1570 = vmatpush1.msra.mxu0 0.0
    %1571 = vmatprep.subr.mxu0 0.0
    %1572 = vmatpush1.msra.mxu0 0.0
    %1573 = vmatprep.subr.mxu0 0.0
    %1574 = vmatpush1.msra.mxu0 0.0
    %1575 = vmatprep.mubr.f32.mxu0 0.0
    %1576 = vmatmul.mubr.f32.gmra.mrb[0].mxu0 %v1435
    %v1577 = vpop.f32.mrb[0].mxu0
    %v1578 = vadd.f32 %v606, %v1577
    %v1579 = vpop.f32.mrb[0].mxu0
    %1580 = vdwg.mxu0
    %v1581 = vadd.f32 %v1437, %v1507
    %v1582 = vadd.f32 %v1438, %v1509
    %v1583 = vxor.u32 %v1581, 2147483648
    %v1584 = vxor.u32 %v1582, 2147483648
    %v1585 = vmul.f32 %v1583, 1.442695
    %v1586 = vpow.pop %v1585
    %v1587 = vmul.f32 %v1584, 1.442695
    %v1588 = vpow.pop %v1587
    %v1589 = vadd.f32 %v1586, 1.0
    %v1590 = vadd.f32 %v1588, 1.0
    %v1591 = vrcp.pop %v1589
    %v1592 = vmul.f32 1.0, %v1591
    %v1593 = vrcp.pop %v1590
    %v1594 = vmul.f32 1.0, %v1593
    %v1595 = vmul.f32 %v1592, %v1578
    %v1596 = vadd.f32 %v1439, %v1595
    %v1597 = vtanh.pop %v1596
    %v1598 = vsub.f32 1.0, %v1594
    %v1599 = vmul.f32 %v1598, %v1597
    %v1600 = vmul.f32 %v1594, %v1435
    %v1601 = vadd.f32 %v1599, %v1600
    %1602 = vst [vmem:[#allocation3 + $0x28] sm:$0xff] %v1601
    %v1603 = vld [vmem:[#allocation2 + $0x90] sm:$0xff]
    %v1604 = vld [vmem:[#allocation2 + $0x98] sm:$0xff]
    %v1605 = vld [vmem:[#allocation2 + $0xa0] sm:$0xff]
    %1606 = vmatprep.subr.mxu0 %v542
    %1607 = vmatpush1.msra.mxu0 %v541
    %1608 = vmatprep.subr.mxu0 %v545
    %1609 = vmatpush1.msra.mxu0 %v544
    %1610 = vmatprep.subr.mxu0 %v548
    %1611 = vmatpush1.msra.mxu0 %v547
    %1612 = vmatprep.subr.mxu0 %v551
    %1613 = vmatpush1.msra.mxu0 %v550
    %1614 = vmatprep.subr.mxu0 %v554
    %1615 = vmatpush1.msra.mxu0 %v553
    %1616 = vmatprep.subr.mxu0 %v557
    %1617 = vmatpush1.msra.mxu0 %v556
    %1618 = vmatprep.subr.mxu0 %v560
    %1619 = vmatpush1.msra.mxu0 %v559
    %1620 = vmatprep.subr.mxu0 %v563
    %1621 = vmatpush1.msra.mxu0 %v562
    %1622 = vmatprep.subr.mxu0 %v566
    %1623 = vmatpush1.msra.mxu0 %v565
    %1624 = vmatprep.subr.mxu0 %v569
    %1625 = vmatpush1.msra.mxu0 %v568
    %1626 = vmatprep.subr.mxu0 %v572
    %1627 = vmatpush1.msra.mxu0 %v571
    %1628 = vmatprep.subr.mxu0 %v575
    %1629 = vmatpush1.msra.mxu0 %v574
    %1630 = vmatprep.subr.mxu0 %v578
    %1631 = vmatpush1.msra.mxu0 %v577
    %1632 = vmatprep.subr.mxu0 %v581
    %1633 = vmatpush1.msra.mxu0 %v580
    %1634 = vmatprep.subr.mxu0 %v584
    %1635 = vmatpush1.msra.mxu0 %v583
    %1636 = vmatprep.subr.mxu0 %v587
    %1637 = vmatpush1.msra.mxu0 %v586
    %1638 = vmatprep.subr.mxu0 0.0
    %1639 = vmatpush1.msra.mxu0 0.0
    %1640 = vmatprep.subr.mxu0 0.0
    %1641 = vmatpush1.msra.mxu0 0.0
    %1642 = vmatprep.subr.mxu0 0.0
    %1643 = vmatpush1.msra.mxu0 0.0
    %1644 = vmatprep.subr.mxu0 0.0
    %1645 = vmatpush1.msra.mxu0 0.0
    %1646 = vmatprep.subr.mxu0 0.0
    %1647 = vmatpush1.msra.mxu0 0.0
    %1648 = vmatprep.subr.mxu0 0.0
    %1649 = vmatpush1.msra.mxu0 0.0
    %1650 = vmatprep.subr.mxu0 0.0
    %1651 = vmatpush1.msra.mxu0 0.0
    %1652 = vmatprep.subr.mxu0 0.0
    %1653 = vmatpush1.msra.mxu0 0.0
    %1654 = vmatprep.subr.mxu0 0.0
    %1655 = vmatpush1.msra.mxu0 0.0
    %1656 = vmatprep.subr.mxu0 0.0
    %1657 = vmatpush1.msra.mxu0 0.0
    %1658 = vmatprep.subr.mxu0 0.0
    %1659 = vmatpush1.msra.mxu0 0.0
    %1660 = vmatprep.subr.mxu0 0.0
    %1661 = vmatpush1.msra.mxu0 0.0
    %1662 = vmatprep.subr.mxu0 0.0
    %1663 = vmatpush1.msra.mxu0 0.0
    %1664 = vmatprep.subr.mxu0 0.0
    %1665 = vmatpush1.msra.mxu0 0.0
    %1666 = vmatprep.subr.mxu0 0.0
    %1667 = vmatpush1.msra.mxu0 0.0
    %1668 = vmatprep.subr.mxu0 0.0
    %1669 = vmatpush1.msra.mxu0 0.0
    %1670 = vmatprep.mubr.f32.mxu0 0.0
    %1671 = vmatmul.mubr.f32.gmra.mrb[0].mxu0 %v1601
    %v1672 = vpop.f32.mrb[0].mxu0
    %v1673 = vadd.f32 %v598, %v1672
    %v1674 = vpop.f32.mrb[0].mxu0
    %v1675 = vadd.f32 %v602, %v1674
    %1676 = vdwg.mxu0
    %1677 = vmatprep.subr.mxu0 0.0
    %1678 = vmatpush1.msra.mxu0 %v543
    %1679 = vmatprep.subr.mxu0 0.0
    %1680 = vmatpush1.msra.mxu0 %v546
    %1681 = vmatprep.subr.mxu0 0.0
    %1682 = vmatpush1.msra.mxu0 %v549
    %1683 = vmatprep.subr.mxu0 0.0
    %1684 = vmatpush1.msra.mxu0 %v552
    %1685 = vmatprep.subr.mxu0 0.0
    %1686 = vmatpush1.msra.mxu0 %v555
    %1687 = vmatprep.subr.mxu0 0.0
    %1688 = vmatpush1.msra.mxu0 %v558
    %1689 = vmatprep.subr.mxu0 0.0
    %1690 = vmatpush1.msra.mxu0 %v561
    %1691 = vmatprep.subr.mxu0 0.0
    %1692 = vmatpush1.msra.mxu0 %v564
    %1693 = vmatprep.subr.mxu0 0.0
    %1694 = vmatpush1.msra.mxu0 %v567
    %1695 = vmatprep.subr.mxu0 0.0
    %1696 = vmatpush1.msra.mxu0 %v570
    %1697 = vmatprep.subr.mxu0 0.0
    %1698 = vmatpush1.msra.mxu0 %v573
    %1699 = vmatprep.subr.mxu0 0.0
    %1700 = vmatpush1.msra.mxu0 %v576
    %1701 = vmatprep.subr.mxu0 0.0
    %1702 = vmatpush1.msra.mxu0 %v579
    %1703 = vmatprep.subr.mxu0 0.0
    %1704 = vmatpush1.msra.mxu0 %v582
    %1705 = vmatprep.subr.mxu0 0.0
    %1706 = vmatpush1.msra.mxu0 %v585
    %1707 = vmatprep.subr.mxu0 0.0
    %1708 = vmatpush1.msra.mxu0 %v588
    %1709 = vmatprep.subr.mxu0 0.0
    %1710 = vmatpush1.msra.mxu0 0.0
    %1711 = vmatprep.subr.mxu0 0.0
    %1712 = vmatpush1.msra.mxu0 0.0
    %1713 = vmatprep.subr.mxu0 0.0
    %1714 = vmatpush1.msra.mxu0 0.0
    %1715 = vmatprep.subr.mxu0 0.0
    %1716 = vmatpush1.msra.mxu0 0.0
    %1717 = vmatprep.subr.mxu0 0.0
    %1718 = vmatpush1.msra.mxu0 0.0
    %1719 = vmatprep.subr.mxu0 0.0
    %1720 = vmatpush1.msra.mxu0 0.0
    %1721 = vmatprep.subr.mxu0 0.0
    %1722 = vmatpush1.msra.mxu0 0.0
    %1723 = vmatprep.subr.mxu0 0.0
    %1724 = vmatpush1.msra.mxu0 0.0
    %1725 = vmatprep.subr.mxu0 0.0
    %1726 = vmatpush1.msra.mxu0 0.0
    %1727 = vmatprep.subr.mxu0 0.0
    %1728 = vmatpush1.msra.mxu0 0.0
    %1729 = vmatprep.subr.mxu0 0.0
    %1730 = vmatpush1.msra.mxu0 0.0
    %1731 = vmatprep.subr.mxu0 0.0
    %1732 = vmatpush1.msra.mxu0 0.0
    %1733 = vmatprep.subr.mxu0 0.0
    %1734 = vmatpush1.msra.mxu0 0.0
    %1735 = vmatprep.subr.mxu0 0.0
    %1736 = vmatpush1.msra.mxu0 0.0
    %1737 = vmatprep.subr.mxu0 0.0
    %1738 = vmatpush1.msra.mxu0 0.0
    %1739 = vmatprep.subr.mxu0 0.0
    %1740 = vmatpush1.msra.mxu0 0.0
    %1741 = vmatprep.mubr.f32.mxu0 0.0
    %1742 = vmatmul.mubr.f32.gmra.mrb[0].mxu0 %v1601
    %v1743 = vpop.f32.mrb[0].mxu0
    %v1744 = vadd.f32 %v606, %v1743
    %v1745 = vpop.f32.mrb[0].mxu0
    %1746 = vdwg.mxu0
    %v1747 = vadd.f32 %v1603, %v1673
    %v1748 = vadd.f32 %v1604, %v1675
    %v1749 = vxor.u32 %v1747, 2147483648
    %v1750 = vxor.u32 %v1748, 2147483648
    %v1751 = vmul.f32 %v1749, 1.442695
    %v1752 = vpow.pop %v1751
    %v1753 = vmul.f32 %v1750, 1.442695
    %v1754 = vpow.pop %v1753
    %v1755 = vadd.f32 %v1752, 1.0
    %v1756 = vadd.f32 %v1754, 1.0
    %v1757 = vrcp.pop %v1755
    %v1758 = vmul.f32 1.0, %v1757
    %v1759 = vrcp.pop %v1756
    %v1760 = vmul.f32 1.0, %v1759
    %v1761 = vmul.f32 %v1758, %v1744
    %v1762 = vadd.f32 %v1605, %v1761
    %v1763 = vtanh.pop %v1762
    %v1764 = vsub.f32 1.0, %v1760
    %v1765 = vmul.f32 %v1764, %v1763
    %v1766 = vmul.f32 %v1760, %v1601
    %v1767 = vadd.f32 %v1765, %v1766
    %1768 = vst [vmem:[#allocation3 + $0x30] sm:$0xff] %v1767
    %v1769 = vld [vmem:[#allocation2 + $0xa8] sm:$0xff]
    %v1770 = vld [vmem:[#allocation2 + $0xb0] sm:$0xff]
    %v1771 = vld [vmem:[#allocation2 + $0xb8] sm:$0xff]
    %1772 = vmatprep.subr.mxu0 %v542
    %1773 = vmatpush1.msra.mxu0 %v541
    %1774 = vmatprep.subr.mxu0 %v545
    %1775 = vmatpush1.msra.mxu0 %v544
    %1776 = vmatprep.subr.mxu0 %v548
    %1777 = vmatpush1.msra.mxu0 %v547
    %1778 = vmatprep.subr.mxu0 %v551
    %1779 = vmatpush1.msra.mxu0 %v550
    %1780 = vmatprep.subr.mxu0 %v554
    %1781 = vmatpush1.msra.mxu0 %v553
    %1782 = vmatprep.subr.mxu0 %v557
    %1783 = vmatpush1.msra.mxu0 %v556
    %1784 = vmatprep.subr.mxu0 %v560
    %1785 = vmatpush1.msra.mxu0 %v559
    %1786 = vmatprep.subr.mxu0 %v563
    %1787 = vmatpush1.msra.mxu0 %v562
    %1788 = vmatprep.subr.mxu0 %v566
    %1789 = vmatpush1.msra.mxu0 %v565
    %1790 = vmatprep.subr.mxu0 %v569
    %1791 = vmatpush1.msra.mxu0 %v568
    %1792 = vmatprep.subr.mxu0 %v572
    %1793 = vmatpush1.msra.mxu0 %v571
    %1794 = vmatprep.subr.mxu0 %v575
    %1795 = vmatpush1.msra.mxu0 %v574
    %1796 = vmatprep.subr.mxu0 %v578
    %1797 = vmatpush1.msra.mxu0 %v577
    %1798 = vmatprep.subr.mxu0 %v581
    %1799 = vmatpush1.msra.mxu0 %v580
    %1800 = vmatprep.subr.mxu0 %v584
    %1801 = vmatpush1.msra.mxu0 %v583
    %1802 = vmatprep.subr.mxu0 %v587
    %1803 = vmatpush1.msra.mxu0 %v586
    %1804 = vmatprep.subr.mxu0 0.0
    %1805 = vmatpush1.msra.mxu0 0.0
    %1806 = vmatprep.subr.mxu0 0.0
    %1807 = vmatpush1.msra.mxu0 0.0
    %1808 = vmatprep.subr.mxu0 0.0
    %1809 = vmatpush1.msra.mxu0 0.0
    %1810 = vmatprep.subr.mxu0 0.0
    %1811 = vmatpush1.msra.mxu0 0.0
    %1812 = vmatprep.subr.mxu0 0.0
    %1813 = vmatpush1.msra.mxu0 0.0
    %1814 = vmatprep.subr.mxu0 0.0
    %1815 = vmatpush1.msra.mxu0 0.0
    %1816 = vmatprep.subr.mxu0 0.0
    %1817 = vmatpush1.msra.mxu0 0.0
    %1818 = vmatprep.subr.mxu0 0.0
    %1819 = vmatpush1.msra.mxu0 0.0
    %1820 = vmatprep.subr.mxu0 0.0
    %1821 = vmatpush1.msra.mxu0 0.0
    %1822 = vmatprep.subr.mxu0 0.0
    %1823 = vmatpush1.msra.mxu0 0.0
    %1824 = vmatprep.subr.mxu0 0.0
    %1825 = vmatpush1.msra.mxu0 0.0
    %1826 = vmatprep.subr.mxu0 0.0
    %1827 = vmatpush1.msra.mxu0 0.0
    %1828 = vmatprep.subr.mxu0 0.0
    %1829 = vmatpush1.msra.mxu0 0.0
    %1830 = vmatprep.subr.mxu0 0.0
    %1831 = vmatpush1.msra.mxu0 0.0
    %1832 = vmatprep.subr.mxu0 0.0
    %1833 = vmatpush1.msra.mxu0 0.0
    %1834 = vmatprep.subr.mxu0 0.0
    %1835 = vmatpush1.msra.mxu0 0.0
    %1836 = vmatprep.mubr.f32.mxu0 0.0
    %1837 = vmatmul.mubr.f32.gmra.mrb[0].mxu0 %v1767
    %v1838 = vpop.f32.mrb[0].mxu0
    %v1839 = vadd.f32 %v598, %v1838
    %v1840 = vpop.f32.mrb[0].mxu0
    %v1841 = vadd.f32 %v602, %v1840
    %1842 = vdwg.mxu0
    %1843 = vmatprep.subr.mxu0 0.0
    %1844 = vmatpush1.msra.mxu0 %v543
    %1845 = vmatprep.subr.mxu0 0.0
    %1846 = vmatpush1.msra.mxu0 %v546
    %1847 = vmatprep.subr.mxu0 0.0
    %1848 = vmatpush1.msra.mxu0 %v549
    %1849 = vmatprep.subr.mxu0 0.0
    %1850 = vmatpush1.msra.mxu0 %v552
    %1851 = vmatprep.subr.mxu0 0.0
    %1852 = vmatpush1.msra.mxu0 %v555
    %1853 = vmatprep.subr.mxu0 0.0
    %1854 = vmatpush1.msra.mxu0 %v558
    %1855 = vmatprep.subr.mxu0 0.0
    %1856 = vmatpush1.msra.mxu0 %v561
    %1857 = vmatprep.subr.mxu0 0.0
    %1858 = vmatpush1.msra.mxu0 %v564
    %1859 = vmatprep.subr.mxu0 0.0
    %1860 = vmatpush1.msra.mxu0 %v567
    %1861 = vmatprep.subr.mxu0 0.0
    %1862 = vmatpush1.msra.mxu0 %v570
    %1863 = vmatprep.subr.mxu0 0.0
    %1864 = vmatpush1.msra.mxu0 %v573
    %1865 = vmatprep.subr.mxu0 0.0
    %1866 = vmatpush1.msra.mxu0 %v576
    %1867 = vmatprep.subr.mxu0 0.0
    %1868 = vmatpush1.msra.mxu0 %v579
    %1869 = vmatprep.subr.mxu0 0.0
    %1870 = vmatpush1.msra.mxu0 %v582
    %1871 = vmatprep.subr.mxu0 0.0
    %1872 = vmatpush1.msra.mxu0 %v585
    %1873 = vmatprep.subr.mxu0 0.0
    %1874 = vmatpush1.msra.mxu0 %v588
    %1875 = vmatprep.subr.mxu0 0.0
    %1876 = vmatpush1.msra.mxu0 0.0
    %1877 = vmatprep.subr.mxu0 0.0
    %1878 = vmatpush1.msra.mxu0 0.0
    %1879 = vmatprep.subr.mxu0 0.0
    %1880 = vmatpush1.msra.mxu0 0.0
    %1881 = vmatprep.subr.mxu0 0.0
    %1882 = vmatpush1.msra.mxu0 0.0
    %1883 = vmatprep.subr.mxu0 0.0
    %1884 = vmatpush1.msra.mxu0 0.0
    %1885 = vmatprep.subr.mxu0 0.0
    %1886 = vmatpush1.msra.mxu0 0.0
    %1887 = vmatprep.subr.mxu0 0.0
    %1888 = vmatpush1.msra.mxu0 0.0
    %1889 = vmatprep.subr.mxu0 0.0
    %1890 = vmatpush1.msra.mxu0 0.0
    %1891 = vmatprep.subr.mxu0 0.0
    %1892 = vmatpush1.msra.mxu0 0.0
    %1893 = vmatprep.subr.mxu0 0.0
    %1894 = vmatpush1.msra.mxu0 0.0
    %1895 = vmatprep.subr.mxu0 0.0
    %1896 = vmatpush1.msra.mxu0 0.0
    %1897 = vmatprep.subr.mxu0 0.0
    %1898 = vmatpush1.msra.mxu0 0.0
    %1899 = vmatprep.subr.mxu0 0.0
    %1900 = vmatpush1.msra.mxu0 0.0
    %1901 = vmatprep.subr.mxu0 0.0
    %1902 = vmatpush1.msra.mxu0 0.0
    %1903 = vmatprep.subr.mxu0 0.0
    %1904 = vmatpush1.msra.mxu0 0.0
    %1905 = vmatprep.subr.mxu0 0.0
    %1906 = vmatpush1.msra.mxu0 0.0
    %1907 = vmatprep.mubr.f32.mxu0 0.0
    %1908 = vmatmul.mubr.f32.gmra.mrb[0].mxu0 %v1767
    %v1909 = vpop.f32.mrb[0].mxu0
    %v1910 = vadd.f32 %v606, %v1909
    %v1911 = vpop.f32.mrb[0].mxu0
    %1912 = vdwg.mxu0
    %v1913 = vadd.f32 %v1769, %v1839
    %v1914 = vadd.f32 %v1770, %v1841
    %v1915 = vxor.u32 %v1913, 2147483648
    %v1916 = vxor.u32 %v1914, 2147483648
    %v1917 = vmul.f32 %v1915, 1.442695
    %v1918 = vpow.pop %v1917
    %v1919 = vmul.f32 %v1916, 1.442695
    %v1920 = vpow.pop %v1919
    %v1921 = vadd.f32 %v1918, 1.0
    %v1922 = vadd.f32 %v1920, 1.0
    %v1923 = vrcp.pop %v1921
    %v1924 = vmul.f32 1.0, %v1923
    %v1925 = vrcp.pop %v1922
    %v1926 = vmul.f32 1.0, %v1925
    %v1927 = vmul.f32 %v1924, %v1910
    %v1928 = vadd.f32 %v1771, %v1927
    %v1929 = vtanh.pop %v1928
    %v1930 = vsub.f32 1.0, %v1926
    %v1931 = vmul.f32 %v1930, %v1929
    %v1932 = vmul.f32 %v1926, %v1767
    %v1933 = vadd.f32 %v1931, %v1932
    %1934 = vst [vmem:[#allocation3 + $0x38] sm:$0xff] %v1933
    %v1935 = vld [vmem:[#allocation2 + $0xc0] sm:$0xff]
    %v1936 = vld [vmem:[#allocation2 + $0xc8] sm:$0xff]
    %v1937 = vld [vmem:[#allocation2 + $0xd0] sm:$0xff]
    %1938 = vmatprep.subr.mxu0 %v542
    %1939 = vmatpush1.msra.mxu0 %v541
    %1940 = vmatprep.subr.mxu0 %v545
    %1941 = vmatpush1.msra.mxu0 %v544
    %1942 = vmatprep.subr.mxu0 %v548
    %1943 = vmatpush1.msra.mxu0 %v547
    %1944 = vmatprep.subr.mxu0 %v551
    %1945 = vmatpush1.msra.mxu0 %v550
    %1946 = vmatprep.subr.mxu0 %v554
    %1947 = vmatpush1.msra.mxu0 %v553
    %1948 = vmatprep.subr.mxu0 %v557
    %1949 = vmatpush1.msra.mxu0 %v556
    %1950 = vmatprep.subr.mxu0 %v560
    %1951 = vmatpush1.msra.mxu0 %v559
    %1952 = vmatprep.subr.mxu0 %v563
    %1953 = vmatpush1.msra.mxu0 %v562
    %1954 = vmatprep.subr.mxu0 %v566
    %1955 = vmatpush1.msra.mxu0 %v565
    %1956 = vmatprep.subr.mxu0 %v569
    %1957 = vmatpush1.msra.mxu0 %v568
    %1958 = vmatprep.subr.mxu0 %v572
    %1959 = vmatpush1.msra.mxu0 %v571
    %1960 = vmatprep.subr.mxu0 %v575
    %1961 = vmatpush1.msra.mxu0 %v574
    %1962 = vmatprep.subr.mxu0 %v578
    %1963 = vmatpush1.msra.mxu0 %v577
    %1964 = vmatprep.subr.mxu0 %v581
    %1965 = vmatpush1.msra.mxu0 %v580
    %1966 = vmatprep.subr.mxu0 %v584
    %1967 = vmatpush1.msra.mxu0 %v583
    %1968 = vmatprep.subr.mxu0 %v587
    %1969 = vmatpush1.msra.mxu0 %v586
    %1970 = vmatprep.subr.mxu0 0.0
    %1971 = vmatpush1.msra.mxu0 0.0
    %1972 = vmatprep.subr.mxu0 0.0
    %1973 = vmatpush1.msra.mxu0 0.0
    %1974 = vmatprep.subr.mxu0 0.0
    %1975 = vmatpush1.msra.mxu0 0.0
    %1976 = vmatprep.subr.mxu0 0.0
    %1977 = vmatpush1.msra.mxu0 0.0
    %1978 = vmatprep.subr.mxu0 0.0
    %1979 = vmatpush1.msra.mxu0 0.0
    %1980 = vmatprep.subr.mxu0 0.0
    %1981 = vmatpush1.msra.mxu0 0.0
    %1982 = vmatprep.subr.mxu0 0.0
    %1983 = vmatpush1.msra.mxu0 0.0
    %1984 = vmatprep.subr.mxu0 0.0
    %1985 = vmatpush1.msra.mxu0 0.0
    %1986 = vmatprep.subr.mxu0 0.0
    %1987 = vmatpush1.msra.mxu0 0.0
    %1988 = vmatprep.subr.mxu0 0.0
    %1989 = vmatpush1.msra.mxu0 0.0
    %1990 = vmatprep.subr.mxu0 0.0
    %1991 = vmatpush1.msra.mxu0 0.0
    %1992 = vmatprep.subr.mxu0 0.0
    %1993 = vmatpush1.msra.mxu0 0.0
    %1994 = vmatprep.subr.mxu0 0.0
    %1995 = vmatpush1.msra.mxu0 0.0
    %1996 = vmatprep.subr.mxu0 0.0
    %1997 = vmatpush1.msra.mxu0 0.0
    %1998 = vmatprep.subr.mxu0 0.0
    %1999 = vmatpush1.msra.mxu0 0.0
    %2000 = vmatprep.subr.mxu0 0.0
    %2001 = vmatpush1.msra.mxu0 0.0
    %2002 = vmatprep.mubr.f32.mxu0 0.0
    %2003 = vmatmul.mubr.f32.gmra.mrb[0].mxu0 %v1933
    %v2004 = vpop.f32.mrb[0].mxu0
    %v2005 = vadd.f32 %v598, %v2004
    %v2006 = vpop.f32.mrb[0].mxu0
    %v2007 = vadd.f32 %v602, %v2006
    %2008 = vdwg.mxu0
    %2009 = vmatprep.subr.mxu0 0.0
    %2010 = vmatpush1.msra.mxu0 %v543
    %2011 = vmatprep.subr.mxu0 0.0
    %2012 = vmatpush1.msra.mxu0 %v546
    %2013 = vmatprep.subr.mxu0 0.0
    %2014 = vmatpush1.msra.mxu0 %v549
    %2015 = vmatprep.subr.mxu0 0.0
    %2016 = vmatpush1.msra.mxu0 %v552
    %2017 = vmatprep.subr.mxu0 0.0
    %2018 = vmatpush1.msra.mxu0 %v555
    %2019 = vmatprep.subr.mxu0 0.0
    %2020 = vmatpush1.msra.mxu0 %v558
    %2021 = vmatprep.subr.mxu0 0.0
    %2022 = vmatpush1.msra.mxu0 %v561
    %2023 = vmatprep.subr.mxu0 0.0
    %2024 = vmatpush1.msra.mxu0 %v564
    %2025 = vmatprep.subr.mxu0 0.0
    %2026 = vmatpush1.msra.mxu0 %v567
    %2027 = vmatprep.subr.mxu0 0.0
    %2028 = vmatpush1.msra.mxu0 %v570
    %2029 = vmatprep.subr.mxu0 0.0
    %2030 = vmatpush1.msra.mxu0 %v573
    %2031 = vmatprep.subr.mxu0 0.0
    %2032 = vmatpush1.msra.mxu0 %v576
    %2033 = vmatprep.subr.mxu0 0.0
    %2034 = vmatpush1.msra.mxu0 %v579
    %2035 = vmatprep.subr.mxu0 0.0
    %2036 = vmatpush1.msra.mxu0 %v582
    %2037 = vmatprep.subr.mxu0 0.0
    %2038 = vmatpush1.msra.mxu0 %v585
    %2039 = vmatprep.subr.mxu0 0.0
    %2040 = vmatpush1.msra.mxu0 %v588
    %2041 = vmatprep.subr.mxu0 0.0
    %2042 = vmatpush1.msra.mxu0 0.0
    %2043 = vmatprep.subr.mxu0 0.0
    %2044 = vmatpush1.msra.mxu0 0.0
    %2045 = vmatprep.subr.mxu0 0.0
    %2046 = vmatpush1.msra.mxu0 0.0
    %2047 = vmatprep.subr.mxu0 0.0
    %2048 = vmatpush1.msra.mxu0 0.0
    %2049 = vmatprep.subr.mxu0 0.0
    %2050 = vmatpush1.msra.mxu0 0.0
    %2051 = vmatprep.subr.mxu0 0.0
    %2052 = vmatpush1.msra.mxu0 0.0
    %2053 = vmatprep.subr.mxu0 0.0
    %2054 = vmatpush1.msra.mxu0 0.0
    %2055 = vmatprep.subr.mxu0 0.0
    %2056 = vmatpush1.msra.mxu0 0.0
    %2057 = vmatprep.subr.mxu0 0.0
    %2058 = vmatpush1.msra.mxu0 0.0
    %2059 = vmatprep.subr.mxu0 0.0
    %2060 = vmatpush1.msra.mxu0 0.0
    %2061 = vmatprep.subr.mxu0 0.0
    %2062 = vmatpush1.msra.mxu0 0.0
    %2063 = vmatprep.subr.mxu0 0.0
    %2064 = vmatpush1.msra.mxu0 0.0
    %2065 = vmatprep.subr.mxu0 0.0
    %2066 = vmatpush1.msra.mxu0 0.0
    %2067 = vmatprep.subr.mxu0 0.0
    %2068 = vmatpush1.msra.mxu0 0.0
    %2069 = vmatprep.subr.mxu0 0.0
    %2070 = vmatpush1.msra.mxu0 0.0
    %2071 = vmatprep.subr.mxu0 0.0
    %2072 = vmatpush1.msra.mxu0 0.0
    %2073 = vmatprep.mubr.f32.mxu0 0.0
    %2074 = vmatmul.mubr.f32.gmra.mrb[0].mxu0 %v1933
    %v2075 = vpop.f32.mrb[0].mxu0
    %v2076 = vadd.f32 %v606, %v2075
    %v2077 = vpop.f32.mrb[0].mxu0
    %2078 = vdwg.mxu0
    %v2079 = vadd.f32 %v1935, %v2005
    %v2080 = vadd.f32 %v1936, %v2007
    %v2081 = vxor.u32 %v2079, 2147483648
    %v2082 = vxor.u32 %v2080, 2147483648
    %v2083 = vmul.f32 %v2081, 1.442695
    %v2084 = vpow.pop %v2083
    %v2085 = vmul.f32 %v2082, 1.442695
    %v2086 = vpow.pop %v2085
    %v2087 = vadd.f32 %v2084, 1.0
    %v2088 = vadd.f32 %v2086, 1.0
    %v2089 = vrcp.pop %v2087
    %v2090 = vmul.f32 1.0, %v2089
    %v2091 = vrcp.pop %v2088
    %v2092 = vmul.f32 1.0, %v2091
    %v2093 = vmul.f32 %v2090, %v2076
    %v2094 = vadd.f32 %v1937, %v2093
    %v2095 = vtanh.pop %v2094
    %v2096 = vsub.f32 1.0, %v2092
    %v2097 = vmul.f32 %v2096, %v2095
    %v2098 = vmul.f32 %v2092, %v1933
    %v2099 = vadd.f32 %v2097, %v2098
    %2100 = vst [vmem:[#allocation3 + $0x40] sm:$0xff] %v2099
    %v2101 = vld [vmem:[#allocation3] sm:$0xff]
    %v2102 = vld [vmem:[#allocation3 + $0x8] sm:$0xff]
    %v2103 = vld [vmem:[#allocation3 + $0x10] sm:$0xff]
    %v2104 = vld [vmem:[#allocation3 + $0x18] sm:$0xff]
    %v2105 = vld [vmem:[#allocation3 + $0x20] sm:$0xff]
    %v2106 = vld [vmem:[#allocation3 + $0x28] sm:$0xff]
    %v2107 = vld [vmem:[#allocation3 + $0x30] sm:$0xff]
    %v2108 = vld [vmem:[#allocation3 + $0x38] sm:$0xff]
    %v2109 = vld [vmem:[#allocation3 + $0x40] sm:$0xff]
    %v2110 = vld [vmem:[#allocation8 + $0x80] sm:$0xff]
    %v2111 = vld [vmem:[#allocation8 + $0x88] sm:$0xff]
    %v2112 = vld [vmem:[#allocation8 + $0x90] sm:$0xff]
    %v2113 = vld [vmem:[#allocation8 + $0x98] sm:$0xff]
    %v2114 = vld [vmem:[#allocation8 + $0xa0] sm:$0xff]
    %v2115 = vld [vmem:[#allocation8 + $0xa8] sm:$0xff]
    %v2116 = vld [vmem:[#allocation8 + $0xb0] sm:$0xff]
    %v2117 = vld [vmem:[#allocation8 + $0xb8] sm:$0xff]
    %v2118 = vld [vmem:[#allocation8 + $0xc0] sm:$0xff]
    %v2119 = vld [vmem:[#allocation8 + $0xc8] sm:$0xff]
    %v2120 = vld [vmem:[#allocation8 + $0xd0] sm:$0xff]
    %v2121 = vld [vmem:[#allocation8 + $0xd8] sm:$0xff]
    %v2122 = vld [vmem:[#allocation8 + $0xe0] sm:$0xff]
    %v2123 = vld [vmem:[#allocation8 + $0xe8] sm:$0xff]
    %v2124 = vld [vmem:[#allocation8 + $0xf0] sm:$0xff]
    %v2125 = vld [vmem:[#allocation8 + $0xf8] sm:$0xff]
    %v2126 = vld [vmem:[#allocation8 + $0x100] sm:$0x1]
    %v2127 = vlaneseq
    %v2128 = vshrl.u32 %v2127, 7
    %v2129 = vsub.s32 0, %v2128
    %v2130 = vrot.slane %v2126, %v2129
    %2131 = vmatprep.subr.mxu0 0.0
    %2132 = vmatpush1.msra.mxu0 %v2110
    %2133 = vmatprep.subr.mxu0 0.0
    %2134 = vmatpush1.msra.mxu0 %v2111
    %2135 = vmatprep.subr.mxu0 0.0
    %2136 = vmatpush1.msra.mxu0 %v2112
    %2137 = vmatprep.subr.mxu0 0.0
    %2138 = vmatpush1.msra.mxu0 %v2113
    %2139 = vmatprep.subr.mxu0 0.0
    %2140 = vmatpush1.msra.mxu0 %v2114
    %2141 = vmatprep.subr.mxu0 0.0
    %2142 = vmatpush1.msra.mxu0 %v2115
    %2143 = vmatprep.subr.mxu0 0.0
    %2144 = vmatpush1.msra.mxu0 %v2116
    %2145 = vmatprep.subr.mxu0 0.0
    %2146 = vmatpush1.msra.mxu0 %v2117
    %2147 = vmatprep.subr.mxu0 0.0
    %2148 = vmatpush1.msra.mxu0 %v2118
    %2149 = vmatprep.subr.mxu0 0.0
    %2150 = vmatpush1.msra.mxu0 %v2119
    %2151 = vmatprep.subr.mxu0 0.0
    %2152 = vmatpush1.msra.mxu0 %v2120
    %2153 = vmatprep.subr.mxu0 0.0
    %2154 = vmatpush1.msra.mxu0 %v2121
    %2155 = vmatprep.subr.mxu0 0.0
    %2156 = vmatpush1.msra.mxu0 %v2122
    %2157 = vmatprep.subr.mxu0 0.0
    %2158 = vmatpush1.msra.mxu0 %v2123
    %2159 = vmatprep.subr.mxu0 0.0
    %2160 = vmatpush1.msra.mxu0 %v2124
    %2161 = vmatprep.subr.mxu0 0.0
    %2162 = vmatpush1.msra.mxu0 %v2125
    %2163 = vmatprep.subr.mxu0 0.0
    %2164 = vmatpush1.msra.mxu0 0.0
    %2165 = vmatprep.subr.mxu0 0.0
    %2166 = vmatpush1.msra.mxu0 0.0
    %2167 = vmatprep.subr.mxu0 0.0
    %2168 = vmatpush1.msra.mxu0 0.0
    %2169 = vmatprep.subr.mxu0 0.0
    %2170 = vmatpush1.msra.mxu0 0.0
    %2171 = vmatprep.subr.mxu0 0.0
    %2172 = vmatpush1.msra.mxu0 0.0
    %2173 = vmatprep.subr.mxu0 0.0
    %2174 = vmatpush1.msra.mxu0 0.0
    %2175 = vmatprep.subr.mxu0 0.0
    %2176 = vmatpush1.msra.mxu0 0.0
    %2177 = vmatprep.subr.mxu0 0.0
    %2178 = vmatpush1.msra.mxu0 0.0
    %2179 = vmatprep.subr.mxu0 0.0
    %2180 = vmatpush1.msra.mxu0 0.0
    %2181 = vmatprep.subr.mxu0 0.0
    %2182 = vmatpush1.msra.mxu0 0.0
    %2183 = vmatprep.subr.mxu0 0.0
    %2184 = vmatpush1.msra.mxu0 0.0
    %2185 = vmatprep.subr.mxu0 0.0
    %2186 = vmatpush1.msra.mxu0 0.0
    %2187 = vmatprep.subr.mxu0 0.0
    %2188 = vmatpush1.msra.mxu0 0.0
    %2189 = vmatprep.subr.mxu0 0.0
    %2190 = vmatpush1.msra.mxu0 0.0
    %2191 = vmatprep.subr.mxu0 0.0
    %2192 = vmatpush1.msra.mxu0 0.0
    %2193 = vmatprep.subr.mxu0 0.0
    %2194 = vmatpush1.msra.mxu0 0.0
    %2195 = vmatprep.mubr.f32.mxu0 0.0
    %2196 = vmatmul.mubr.f32.gmra.mrb[0].mxu0 %v2101
    %v2197 = vpop.f32.mrb[0].mxu0
    %v2198 = vadd.f32 %v2130, %v2197
    %v2199 = vpop.f32.mrb[0].mxu0
    %2200 = vmatprep.mubr.f32.mxu0 0.0
    %2201 = vmatmul.mubr.f32.gmra.mrb[0].mxu0 %v2102
    %v2202 = vpop.f32.mrb[0].mxu0
    %v2203 = vadd.f32 %v2130, %v2202
    %v2204 = vpop.f32.mrb[0].mxu0
    %2205 = vmatprep.mubr.f32.mxu0 0.0
    %2206 = vmatmul.mubr.f32.gmra.mrb[0].mxu0 %v2103
    %v2207 = vpop.f32.mrb[0].mxu0
    %v2208 = vadd.f32 %v2130, %v2207
    %v2209 = vpop.f32.mrb[0].mxu0
    %2210 = vmatprep.mubr.f32.mxu0 0.0
    %2211 = vmatmul.mubr.f32.gmra.mrb[0].mxu0 %v2104
    %v2212 = vpop.f32.mrb[0].mxu0
    %v2213 = vadd.f32 %v2130, %v2212
    %v2214 = vpop.f32.mrb[0].mxu0
    %2215 = vmatprep.mubr.f32.mxu0 0.0
    %2216 = vmatmul.mubr.f32.gmra.mrb[0].mxu0 %v2105
    %v2217 = vpop.f32.mrb[0].mxu0
    %v2218 = vadd.f32 %v2130, %v2217
    %v2219 = vpop.f32.mrb[0].mxu0
    %2220 = vmatprep.mubr.f32.mxu0 0.0
    %2221 = vmatmul.mubr.f32.gmra.mrb[0].mxu0 %v2106
    %v2222 = vpop.f32.mrb[0].mxu0
    %v2223 = vadd.f32 %v2130, %v2222
    %v2224 = vpop.f32.mrb[0].mxu0
    %2225 = vmatprep.mubr.f32.mxu0 0.0
    %2226 = vmatmul.mubr.f32.gmra.mrb[0].mxu0 %v2107
    %v2227 = vpop.f32.mrb[0].mxu0
    %v2228 = vadd.f32 %v2130, %v2227
    %v2229 = vpop.f32.mrb[0].mxu0
    %2230 = vmatprep.mubr.f32.mxu0 0.0
    %2231 = vmatmul.mubr.f32.gmra.mrb[0].mxu0 %v2108
    %v2232 = vpop.f32.mrb[0].mxu0
    %v2233 = vadd.f32 %v2130, %v2232
    %v2234 = vpop.f32.mrb[0].mxu0
    %2235 = vmatprep.mubr.f32.mxu0 0.0
    %2236 = vmatmul.mubr.f32.gmra.mrb[0].mxu0 %v2109
    %v2237 = vpop.f32.mrb[0].mxu0
    %v2238 = vadd.f32 %v2130, %v2237
    %v2239 = vpop.f32.mrb[0].mxu0
    %2240 = vdwg.mxu0
    %v2241 = vmax.f32 %v2198, 0.0
    %v2242 = vmax.f32 %v2203, 0.0
    %v2243 = vmax.f32 %v2208, 0.0
    %v2244 = vmax.f32 %v2213, 0.0
    %v2245 = vmax.f32 %v2218, 0.0
    %v2246 = vmax.f32 %v2223, 0.0
    %v2247 = vmax.f32 %v2228, 0.0
    %v2248 = vmax.f32 %v2233, 0.0
    %v2249 = vmax.f32 %v2238, 0.0
    %v2250 = vld [vmem:[#allocation8 + $0x108] sm:$0xff]
    %v2251 = vld [vmem:[#allocation8 + $0x110] sm:$0xff]
    %v2252 = vld [vmem:[#allocation8 + $0x118] sm:$0xff]
    %v2253 = vld [vmem:[#allocation8 + $0x120] sm:$0xff]
    %v2254 = vld [vmem:[#allocation8 + $0x128] sm:$0xff]
    %v2255 = vld [vmem:[#allocation8 + $0x130] sm:$0xff]
    %v2256 = vld [vmem:[#allocation8 + $0x138] sm:$0xff]
    %v2257 = vld [vmem:[#allocation8 + $0x140] sm:$0xff]
    %v2258 = vld [vmem:[#allocation8 + $0x148] sm:$0xff]
    %v2259 = vld [vmem:[#allocation8 + $0x150] sm:$0xff]
    %v2260 = vld [vmem:[#allocation8 + $0x158] sm:$0xff]
    %v2261 = vld [vmem:[#allocation8 + $0x160] sm:$0xff]
    %v2262 = vld [vmem:[#allocation8 + $0x168] sm:$0xff]
    %v2263 = vld [vmem:[#allocation8 + $0x170] sm:$0xff]
    %v2264 = vld [vmem:[#allocation8 + $0x178] sm:$0xff]
    %v2265 = vld [vmem:[#allocation8 + $0x180] sm:$0xff]
    %v2266 = vld [vmem:[#allocation8 + $0x188] sm:$0x1]
    %v2267 = vlaneseq
    %v2268 = vshrl.u32 %v2267, 7
    %v2269 = vsub.s32 0, %v2268
    %v2270 = vrot.slane %v2266, %v2269
    %2271 = vmatprep.subr.mxu0 0.0
    %2272 = vmatpush1.msra.mxu0 %v2250
    %2273 = vmatprep.subr.mxu0 0.0
    %2274 = vmatpush1.msra.mxu0 %v2251
    %2275 = vmatprep.subr.mxu0 0.0
    %2276 = vmatpush1.msra.mxu0 %v2252
    %2277 = vmatprep.subr.mxu0 0.0
    %2278 = vmatpush1.msra.mxu0 %v2253
    %2279 = vmatprep.subr.mxu0 0.0
    %2280 = vmatpush1.msra.mxu0 %v2254
    %2281 = vmatprep.subr.mxu0 0.0
    %2282 = vmatpush1.msra.mxu0 %v2255
    %2283 = vmatprep.subr.mxu0 0.0
    %2284 = vmatpush1.msra.mxu0 %v2256
    %2285 = vmatprep.subr.mxu0 0.0
    %2286 = vmatpush1.msra.mxu0 %v2257
    %2287 = vmatprep.subr.mxu0 0.0
    %2288 = vmatpush1.msra.mxu0 %v2258
    %2289 = vmatprep.subr.mxu0 0.0
    %2290 = vmatpush1.msra.mxu0 %v2259
    %2291 = vmatprep.subr.mxu0 0.0
    %2292 = vmatpush1.msra.mxu0 %v2260
    %2293 = vmatprep.subr.mxu0 0.0
    %2294 = vmatpush1.msra.mxu0 %v2261
    %2295 = vmatprep.subr.mxu0 0.0
    %2296 = vmatpush1.msra.mxu0 %v2262
    %2297 = vmatprep.subr.mxu0 0.0
    %2298 = vmatpush1.msra.mxu0 %v2263
    %2299 = vmatprep.subr.mxu0 0.0
    %2300 = vmatpush1.msra.mxu0 %v2264
    %2301 = vmatprep.subr.mxu0 0.0
    %2302 = vmatpush1.msra.mxu0 %v2265
    %2303 = vmatprep.subr.mxu0 0.0
    %2304 = vmatpush1.msra.mxu0 0.0
    %2305 = vmatprep.subr.mxu0 0.0
    %2306 = vmatpush1.msra.mxu0 0.0
    %2307 = vmatprep.subr.mxu0 0.0
    %2308 = vmatpush1.msra.mxu0 0.0
    %2309 = vmatprep.subr.mxu0 0.0
    %2310 = vmatpush1.msra.mxu0 0.0
    %2311 = vmatprep.subr.mxu0 0.0
    %2312 = vmatpush1.msra.mxu0 0.0
    %2313 = vmatprep.subr.mxu0 0.0
    %2314 = vmatpush1.msra.mxu0 0.0
    %2315 = vmatprep.subr.mxu0 0.0
    %2316 = vmatpush1.msra.mxu0 0.0
    %2317 = vmatprep.subr.mxu0 0.0
    %2318 = vmatpush1.msra.mxu0 0.0
    %2319 = vmatprep.subr.mxu0 0.0
    %2320 = vmatpush1.msra.mxu0 0.0
    %2321 = vmatprep.subr.mxu0 0.0
    %2322 = vmatpush1.msra.mxu0 0.0
    %2323 = vmatprep.subr.mxu0 0.0
    %2324 = vmatpush1.msra.mxu0 0.0
    %2325 = vmatprep.subr.mxu0 0.0
    %2326 = vmatpush1.msra.mxu0 0.0
    %2327 = vmatprep.subr.mxu0 0.0
    %2328 = vmatpush1.msra.mxu0 0.0
    %2329 = vmatprep.subr.mxu0 0.0
    %2330 = vmatpush1.msra.mxu0 0.0
    %2331 = vmatprep.subr.mxu0 0.0
    %2332 = vmatpush1.msra.mxu0 0.0
    %2333 = vmatprep.subr.mxu0 0.0
    %2334 = vmatpush1.msra.mxu0 0.0
    %2335 = vmatprep.mubr.f32.mxu0 0.0
    %2336 = vmatmul.mubr.f32.gmra.mrb[0].mxu0 %v2241
    %v2337 = vpop.f32.mrb[0].mxu0
    %v2338 = vadd.f32 %v2270, %v2337
    %v2339 = vpop.f32.mrb[0].mxu0
    %2340 = vmatprep.mubr.f32.mxu0 0.0
    %2341 = vmatmul.mubr.f32.gmra.mrb[0].mxu0 %v2242
    %v2342 = vpop.f32.mrb[0].mxu0
    %v2343 = vadd.f32 %v2270, %v2342
    %v2344 = vpop.f32.mrb[0].mxu0
    %2345 = vmatprep.mubr.f32.mxu0 0.0
    %2346 = vmatmul.mubr.f32.gmra.mrb[0].mxu0 %v2243
    %v2347 = vpop.f32.mrb[0].mxu0
    %v2348 = vadd.f32 %v2270, %v2347
    %v2349 = vpop.f32.mrb[0].mxu0
    %2350 = vmatprep.mubr.f32.mxu0 0.0
    %2351 = vmatmul.mubr.f32.gmra.mrb[0].mxu0 %v2244
    %v2352 = vpop.f32.mrb[0].mxu0
    %v2353 = vadd.f32 %v2270, %v2352
    %v2354 = vpop.f32.mrb[0].mxu0
    %2355 = vmatprep.mubr.f32.mxu0 0.0
    %2356 = vmatmul.mubr.f32.gmra.mrb[0].mxu0 %v2245
    %v2357 = vpop.f32.mrb[0].mxu0
    %v2358 = vadd.f32 %v2270, %v2357
    %v2359 = vpop.f32.mrb[0].mxu0
    %2360 = vmatprep.mubr.f32.mxu0 0.0
    %2361 = vmatmul.mubr.f32.gmra.mrb[0].mxu0 %v2246
    %v2362 = vpop.f32.mrb[0].mxu0
    %v2363 = vadd.f32 %v2270, %v2362
    %v2364 = vpop.f32.mrb[0].mxu0
    %2365 = vmatprep.mubr.f32.mxu0 0.0
    %2366 = vmatmul.mubr.f32.gmra.mrb[0].mxu0 %v2247
    %v2367 = vpop.f32.mrb[0].mxu0
    %v2368 = vadd.f32 %v2270, %v2367
    %v2369 = vpop.f32.mrb[0].mxu0
    %2370 = vmatprep.mubr.f32.mxu0 0.0
    %2371 = vmatmul.mubr.f32.gmra.mrb[0].mxu0 %v2248
    %v2372 = vpop.f32.mrb[0].mxu0
    %v2373 = vadd.f32 %v2270, %v2372
    %v2374 = vpop.f32.mrb[0].mxu0
    %2375 = vmatprep.mubr.f32.mxu0 0.0
    %2376 = vmatmul.mubr.f32.gmra.mrb[0].mxu0 %v2249
    %v2377 = vpop.f32.mrb[0].mxu0
    %v2378 = vadd.f32 %v2270, %v2377
    %v2379 = vpop.f32.mrb[0].mxu0
    %2380 = vdwg.mxu0
    %v2381 = vmax.f32 %v2338, 0.0
    %v2382 = vmax.f32 %v2343, 0.0
    %v2383 = vmax.f32 %v2348, 0.0
    %v2384 = vmax.f32 %v2353, 0.0
    %v2385 = vmax.f32 %v2358, 0.0
    %v2386 = vmax.f32 %v2363, 0.0
    %v2387 = vmax.f32 %v2368, 0.0
    %v2388 = vmax.f32 %v2373, 0.0
    %v2389 = vmax.f32 %v2378, 0.0
    %v2390 = vld [vmem:[#allocation8 + $0x190] sm:$0xff]
    %v2391 = vld [vmem:[#allocation8 + $0x198] sm:$0xff]
    %v2392 = vld [vmem:[#allocation8 + $0x1a0] sm:$0xff]
    %v2393 = vld [vmem:[#allocation8 + $0x1a8] sm:$0xff]
    %v2394 = vld [vmem:[#allocation8 + $0x1b0] sm:$0xff]
    %v2395 = vld [vmem:[#allocation8 + $0x1b8] sm:$0xff]
    %v2396 = vld [vmem:[#allocation8 + $0x1c0] sm:$0xff]
    %v2397 = vld [vmem:[#allocation8 + $0x1c8] sm:$0xff]
    %v2398 = vld [vmem:[#allocation8 + $0x1d0] sm:$0xff]
    %v2399 = vld [vmem:[#allocation8 + $0x1d8] sm:$0xff]
    %v2400 = vld [vmem:[#allocation8 + $0x1e0] sm:$0xff]
    %v2401 = vld [vmem:[#allocation8 + $0x1e8] sm:$0xff]
    %v2402 = vld [vmem:[#allocation8 + $0x1f0] sm:$0xff]
    %v2403 = vld [vmem:[#allocation8 + $0x1f8] sm:$0xff]
    %v2404 = vld [vmem:[#allocation8 + $0x200] sm:$0xff]
    %v2405 = vld [vmem:[#allocation8 + $0x208] sm:$0xff]
    %v2406 = vld [vmem:[#allocation8 + $0x210] sm:$0x1]
    %v2407 = vlaneseq
    %v2408 = vshrl.u32 %v2407, 7
    %v2409 = vsub.s32 0, %v2408
    %v2410 = vrot.slane %v2406, %v2409
    %2411 = vmatprep.subr.mxu0 0.0
    %2412 = vmatpush1.msra.mxu0 %v2390
    %2413 = vmatprep.subr.mxu0 0.0
    %2414 = vmatpush1.msra.mxu0 %v2391
    %2415 = vmatprep.subr.mxu0 0.0
    %2416 = vmatpush1.msra.mxu0 %v2392
    %2417 = vmatprep.subr.mxu0 0.0
    %2418 = vmatpush1.msra.mxu0 %v2393
    %2419 = vmatprep.subr.mxu0 0.0
    %2420 = vmatpush1.msra.mxu0 %v2394
    %2421 = vmatprep.subr.mxu0 0.0
    %2422 = vmatpush1.msra.mxu0 %v2395
    %2423 = vmatprep.subr.mxu0 0.0
    %2424 = vmatpush1.msra.mxu0 %v2396
    %2425 = vmatprep.subr.mxu0 0.0
    %2426 = vmatpush1.msra.mxu0 %v2397
    %2427 = vmatprep.subr.mxu0 0.0
    %2428 = vmatpush1.msra.mxu0 %v2398
    %2429 = vmatprep.subr.mxu0 0.0
    %2430 = vmatpush1.msra.mxu0 %v2399
    %2431 = vmatprep.subr.mxu0 0.0
    %2432 = vmatpush1.msra.mxu0 %v2400
    %2433 = vmatprep.subr.mxu0 0.0
    %2434 = vmatpush1.msra.mxu0 %v2401
    %2435 = vmatprep.subr.mxu0 0.0
    %2436 = vmatpush1.msra.mxu0 %v2402
    %2437 = vmatprep.subr.mxu0 0.0
    %2438 = vmatpush1.msra.mxu0 %v2403
    %2439 = vmatprep.subr.mxu0 0.0
    %2440 = vmatpush1.msra.mxu0 %v2404
    %2441 = vmatprep.subr.mxu0 0.0
    %2442 = vmatpush1.msra.mxu0 %v2405
    %2443 = vmatprep.subr.mxu0 0.0
    %2444 = vmatpush1.msra.mxu0 0.0
    %2445 = vmatprep.subr.mxu0 0.0
    %2446 = vmatpush1.msra.mxu0 0.0
    %2447 = vmatprep.subr.mxu0 0.0
    %2448 = vmatpush1.msra.mxu0 0.0
    %2449 = vmatprep.subr.mxu0 0.0
    %2450 = vmatpush1.msra.mxu0 0.0
    %2451 = vmatprep.subr.mxu0 0.0
    %2452 = vmatpush1.msra.mxu0 0.0
    %2453 = vmatprep.subr.mxu0 0.0
    %2454 = vmatpush1.msra.mxu0 0.0
    %2455 = vmatprep.subr.mxu0 0.0
    %2456 = vmatpush1.msra.mxu0 0.0
    %2457 = vmatprep.subr.mxu0 0.0
    %2458 = vmatpush1.msra.mxu0 0.0
    %2459 = vmatprep.subr.mxu0 0.0
    %2460 = vmatpush1.msra.mxu0 0.0
    %2461 = vmatprep.subr.mxu0 0.0
    %2462 = vmatpush1.msra.mxu0 0.0
    %2463 = vmatprep.subr.mxu0 0.0
    %2464 = vmatpush1.msra.mxu0 0.0
    %2465 = vmatprep.subr.mxu0 0.0
    %2466 = vmatpush1.msra.mxu0 0.0
    %2467 = vmatprep.subr.mxu0 0.0
    %2468 = vmatpush1.msra.mxu0 0.0
    %2469 = vmatprep.subr.mxu0 0.0
    %2470 = vmatpush1.msra.mxu0 0.0
    %2471 = vmatprep.subr.mxu0 0.0
    %2472 = vmatpush1.msra.mxu0 0.0
    %2473 = vmatprep.subr.mxu0 0.0
    %2474 = vmatpush1.msra.mxu0 0.0
    %2475 = vmatprep.mubr.f32.mxu0 0.0
    %2476 = vmatmul.mubr.f32.gmra.mrb[0].mxu0 %v2381
    %v2477 = vpop.f32.mrb[0].mxu0
    %v2478 = vadd.f32 %v2410, %v2477
    %v2479 = vpop.f32.mrb[0].mxu0
    %2480 = vmatprep.mubr.f32.mxu0 0.0
    %2481 = vmatmul.mubr.f32.gmra.mrb[0].mxu0 %v2382
    %v2482 = vpop.f32.mrb[0].mxu0
    %v2483 = vadd.f32 %v2410, %v2482
    %v2484 = vpop.f32.mrb[0].mxu0
    %2485 = vmatprep.mubr.f32.mxu0 0.0
    %2486 = vmatmul.mubr.f32.gmra.mrb[0].mxu0 %v2383
    %v2487 = vpop.f32.mrb[0].mxu0
    %v2488 = vadd.f32 %v2410, %v2487
    %v2489 = vpop.f32.mrb[0].mxu0
    %2490 = vmatprep.mubr.f32.mxu0 0.0
    %2491 = vmatmul.mubr.f32.gmra.mrb[0].mxu0 %v2384
    %v2492 = vpop.f32.mrb[0].mxu0
    %v2493 = vadd.f32 %v2410, %v2492
    %v2494 = vpop.f32.mrb[0].mxu0
    %2495 = vmatprep.mubr.f32.mxu0 0.0
    %2496 = vmatmul.mubr.f32.gmra.mrb[0].mxu0 %v2385
    %v2497 = vpop.f32.mrb[0].mxu0
    %v2498 = vadd.f32 %v2410, %v2497
    %v2499 = vpop.f32.mrb[0].mxu0
    %2500 = vmatprep.mubr.f32.mxu0 0.0
    %2501 = vmatmul.mubr.f32.gmra.mrb[0].mxu0 %v2386
    %v2502 = vpop.f32.mrb[0].mxu0
    %v2503 = vadd.f32 %v2410, %v2502
    %v2504 = vpop.f32.mrb[0].mxu0
    %2505 = vmatprep.mubr.f32.mxu0 0.0
    %2506 = vmatmul.mubr.f32.gmra.mrb[0].mxu0 %v2387
    %v2507 = vpop.f32.mrb[0].mxu0
    %v2508 = vadd.f32 %v2410, %v2507
    %v2509 = vpop.f32.mrb[0].mxu0
    %2510 = vmatprep.mubr.f32.mxu0 0.0
    %2511 = vmatmul.mubr.f32.gmra.mrb[0].mxu0 %v2388
    %v2512 = vpop.f32.mrb[0].mxu0
    %v2513 = vadd.f32 %v2410, %v2512
    %v2514 = vpop.f32.mrb[0].mxu0
    %2515 = vmatprep.mubr.f32.mxu0 0.0
    %2516 = vmatmul.mubr.f32.gmra.mrb[0].mxu0 %v2389
    %v2517 = vpop.f32.mrb[0].mxu0
    %v2518 = vadd.f32 %v2410, %v2517
    %v2519 = vpop.f32.mrb[0].mxu0
    %2520 = vdwg.mxu0
    %v2521 = vtanh.pop %v2478
    %v2522 = vtanh.pop %v2483
    %v2523 = vtanh.pop %v2488
    %v2524 = vtanh.pop %v2493
    %v2525 = vtanh.pop %v2498
    %v2526 = vtanh.pop %v2503
    %v2527 = vtanh.pop %v2508
    %v2528 = vtanh.pop %v2513
    %v2529 = vtanh.pop %v2518
    %v2530 = vmax.f32 %v2478, -20.0
    %v2531 = vmax.f32 %v2483, -20.0
    %v2532 = vmax.f32 %v2488, -20.0
    %v2533 = vmax.f32 %v2493, -20.0
    %v2534 = vmax.f32 %v2498, -20.0
    %v2535 = vmax.f32 %v2503, -20.0
    %v2536 = vmax.f32 %v2508, -20.0
    %v2537 = vmax.f32 %v2513, -20.0
    %v2538 = vmax.f32 %v2518, -20.0
    %v2539 = vmin.f32 %v2530, 2.0
    %v2540 = vmin.f32 %v2531, 2.0
    %v2541 = vmin.f32 %v2532, 2.0
    %v2542 = vmin.f32 %v2533, 2.0
    %v2543 = vmin.f32 %v2534, 2.0
    %v2544 = vmin.f32 %v2535, 2.0
    %v2545 = vmin.f32 %v2536, 2.0
    %v2546 = vmin.f32 %v2537, 2.0
    %v2547 = vmin.f32 %v2538, 2.0
    %v2548 = vsub.f32 0.0, %v2539
    %v2549 = vsub.f32 0.0, %v2540
    %v2550 = vsub.f32 0.0, %v2541
    %v2551 = vsub.f32 0.0, %v2542
    %v2552 = vsub.f32 0.0, %v2543
    %v2553 = vsub.f32 0.0, %v2544
    %v2554 = vsub.f32 0.0, %v2545
    %v2555 = vsub.f32 0.0, %v2546
    %v2556 = vsub.f32 0.0, %v2547
    %v2557 = vsub.f32 %v2548, 0.9189385
    %v2558 = vsub.f32 %v2549, 0.9189385
    %v2559 = vsub.f32 %v2550, 0.9189385
    %v2560 = vsub.f32 %v2551, 0.9189385
    %v2561 = vsub.f32 %v2552, 0.9189385
    %v2562 = vsub.f32 %v2553, 0.9189385
    %v2563 = vsub.f32 %v2554, 0.9189385
    %v2564 = vsub.f32 %v2555, 0.9189385
    %v2565 = vsub.f32 %v2556, 0.9189385
    %v2566 = vmul.f32 %v2521, %v2521
    %v2567 = vmul.f32 %v2522, %v2522
    %v2568 = vmul.f32 %v2523, %v2523
    %v2569 = vmul.f32 %v2524, %v2524
    %v2570 = vmul.f32 %v2525, %v2525
    %v2571 = vmul.f32 %v2526, %v2526
    %v2572 = vmul.f32 %v2527, %v2527
    %v2573 = vmul.f32 %v2528, %v2528
    %v2574 = vmul.f32 %v2529, %v2529
    %v2575 = vsub.f32 1.0, %v2566
    %v2576 = vsub.f32 1.0, %v2567
    %v2577 = vsub.f32 1.0, %v2568
    %v2578 = vsub.f32 1.0, %v2569
    %v2579 = vsub.f32 1.0, %v2570
    %v2580 = vsub.f32 1.0, %v2571
    %v2581 = vsub.f32 1.0, %v2572
    %v2582 = vsub.f32 1.0, %v2573
    %v2583 = vsub.f32 1.0, %v2574
    %v2584 = vadd.f32 %v2575, 1e-06
    %v2585 = vadd.f32 %v2576, 1e-06
    %v2586 = vadd.f32 %v2577, 1e-06
    %v2587 = vadd.f32 %v2578, 1e-06
    %v2588 = vadd.f32 %v2579, 1e-06
    %v2589 = vadd.f32 %v2580, 1e-06
    %v2590 = vadd.f32 %v2581, 1e-06
    %v2591 = vadd.f32 %v2582, 1e-06
    %v2592 = vadd.f32 %v2583, 1e-06
    %v2593 = vlog2.pop %v2584
    %v2594 = vmul.f32 %v2593, 0.6931472
    %v2595 = vlog2.pop %v2585
    %v2596 = vmul.f32 %v2595, 0.6931472
    %v2597 = vlog2.pop %v2586
    %v2598 = vmul.f32 %v2597, 0.6931472
    %v2599 = vlog2.pop %v2587
    %v2600 = vmul.f32 %v2599, 0.6931472
    %v2601 = vlog2.pop %v2588
    %v2602 = vmul.f32 %v2601, 0.6931472
    %v2603 = vlog2.pop %v2589
    %v2604 = vmul.f32 %v2603, 0.6931472
    %v2605 = vlog2.pop %v2590
    %v2606 = vmul.f32 %v2605, 0.6931472
    %v2607 = vlog2.pop %v2591
    %v2608 = vmul.f32 %v2607, 0.6931472
    %v2609 = vlog2.pop %v2592
    %v2610 = vmul.f32 %v2609, 0.6931472
    %2620 = vrot.lane.b32.xlu0 %v2594, 4
    %v2621 = vpop.permute.xlu0 %2620
    %2622 = vrot.lane.b32.xlu0 %v2596, 4
    %v2623 = vpop.permute.xlu0 %2622
    %2624 = vrot.lane.b32.xlu0 %v2598, 4
    %v2625 = vpop.permute.xlu0 %2624
    %2626 = vrot.lane.b32.xlu0 %v2600, 4
    %v2627 = vpop.permute.xlu0 %2626
    %2628 = vrot.lane.b32.xlu0 %v2602, 4
    %v2629 = vpop.permute.xlu0 %2628
    %2630 = vrot.lane.b32.xlu0 %v2604, 4
    %v2631 = vpop.permute.xlu0 %2630
    %2632 = vrot.lane.b32.xlu0 %v2606, 4
    %v2633 = vpop.permute.xlu0 %2632
    %2634 = vrot.lane.b32.xlu0 %v2608, 4
    %v2635 = vpop.permute.xlu0 %2634
    %2636 = vrot.lane.b32.xlu0 %v2610, 4
    %v2637 = vpop.permute.xlu0 %2636
    %v2647 = vsub.f32 %v2557, %v2621
    %v2648 = vsub.f32 %v2558, %v2623
    %v2649 = vsub.f32 %v2559, %v2625
    %v2650 = vsub.f32 %v2560, %v2627
    %v2651 = vsub.f32 %v2561, %v2629
    %v2652 = vsub.f32 %v2562, %v2631
    %v2653 = vsub.f32 %v2563, %v2633
    %v2654 = vsub.f32 %v2564, %v2635
    %v2655 = vsub.f32 %v2565, %v2637
    %2665 = vrot.lane.b32.xlu0 %v2647, 124
    %v2666 = vpop.permute.xlu0 %2665
    %2667 = vrot.lane.b32.xlu0 %v2648, 124
    %v2668 = vpop.permute.xlu0 %2667
    %2669 = vrot.lane.b32.xlu0 %v2649, 124
    %v2670 = vpop.permute.xlu0 %2669
    %2671 = vrot.lane.b32.xlu0 %v2650, 124
    %v2672 = vpop.permute.xlu0 %2671
    %2673 = vrot.lane.b32.xlu0 %v2651, 124
    %v2674 = vpop.permute.xlu0 %2673
    %2675 = vrot.lane.b32.xlu0 %v2652, 124
    %v2676 = vpop.permute.xlu0 %2675
    %2677 = vrot.lane.b32.xlu0 %v2653, 124
    %v2678 = vpop.permute.xlu0 %2677
    %2679 = vrot.lane.b32.xlu0 %v2654, 124
    %v2680 = vpop.permute.xlu0 %2679
    %2681 = vrot.lane.b32.xlu0 %v2655, 124
    %v2682 = vpop.permute.xlu0 %2681
    %vm2692 = vcmask 31744
    %v2693 = vsel %vm2692, %v2666, 0.0
    %2694 = vadd.xlane.f32.xlu0 %v2693
    %v2695 = vpop.xlane.xlu0 %2694
    %v2696 = vsel %vm2692, %v2668, 0.0
    %2697 = vadd.xlane.f32.xlu0 %v2696
    %v2698 = vpop.xlane.xlu0 %2697
    %v2699 = vsel %vm2692, %v2670, 0.0
    %2700 = vadd.xlane.f32.xlu0 %v2699
    %v2701 = vpop.xlane.xlu0 %2700
    %v2702 = vsel %vm2692, %v2672, 0.0
    %2703 = vadd.xlane.f32.xlu0 %v2702
    %v2704 = vpop.xlane.xlu0 %2703
    %v2705 = vsel %vm2692, %v2674, 0.0
    %2706 = vadd.xlane.f32.xlu0 %v2705
    %v2707 = vpop.xlane.xlu0 %2706
    %v2708 = vsel %vm2692, %v2676, 0.0
    %2709 = vadd.xlane.f32.xlu0 %v2708
    %v2710 = vpop.xlane.xlu0 %2709
    %v2711 = vsel %vm2692, %v2678, 0.0
    %2712 = vadd.xlane.f32.xlu0 %v2711
    %v2713 = vpop.xlane.xlu0 %2712
    %v2714 = vsel %vm2692, %v2680, 0.0
    %2715 = vadd.xlane.f32.xlu0 %v2714
    %v2716 = vpop.xlane.xlu0 %2715
    %v2717 = vsel %vm2692, %v2682, 0.0
    %2718 = vadd.xlane.f32.xlu0 %v2717
    %v2719 = vpop.xlane.xlu0 %2718
    %v2720 = vld [vmem:[#allocation8 + $0x218] sm:$0xff]
    %v2721 = vld [vmem:[#allocation8 + $0x220] sm:$0xff]
    %v2722 = vld [vmem:[#allocation8 + $0x228] sm:$0xff]
    %v2723 = vld [vmem:[#allocation8 + $0x230] sm:$0xff]
    %v2724 = vld [vmem:[#allocation8 + $0x238] sm:$0xff]
    %v2725 = vld [vmem:[#allocation8 + $0x240] sm:$0xff]
    %v2726 = vld [vmem:[#allocation8 + $0x248] sm:$0xff]
    %v2727 = vld [vmem:[#allocation8 + $0x250] sm:$0xff]
    %v2728 = vld [vmem:[#allocation8 + $0x258] sm:$0xff]
    %v2729 = vld [vmem:[#allocation8 + $0x260] sm:$0xff]
    %v2730 = vld [vmem:[#allocation8 + $0x268] sm:$0xff]
    %v2731 = vld [vmem:[#allocation8 + $0x270] sm:$0xff]
    %v2732 = vld [vmem:[#allocation8 + $0x278] sm:$0xff]
    %v2733 = vld [vmem:[#allocation8 + $0x280] sm:$0xff]
    %v2734 = vld [vmem:[#allocation8 + $0x288] sm:$0xff]
    %v2735 = vld [vmem:[#allocation8 + $0x290] sm:$0xff]
    %v2736 = vld [vmem:[#allocation8 + $0x298] sm:$0xff]
    %v2737 = vld [vmem:[#allocation8 + $0x2a0] sm:$0xff]
    %v2738 = vld [vmem:[#allocation8 + $0x2a8] sm:$0xff]
    %v2739 = vld [vmem:[#allocation8 + $0x2b0] sm:$0xff]
    %v2740 = vld [vmem:[#allocation8 + $0x2b8] sm:$0xff]
    %v2741 = vld [vmem:[#allocation8 + $0x2c0] sm:$0xff]
    %v2742 = vld [vmem:[#allocation8 + $0x2c8] sm:$0xff]
    %v2743 = vld [vmem:[#allocation8 + $0x2d0] sm:$0xff]
    %v2744 = vld [vmem:[#allocation8 + $0x2d8] sm:$0xff]
    %v2745 = vld [vmem:[#allocation8 + $0x2e0] sm:$0xff]
    %v2746 = vld [vmem:[#allocation8 + $0x2e8] sm:$0xff]
    %v2747 = vld [vmem:[#allocation8 + $0x2f0] sm:$0xff]
    %v2748 = vld [vmem:[#allocation8 + $0x2f8] sm:$0xff]
    %v2749 = vld [vmem:[#allocation8 + $0x300] sm:$0xff]
    %v2750 = vld [vmem:[#allocation8 + $0x308] sm:$0xff]
    %v2751 = vld [vmem:[#allocation8 + $0x310] sm:$0xff]
    %2752 = vmatprep.subr.mxu0 0.0
    %2753 = vmatpush1.msra.mxu0 %v2736
    %2754 = vmatprep.subr.mxu0 0.0
    %2755 = vmatpush1.msra.mxu0 %v2737
    %2756 = vmatprep.subr.mxu0 0.0
    %2757 = vmatpush1.msra.mxu0 %v2738
    %2758 = vmatprep.subr.mxu0 0.0
    %2759 = vmatpush1.msra.mxu0 %v2739
    %2760 = vmatprep.subr.mxu0 0.0
    %2761 = vmatpush1.msra.mxu0 %v2740
    %2762 = vmatprep.subr.mxu0 0.0
    %2763 = vmatpush1.msra.mxu0 %v2741
    %2764 = vmatprep.subr.mxu0 0.0
    %2765 = vmatpush1.msra.mxu0 %v2742
    %2766 = vmatprep.subr.mxu0 0.0
    %2767 = vmatpush1.msra.mxu0 %v2743
    %2768 = vmatprep.subr.mxu0 0.0
    %2769 = vmatpush1.msra.mxu0 %v2744
    %2770 = vmatprep.subr.mxu0 0.0
    %2771 = vmatpush1.msra.mxu0 %v2745
    %2772 = vmatprep.subr.mxu0 0.0
    %2773 = vmatpush1.msra.mxu0 %v2746
    %2774 = vmatprep.subr.mxu0 0.0
    %2775 = vmatpush1.msra.mxu0 %v2747
    %2776 = vmatprep.subr.mxu0 0.0
    %2777 = vmatpush1.msra.mxu0 %v2748
    %2778 = vmatprep.subr.mxu0 0.0
    %2779 = vmatpush1.msra.mxu0 %v2749
    %2780 = vmatprep.subr.mxu0 0.0
    %2781 = vmatpush1.msra.mxu0 %v2750
    %2782 = vmatprep.subr.mxu0 0.0
    %2783 = vmatpush1.msra.mxu0 %v2751
    %2784 = vmatprep.subr.mxu0 0.0
    %2785 = vmatpush1.msra.mxu0 0.0
    %2786 = vmatprep.subr.mxu0 0.0
    %2787 = vmatpush1.msra.mxu0 0.0
    %2788 = vmatprep.subr.mxu0 0.0
    %2789 = vmatpush1.msra.mxu0 0.0
    %2790 = vmatprep.subr.mxu0 0.0
    %2791 = vmatpush1.msra.mxu0 0.0
    %2792 = vmatprep.subr.mxu0 0.0
    %2793 = vmatpush1.msra.mxu0 0.0
    %2794 = vmatprep.subr.mxu0 0.0
    %2795 = vmatpush1.msra.mxu0 0.0
    %2796 = vmatprep.subr.mxu0 0.0
    %2797 = vmatpush1.msra.mxu0 0.0
    %2798 = vmatprep.subr.mxu0 0.0
    %2799 = vmatpush1.msra.mxu0 0.0
    %2800 = vmatprep.subr.mxu0 0.0
    %2801 = vmatpush1.msra.mxu0 0.0
    %2802 = vmatprep.subr.mxu0 0.0
    %2803 = vmatpush1.msra.mxu0 0.0
    %2804 = vmatprep.subr.mxu0 0.0
    %2805 = vmatpush1.msra.mxu0 0.0
    %2806 = vmatprep.subr.mxu0 0.0
    %2807 = vmatpush1.msra.mxu0 0.0
    %2808 = vmatprep.subr.mxu0 0.0
    %2809 = vmatpush1.msra.mxu0 0.0
    %2810 = vmatprep.subr.mxu0 0.0
    %2811 = vmatpush1.msra.mxu0 0.0
    %2812 = vmatprep.subr.mxu0 0.0
    %2813 = vmatpush1.msra.mxu0 0.0
    %2814 = vmatprep.subr.mxu0 0.0
    %2815 = vmatpush1.msra.mxu0 0.0
    %2816 = vmatprep.mubr.f32.mxu0 0.0
    %2817 = vmatmul.mubr.f32.gmra.mrb[0].mxu0 %v2521
    %v2818 = vpop.f32.mrb[0].mxu0
    %v2819 = vadd.f32 0.0, %v2818
    %v2820 = vpop.f32.mrb[0].mxu0
    %2821 = vmatprep.mubr.f32.mxu0 0.0
    %2822 = vmatmul.mubr.f32.gmra.mrb[0].mxu0 %v2522
    %v2823 = vpop.f32.mrb[0].mxu0
    %v2824 = vadd.f32 0.0, %v2823
    %v2825 = vpop.f32.mrb[0].mxu0
    %2826 = vmatprep.mubr.f32.mxu0 0.0
    %2827 = vmatmul.mubr.f32.gmra.mrb[0].mxu0 %v2523
    %v2828 = vpop.f32.mrb[0].mxu0
    %v2829 = vadd.f32 0.0, %v2828
    %v2830 = vpop.f32.mrb[0].mxu0
    %2831 = vmatprep.mubr.f32.mxu0 0.0
    %2832 = vmatmul.mubr.f32.gmra.mrb[0].mxu0 %v2524
    %v2833 = vpop.f32.mrb[0].mxu0
    %v2834 = vadd.f32 0.0, %v2833
    %v2835 = vpop.f32.mrb[0].mxu0
    %2836 = vmatprep.mubr.f32.mxu0 0.0
    %2837 = vmatmul.mubr.f32.gmra.mrb[0].mxu0 %v2525
    %v2838 = vpop.f32.mrb[0].mxu0
    %v2839 = vadd.f32 0.0, %v2838
    %v2840 = vpop.f32.mrb[0].mxu0
    %2841 = vmatprep.mubr.f32.mxu0 0.0
    %2842 = vmatmul.mubr.f32.gmra.mrb[0].mxu0 %v2526
    %v2843 = vpop.f32.mrb[0].mxu0
    %v2844 = vadd.f32 0.0, %v2843
    %v2845 = vpop.f32.mrb[0].mxu0
    %2846 = vmatprep.mubr.f32.mxu0 0.0
    %2847 = vmatmul.mubr.f32.gmra.mrb[0].mxu0 %v2527
    %v2848 = vpop.f32.mrb[0].mxu0
    %v2849 = vadd.f32 0.0, %v2848
    %v2850 = vpop.f32.mrb[0].mxu0
    %2851 = vmatprep.mubr.f32.mxu0 0.0
    %2852 = vmatmul.mubr.f32.gmra.mrb[0].mxu0 %v2528
    %v2853 = vpop.f32.mrb[0].mxu0
    %v2854 = vadd.f32 0.0, %v2853
    %v2855 = vpop.f32.mrb[0].mxu0
    %2856 = vmatprep.mubr.f32.mxu0 0.0
    %2857 = vmatmul.mubr.f32.gmra.mrb[0].mxu0 %v2529
    %v2858 = vpop.f32.mrb[0].mxu0
    %v2859 = vadd.f32 0.0, %v2858
    %v2860 = vpop.f32.mrb[0].mxu0
    %2861 = vdwg.mxu0
    %2862 = vmatprep.subr.mxu0 0.0
    %2863 = vmatpush1.msra.mxu0 %v2720
    %2864 = vmatprep.subr.mxu0 0.0
    %2865 = vmatpush1.msra.mxu0 %v2721
    %2866 = vmatprep.subr.mxu0 0.0
    %2867 = vmatpush1.msra.mxu0 %v2722
    %2868 = vmatprep.subr.mxu0 0.0
    %2869 = vmatpush1.msra.mxu0 %v2723
    %2870 = vmatprep.subr.mxu0 0.0
    %2871 = vmatpush1.msra.mxu0 %v2724
    %2872 = vmatprep.subr.mxu0 0.0
    %2873 = vmatpush1.msra.mxu0 %v2725
    %2874 = vmatprep.subr.mxu0 0.0
    %2875 = vmatpush1.msra.mxu0 %v2726
    %2876 = vmatprep.subr.mxu0 0.0
    %2877 = vmatpush1.msra.mxu0 %v2727
    %2878 = vmatprep.subr.mxu0 0.0
    %2879 = vmatpush1.msra.mxu0 %v2728
    %2880 = vmatprep.subr.mxu0 0.0
    %2881 = vmatpush1.msra.mxu0 %v2729
    %2882 = vmatprep.subr.mxu0 0.0
    %2883 = vmatpush1.msra.mxu0 %v2730
    %2884 = vmatprep.subr.mxu0 0.0
    %2885 = vmatpush1.msra.mxu0 %v2731
    %2886 = vmatprep.subr.mxu0 0.0
    %2887 = vmatpush1.msra.mxu0 %v2732
    %2888 = vmatprep.subr.mxu0 0.0
    %2889 = vmatpush1.msra.mxu0 %v2733
    %2890 = vmatprep.subr.mxu0 0.0
    %2891 = vmatpush1.msra.mxu0 %v2734
    %2892 = vmatprep.subr.mxu0 0.0
    %2893 = vmatpush1.msra.mxu0 %v2735
    %2894 = vmatprep.subr.mxu0 0.0
    %2895 = vmatpush1.msra.mxu0 0.0
    %2896 = vmatprep.subr.mxu0 0.0
    %2897 = vmatpush1.msra.mxu0 0.0
    %2898 = vmatprep.subr.mxu0 0.0
    %2899 = vmatpush1.msra.mxu0 0.0
    %2900 = vmatprep.subr.mxu0 0.0
    %2901 = vmatpush1.msra.mxu0 0.0
    %2902 = vmatprep.subr.mxu0 0.0
    %2903 = vmatpush1.msra.mxu0 0.0
    %2904 = vmatprep.subr.mxu0 0.0
    %2905 = vmatpush1.msra.mxu0 0.0
    %2906 = vmatprep.subr.mxu0 0.0
    %2907 = vmatpush1.msra.mxu0 0.0
    %2908 = vmatprep.subr.mxu0 0.0
    %2909 = vmatpush1.msra.mxu0 0.0
    %2910 = vmatprep.subr.mxu0 0.0
    %2911 = vmatpush1.msra.mxu0 0.0
    %2912 = vmatprep.subr.mxu0 0.0
    %2913 = vmatpush1.msra.mxu0 0.0
    %2914 = vmatprep.subr.mxu0 0.0
    %2915 = vmatpush1.msra.mxu0 0.0
    %2916 = vmatprep.subr.mxu0 0.0
    %2917 = vmatpush1.msra.mxu0 0.0
    %2918 = vmatprep.subr.mxu0 0.0
    %2919 = vmatpush1.msra.mxu0 0.0
    %2920 = vmatprep.subr.mxu0 0.0
    %2921 = vmatpush1.msra.mxu0 0.0
    %2922 = vmatprep.subr.mxu0 0.0
    %2923 = vmatpush1.msra.mxu0 0.0
    %2924 = vmatprep.subr.mxu0 0.0
    %2925 = vmatpush1.msra.mxu0 0.0
    %2926 = vmatprep.mubr.f32.mxu0 0.0
    %2927 = vmatmul.mubr.f32.gmra.mrb[0].mxu0 %v75
    %v2928 = vpop.f32.mrb[0].mxu0
    %v2929 = vadd.f32 %v2819, %v2928
    %v2930 = vpop.f32.mrb[0].mxu0
    %2931 = vmatprep.mubr.f32.mxu0 0.0
    %2932 = vmatmul.mubr.f32.gmra.mrb[0].mxu0 %v76
    %v2933 = vpop.f32.mrb[0].mxu0
    %v2934 = vadd.f32 %v2824, %v2933
    %v2935 = vpop.f32.mrb[0].mxu0
    %2936 = vmatprep.mubr.f32.mxu0 0.0
    %2937 = vmatmul.mubr.f32.gmra.mrb[0].mxu0 %v77
    %v2938 = vpop.f32.mrb[0].mxu0
    %v2939 = vadd.f32 %v2829, %v2938
    %v2940 = vpop.f32.mrb[0].mxu0
    %2941 = vmatprep.mubr.f32.mxu0 0.0
    %2942 = vmatmul.mubr.f32.gmra.mrb[0].mxu0 %v78
    %v2943 = vpop.f32.mrb[0].mxu0
    %v2944 = vadd.f32 %v2834, %v2943
    %v2945 = vpop.f32.mrb[0].mxu0
    %2946 = vmatprep.mubr.f32.mxu0 0.0
    %2947 = vmatmul.mubr.f32.gmra.mrb[0].mxu0 %v79
    %v2948 = vpop.f32.mrb[0].mxu0
    %v2949 = vadd.f32 %v2839, %v2948
    %v2950 = vpop.f32.mrb[0].mxu0
    %2951 = vmatprep.mubr.f32.mxu0 0.0
    %2952 = vmatmul.mubr.f32.gmra.mrb[0].mxu0 %v80
    %v2953 = vpop.f32.mrb[0].mxu0
    %v2954 = vadd.f32 %v2844, %v2953
    %v2955 = vpop.f32.mrb[0].mxu0
    %2956 = vmatprep.mubr.f32.mxu0 0.0
    %2957 = vmatmul.mubr.f32.gmra.mrb[0].mxu0 %v81
    %v2958 = vpop.f32.mrb[0].mxu0
    %v2959 = vadd.f32 %v2849, %v2958
    %v2960 = vpop.f32.mrb[0].mxu0
    %2961 = vmatprep.mubr.f32.mxu0 0.0
    %2962 = vmatmul.mubr.f32.gmra.mrb[0].mxu0 %v82
    %v2963 = vpop.f32.mrb[0].mxu0
    %v2964 = vadd.f32 %v2854, %v2963
    %v2965 = vpop.f32.mrb[0].mxu0
    %2966 = vmatprep.mubr.f32.mxu0 0.0
    %2967 = vmatmul.mubr.f32.gmra.mrb[0].mxu0 %v83
    %v2968 = vpop.f32.mrb[0].mxu0
    %v2969 = vadd.f32 %v2859, %v2968
    %v2970 = vpop.f32.mrb[0].mxu0
    %2971 = vdwg.mxu0
    %v2972 = vmax.f32 %v2929, 0.0
    %v2973 = vmax.f32 %v2934, 0.0
    %v2974 = vmax.f32 %v2939, 0.0
    %v2975 = vmax.f32 %v2944, 0.0
    %v2976 = vmax.f32 %v2949, 0.0
    %v2977 = vmax.f32 %v2954, 0.0
    %v2978 = vmax.f32 %v2959, 0.0
    %v2979 = vmax.f32 %v2964, 0.0
    %v2980 = vmax.f32 %v2969, 0.0
    %v2981 = vld [vmem:[#allocation8 + $0x318] sm:$0xff]
    %v2982 = vld [vmem:[#allocation8 + $0x320] sm:$0xff]
    %v2983 = vld [vmem:[#allocation8 + $0x328] sm:$0xff]
    %v2984 = vld [vmem:[#allocation8 + $0x330] sm:$0xff]
    %v2985 = vld [vmem:[#allocation8 + $0x338] sm:$0xff]
    %v2986 = vld [vmem:[#allocation8 + $0x340] sm:$0xff]
    %v2987 = vld [vmem:[#allocation8 + $0x348] sm:$0xff]
    %v2988 = vld [vmem:[#allocation8 + $0x350] sm:$0xff]
    %v2989 = vld [vmem:[#allocation8 + $0x358] sm:$0xff]
    %v2990 = vld [vmem:[#allocation8 + $0x360] sm:$0xff]
    %v2991 = vld [vmem:[#allocation8 + $0x368] sm:$0xff]
    %v2992 = vld [vmem:[#allocation8 + $0x370] sm:$0xff]
    %v2993 = vld [vmem:[#allocation8 + $0x378] sm:$0xff]
    %v2994 = vld [vmem:[#allocation8 + $0x380] sm:$0xff]
    %v2995 = vld [vmem:[#allocation8 + $0x388] sm:$0xff]
    %v2996 = vld [vmem:[#allocation8 + $0x390] sm:$0xff]
    %2997 = vmatprep.subr.mxu0 0.0
    %2998 = vmatpush1.msra.mxu0 %v2981
    %2999 = vmatprep.subr.mxu0 0.0
    %3000 = vmatpush1.msra.mxu0 %v2982
    %3001 = vmatprep.subr.mxu0 0.0
    %3002 = vmatpush1.msra.mxu0 %v2983
    %3003 = vmatprep.subr.mxu0 0.0
    %3004 = vmatpush1.msra.mxu0 %v2984
    %3005 = vmatprep.subr.mxu0 0.0
    %3006 = vmatpush1.msra.mxu0 %v2985
    %3007 = vmatprep.subr.mxu0 0.0
    %3008 = vmatpush1.msra.mxu0 %v2986
    %3009 = vmatprep.subr.mxu0 0.0
    %3010 = vmatpush1.msra.mxu0 %v2987
    %3011 = vmatprep.subr.mxu0 0.0
    %3012 = vmatpush1.msra.mxu0 %v2988
    %3013 = vmatprep.subr.mxu0 0.0
    %3014 = vmatpush1.msra.mxu0 %v2989
    %3015 = vmatprep.subr.mxu0 0.0
    %3016 = vmatpush1.msra.mxu0 %v2990
    %3017 = vmatprep.subr.mxu0 0.0
    %3018 = vmatpush1.msra.mxu0 %v2991
    %3019 = vmatprep.subr.mxu0 0.0
    %3020 = vmatpush1.msra.mxu0 %v2992
    %3021 = vmatprep.subr.mxu0 0.0
    %3022 = vmatpush1.msra.mxu0 %v2993
    %3023 = vmatprep.subr.mxu0 0.0
    %3024 = vmatpush1.msra.mxu0 %v2994
    %3025 = vmatprep.subr.mxu0 0.0
    %3026 = vmatpush1.msra.mxu0 %v2995
    %3027 = vmatprep.subr.mxu0 0.0
    %3028 = vmatpush1.msra.mxu0 %v2996
    %3029 = vmatprep.subr.mxu0 0.0
    %3030 = vmatpush1.msra.mxu0 0.0
    %3031 = vmatprep.subr.mxu0 0.0
    %3032 = vmatpush1.msra.mxu0 0.0
    %3033 = vmatprep.subr.mxu0 0.0
    %3034 = vmatpush1.msra.mxu0 0.0
    %3035 = vmatprep.subr.mxu0 0.0
    %3036 = vmatpush1.msra.mxu0 0.0
    %3037 = vmatprep.subr.mxu0 0.0
    %3038 = vmatpush1.msra.mxu0 0.0
    %3039 = vmatprep.subr.mxu0 0.0
    %3040 = vmatpush1.msra.mxu0 0.0
    %3041 = vmatprep.subr.mxu0 0.0
    %3042 = vmatpush1.msra.mxu0 0.0
    %3043 = vmatprep.subr.mxu0 0.0
    %3044 = vmatpush1.msra.mxu0 0.0
    %3045 = vmatprep.subr.mxu0 0.0
    %3046 = vmatpush1.msra.mxu0 0.0
    %3047 = vmatprep.subr.mxu0 0.0
    %3048 = vmatpush1.msra.mxu0 0.0
    %3049 = vmatprep.subr.mxu0 0.0
    %3050 = vmatpush1.msra.mxu0 0.0
    %3051 = vmatprep.subr.mxu0 0.0
    %3052 = vmatpush1.msra.mxu0 0.0
    %3053 = vmatprep.subr.mxu0 0.0
    %3054 = vmatpush1.msra.mxu0 0.0
    %3055 = vmatprep.subr.mxu0 0.0
    %3056 = vmatpush1.msra.mxu0 0.0
    %3057 = vmatprep.subr.mxu0 0.0
    %3058 = vmatpush1.msra.mxu0 0.0
    %3059 = vmatprep.subr.mxu0 0.0
    %3060 = vmatpush1.msra.mxu0 0.0
    %3061 = vmatprep.mubr.f32.mxu0 0.0
    %3062 = vmatmul.mubr.f32.gmra.mrb[0].mxu0 %v76
    %v3063 = vpop.f32.mrb[0].mxu0
    %v3064 = vadd.f32 0.0, %v3063
    %v3065 = vpop.f32.mrb[0].mxu0
    %3066 = vmatprep.mubr.f32.mxu0 0.0
    %3067 = vmatmul.mubr.f32.gmra.mrb[0].mxu0 %v77
    %v3068 = vpop.f32.mrb[0].mxu0
    %v3069 = vadd.f32 0.0, %v3068
    %v3070 = vpop.f32.mrb[0].mxu0
    %3071 = vmatprep.mubr.f32.mxu0 0.0
    %3072 = vmatmul.mubr.f32.gmra.mrb[0].mxu0 %v78
    %v3073 = vpop.f32.mrb[0].mxu0
    %v3074 = vadd.f32 0.0, %v3073
    %v3075 = vpop.f32.mrb[0].mxu0
    %3076 = vmatprep.mubr.f32.mxu0 0.0
    %3077 = vmatmul.mubr.f32.gmra.mrb[0].mxu0 %v79
    %v3078 = vpop.f32.mrb[0].mxu0
    %v3079 = vadd.f32 0.0, %v3078
    %v3080 = vpop.f32.mrb[0].mxu0
    %3081 = vmatprep.mubr.f32.mxu0 0.0
    %3082 = vmatmul.mubr.f32.gmra.mrb[0].mxu0 %v80
    %v3083 = vpop.f32.mrb[0].mxu0
    %v3084 = vadd.f32 0.0, %v3083
    %v3085 = vpop.f32.mrb[0].mxu0
    %3086 = vmatprep.mubr.f32.mxu0 0.0
    %3087 = vmatmul.mubr.f32.gmra.mrb[0].mxu0 %v81
    %v3088 = vpop.f32.mrb[0].mxu0
    %v3089 = vadd.f32 0.0, %v3088
    %v3090 = vpop.f32.mrb[0].mxu0
    %3091 = vmatprep.mubr.f32.mxu0 0.0
    %3092 = vmatmul.mubr.f32.gmra.mrb[0].mxu0 %v82
    %v3093 = vpop.f32.mrb[0].mxu0
    %v3094 = vadd.f32 0.0, %v3093
    %v3095 = vpop.f32.mrb[0].mxu0
    %3096 = vmatprep.mubr.f32.mxu0 0.0
    %3097 = vmatmul.mubr.f32.gmra.mrb[0].mxu0 %v83
    %v3098 = vpop.f32.mrb[0].mxu0
    %v3099 = vadd.f32 0.0, %v3098
    %v3100 = vpop.f32.mrb[0].mxu0
    %3101 = vdwg.mxu0
    %v3102 = vmax.f32 %v3064, 0.0
    %v3103 = vmax.f32 %v3069, 0.0
    %v3104 = vmax.f32 %v3074, 0.0
    %v3105 = vmax.f32 %v3079, 0.0
    %v3106 = vmax.f32 %v3084, 0.0
    %v3107 = vmax.f32 %v3089, 0.0
    %v3108 = vmax.f32 %v3094, 0.0
    %v3109 = vmax.f32 %v3099, 0.0
    %v3110 = vld [vmem:[#allocation8 + $0x630] sm:$0xff]
    %v3111 = vld [vmem:[#allocation8 + $0x638] sm:$0xff]
    %v3112 = vld [vmem:[#allocation8 + $0x640] sm:$0xff]
    %v3113 = vld [vmem:[#allocation8 + $0x648] sm:$0xff]
    %v3114 = vld [vmem:[#allocation8 + $0x650] sm:$0xff]
    %v3115 = vld [vmem:[#allocation8 + $0x658] sm:$0xff]
    %v3116 = vld [vmem:[#allocation8 + $0x660] sm:$0xff]
    %v3117 = vld [vmem:[#allocation8 + $0x668] sm:$0xff]
    %v3118 = vld [vmem:[#allocation8 + $0x670] sm:$0xff]
    %v3119 = vld [vmem:[#allocation8 + $0x678] sm:$0xff]
    %v3120 = vld [vmem:[#allocation8 + $0x680] sm:$0xff]
    %v3121 = vld [vmem:[#allocation8 + $0x688] sm:$0xff]
    %v3122 = vld [vmem:[#allocation8 + $0x690] sm:$0xff]
    %v3123 = vld [vmem:[#allocation8 + $0x698] sm:$0xff]
    %v3124 = vld [vmem:[#allocation8 + $0x6a0] sm:$0xff]
    %v3125 = vld [vmem:[#allocation8 + $0x6a8] sm:$0xff]
    %v3126 = vld [vmem:[#allocation8 + $0x6b0] sm:$0x1]
    %v3127 = vld [vmem:[#allocation8 + $0x6b8] sm:$0xff]
    %v3128 = vld [vmem:[#allocation8 + $0x6c0] sm:$0xff]
    %v3129 = vld [vmem:[#allocation8 + $0x6c8] sm:$0xff]
    %v3130 = vld [vmem:[#allocation8 + $0x6d0] sm:$0xff]
    %v3131 = vld [vmem:[#allocation8 + $0x6d8] sm:$0xff]
    %v3132 = vld [vmem:[#allocation8 + $0x6e0] sm:$0xff]
    %v3133 = vld [vmem:[#allocation8 + $0x6e8] sm:$0xff]
    %v3134 = vld [vmem:[#allocation8 + $0x6f0] sm:$0xff]
    %v3135 = vld [vmem:[#allocation8 + $0x6f8] sm:$0xff]
    %v3136 = vld [vmem:[#allocation8 + $0x700] sm:$0xff]
    %v3137 = vld [vmem:[#allocation8 + $0x708] sm:$0xff]
    %v3138 = vld [vmem:[#allocation8 + $0x710] sm:$0xff]
    %v3139 = vld [vmem:[#allocation8 + $0x718] sm:$0xff]
    %v3140 = vld [vmem:[#allocation8 + $0x720] sm:$0xff]
    %v3141 = vld [vmem:[#allocation8 + $0x728] sm:$0xff]
    %v3142 = vld [vmem:[#allocation8 + $0x730] sm:$0xff]
    %3143 = vmatprep.subr.mxu0 0.0
    %3144 = vmatpush1.msra.mxu0 %v3127
    %3145 = vmatprep.subr.mxu0 0.0
    %3146 = vmatpush1.msra.mxu0 %v3128
    %3147 = vmatprep.subr.mxu0 0.0
    %3148 = vmatpush1.msra.mxu0 %v3129
    %3149 = vmatprep.subr.mxu0 0.0
    %3150 = vmatpush1.msra.mxu0 %v3130
    %3151 = vmatprep.subr.mxu0 0.0
    %3152 = vmatpush1.msra.mxu0 %v3131
    %3153 = vmatprep.subr.mxu0 0.0
    %3154 = vmatpush1.msra.mxu0 %v3132
    %3155 = vmatprep.subr.mxu0 0.0
    %3156 = vmatpush1.msra.mxu0 %v3133
    %3157 = vmatprep.subr.mxu0 0.0
    %3158 = vmatpush1.msra.mxu0 %v3134
    %3159 = vmatprep.subr.mxu0 0.0
    %3160 = vmatpush1.msra.mxu0 %v3135
    %3161 = vmatprep.subr.mxu0 0.0
    %3162 = vmatpush1.msra.mxu0 %v3136
    %3163 = vmatprep.subr.mxu0 0.0
    %3164 = vmatpush1.msra.mxu0 %v3137
    %3165 = vmatprep.subr.mxu0 0.0
    %3166 = vmatpush1.msra.mxu0 %v3138
    %3167 = vmatprep.subr.mxu0 0.0
    %3168 = vmatpush1.msra.mxu0 %v3139
    %3169 = vmatprep.subr.mxu0 0.0
    %3170 = vmatpush1.msra.mxu0 %v3140
    %3171 = vmatprep.subr.mxu0 0.0
    %3172 = vmatpush1.msra.mxu0 %v3141
    %3173 = vmatprep.subr.mxu0 0.0
    %3174 = vmatpush1.msra.mxu0 %v3142
    %3175 = vmatprep.subr.mxu0 0.0
    %3176 = vmatpush1.msra.mxu0 0.0
    %3177 = vmatprep.subr.mxu0 0.0
    %3178 = vmatpush1.msra.mxu0 0.0
    %3179 = vmatprep.subr.mxu0 0.0
    %3180 = vmatpush1.msra.mxu0 0.0
    %3181 = vmatprep.subr.mxu0 0.0
    %3182 = vmatpush1.msra.mxu0 0.0
    %3183 = vmatprep.subr.mxu0 0.0
    %3184 = vmatpush1.msra.mxu0 0.0
    %3185 = vmatprep.subr.mxu0 0.0
    %3186 = vmatpush1.msra.mxu0 0.0
    %3187 = vmatprep.subr.mxu0 0.0
    %3188 = vmatpush1.msra.mxu0 0.0
    %3189 = vmatprep.subr.mxu0 0.0
    %3190 = vmatpush1.msra.mxu0 0.0
    %3191 = vmatprep.subr.mxu0 0.0
    %3192 = vmatpush1.msra.mxu0 0.0
    %3193 = vmatprep.subr.mxu0 0.0
    %3194 = vmatpush1.msra.mxu0 0.0
    %3195 = vmatprep.subr.mxu0 0.0
    %3196 = vmatpush1.msra.mxu0 0.0
    %3197 = vmatprep.subr.mxu0 0.0
    %3198 = vmatpush1.msra.mxu0 0.0
    %3199 = vmatprep.subr.mxu0 0.0
    %3200 = vmatpush1.msra.mxu0 0.0
    %3201 = vmatprep.subr.mxu0 0.0
    %3202 = vmatpush1.msra.mxu0 0.0
    %3203 = vmatprep.subr.mxu0 0.0
    %3204 = vmatpush1.msra.mxu0 0.0
    %3205 = vmatprep.subr.mxu0 0.0
    %3206 = vmatpush1.msra.mxu0 0.0
    %3207 = vmatprep.mubr.f32.mxu0 0.0
    %3208 = vmatmul.mubr.f32.gmra.mrb[0].mxu0 %v2972
    %v3209 = vpop.f32.mrb[0].mxu0
    %v3210 = vadd.f32 0.0, %v3209
    %v3211 = vpop.f32.mrb[0].mxu0
    %3212 = vmatprep.mubr.f32.mxu0 0.0
    %3213 = vmatmul.mubr.f32.gmra.mrb[0].mxu0 %v2973
    %v3214 = vpop.f32.mrb[0].mxu0
    %v3215 = vadd.f32 0.0, %v3214
    %v3216 = vpop.f32.mrb[0].mxu0
    %3217 = vmatprep.mubr.f32.mxu0 0.0
    %3218 = vmatmul.mubr.f32.gmra.mrb[0].mxu0 %v2974
    %v3219 = vpop.f32.mrb[0].mxu0
    %v3220 = vadd.f32 0.0, %v3219
    %v3221 = vpop.f32.mrb[0].mxu0
    %3222 = vmatprep.mubr.f32.mxu0 0.0
    %3223 = vmatmul.mubr.f32.gmra.mrb[0].mxu0 %v2975
    %v3224 = vpop.f32.mrb[0].mxu0
    %v3225 = vadd.f32 0.0, %v3224
    %v3226 = vpop.f32.mrb[0].mxu0
    %3227 = vmatprep.mubr.f32.mxu0 0.0
    %3228 = vmatmul.mubr.f32.gmra.mrb[0].mxu0 %v2976
    %v3229 = vpop.f32.mrb[0].mxu0
    %v3230 = vadd.f32 0.0, %v3229
    %v3231 = vpop.f32.mrb[0].mxu0
    %3232 = vmatprep.mubr.f32.mxu0 0.0
    %3233 = vmatmul.mubr.f32.gmra.mrb[0].mxu0 %v2977
    %v3234 = vpop.f32.mrb[0].mxu0
    %v3235 = vadd.f32 0.0, %v3234
    %v3236 = vpop.f32.mrb[0].mxu0
    %3237 = vmatprep.mubr.f32.mxu0 0.0
    %3238 = vmatmul.mubr.f32.gmra.mrb[0].mxu0 %v2978
    %v3239 = vpop.f32.mrb[0].mxu0
    %v3240 = vadd.f32 0.0, %v3239
    %v3241 = vpop.f32.mrb[0].mxu0
    %3242 = vmatprep.mubr.f32.mxu0 0.0
    %3243 = vmatmul.mubr.f32.gmra.mrb[0].mxu0 %v2979
    %v3244 = vpop.f32.mrb[0].mxu0
    %v3245 = vadd.f32 0.0, %v3244
    %v3246 = vpop.f32.mrb[0].mxu0
    %3247 = vmatprep.mubr.f32.mxu0 0.0
    %3248 = vmatmul.mubr.f32.gmra.mrb[0].mxu0 %v2980
    %v3249 = vpop.f32.mrb[0].mxu0
    %v3250 = vadd.f32 0.0, %v3249
    %v3251 = vpop.f32.mrb[0].mxu0
    %3252 = vdwg.mxu0
    %3253 = vmatprep.subr.mxu0 0.0
    %3254 = vmatpush1.msra.mxu0 %v3110
    %3255 = vmatprep.subr.mxu0 0.0
    %3256 = vmatpush1.msra.mxu0 %v3111
    %3257 = vmatprep.subr.mxu0 0.0
    %3258 = vmatpush1.msra.mxu0 %v3112
    %3259 = vmatprep.subr.mxu0 0.0
    %3260 = vmatpush1.msra.mxu0 %v3113
    %3261 = vmatprep.subr.mxu0 0.0
    %3262 = vmatpush1.msra.mxu0 %v3114
    %3263 = vmatprep.subr.mxu0 0.0
    %3264 = vmatpush1.msra.mxu0 %v3115
    %3265 = vmatprep.subr.mxu0 0.0
    %3266 = vmatpush1.msra.mxu0 %v3116
    %3267 = vmatprep.subr.mxu0 0.0
    %3268 = vmatpush1.msra.mxu0 %v3117
    %3269 = vmatprep.subr.mxu0 0.0
    %3270 = vmatpush1.msra.mxu0 %v3118
    %3271 = vmatprep.subr.mxu0 0.0
    %3272 = vmatpush1.msra.mxu0 %v3119
    %3273 = vmatprep.subr.mxu0 0.0
    %3274 = vmatpush1.msra.mxu0 %v3120
    %3275 = vmatprep.subr.mxu0 0.0
    %3276 = vmatpush1.msra.mxu0 %v3121
    %3277 = vmatprep.subr.mxu0 0.0
    %3278 = vmatpush1.msra.mxu0 %v3122
    %3279 = vmatprep.subr.mxu0 0.0
    %3280 = vmatpush1.msra.mxu0 %v3123
    %3281 = vmatprep.subr.mxu0 0.0
    %3282 = vmatpush1.msra.mxu0 %v3124
    %3283 = vmatprep.subr.mxu0 0.0
    %3284 = vmatpush1.msra.mxu0 %v3125
    %3285 = vmatprep.subr.mxu0 0.0
    %3286 = vmatpush1.msra.mxu0 0.0
    %3287 = vmatprep.subr.mxu0 0.0
    %3288 = vmatpush1.msra.mxu0 0.0
    %3289 = vmatprep.subr.mxu0 0.0
    %3290 = vmatpush1.msra.mxu0 0.0
    %3291 = vmatprep.subr.mxu0 0.0
    %3292 = vmatpush1.msra.mxu0 0.0
    %3293 = vmatprep.subr.mxu0 0.0
    %3294 = vmatpush1.msra.mxu0 0.0
    %3295 = vmatprep.subr.mxu0 0.0
    %3296 = vmatpush1.msra.mxu0 0.0
    %3297 = vmatprep.subr.mxu0 0.0
    %3298 = vmatpush1.msra.mxu0 0.0
    %3299 = vmatprep.subr.mxu0 0.0
    %3300 = vmatpush1.msra.mxu0 0.0
    %3301 = vmatprep.subr.mxu0 0.0
    %3302 = vmatpush1.msra.mxu0 0.0
    %3303 = vmatprep.subr.mxu0 0.0
    %3304 = vmatpush1.msra.mxu0 0.0
    %3305 = vmatprep.subr.mxu0 0.0
    %3306 = vmatpush1.msra.mxu0 0.0
    %3307 = vmatprep.subr.mxu0 0.0
    %3308 = vmatpush1.msra.mxu0 0.0
    %3309 = vmatprep.subr.mxu0 0.0
    %3310 = vmatpush1.msra.mxu0 0.0
    %3311 = vmatprep.subr.mxu0 0.0
    %3312 = vmatpush1.msra.mxu0 0.0
    %3313 = vmatprep.subr.mxu0 0.0
    %3314 = vmatpush1.msra.mxu0 0.0
    %3315 = vmatprep.subr.mxu0 0.0
    %3316 = vmatpush1.msra.mxu0 0.0
    %3317 = vmatprep.mubr.f32.mxu0 0.0
    %3318 = vmatmul.mubr.f32.gmra.mrb[0].mxu0 %v2101
    %v3319 = vpop.f32.mrb[0].mxu0
    %v3320 = vadd.f32 %v3210, %v3319
    %v3321 = vpop.f32.mrb[0].mxu0
    %3322 = vmatprep.mubr.f32.mxu0 0.0
    %3323 = vmatmul.mubr.f32.gmra.mrb[0].mxu0 %v2102
    %v3324 = vpop.f32.mrb[0].mxu0
    %v3325 = vadd.f32 %v3215, %v3324
    %v3326 = vpop.f32.mrb[0].mxu0
    %3327 = vmatprep.mubr.f32.mxu0 0.0
    %3328 = vmatmul.mubr.f32.gmra.mrb[0].mxu0 %v2103
    %v3329 = vpop.f32.mrb[0].mxu0
    %v3330 = vadd.f32 %v3220, %v3329
    %v3331 = vpop.f32.mrb[0].mxu0
    %3332 = vmatprep.mubr.f32.mxu0 0.0
    %3333 = vmatmul.mubr.f32.gmra.mrb[0].mxu0 %v2104
    %v3334 = vpop.f32.mrb[0].mxu0
    %v3335 = vadd.f32 %v3225, %v3334
    %v3336 = vpop.f32.mrb[0].mxu0
    %3337 = vmatprep.mubr.f32.mxu0 0.0
    %3338 = vmatmul.mubr.f32.gmra.mrb[0].mxu0 %v2105
    %v3339 = vpop.f32.mrb[0].mxu0
    %v3340 = vadd.f32 %v3230, %v3339
    %v3341 = vpop.f32.mrb[0].mxu0
    %3342 = vmatprep.mubr.f32.mxu0 0.0
    %3343 = vmatmul.mubr.f32.gmra.mrb[0].mxu0 %v2106
    %v3344 = vpop.f32.mrb[0].mxu0
    %v3345 = vadd.f32 %v3235, %v3344
    %v3346 = vpop.f32.mrb[0].mxu0
    %3347 = vmatprep.mubr.f32.mxu0 0.0
    %3348 = vmatmul.mubr.f32.gmra.mrb[0].mxu0 %v2107
    %v3349 = vpop.f32.mrb[0].mxu0
    %v3350 = vadd.f32 %v3240, %v3349
    %v3351 = vpop.f32.mrb[0].mxu0
    %3352 = vmatprep.mubr.f32.mxu0 0.0
    %3353 = vmatmul.mubr.f32.gmra.mrb[0].mxu0 %v2108
    %v3354 = vpop.f32.mrb[0].mxu0
    %v3355 = vadd.f32 %v3245, %v3354
    %v3356 = vpop.f32.mrb[0].mxu0
    %3357 = vmatprep.mubr.f32.mxu0 0.0
    %3358 = vmatmul.mubr.f32.gmra.mrb[0].mxu0 %v2109
    %v3359 = vpop.f32.mrb[0].mxu0
    %v3360 = vadd.f32 %v3250, %v3359
    %v3361 = vpop.f32.mrb[0].mxu0
    %3362 = vdwg.mxu0
    %v3363 = vlaneseq
    %v3364 = vshrl.u32 %v3363, 7
    %v3365 = vsub.s32 0, %v3364
    %v3366 = vrot.slane %v3126, %v3365
    %v3367 = vadd.f32 %v3320, %v3366
    %v3368 = vadd.f32 %v3325, %v3366
    %v3369 = vadd.f32 %v3330, %v3366
    %v3370 = vadd.f32 %v3335, %v3366
    %v3371 = vadd.f32 %v3340, %v3366
    %v3372 = vadd.f32 %v3345, %v3366
    %v3373 = vadd.f32 %v3350, %v3366
    %v3374 = vadd.f32 %v3355, %v3366
    %v3375 = vadd.f32 %v3360, %v3366
    %v3376 = vmax.f32 %v3367, 0.0
    %v3377 = vmax.f32 %v3368, 0.0
    %v3378 = vmax.f32 %v3369, 0.0
    %v3379 = vmax.f32 %v3370, 0.0
    %v3380 = vmax.f32 %v3371, 0.0
    %v3381 = vmax.f32 %v3372, 0.0
    %v3382 = vmax.f32 %v3373, 0.0
    %v3383 = vmax.f32 %v3374, 0.0
    %v3384 = vmax.f32 %v3375, 0.0
    %v3385 = vld [vmem:[#allocation8 + $0x738] sm:$0xff]
    %v3386 = vld [vmem:[#allocation8 + $0x740] sm:$0xff]
    %v3387 = vld [vmem:[#allocation8 + $0x748] sm:$0xff]
    %v3388 = vld [vmem:[#allocation8 + $0x750] sm:$0xff]
    %v3389 = vld [vmem:[#allocation8 + $0x758] sm:$0xff]
    %v3390 = vld [vmem:[#allocation8 + $0x760] sm:$0xff]
    %v3391 = vld [vmem:[#allocation8 + $0x768] sm:$0xff]
    %v3392 = vld [vmem:[#allocation8 + $0x770] sm:$0xff]
    %v3393 = vld [vmem:[#allocation8 + $0x778] sm:$0xff]
    %v3394 = vld [vmem:[#allocation8 + $0x780] sm:$0xff]
    %v3395 = vld [vmem:[#allocation8 + $0x788] sm:$0xff]
    %v3396 = vld [vmem:[#allocation8 + $0x790] sm:$0xff]
    %v3397 = vld [vmem:[#allocation8 + $0x798] sm:$0xff]
    %v3398 = vld [vmem:[#allocation8 + $0x7a0] sm:$0xff]
    %v3399 = vld [vmem:[#allocation8 + $0x7a8] sm:$0xff]
    %v3400 = vld [vmem:[#allocation8 + $0x7b0] sm:$0xff]
    %v3401 = vld [vmem:[#allocation8 + $0x7b8] sm:$0x1]
    %v3402 = vlaneseq
    %v3403 = vshrl.u32 %v3402, 7
    %v3404 = vsub.s32 0, %v3403
    %v3405 = vrot.slane %v3401, %v3404
    %3406 = vmatprep.subr.mxu0 0.0
    %3407 = vmatpush1.msra.mxu0 %v3385
    %3408 = vmatprep.subr.mxu0 0.0
    %3409 = vmatpush1.msra.mxu0 %v3386
    %3410 = vmatprep.subr.mxu0 0.0
    %3411 = vmatpush1.msra.mxu0 %v3387
    %3412 = vmatprep.subr.mxu0 0.0
    %3413 = vmatpush1.msra.mxu0 %v3388
    %3414 = vmatprep.subr.mxu0 0.0
    %3415 = vmatpush1.msra.mxu0 %v3389
    %3416 = vmatprep.subr.mxu0 0.0
    %3417 = vmatpush1.msra.mxu0 %v3390
    %3418 = vmatprep.subr.mxu0 0.0
    %3419 = vmatpush1.msra.mxu0 %v3391
    %3420 = vmatprep.subr.mxu0 0.0
    %3421 = vmatpush1.msra.mxu0 %v3392
    %3422 = vmatprep.subr.mxu0 0.0
    %3423 = vmatpush1.msra.mxu0 %v3393
    %3424 = vmatprep.subr.mxu0 0.0
    %3425 = vmatpush1.msra.mxu0 %v3394
    %3426 = vmatprep.subr.mxu0 0.0
    %3427 = vmatpush1.msra.mxu0 %v3395
    %3428 = vmatprep.subr.mxu0 0.0
    %3429 = vmatpush1.msra.mxu0 %v3396
    %3430 = vmatprep.subr.mxu0 0.0
    %3431 = vmatpush1.msra.mxu0 %v3397
    %3432 = vmatprep.subr.mxu0 0.0
    %3433 = vmatpush1.msra.mxu0 %v3398
    %3434 = vmatprep.subr.mxu0 0.0
    %3435 = vmatpush1.msra.mxu0 %v3399
    %3436 = vmatprep.subr.mxu0 0.0
    %3437 = vmatpush1.msra.mxu0 %v3400
    %3438 = vmatprep.subr.mxu0 0.0
    %3439 = vmatpush1.msra.mxu0 0.0
    %3440 = vmatprep.subr.mxu0 0.0
    %3441 = vmatpush1.msra.mxu0 0.0
    %3442 = vmatprep.subr.mxu0 0.0
    %3443 = vmatpush1.msra.mxu0 0.0
    %3444 = vmatprep.subr.mxu0 0.0
    %3445 = vmatpush1.msra.mxu0 0.0
    %3446 = vmatprep.subr.mxu0 0.0
    %3447 = vmatpush1.msra.mxu0 0.0
    %3448 = vmatprep.subr.mxu0 0.0
    %3449 = vmatpush1.msra.mxu0 0.0
    %3450 = vmatprep.subr.mxu0 0.0
    %3451 = vmatpush1.msra.mxu0 0.0
    %3452 = vmatprep.subr.mxu0 0.0
    %3453 = vmatpush1.msra.mxu0 0.0
    %3454 = vmatprep.subr.mxu0 0.0
    %3455 = vmatpush1.msra.mxu0 0.0
    %3456 = vmatprep.subr.mxu0 0.0
    %3457 = vmatpush1.msra.mxu0 0.0
    %3458 = vmatprep.subr.mxu0 0.0
    %3459 = vmatpush1.msra.mxu0 0.0
    %3460 = vmatprep.subr.mxu0 0.0
    %3461 = vmatpush1.msra.mxu0 0.0
    %3462 = vmatprep.subr.mxu0 0.0
    %3463 = vmatpush1.msra.mxu0 0.0
    %3464 = vmatprep.subr.mxu0 0.0
    %3465 = vmatpush1.msra.mxu0 0.0
    %3466 = vmatprep.subr.mxu0 0.0
    %3467 = vmatpush1.msra.mxu0 0.0
    %3468 = vmatprep.subr.mxu0 0.0
    %3469 = vmatpush1.msra.mxu0 0.0
    %3470 = vmatprep.mubr.f32.mxu0 0.0
    %3471 = vmatmul.mubr.f32.gmra.mrb[0].mxu0 %v3376
    %v3472 = vpop.f32.mrb[0].mxu0
    %v3473 = vadd.f32 %v3405, %v3472
    %v3474 = vpop.f32.mrb[0].mxu0
    %3475 = vmatprep.mubr.f32.mxu0 0.0
    %3476 = vmatmul.mubr.f32.gmra.mrb[0].mxu0 %v3377
    %v3477 = vpop.f32.mrb[0].mxu0
    %v3478 = vadd.f32 %v3405, %v3477
    %v3479 = vpop.f32.mrb[0].mxu0
    %3480 = vmatprep.mubr.f32.mxu0 0.0
    %3481 = vmatmul.mubr.f32.gmra.mrb[0].mxu0 %v3378
    %v3482 = vpop.f32.mrb[0].mxu0
    %v3483 = vadd.f32 %v3405, %v3482
    %v3484 = vpop.f32.mrb[0].mxu0
    %3485 = vmatprep.mubr.f32.mxu0 0.0
    %3486 = vmatmul.mubr.f32.gmra.mrb[0].mxu0 %v3379
    %v3487 = vpop.f32.mrb[0].mxu0
    %v3488 = vadd.f32 %v3405, %v3487
    %v3489 = vpop.f32.mrb[0].mxu0
    %3490 = vmatprep.mubr.f32.mxu0 0.0
    %3491 = vmatmul.mubr.f32.gmra.mrb[0].mxu0 %v3380
    %v3492 = vpop.f32.mrb[0].mxu0
    %v3493 = vadd.f32 %v3405, %v3492
    %v3494 = vpop.f32.mrb[0].mxu0
    %3495 = vmatprep.mubr.f32.mxu0 0.0
    %3496 = vmatmul.mubr.f32.gmra.mrb[0].mxu0 %v3381
    %v3497 = vpop.f32.mrb[0].mxu0
    %v3498 = vadd.f32 %v3405, %v3497
    %v3499 = vpop.f32.mrb[0].mxu0
    %3500 = vmatprep.mubr.f32.mxu0 0.0
    %3501 = vmatmul.mubr.f32.gmra.mrb[0].mxu0 %v3382
    %v3502 = vpop.f32.mrb[0].mxu0
    %v3503 = vadd.f32 %v3405, %v3502
    %v3504 = vpop.f32.mrb[0].mxu0
    %3505 = vmatprep.mubr.f32.mxu0 0.0
    %3506 = vmatmul.mubr.f32.gmra.mrb[0].mxu0 %v3383
    %v3507 = vpop.f32.mrb[0].mxu0
    %v3508 = vadd.f32 %v3405, %v3507
    %v3509 = vpop.f32.mrb[0].mxu0
    %3510 = vmatprep.mubr.f32.mxu0 0.0
    %3511 = vmatmul.mubr.f32.gmra.mrb[0].mxu0 %v3384
    %v3512 = vpop.f32.mrb[0].mxu0
    %v3513 = vadd.f32 %v3405, %v3512
    %v3514 = vpop.f32.mrb[0].mxu0
    %3515 = vdwg.mxu0
    %v3516 = vmax.f32 %v3473, 0.0
    %v3517 = vmax.f32 %v3478, 0.0
    %v3518 = vmax.f32 %v3483, 0.0
    %v3519 = vmax.f32 %v3488, 0.0
    %v3520 = vmax.f32 %v3493, 0.0
    %v3521 = vmax.f32 %v3498, 0.0
    %v3522 = vmax.f32 %v3503, 0.0
    %v3523 = vmax.f32 %v3508, 0.0
    %v3524 = vmax.f32 %v3513, 0.0
    %v3525 = vld [vmem:[#allocation8 + $0x7c0] sm:$0xff]
    %v3526 = vld [vmem:[#allocation8 + $0x7c8] sm:$0xff]
    %v3527 = vld [vmem:[#allocation8 + $0x7d0] sm:$0xff]
    %v3528 = vld [vmem:[#allocation8 + $0x7d8] sm:$0xff]
    %v3529 = vld [vmem:[#allocation8 + $0x7e0] sm:$0xff]
    %v3530 = vld [vmem:[#allocation8 + $0x7e8] sm:$0xff]
    %v3531 = vld [vmem:[#allocation8 + $0x7f0] sm:$0xff]
    %v3532 = vld [vmem:[#allocation8 + $0x7f8] sm:$0xff]
    %v3533 = vld [vmem:[#allocation8 + $0x800] sm:$0xff]
    %v3534 = vld [vmem:[#allocation8 + $0x808] sm:$0xff]
    %v3535 = vld [vmem:[#allocation8 + $0x810] sm:$0xff]
    %v3536 = vld [vmem:[#allocation8 + $0x818] sm:$0xff]
    %v3537 = vld [vmem:[#allocation8 + $0x820] sm:$0xff]
    %v3538 = vld [vmem:[#allocation8 + $0x828] sm:$0xff]
    %v3539 = vld [vmem:[#allocation8 + $0x830] sm:$0xff]
    %v3540 = vld [vmem:[#allocation8 + $0x838] sm:$0xff]
    %v3541 = vld [vmem:[#allocation8 + $0x840] sm:$0x1]
    %v3542 = vlaneseq
    %v3543 = vshrl.u32 %v3542, 7
    %v3544 = vsub.s32 0, %v3543
    %v3545 = vrot.slane %v3541, %v3544
    %3546 = vmatprep.subr.mxu0 0.0
    %3547 = vmatpush1.msra.mxu0 %v3525
    %3548 = vmatprep.subr.mxu0 0.0
    %3549 = vmatpush1.msra.mxu0 %v3526
    %3550 = vmatprep.subr.mxu0 0.0
    %3551 = vmatpush1.msra.mxu0 %v3527
    %3552 = vmatprep.subr.mxu0 0.0
    %3553 = vmatpush1.msra.mxu0 %v3528
    %3554 = vmatprep.subr.mxu0 0.0
    %3555 = vmatpush1.msra.mxu0 %v3529
    %3556 = vmatprep.subr.mxu0 0.0
    %3557 = vmatpush1.msra.mxu0 %v3530
    %3558 = vmatprep.subr.mxu0 0.0
    %3559 = vmatpush1.msra.mxu0 %v3531
    %3560 = vmatprep.subr.mxu0 0.0
    %3561 = vmatpush1.msra.mxu0 %v3532
    %3562 = vmatprep.subr.mxu0 0.0
    %3563 = vmatpush1.msra.mxu0 %v3533
    %3564 = vmatprep.subr.mxu0 0.0
    %3565 = vmatpush1.msra.mxu0 %v3534
    %3566 = vmatprep.subr.mxu0 0.0
    %3567 = vmatpush1.msra.mxu0 %v3535
    %3568 = vmatprep.subr.mxu0 0.0
    %3569 = vmatpush1.msra.mxu0 %v3536
    %3570 = vmatprep.subr.mxu0 0.0
    %3571 = vmatpush1.msra.mxu0 %v3537
    %3572 = vmatprep.subr.mxu0 0.0
    %3573 = vmatpush1.msra.mxu0 %v3538
    %3574 = vmatprep.subr.mxu0 0.0
    %3575 = vmatpush1.msra.mxu0 %v3539
    %3576 = vmatprep.subr.mxu0 0.0
    %3577 = vmatpush1.msra.mxu0 %v3540
    %3578 = vmatprep.subr.mxu0 0.0
    %3579 = vmatpush1.msra.mxu0 0.0
    %3580 = vmatprep.subr.mxu0 0.0
    %3581 = vmatpush1.msra.mxu0 0.0
    %3582 = vmatprep.subr.mxu0 0.0
    %3583 = vmatpush1.msra.mxu0 0.0
    %3584 = vmatprep.subr.mxu0 0.0
    %3585 = vmatpush1.msra.mxu0 0.0
    %3586 = vmatprep.subr.mxu0 0.0
    %3587 = vmatpush1.msra.mxu0 0.0
    %3588 = vmatprep.subr.mxu0 0.0
    %3589 = vmatpush1.msra.mxu0 0.0
    %3590 = vmatprep.subr.mxu0 0.0
    %3591 = vmatpush1.msra.mxu0 0.0
    %3592 = vmatprep.subr.mxu0 0.0
    %3593 = vmatpush1.msra.mxu0 0.0
    %3594 = vmatprep.subr.mxu0 0.0
    %3595 = vmatpush1.msra.mxu0 0.0
    %3596 = vmatprep.subr.mxu0 0.0
    %3597 = vmatpush1.msra.mxu0 0.0
    %3598 = vmatprep.subr.mxu0 0.0
    %3599 = vmatpush1.msra.mxu0 0.0
    %3600 = vmatprep.subr.mxu0 0.0
    %3601 = vmatpush1.msra.mxu0 0.0
    %3602 = vmatprep.subr.mxu0 0.0
    %3603 = vmatpush1.msra.mxu0 0.0
    %3604 = vmatprep.subr.mxu0 0.0
    %3605 = vmatpush1.msra.mxu0 0.0
    %3606 = vmatprep.subr.mxu0 0.0
    %3607 = vmatpush1.msra.mxu0 0.0
    %3608 = vmatprep.subr.mxu0 0.0
    %3609 = vmatpush1.msra.mxu0 0.0
    %3610 = vmatprep.mubr.f32.mxu0 0.0
    %3611 = vmatmul.mubr.f32.gmra.mrb[0].mxu0 %v3516
    %v3612 = vpop.f32.mrb[0].mxu0
    %v3613 = vpop.f32.mrb[0].mxu0
    %3614 = vmatprep.mubr.f32.mxu0 0.0
    %3615 = vmatmul.mubr.f32.gmra.mrb[0].mxu0 %v3517
    %v3616 = vpop.f32.mrb[0].mxu0
    %v3617 = vadd.f32 %v3545, %v3616
    %v3618 = vpop.f32.mrb[0].mxu0
    %3619 = vmatprep.mubr.f32.mxu0 0.0
    %3620 = vmatmul.mubr.f32.gmra.mrb[0].mxu0 %v3518
    %v3621 = vpop.f32.mrb[0].mxu0
    %v3622 = vadd.f32 %v3545, %v3621
    %v3623 = vpop.f32.mrb[0].mxu0
    %3624 = vmatprep.mubr.f32.mxu0 0.0
    %3625 = vmatmul.mubr.f32.gmra.mrb[0].mxu0 %v3519
    %v3626 = vpop.f32.mrb[0].mxu0
    %v3627 = vadd.f32 %v3545, %v3626
    %v3628 = vpop.f32.mrb[0].mxu0
    %3629 = vmatprep.mubr.f32.mxu0 0.0
    %3630 = vmatmul.mubr.f32.gmra.mrb[0].mxu0 %v3520
    %v3631 = vpop.f32.mrb[0].mxu0
    %v3632 = vadd.f32 %v3545, %v3631
    %v3633 = vpop.f32.mrb[0].mxu0
    %3634 = vmatprep.mubr.f32.mxu0 0.0
    %3635 = vmatmul.mubr.f32.gmra.mrb[0].mxu0 %v3521
    %v3636 = vpop.f32.mrb[0].mxu0
    %v3637 = vadd.f32 %v3545, %v3636
    %v3638 = vpop.f32.mrb[0].mxu0
    %3639 = vmatprep.mubr.f32.mxu0 0.0
    %3640 = vmatmul.mubr.f32.gmra.mrb[0].mxu0 %v3522
    %v3641 = vpop.f32.mrb[0].mxu0
    %v3642 = vadd.f32 %v3545, %v3641
    %v3643 = vpop.f32.mrb[0].mxu0
    %3644 = vmatprep.mubr.f32.mxu0 0.0
    %3645 = vmatmul.mubr.f32.gmra.mrb[0].mxu0 %v3523
    %v3646 = vpop.f32.mrb[0].mxu0
    %v3647 = vadd.f32 %v3545, %v3646
    %v3648 = vpop.f32.mrb[0].mxu0
    %3649 = vmatprep.mubr.f32.mxu0 0.0
    %3650 = vmatmul.mubr.f32.gmra.mrb[0].mxu0 %v3524
    %v3651 = vpop.f32.mrb[0].mxu0
    %v3652 = vadd.f32 %v3545, %v3651
    %v3653 = vpop.f32.mrb[0].mxu0
    %3654 = vdwg.mxu0
    %3663 = vrot.lane.b32.xlu0 %v3617, 127
    %v3664 = vpop.permute.xlu0 %3663
    %3665 = vrot.lane.b32.xlu0 %v3622, 127
    %v3666 = vpop.permute.xlu0 %3665
    %3667 = vrot.lane.b32.xlu0 %v3627, 127
    %v3668 = vpop.permute.xlu0 %3667
    %3669 = vrot.lane.b32.xlu0 %v3632, 127
    %v3670 = vpop.permute.xlu0 %3669
    %3671 = vrot.lane.b32.xlu0 %v3637, 127
    %v3672 = vpop.permute.xlu0 %3671
    %3673 = vrot.lane.b32.xlu0 %v3642, 127
    %v3674 = vpop.permute.xlu0 %3673
    %3675 = vrot.lane.b32.xlu0 %v3647, 127
    %v3676 = vpop.permute.xlu0 %3675
    %3677 = vrot.lane.b32.xlu0 %v3652, 127
    %v3678 = vpop.permute.xlu0 %3677
    %v3687 = vmin.f32 %v3617, %v3664
    %v3688 = vmin.f32 %v3622, %v3666
    %v3689 = vmin.f32 %v3627, %v3668
    %v3690 = vmin.f32 %v3632, %v3670
    %v3691 = vmin.f32 %v3637, %v3672
    %v3692 = vmin.f32 %v3642, %v3674
    %v3693 = vmin.f32 %v3647, %v3676
    %v3694 = vmin.f32 %v3652, %v3678
    %v3695 = vmul.f32 %v2695, 0.1
    %v3696 = vmul.f32 %v2698, 0.1
    %v3697 = vmul.f32 %v2701, 0.1
    %v3698 = vmul.f32 %v2704, 0.1
    %v3699 = vmul.f32 %v2707, 0.1
    %v3700 = vmul.f32 %v2710, 0.1
    %v3701 = vmul.f32 %v2713, 0.1
    %v3702 = vmul.f32 %v2716, 0.1
    %v3703 = vmul.f32 %v2719, 0.1
    %v3704 = vsub.f32 %v3687, %v3696
    %v3705 = vsub.f32 %v3688, %v3697
    %v3706 = vsub.f32 %v3689, %v3698
    %v3707 = vsub.f32 %v3690, %v3699
    %v3708 = vsub.f32 %v3691, %v3700
    %v3709 = vsub.f32 %v3692, %v3701
    %v3710 = vsub.f32 %v3693, %v3702
    %v3711 = vsub.f32 %v3694, %v3703
    %v3712 = vsub.f32 1.0, %v76
    %v3713 = vsub.f32 1.0, %v77
    %v3714 = vsub.f32 1.0, %v78
    %v3715 = vsub.f32 1.0, %v79
    %v3716 = vsub.f32 1.0, %v80
    %v3717 = vsub.f32 1.0, %v81
    %v3718 = vsub.f32 1.0, %v82
    %v3719 = vsub.f32 1.0, %v83
    %v3720 = vmul.f32 %v3712, 0.99
    %v3721 = vmul.f32 %v3713, 0.99
    %v3722 = vmul.f32 %v3714, 0.99
    %v3723 = vmul.f32 %v3715, 0.99
    %v3724 = vmul.f32 %v3716, 0.99
    %v3725 = vmul.f32 %v3717, 0.99
    %v3726 = vmul.f32 %v3718, 0.99
    %v3727 = vmul.f32 %v3719, 0.99
    %3736 = vrot.lane.b32.xlu0 %v3704, 16
    %v3737 = vpop.permute.xlu0 %3736
    %3738 = vrot.lane.b32.xlu0 %v3705, 16
    %v3739 = vpop.permute.xlu0 %3738
    %3740 = vrot.lane.b32.xlu0 %v3706, 16
    %v3741 = vpop.permute.xlu0 %3740
    %3742 = vrot.lane.b32.xlu0 %v3707, 16
    %v3743 = vpop.permute.xlu0 %3742
    %3744 = vrot.lane.b32.xlu0 %v3708, 16
    %v3745 = vpop.permute.xlu0 %3744
    %3746 = vrot.lane.b32.xlu0 %v3709, 16
    %v3747 = vpop.permute.xlu0 %3746
    %3748 = vrot.lane.b32.xlu0 %v3710, 16
    %v3749 = vpop.permute.xlu0 %3748
    %3750 = vrot.lane.b32.xlu0 %v3711, 16
    %v3751 = vpop.permute.xlu0 %3750
    %v3760 = vmul.f32 %v3720, %v3737
    %v3761 = vmul.f32 %v3721, %v3739
    %v3762 = vmul.f32 %v3722, %v3741
    %v3763 = vmul.f32 %v3723, %v3743
    %v3764 = vmul.f32 %v3724, %v3745
    %v3765 = vmul.f32 %v3725, %v3747
    %v3766 = vmul.f32 %v3726, %v3749
    %v3767 = vmul.f32 %v3727, %v3751
    %3776 = vrot.lane.b32.xlu0 %v3760, 116
    %v3777 = vpop.permute.xlu0 %3776
    %3778 = vrot.lane.b32.xlu0 %v3761, 116
    %v3779 = vpop.permute.xlu0 %3778
    %3780 = vrot.lane.b32.xlu0 %v3762, 116
    %v3781 = vpop.permute.xlu0 %3780
    %3782 = vrot.lane.b32.xlu0 %v3763, 116
    %v3783 = vpop.permute.xlu0 %3782
    %3784 = vrot.lane.b32.xlu0 %v3764, 116
    %v3785 = vpop.permute.xlu0 %3784
    %3786 = vrot.lane.b32.xlu0 %v3765, 116
    %v3787 = vpop.permute.xlu0 %3786
    %3788 = vrot.lane.b32.xlu0 %v3766, 116
    %v3789 = vpop.permute.xlu0 %3788
    %3790 = vrot.lane.b32.xlu0 %v3767, 116
    %v3791 = vpop.permute.xlu0 %3790
    %v3800 = vadd.f32 %v76, %v3777
    %v3801 = vadd.f32 %v77, %v3779
    %v3802 = vadd.f32 %v78, %v3781
    %v3803 = vadd.f32 %v79, %v3783
    %v3804 = vadd.f32 %v80, %v3785
    %v3805 = vadd.f32 %v81, %v3787
    %v3806 = vadd.f32 %v82, %v3789
    %v3807 = vadd.f32 %v83, %v3791
    %v3808 = vld [vmem:[#allocation8 + $0x398] sm:$0xff]
    %v3809 = vld [vmem:[#allocation8 + $0x3a0] sm:$0xff]
    %v3810 = vld [vmem:[#allocation8 + $0x3a8] sm:$0xff]
    %v3811 = vld [vmem:[#allocation8 + $0x3b0] sm:$0xff]
    %v3812 = vld [vmem:[#allocation8 + $0x3b8] sm:$0xff]
    %v3813 = vld [vmem:[#allocation8 + $0x3c0] sm:$0xff]
    %v3814 = vld [vmem:[#allocation8 + $0x3c8] sm:$0xff]
    %v3815 = vld [vmem:[#allocation8 + $0x3d0] sm:$0xff]
    %v3816 = vld [vmem:[#allocation8 + $0x3d8] sm:$0xff]
    %v3817 = vld [vmem:[#allocation8 + $0x3e0] sm:$0xff]
    %v3818 = vld [vmem:[#allocation8 + $0x3e8] sm:$0xff]
    %v3819 = vld [vmem:[#allocation8 + $0x3f0] sm:$0xff]
    %v3820 = vld [vmem:[#allocation8 + $0x3f8] sm:$0xff]
    %v3821 = vld [vmem:[#allocation8 + $0x400] sm:$0xff]
    %v3822 = vld [vmem:[#allocation8 + $0x408] sm:$0xff]
    %v3823 = vld [vmem:[#allocation8 + $0x410] sm:$0xff]
    %v3824 = vld [vmem:[#allocation8 + $0x418] sm:$0x1]
    %v3825 = vld [vmem:[#allocation8 + $0x420] sm:$0xff]
    %v3826 = vld [vmem:[#allocation8 + $0x428] sm:$0xff]
    %v3827 = vld [vmem:[#allocation8 + $0x430] sm:$0xff]
    %v3828 = vld [vmem:[#allocation8 + $0x438] sm:$0xff]
    %v3829 = vld [vmem:[#allocation8 + $0x440] sm:$0xff]
    %v3830 = vld [vmem:[#allocation8 + $0x448] sm:$0xff]
    %v3831 = vld [vmem:[#allocation8 + $0x450] sm:$0xff]
    %v3832 = vld [vmem:[#allocation8 + $0x458] sm:$0xff]
    %v3833 = vld [vmem:[#allocation8 + $0x460] sm:$0xff]
    %v3834 = vld [vmem:[#allocation8 + $0x468] sm:$0xff]
    %v3835 = vld [vmem:[#allocation8 + $0x470] sm:$0xff]
    %v3836 = vld [vmem:[#allocation8 + $0x478] sm:$0xff]
    %v3837 = vld [vmem:[#allocation8 + $0x480] sm:$0xff]
    %v3838 = vld [vmem:[#allocation8 + $0x488] sm:$0xff]
    %v3839 = vld [vmem:[#allocation8 + $0x490] sm:$0xff]
    %v3840 = vld [vmem:[#allocation8 + $0x498] sm:$0xff]
    %3841 = vmatprep.subr.mxu0 0.0
    %3842 = vmatpush1.msra.mxu0 %v3825
    %3843 = vmatprep.subr.mxu0 0.0
    %3844 = vmatpush1.msra.mxu0 %v3826
    %3845 = vmatprep.subr.mxu0 0.0
    %3846 = vmatpush1.msra.mxu0 %v3827
    %3847 = vmatprep.subr.mxu0 0.0
    %3848 = vmatpush1.msra.mxu0 %v3828
    %3849 = vmatprep.subr.mxu0 0.0
    %3850 = vmatpush1.msra.mxu0 %v3829
    %3851 = vmatprep.subr.mxu0 0.0
    %3852 = vmatpush1.msra.mxu0 %v3830
    %3853 = vmatprep.subr.mxu0 0.0
    %3854 = vmatpush1.msra.mxu0 %v3831
    %3855 = vmatprep.subr.mxu0 0.0
    %3856 = vmatpush1.msra.mxu0 %v3832
    %3857 = vmatprep.subr.mxu0 0.0
    %3858 = vmatpush1.msra.mxu0 %v3833
    %3859 = vmatprep.subr.mxu0 0.0
    %3860 = vmatpush1.msra.mxu0 %v3834
    %3861 = vmatprep.subr.mxu0 0.0
    %3862 = vmatpush1.msra.mxu0 %v3835
    %3863 = vmatprep.subr.mxu0 0.0
    %3864 = vmatpush1.msra.mxu0 %v3836
    %3865 = vmatprep.subr.mxu0 0.0
    %3866 = vmatpush1.msra.mxu0 %v3837
    %3867 = vmatprep.subr.mxu0 0.0
    %3868 = vmatpush1.msra.mxu0 %v3838
    %3869 = vmatprep.subr.mxu0 0.0
    %3870 = vmatpush1.msra.mxu0 %v3839
    %3871 = vmatprep.subr.mxu0 0.0
    %3872 = vmatpush1.msra.mxu0 %v3840
    %3873 = vmatprep.subr.mxu0 0.0
    %3874 = vmatpush1.msra.mxu0 0.0
    %3875 = vmatprep.subr.mxu0 0.0
    %3876 = vmatpush1.msra.mxu0 0.0
    %3877 = vmatprep.subr.mxu0 0.0
    %3878 = vmatpush1.msra.mxu0 0.0
    %3879 = vmatprep.subr.mxu0 0.0
    %3880 = vmatpush1.msra.mxu0 0.0
    %3881 = vmatprep.subr.mxu0 0.0
    %3882 = vmatpush1.msra.mxu0 0.0
    %3883 = vmatprep.subr.mxu0 0.0
    %3884 = vmatpush1.msra.mxu0 0.0
    %3885 = vmatprep.subr.mxu0 0.0
    %3886 = vmatpush1.msra.mxu0 0.0
    %3887 = vmatprep.subr.mxu0 0.0
    %3888 = vmatpush1.msra.mxu0 0.0
    %3889 = vmatprep.subr.mxu0 0.0
    %3890 = vmatpush1.msra.mxu0 0.0
    %3891 = vmatprep.subr.mxu0 0.0
    %3892 = vmatpush1.msra.mxu0 0.0
    %3893 = vmatprep.subr.mxu0 0.0
    %3894 = vmatpush1.msra.mxu0 0.0
    %3895 = vmatprep.subr.mxu0 0.0
    %3896 = vmatpush1.msra.mxu0 0.0
    %3897 = vmatprep.subr.mxu0 0.0
    %3898 = vmatpush1.msra.mxu0 0.0
    %3899 = vmatprep.subr.mxu0 0.0
    %3900 = vmatpush1.msra.mxu0 0.0
    %3901 = vmatprep.subr.mxu0 0.0
    %3902 = vmatpush1.msra.mxu0 0.0
    %3903 = vmatprep.subr.mxu0 0.0
    %3904 = vmatpush1.msra.mxu0 0.0
    %3905 = vmatprep.mubr.f32.mxu0 0.0
    %3906 = vmatmul.mubr.f32.gmra.mrb[0].mxu0 %v2972
    %v3907 = vpop.f32.mrb[0].mxu0
    %v3908 = vadd.f32 0.0, %v3907
    %v3909 = vpop.f32.mrb[0].mxu0
    %3910 = vmatprep.mubr.f32.mxu0 0.0
    %3911 = vmatmul.mubr.f32.gmra.mrb[0].mxu0 %v2973
    %v3912 = vpop.f32.mrb[0].mxu0
    %v3913 = vadd.f32 0.0, %v3912
    %v3914 = vpop.f32.mrb[0].mxu0
    %3915 = vmatprep.mubr.f32.mxu0 0.0
    %3916 = vmatmul.mubr.f32.gmra.mrb[0].mxu0 %v2974
    %v3917 = vpop.f32.mrb[0].mxu0
    %v3918 = vadd.f32 0.0, %v3917
    %v3919 = vpop.f32.mrb[0].mxu0
    %3920 = vmatprep.mubr.f32.mxu0 0.0
    %3921 = vmatmul.mubr.f32.gmra.mrb[0].mxu0 %v2975
    %v3922 = vpop.f32.mrb[0].mxu0
    %v3923 = vadd.f32 0.0, %v3922
    %v3924 = vpop.f32.mrb[0].mxu0
    %3925 = vmatprep.mubr.f32.mxu0 0.0
    %3926 = vmatmul.mubr.f32.gmra.mrb[0].mxu0 %v2976
    %v3927 = vpop.f32.mrb[0].mxu0
    %v3928 = vadd.f32 0.0, %v3927
    %v3929 = vpop.f32.mrb[0].mxu0
    %3930 = vmatprep.mubr.f32.mxu0 0.0
    %3931 = vmatmul.mubr.f32.gmra.mrb[0].mxu0 %v2977
    %v3932 = vpop.f32.mrb[0].mxu0
    %v3933 = vadd.f32 0.0, %v3932
    %v3934 = vpop.f32.mrb[0].mxu0
    %3935 = vmatprep.mubr.f32.mxu0 0.0
    %3936 = vmatmul.mubr.f32.gmra.mrb[0].mxu0 %v2978
    %v3937 = vpop.f32.mrb[0].mxu0
    %v3938 = vadd.f32 0.0, %v3937
    %v3939 = vpop.f32.mrb[0].mxu0
    %3940 = vmatprep.mubr.f32.mxu0 0.0
    %3941 = vmatmul.mubr.f32.gmra.mrb[0].mxu0 %v2979
    %v3942 = vpop.f32.mrb[0].mxu0
    %v3943 = vadd.f32 0.0, %v3942
    %v3944 = vpop.f32.mrb[0].mxu0
    %3945 = vmatprep.mubr.f32.mxu0 0.0
    %3946 = vmatmul.mubr.f32.gmra.mrb[0].mxu0 %v2980
    %v3947 = vpop.f32.mrb[0].mxu0
    %v3948 = vadd.f32 0.0, %v3947
    %v3949 = vpop.f32.mrb[0].mxu0
    %3950 = vdwg.mxu0
    %3951 = vmatprep.subr.mxu0 0.0
    %3952 = vmatpush1.msra.mxu0 %v3808
    %3953 = vmatprep.subr.mxu0 0.0
    %3954 = vmatpush1.msra.mxu0 %v3809
    %3955 = vmatprep.subr.mxu0 0.0
    %3956 = vmatpush1.msra.mxu0 %v3810
    %3957 = vmatprep.subr.mxu0 0.0
    %3958 = vmatpush1.msra.mxu0 %v3811
    %3959 = vmatprep.subr.mxu0 0.0
    %3960 = vmatpush1.msra.mxu0 %v3812
    %3961 = vmatprep.subr.mxu0 0.0
    %3962 = vmatpush1.msra.mxu0 %v3813
    %3963 = vmatprep.subr.mxu0 0.0
    %3964 = vmatpush1.msra.mxu0 %v3814
    %3965 = vmatprep.subr.mxu0 0.0
    %3966 = vmatpush1.msra.mxu0 %v3815
    %3967 = vmatprep.subr.mxu0 0.0
    %3968 = vmatpush1.msra.mxu0 %v3816
    %3969 = vmatprep.subr.mxu0 0.0
    %3970 = vmatpush1.msra.mxu0 %v3817
    %3971 = vmatprep.subr.mxu0 0.0
    %3972 = vmatpush1.msra.mxu0 %v3818
    %3973 = vmatprep.subr.mxu0 0.0
    %3974 = vmatpush1.msra.mxu0 %v3819
    %3975 = vmatprep.subr.mxu0 0.0
    %3976 = vmatpush1.msra.mxu0 %v3820
    %3977 = vmatprep.subr.mxu0 0.0
    %3978 = vmatpush1.msra.mxu0 %v3821
    %3979 = vmatprep.subr.mxu0 0.0
    %3980 = vmatpush1.msra.mxu0 %v3822
    %3981 = vmatprep.subr.mxu0 0.0
    %3982 = vmatpush1.msra.mxu0 %v3823
    %3983 = vmatprep.subr.mxu0 0.0
    %3984 = vmatpush1.msra.mxu0 0.0
    %3985 = vmatprep.subr.mxu0 0.0
    %3986 = vmatpush1.msra.mxu0 0.0
    %3987 = vmatprep.subr.mxu0 0.0
    %3988 = vmatpush1.msra.mxu0 0.0
    %3989 = vmatprep.subr.mxu0 0.0
    %3990 = vmatpush1.msra.mxu0 0.0
    %3991 = vmatprep.subr.mxu0 0.0
    %3992 = vmatpush1.msra.mxu0 0.0
    %3993 = vmatprep.subr.mxu0 0.0
    %3994 = vmatpush1.msra.mxu0 0.0
    %3995 = vmatprep.subr.mxu0 0.0
    %3996 = vmatpush1.msra.mxu0 0.0
    %3997 = vmatprep.subr.mxu0 0.0
    %3998 = vmatpush1.msra.mxu0 0.0
    %3999 = vmatprep.subr.mxu0 0.0
    %4000 = vmatpush1.msra.mxu0 0.0
    %4001 = vmatprep.subr.mxu0 0.0
    %4002 = vmatpush1.msra.mxu0 0.0
    %4003 = vmatprep.subr.mxu0 0.0
    %4004 = vmatpush1.msra.mxu0 0.0
    %4005 = vmatprep.subr.mxu0 0.0
    %4006 = vmatpush1.msra.mxu0 0.0
    %4007 = vmatprep.subr.mxu0 0.0
    %4008 = vmatpush1.msra.mxu0 0.0
    %4009 = vmatprep.subr.mxu0 0.0
    %4010 = vmatpush1.msra.mxu0 0.0
    %4011 = vmatprep.subr.mxu0 0.0
    %4012 = vmatpush1.msra.mxu0 0.0
    %4013 = vmatprep.subr.mxu0 0.0
    %4014 = vmatpush1.msra.mxu0 0.0
    %4015 = vmatprep.mubr.f32.mxu0 0.0
    %4016 = vmatmul.mubr.f32.gmra.mrb[0].mxu0 %v2101
    %v4017 = vpop.f32.mrb[0].mxu0
    %v4018 = vadd.f32 %v3908, %v4017
    %v4019 = vpop.f32.mrb[0].mxu0
    %4020 = vmatprep.mubr.f32.mxu0 0.0
    %4021 = vmatmul.mubr.f32.gmra.mrb[0].mxu0 %v2102
    %v4022 = vpop.f32.mrb[0].mxu0
    %v4023 = vadd.f32 %v3913, %v4022
    %v4024 = vpop.f32.mrb[0].mxu0
    %4025 = vmatprep.mubr.f32.mxu0 0.0
    %4026 = vmatmul.mubr.f32.gmra.mrb[0].mxu0 %v2103
    %v4027 = vpop.f32.mrb[0].mxu0
    %v4028 = vadd.f32 %v3918, %v4027
    %v4029 = vpop.f32.mrb[0].mxu0
    %4030 = vmatprep.mubr.f32.mxu0 0.0
    %4031 = vmatmul.mubr.f32.gmra.mrb[0].mxu0 %v2104
    %v4032 = vpop.f32.mrb[0].mxu0
    %v4033 = vadd.f32 %v3923, %v4032
    %v4034 = vpop.f32.mrb[0].mxu0
    %4035 = vmatprep.mubr.f32.mxu0 0.0
    %4036 = vmatmul.mubr.f32.gmra.mrb[0].mxu0 %v2105
    %v4037 = vpop.f32.mrb[0].mxu0
    %v4038 = vadd.f32 %v3928, %v4037
    %v4039 = vpop.f32.mrb[0].mxu0
    %4040 = vmatprep.mubr.f32.mxu0 0.0
    %4041 = vmatmul.mubr.f32.gmra.mrb[0].mxu0 %v2106
    %v4042 = vpop.f32.mrb[0].mxu0
    %v4043 = vadd.f32 %v3933, %v4042
    %v4044 = vpop.f32.mrb[0].mxu0
    %4045 = vmatprep.mubr.f32.mxu0 0.0
    %4046 = vmatmul.mubr.f32.gmra.mrb[0].mxu0 %v2107
    %v4047 = vpop.f32.mrb[0].mxu0
    %v4048 = vadd.f32 %v3938, %v4047
    %v4049 = vpop.f32.mrb[0].mxu0
    %4050 = vmatprep.mubr.f32.mxu0 0.0
    %4051 = vmatmul.mubr.f32.gmra.mrb[0].mxu0 %v2108
    %v4052 = vpop.f32.mrb[0].mxu0
    %v4053 = vadd.f32 %v3943, %v4052
    %v4054 = vpop.f32.mrb[0].mxu0
    %4055 = vmatprep.mubr.f32.mxu0 0.0
    %4056 = vmatmul.mubr.f32.gmra.mrb[0].mxu0 %v2109
    %v4057 = vpop.f32.mrb[0].mxu0
    %v4058 = vadd.f32 %v3948, %v4057
    %v4059 = vpop.f32.mrb[0].mxu0
    %4060 = vdwg.mxu0
    %v4061 = vlaneseq
    %v4062 = vshrl.u32 %v4061, 7
    %v4063 = vsub.s32 0, %v4062
    %v4064 = vrot.slane %v3824, %v4063
    %v4065 = vadd.f32 %v4018, %v4064
    %v4066 = vadd.f32 %v4023, %v4064
    %v4067 = vadd.f32 %v4028, %v4064
    %v4068 = vadd.f32 %v4033, %v4064
    %v4069 = vadd.f32 %v4038, %v4064
    %v4070 = vadd.f32 %v4043, %v4064
    %v4071 = vadd.f32 %v4048, %v4064
    %v4072 = vadd.f32 %v4053, %v4064
    %v4073 = vadd.f32 %v4058, %v4064
    %v4074 = vld [vmem:[#allocation8 + $0x4a0] sm:$0xff]
    %v4075 = vld [vmem:[#allocation8 + $0x4a8] sm:$0xff]
    %v4076 = vld [vmem:[#allocation8 + $0x4b0] sm:$0xff]
    %v4077 = vld [vmem:[#allocation8 + $0x4b8] sm:$0xff]
    %v4078 = vld [vmem:[#allocation8 + $0x4c0] sm:$0xff]
    %v4079 = vld [vmem:[#allocation8 + $0x4c8] sm:$0xff]
    %v4080 = vld [vmem:[#allocation8 + $0x4d0] sm:$0xff]
    %v4081 = vld [vmem:[#allocation8 + $0x4d8] sm:$0xff]
    %v4082 = vld [vmem:[#allocation8 + $0x4e0] sm:$0xff]
    %v4083 = vld [vmem:[#allocation8 + $0x4e8] sm:$0xff]
    %v4084 = vld [vmem:[#allocation8 + $0x4f0] sm:$0xff]
    %v4085 = vld [vmem:[#allocation8 + $0x4f8] sm:$0xff]
    %v4086 = vld [vmem:[#allocation8 + $0x500] sm:$0xff]
    %v4087 = vld [vmem:[#allocation8 + $0x508] sm:$0xff]
    %v4088 = vld [vmem:[#allocation8 + $0x510] sm:$0xff]
    %v4089 = vld [vmem:[#allocation8 + $0x518] sm:$0xff]
    %4090 = vmatprep.subr.mxu0 0.0
    %4091 = vmatpush1.msra.mxu0 %v4074
    %4092 = vmatprep.subr.mxu0 0.0
    %4093 = vmatpush1.msra.mxu0 %v4075
    %4094 = vmatprep.subr.mxu0 0.0
    %4095 = vmatpush1.msra.mxu0 %v4076
    %4096 = vmatprep.subr.mxu0 0.0
    %4097 = vmatpush1.msra.mxu0 %v4077
    %4098 = vmatprep.subr.mxu0 0.0
    %4099 = vmatpush1.msra.mxu0 %v4078
    %4100 = vmatprep.subr.mxu0 0.0
    %4101 = vmatpush1.msra.mxu0 %v4079
    %4102 = vmatprep.subr.mxu0 0.0
    %4103 = vmatpush1.msra.mxu0 %v4080
    %4104 = vmatprep.subr.mxu0 0.0
    %4105 = vmatpush1.msra.mxu0 %v4081
    %4106 = vmatprep.subr.mxu0 0.0
    %4107 = vmatpush1.msra.mxu0 %v4082
    %4108 = vmatprep.subr.mxu0 0.0
    %4109 = vmatpush1.msra.mxu0 %v4083
    %4110 = vmatprep.subr.mxu0 0.0
    %4111 = vmatpush1.msra.mxu0 %v4084
    %4112 = vmatprep.subr.mxu0 0.0
    %4113 = vmatpush1.msra.mxu0 %v4085
    %4114 = vmatprep.subr.mxu0 0.0
    %4115 = vmatpush1.msra.mxu0 %v4086
    %4116 = vmatprep.subr.mxu0 0.0
    %4117 = vmatpush1.msra.mxu0 %v4087
    %4118 = vmatprep.subr.mxu0 0.0
    %4119 = vmatpush1.msra.mxu0 %v4088
    %4120 = vmatprep.subr.mxu0 0.0
    %4121 = vmatpush1.msra.mxu0 %v4089
    %4122 = vmatprep.subr.mxu0 0.0
    %4123 = vmatpush1.msra.mxu0 0.0
    %4124 = vmatprep.subr.mxu0 0.0
    %4125 = vmatpush1.msra.mxu0 0.0
    %4126 = vmatprep.subr.mxu0 0.0
    %4127 = vmatpush1.msra.mxu0 0.0
    %4128 = vmatprep.subr.mxu0 0.0
    %4129 = vmatpush1.msra.mxu0 0.0
    %4130 = vmatprep.subr.mxu0 0.0
    %4131 = vmatpush1.msra.mxu0 0.0
    %4132 = vmatprep.subr.mxu0 0.0
    %4133 = vmatpush1.msra.mxu0 0.0
    %4134 = vmatprep.subr.mxu0 0.0
    %4135 = vmatpush1.msra.mxu0 0.0
    %4136 = vmatprep.subr.mxu0 0.0
    %4137 = vmatpush1.msra.mxu0 0.0
    %4138 = vmatprep.subr.mxu0 0.0
    %4139 = vmatpush1.msra.mxu0 0.0
    %4140 = vmatprep.subr.mxu0 0.0
    %4141 = vmatpush1.msra.mxu0 0.0
    %4142 = vmatprep.subr.mxu0 0.0
    %4143 = vmatpush1.msra.mxu0 0.0
    %4144 = vmatprep.subr.mxu0 0.0
    %4145 = vmatpush1.msra.mxu0 0.0
    %4146 = vmatprep.subr.mxu0 0.0
    %4147 = vmatpush1.msra.mxu0 0.0
    %4148 = vmatprep.subr.mxu0 0.0
    %4149 = vmatpush1.msra.mxu0 0.0
    %4150 = vmatprep.subr.mxu0 0.0
    %4151 = vmatpush1.msra.mxu0 0.0
    %4152 = vmatprep.subr.mxu0 0.0
    %4153 = vmatpush1.msra.mxu0 0.0
    %4154 = vmatprep.mubr.f32.mxu0 0.0
    %4155 = vmatmul.mubr.f32.gmra.mrb[0].mxu0 %v2972
    %v4156 = vpop.f32.mrb[0].mxu0
    %v4157 = vadd.f32 0.0, %v4156
    %v4158 = vpop.f32.mrb[0].mxu0
    %4159 = vmatprep.mubr.f32.mxu0 0.0
    %4160 = vmatmul.mubr.f32.gmra.mrb[0].mxu0 %v2973
    %v4161 = vpop.f32.mrb[0].mxu0
    %v4162 = vadd.f32 0.0, %v4161
    %v4163 = vpop.f32.mrb[0].mxu0
    %4164 = vmatprep.mubr.f32.mxu0 0.0
    %4165 = vmatmul.mubr.f32.gmra.mrb[0].mxu0 %v2974
    %v4166 = vpop.f32.mrb[0].mxu0
    %v4167 = vadd.f32 0.0, %v4166
    %v4168 = vpop.f32.mrb[0].mxu0
    %4169 = vmatprep.mubr.f32.mxu0 0.0
    %4170 = vmatmul.mubr.f32.gmra.mrb[0].mxu0 %v2975
    %v4171 = vpop.f32.mrb[0].mxu0
    %v4172 = vadd.f32 0.0, %v4171
    %v4173 = vpop.f32.mrb[0].mxu0
    %4174 = vmatprep.mubr.f32.mxu0 0.0
    %4175 = vmatmul.mubr.f32.gmra.mrb[0].mxu0 %v2976
    %v4176 = vpop.f32.mrb[0].mxu0
    %v4177 = vadd.f32 0.0, %v4176
    %v4178 = vpop.f32.mrb[0].mxu0
    %4179 = vmatprep.mubr.f32.mxu0 0.0
    %4180 = vmatmul.mubr.f32.gmra.mrb[0].mxu0 %v2977
    %v4181 = vpop.f32.mrb[0].mxu0
    %v4182 = vadd.f32 0.0, %v4181
    %v4183 = vpop.f32.mrb[0].mxu0
    %4184 = vmatprep.mubr.f32.mxu0 0.0
    %4185 = vmatmul.mubr.f32.gmra.mrb[0].mxu0 %v2978
    %v4186 = vpop.f32.mrb[0].mxu0
    %v4187 = vadd.f32 0.0, %v4186
    %v4188 = vpop.f32.mrb[0].mxu0
    %4189 = vmatprep.mubr.f32.mxu0 0.0
    %4190 = vmatmul.mubr.f32.gmra.mrb[0].mxu0 %v2979
    %v4191 = vpop.f32.mrb[0].mxu0
    %v4192 = vadd.f32 0.0, %v4191
    %v4193 = vpop.f32.mrb[0].mxu0
    %4194 = vmatprep.mubr.f32.mxu0 0.0
    %4195 = vmatmul.mubr.f32.gmra.mrb[0].mxu0 %v2980
    %v4196 = vpop.f32.mrb[0].mxu0
    %v4197 = vadd.f32 0.0, %v4196
    %v4198 = vpop.f32.mrb[0].mxu0
    %4199 = vdwg.mxu0
    %v4200 = vadd.f32 %v4065, %v4157
    %v4201 = vadd.f32 %v4066, %v4162
    %v4202 = vadd.f32 %v4067, %v4167
    %v4203 = vadd.f32 %v4068, %v4172
    %v4204 = vadd.f32 %v4069, %v4177
    %v4205 = vadd.f32 %v4070, %v4182
    %v4206 = vadd.f32 %v4071, %v4187
    %v4207 = vadd.f32 %v4072, %v4192
    %v4208 = vadd.f32 %v4073, %v4197
    %v4209 = vmax.f32 %v4200, 0.0
    %v4210 = vmax.f32 %v4201, 0.0
    %v4211 = vmax.f32 %v4202, 0.0
    %v4212 = vmax.f32 %v4203, 0.0
    %v4213 = vmax.f32 %v4204, 0.0
    %v4214 = vmax.f32 %v4205, 0.0
    %v4215 = vmax.f32 %v4206, 0.0
    %v4216 = vmax.f32 %v4207, 0.0
    %v4217 = vmax.f32 %v4208, 0.0
    %4218 = vst [vmem:[#allocation4] sm:$0xff] %v4209
    %4219 = vst [vmem:[#allocation4 + $0x8] sm:$0xff] %v4210
    %4220 = vst [vmem:[#allocation4 + $0x10] sm:$0xff] %v4211
    %4221 = vst [vmem:[#allocation4 + $0x18] sm:$0xff] %v4212
    %4222 = vst [vmem:[#allocation4 + $0x20] sm:$0xff] %v4213
    %4223 = vst [vmem:[#allocation4 + $0x28] sm:$0xff] %v4214
    %4224 = vst [vmem:[#allocation4 + $0x30] sm:$0xff] %v4215
    %4225 = vst [vmem:[#allocation4 + $0x38] sm:$0xff] %v4216
    %4226 = vst [vmem:[#allocation4 + $0x40] sm:$0xff] %v4217
    %4227 = vmatprep.subr.mxu0 0.0
    %4228 = vmatpush1.msra.mxu0 %v4074
    %4229 = vmatprep.subr.mxu0 0.0
    %4230 = vmatpush1.msra.mxu0 %v4075
    %4231 = vmatprep.subr.mxu0 0.0
    %4232 = vmatpush1.msra.mxu0 %v4076
    %4233 = vmatprep.subr.mxu0 0.0
    %4234 = vmatpush1.msra.mxu0 %v4077
    %4235 = vmatprep.subr.mxu0 0.0
    %4236 = vmatpush1.msra.mxu0 %v4078
    %4237 = vmatprep.subr.mxu0 0.0
    %4238 = vmatpush1.msra.mxu0 %v4079
    %4239 = vmatprep.subr.mxu0 0.0
    %4240 = vmatpush1.msra.mxu0 %v4080
    %4241 = vmatprep.subr.mxu0 0.0
    %4242 = vmatpush1.msra.mxu0 %v4081
    %4243 = vmatprep.subr.mxu0 0.0
    %4244 = vmatpush1.msra.mxu0 %v4082
    %4245 = vmatprep.subr.mxu0 0.0
    %4246 = vmatpush1.msra.mxu0 %v4083
    %4247 = vmatprep.subr.mxu0 0.0
    %4248 = vmatpush1.msra.mxu0 %v4084
    %4249 = vmatprep.subr.mxu0 0.0
    %4250 = vmatpush1.msra.mxu0 %v4085
    %4251 = vmatprep.subr.mxu0 0.0
    %4252 = vmatpush1.msra.mxu0 %v4086
    %4253 = vmatprep.subr.mxu0 0.0
    %4254 = vmatpush1.msra.mxu0 %v4087
    %4255 = vmatprep.subr.mxu0 0.0
    %4256 = vmatpush1.msra.mxu0 %v4088
    %4257 = vmatprep.subr.mxu0 0.0
    %4258 = vmatpush1.msra.mxu0 %v4089
    %4259 = vmatprep.subr.mxu0 0.0
    %4260 = vmatpush1.msra.mxu0 0.0
    %4261 = vmatprep.subr.mxu0 0.0
    %4262 = vmatpush1.msra.mxu0 0.0
    %4263 = vmatprep.subr.mxu0 0.0
    %4264 = vmatpush1.msra.mxu0 0.0
    %4265 = vmatprep.subr.mxu0 0.0
    %4266 = vmatpush1.msra.mxu0 0.0
    %4267 = vmatprep.subr.mxu0 0.0
    %4268 = vmatpush1.msra.mxu0 0.0
    %4269 = vmatprep.subr.mxu0 0.0
    %4270 = vmatpush1.msra.mxu0 0.0
    %4271 = vmatprep.subr.mxu0 0.0
    %4272 = vmatpush1.msra.mxu0 0.0
    %4273 = vmatprep.subr.mxu0 0.0
    %4274 = vmatpush1.msra.mxu0 0.0
    %4275 = vmatprep.subr.mxu0 0.0
    %4276 = vmatpush1.msra.mxu0 0.0
    %4277 = vmatprep.subr.mxu0 0.0
    %4278 = vmatpush1.msra.mxu0 0.0
    %4279 = vmatprep.subr.mxu0 0.0
    %4280 = vmatpush1.msra.mxu0 0.0
    %4281 = vmatprep.subr.mxu0 0.0
    %4282 = vmatpush1.msra.mxu0 0.0
    %4283 = vmatprep.subr.mxu0 0.0
    %4284 = vmatpush1.msra.mxu0 0.0
    %4285 = vmatprep.subr.mxu0 0.0
    %4286 = vmatpush1.msra.mxu0 0.0
    %4287 = vmatprep.subr.mxu0 0.0
    %4288 = vmatpush1.msra.mxu0 0.0
    %4289 = vmatprep.subr.mxu0 0.0
    %4290 = vmatpush1.msra.mxu0 0.0
    %4291 = vmatprep.mubr.f32.mxu0 0.0
    %4292 = vmatmul.mubr.f32.gmra.mrb[0].mxu0 %v3102
    %v4293 = vpop.f32.mrb[0].mxu0
    %v4294 = vadd.f32 0.0, %v4293
    %v4295 = vpop.f32.mrb[0].mxu0
    %4296 = vmatprep.mubr.f32.mxu0 0.0
    %4297 = vmatmul.mubr.f32.gmra.mrb[0].mxu0 %v3103
    %v4298 = vpop.f32.mrb[0].mxu0
    %v4299 = vadd.f32 0.0, %v4298
    %v4300 = vpop.f32.mrb[0].mxu0
    %4301 = vmatprep.mubr.f32.mxu0 0.0
    %4302 = vmatmul.mubr.f32.gmra.mrb[0].mxu0 %v3104
    %v4303 = vpop.f32.mrb[0].mxu0
    %v4304 = vadd.f32 0.0, %v4303
    %v4305 = vpop.f32.mrb[0].mxu0
    %4306 = vmatprep.mubr.f32.mxu0 0.0
    %4307 = vmatmul.mubr.f32.gmra.mrb[0].mxu0 %v3105
    %v4308 = vpop.f32.mrb[0].mxu0
    %v4309 = vadd.f32 0.0, %v4308
    %v4310 = vpop.f32.mrb[0].mxu0
    %4311 = vmatprep.mubr.f32.mxu0 0.0
    %4312 = vmatmul.mubr.f32.gmra.mrb[0].mxu0 %v3106
    %v4313 = vpop.f32.mrb[0].mxu0
    %v4314 = vadd.f32 0.0, %v4313
    %v4315 = vpop.f32.mrb[0].mxu0
    %4316 = vmatprep.mubr.f32.mxu0 0.0
    %4317 = vmatmul.mubr.f32.gmra.mrb[0].mxu0 %v3107
    %v4318 = vpop.f32.mrb[0].mxu0
    %v4319 = vadd.f32 0.0, %v4318
    %v4320 = vpop.f32.mrb[0].mxu0
    %4321 = vmatprep.mubr.f32.mxu0 0.0
    %4322 = vmatmul.mubr.f32.gmra.mrb[0].mxu0 %v3108
    %v4323 = vpop.f32.mrb[0].mxu0
    %v4324 = vadd.f32 0.0, %v4323
    %v4325 = vpop.f32.mrb[0].mxu0
    %4326 = vmatprep.mubr.f32.mxu0 0.0
    %4327 = vmatmul.mubr.f32.gmra.mrb[0].mxu0 %v3109
    %v4328 = vpop.f32.mrb[0].mxu0
    %v4329 = vadd.f32 0.0, %v4328
    %v4330 = vpop.f32.mrb[0].mxu0
    %4331 = vdwg.mxu0
    %v4332 = vadd.f32 %v4065, %v4294
    %v4333 = vadd.f32 %v4066, %v4299
    %v4334 = vadd.f32 %v4067, %v4304
    %v4335 = vadd.f32 %v4068, %v4309
    %v4336 = vadd.f32 %v4069, %v4314
    %v4337 = vadd.f32 %v4070, %v4319
    %v4338 = vadd.f32 %v4071, %v4324
    %v4339 = vadd.f32 %v4072, %v4329
    %v4340 = vmax.f32 %v4332, 0.0
    %v4341 = vmax.f32 %v4333, 0.0
    %v4342 = vmax.f32 %v4334, 0.0
    %v4343 = vmax.f32 %v4335, 0.0
    %v4344 = vmax.f32 %v4336, 0.0
    %v4345 = vmax.f32 %v4337, 0.0
    %v4346 = vmax.f32 %v4338, 0.0
    %v4347 = vmax.f32 %v4339, 0.0
    %4348 = vst [vmem:[#allocation4 + $0x48] sm:$0xff] %v4340
    %4349 = vst [vmem:[#allocation4 + $0x50] sm:$0xff] %v4341
    %4350 = vst [vmem:[#allocation4 + $0x58] sm:$0xff] %v4342
    %4351 = vst [vmem:[#allocation4 + $0x60] sm:$0xff] %v4343
    %4352 = vst [vmem:[#allocation4 + $0x68] sm:$0xff] %v4344
    %4353 = vst [vmem:[#allocation4 + $0x70] sm:$0xff] %v4345
    %4354 = vst [vmem:[#allocation4 + $0x78] sm:$0xff] %v4346
    %4355 = vst [vmem:[#allocation4 + $0x80] sm:$0xff] %v4347
    %v4356 = vld [vmem:[#allocation4] sm:$0xff]
    %v4357 = vld [vmem:[#allocation4 + $0x8] sm:$0xff]
    %v4358 = vld [vmem:[#allocation4 + $0x10] sm:$0xff]
    %v4359 = vld [vmem:[#allocation4 + $0x18] sm:$0xff]
    %v4360 = vld [vmem:[#allocation4 + $0x20] sm:$0xff]
    %v4361 = vld [vmem:[#allocation4 + $0x28] sm:$0xff]
    %v4362 = vld [vmem:[#allocation4 + $0x30] sm:$0xff]
    %v4363 = vld [vmem:[#allocation4 + $0x38] sm:$0xff]
    %v4364 = vld [vmem:[#allocation4 + $0x40] sm:$0xff]
    %v4365 = vld [vmem:[#allocation4 + $0x48] sm:$0xff]
    %v4366 = vld [vmem:[#allocation4 + $0x50] sm:$0xff]
    %v4367 = vld [vmem:[#allocation4 + $0x58] sm:$0xff]
    %v4368 = vld [vmem:[#allocation4 + $0x60] sm:$0xff]
    %v4369 = vld [vmem:[#allocation4 + $0x68] sm:$0xff]
    %v4370 = vld [vmem:[#allocation4 + $0x70] sm:$0xff]
    %v4371 = vld [vmem:[#allocation4 + $0x78] sm:$0xff]
    %v4372 = vld [vmem:[#allocation4 + $0x80] sm:$0xff]
    %v4373 = vld [vmem:[#allocation8 + $0x520] sm:$0xff]
    %v4374 = vld [vmem:[#allocation8 + $0x528] sm:$0xff]
    %v4375 = vld [vmem:[#allocation8 + $0x530] sm:$0xff]
    %v4376 = vld [vmem:[#allocation8 + $0x538] sm:$0xff]
    %v4377 = vld [vmem:[#allocation8 + $0x540] sm:$0xff]
    %v4378 = vld [vmem:[#allocation8 + $0x548] sm:$0xff]
    %v4379 = vld [vmem:[#allocation8 + $0x550] sm:$0xff]
    %v4380 = vld [vmem:[#allocation8 + $0x558] sm:$0xff]
    %v4381 = vld [vmem:[#allocation8 + $0x560] sm:$0xff]
    %v4382 = vld [vmem:[#allocation8 + $0x568] sm:$0xff]
    %v4383 = vld [vmem:[#allocation8 + $0x570] sm:$0xff]
    %v4384 = vld [vmem:[#allocation8 + $0x578] sm:$0xff]
    %v4385 = vld [vmem:[#allocation8 + $0x580] sm:$0xff]
    %v4386 = vld [vmem:[#allocation8 + $0x588] sm:$0xff]
    %v4387 = vld [vmem:[#allocation8 + $0x590] sm:$0xff]
    %v4388 = vld [vmem:[#allocation8 + $0x598] sm:$0xff]
    %v4389 = vld [vmem:[#allocation8 + $0x5a0] sm:$0x1]
    %v4390 = vlaneseq
    %v4391 = vshrl.u32 %v4390, 7
    %v4392 = vsub.s32 0, %v4391
    %v4393 = vrot.slane %v4389, %v4392
    %4394 = vmatprep.subr.mxu0 0.0
    %4395 = vmatpush1.msra.mxu0 %v4373
    %4396 = vmatprep.subr.mxu0 0.0
    %4397 = vmatpush1.msra.mxu0 %v4374
    %4398 = vmatprep.subr.mxu0 0.0
    %4399 = vmatpush1.msra.mxu0 %v4375
    %4400 = vmatprep.subr.mxu0 0.0
    %4401 = vmatpush1.msra.mxu0 %v4376
    %4402 = vmatprep.subr.mxu0 0.0
    %4403 = vmatpush1.msra.mxu0 %v4377
    %4404 = vmatprep.subr.mxu0 0.0
    %4405 = vmatpush1.msra.mxu0 %v4378
    %4406 = vmatprep.subr.mxu0 0.0
    %4407 = vmatpush1.msra.mxu0 %v4379
    %4408 = vmatprep.subr.mxu0 0.0
    %4409 = vmatpush1.msra.mxu0 %v4380
    %4410 = vmatprep.subr.mxu0 0.0
    %4411 = vmatpush1.msra.mxu0 %v4381
    %4412 = vmatprep.subr.mxu0 0.0
    %4413 = vmatpush1.msra.mxu0 %v4382
    %4414 = vmatprep.subr.mxu0 0.0
    %4415 = vmatpush1.msra.mxu0 %v4383
    %4416 = vmatprep.subr.mxu0 0.0
    %4417 = vmatpush1.msra.mxu0 %v4384
    %4418 = vmatprep.subr.mxu0 0.0
    %4419 = vmatpush1.msra.mxu0 %v4385
    %4420 = vmatprep.subr.mxu0 0.0
    %4421 = vmatpush1.msra.mxu0 %v4386
    %4422 = vmatprep.subr.mxu0 0.0
    %4423 = vmatpush1.msra.mxu0 %v4387
    %4424 = vmatprep.subr.mxu0 0.0
    %4425 = vmatpush1.msra.mxu0 %v4388
    %4426 = vmatprep.subr.mxu0 0.0
    %4427 = vmatpush1.msra.mxu0 0.0
    %4428 = vmatprep.subr.mxu0 0.0
    %4429 = vmatpush1.msra.mxu0 0.0
    %4430 = vmatprep.subr.mxu0 0.0
    %4431 = vmatpush1.msra.mxu0 0.0
    %4432 = vmatprep.subr.mxu0 0.0
    %4433 = vmatpush1.msra.mxu0 0.0
    %4434 = vmatprep.subr.mxu0 0.0
    %4435 = vmatpush1.msra.mxu0 0.0
    %4436 = vmatprep.subr.mxu0 0.0
    %4437 = vmatpush1.msra.mxu0 0.0
    %4438 = vmatprep.subr.mxu0 0.0
    %4439 = vmatpush1.msra.mxu0 0.0
    %4440 = vmatprep.subr.mxu0 0.0
    %4441 = vmatpush1.msra.mxu0 0.0
    %4442 = vmatprep.subr.mxu0 0.0
    %4443 = vmatpush1.msra.mxu0 0.0
    %4444 = vmatprep.subr.mxu0 0.0
    %4445 = vmatpush1.msra.mxu0 0.0
    %4446 = vmatprep.subr.mxu0 0.0
    %4447 = vmatpush1.msra.mxu0 0.0
    %4448 = vmatprep.subr.mxu0 0.0
    %4449 = vmatpush1.msra.mxu0 0.0
    %4450 = vmatprep.subr.mxu0 0.0
    %4451 = vmatpush1.msra.mxu0 0.0
    %4452 = vmatprep.subr.mxu0 0.0
    %4453 = vmatpush1.msra.mxu0 0.0
    %4454 = vmatprep.subr.mxu0 0.0
    %4455 = vmatpush1.msra.mxu0 0.0
    %4456 = vmatprep.subr.mxu0 0.0
    %4457 = vmatpush1.msra.mxu0 0.0
    %4458 = vmatprep.mubr.f32.mxu0 0.0
    %4459 = vmatmul.mubr.f32.gmra.mrb[0].mxu0 %v4356
    %v4460 = vpop.f32.mrb[0].mxu0
    %v4461 = vadd.f32 %v4393, %v4460
    %v4462 = vpop.f32.mrb[0].mxu0
    %4463 = vmatprep.mubr.f32.mxu0 0.0
    %4464 = vmatmul.mubr.f32.gmra.mrb[0].mxu0 %v4357
    %v4465 = vpop.f32.mrb[0].mxu0
    %v4466 = vadd.f32 %v4393, %v4465
    %v4467 = vpop.f32.mrb[0].mxu0
    %4468 = vmatprep.mubr.f32.mxu0 0.0
    %4469 = vmatmul.mubr.f32.gmra.mrb[0].mxu0 %v4358
    %v4470 = vpop.f32.mrb[0].mxu0
    %v4471 = vadd.f32 %v4393, %v4470
    %v4472 = vpop.f32.mrb[0].mxu0
    %4473 = vmatprep.mubr.f32.mxu0 0.0
    %4474 = vmatmul.mubr.f32.gmra.mrb[0].mxu0 %v4359
    %v4475 = vpop.f32.mrb[0].mxu0
    %v4476 = vadd.f32 %v4393, %v4475
    %v4477 = vpop.f32.mrb[0].mxu0
    %4478 = vmatprep.mubr.f32.mxu0 0.0
    %4479 = vmatmul.mubr.f32.gmra.mrb[0].mxu0 %v4360
    %v4480 = vpop.f32.mrb[0].mxu0
    %v4481 = vadd.f32 %v4393, %v4480
    %v4482 = vpop.f32.mrb[0].mxu0
    %4483 = vmatprep.mubr.f32.mxu0 0.0
    %4484 = vmatmul.mubr.f32.gmra.mrb[0].mxu0 %v4361
    %v4485 = vpop.f32.mrb[0].mxu0
    %v4486 = vadd.f32 %v4393, %v4485
    %v4487 = vpop.f32.mrb[0].mxu0
    %4488 = vmatprep.mubr.f32.mxu0 0.0
    %4489 = vmatmul.mubr.f32.gmra.mrb[0].mxu0 %v4362
    %v4490 = vpop.f32.mrb[0].mxu0
    %v4491 = vadd.f32 %v4393, %v4490
    %v4492 = vpop.f32.mrb[0].mxu0
    %4493 = vmatprep.mubr.f32.mxu0 0.0
    %4494 = vmatmul.mubr.f32.gmra.mrb[0].mxu0 %v4363
    %v4495 = vpop.f32.mrb[0].mxu0
    %v4496 = vadd.f32 %v4393, %v4495
    %v4497 = vpop.f32.mrb[0].mxu0
    %4498 = vmatprep.mubr.f32.mxu0 0.0
    %4499 = vmatmul.mubr.f32.gmra.mrb[0].mxu0 %v4364
    %v4500 = vpop.f32.mrb[0].mxu0
    %v4501 = vadd.f32 %v4393, %v4500
    %v4502 = vpop.f32.mrb[0].mxu0
    %4503 = vmatprep.mubr.f32.mxu0 0.0
    %4504 = vmatmul.mubr.f32.gmra.mrb[0].mxu0 %v4365
    %v4505 = vpop.f32.mrb[0].mxu0
    %v4506 = vadd.f32 %v4393, %v4505
    %v4507 = vpop.f32.mrb[0].mxu0
    %4508 = vmatprep.mubr.f32.mxu0 0.0
    %4509 = vmatmul.mubr.f32.gmra.mrb[0].mxu0 %v4366
    %v4510 = vpop.f32.mrb[0].mxu0
    %v4511 = vadd.f32 %v4393, %v4510
    %v4512 = vpop.f32.mrb[0].mxu0
    %4513 = vmatprep.mubr.f32.mxu0 0.0
    %4514 = vmatmul.mubr.f32.gmra.mrb[0].mxu0 %v4367
    %v4515 = vpop.f32.mrb[0].mxu0
    %v4516 = vadd.f32 %v4393, %v4515
    %v4517 = vpop.f32.mrb[0].mxu0
    %4518 = vmatprep.mubr.f32.mxu0 0.0
    %4519 = vmatmul.mubr.f32.gmra.mrb[0].mxu0 %v4368
    %v4520 = vpop.f32.mrb[0].mxu0
    %v4521 = vadd.f32 %v4393, %v4520
    %v4522 = vpop.f32.mrb[0].mxu0
    %4523 = vmatprep.mubr.f32.mxu0 0.0
    %4524 = vmatmul.mubr.f32.gmra.mrb[0].mxu0 %v4369
    %v4525 = vpop.f32.mrb[0].mxu0
    %v4526 = vadd.f32 %v4393, %v4525
    %v4527 = vpop.f32.mrb[0].mxu0
    %4528 = vmatprep.mubr.f32.mxu0 0.0
    %4529 = vmatmul.mubr.f32.gmra.mrb[0].mxu0 %v4370
    %v4530 = vpop.f32.mrb[0].mxu0
    %v4531 = vadd.f32 %v4393, %v4530
    %v4532 = vpop.f32.mrb[0].mxu0
    %4533 = vmatprep.mubr.f32.mxu0 0.0
    %4534 = vmatmul.mubr.f32.gmra.mrb[0].mxu0 %v4371
    %v4535 = vpop.f32.mrb[0].mxu0
    %v4536 = vadd.f32 %v4393, %v4535
    %v4537 = vpop.f32.mrb[0].mxu0
    %4538 = vmatprep.mubr.f32.mxu0 0.0
    %4539 = vmatmul.mubr.f32.gmra.mrb[0].mxu0 %v4372
    %v4540 = vpop.f32.mrb[0].mxu0
    %v4541 = vadd.f32 %v4393, %v4540
    %v4542 = vpop.f32.mrb[0].mxu0
    %4543 = vdwg.mxu0
    %v4544 = vmax.f32 %v4461, 0.0
    %v4545 = vmax.f32 %v4466, 0.0
    %v4546 = vmax.f32 %v4471, 0.0
    %v4547 = vmax.f32 %v4476, 0.0
    %v4548 = vmax.f32 %v4481, 0.0
    %v4549 = vmax.f32 %v4486, 0.0
    %v4550 = vmax.f32 %v4491, 0.0
    %v4551 = vmax.f32 %v4496, 0.0
    %v4552 = vmax.f32 %v4501, 0.0
    %v4553 = vmax.f32 %v4506, 0.0
    %v4554 = vmax.f32 %v4511, 0.0
    %v4555 = vmax.f32 %v4516, 0.0
    %v4556 = vmax.f32 %v4521, 0.0
    %v4557 = vmax.f32 %v4526, 0.0
    %v4558 = vmax.f32 %v4531, 0.0
    %v4559 = vmax.f32 %v4536, 0.0
    %v4560 = vmax.f32 %v4541, 0.0
    %v4561 = vld [vmem:[#allocation8 + $0x5a8] sm:$0xff]
    %v4562 = vld [vmem:[#allocation8 + $0x5b0] sm:$0xff]
    %v4563 = vld [vmem:[#allocation8 + $0x5b8] sm:$0xff]
    %v4564 = vld [vmem:[#allocation8 + $0x5c0] sm:$0xff]
    %v4565 = vld [vmem:[#allocation8 + $0x5c8] sm:$0xff]
    %v4566 = vld [vmem:[#allocation8 + $0x5d0] sm:$0xff]
    %v4567 = vld [vmem:[#allocation8 + $0x5d8] sm:$0xff]
    %v4568 = vld [vmem:[#allocation8 + $0x5e0] sm:$0xff]
    %v4569 = vld [vmem:[#allocation8 + $0x5e8] sm:$0xff]
    %v4570 = vld [vmem:[#allocation8 + $0x5f0] sm:$0xff]
    %v4571 = vld [vmem:[#allocation8 + $0x5f8] sm:$0xff]
    %v4572 = vld [vmem:[#allocation8 + $0x600] sm:$0xff]
    %v4573 = vld [vmem:[#allocation8 + $0x608] sm:$0xff]
    %v4574 = vld [vmem:[#allocation8 + $0x610] sm:$0xff]
    %v4575 = vld [vmem:[#allocation8 + $0x618] sm:$0xff]
    %v4576 = vld [vmem:[#allocation8 + $0x620] sm:$0xff]
    %v4577 = vld [vmem:[#allocation8 + $0x628] sm:$0x1]
    %v4578 = vlaneseq
    %v4579 = vshrl.u32 %v4578, 7
    %v4580 = vsub.s32 0, %v4579
    %v4581 = vrot.slane %v4577, %v4580
    %4582 = vmatprep.subr.mxu0 0.0
    %4583 = vmatpush1.msra.mxu0 %v4561
    %4584 = vmatprep.subr.mxu0 0.0
    %4585 = vmatpush1.msra.mxu0 %v4562
    %4586 = vmatprep.subr.mxu0 0.0
    %4587 = vmatpush1.msra.mxu0 %v4563
    %4588 = vmatprep.subr.mxu0 0.0
    %4589 = vmatpush1.msra.mxu0 %v4564
    %4590 = vmatprep.subr.mxu0 0.0
    %4591 = vmatpush1.msra.mxu0 %v4565
    %4592 = vmatprep.subr.mxu0 0.0
    %4593 = vmatpush1.msra.mxu0 %v4566
    %4594 = vmatprep.subr.mxu0 0.0
    %4595 = vmatpush1.msra.mxu0 %v4567
    %4596 = vmatprep.subr.mxu0 0.0
    %4597 = vmatpush1.msra.mxu0 %v4568
    %4598 = vmatprep.subr.mxu0 0.0
    %4599 = vmatpush1.msra.mxu0 %v4569
    %4600 = vmatprep.subr.mxu0 0.0
    %4601 = vmatpush1.msra.mxu0 %v4570
    %4602 = vmatprep.subr.mxu0 0.0
    %4603 = vmatpush1.msra.mxu0 %v4571
    %4604 = vmatprep.subr.mxu0 0.0
    %4605 = vmatpush1.msra.mxu0 %v4572
    %4606 = vmatprep.subr.mxu0 0.0
    %4607 = vmatpush1.msra.mxu0 %v4573
    %4608 = vmatprep.subr.mxu0 0.0
    %4609 = vmatpush1.msra.mxu0 %v4574
    %4610 = vmatprep.subr.mxu0 0.0
    %4611 = vmatpush1.msra.mxu0 %v4575
    %4612 = vmatprep.subr.mxu0 0.0
    %4613 = vmatpush1.msra.mxu0 %v4576
    %4614 = vmatprep.subr.mxu0 0.0
    %4615 = vmatpush1.msra.mxu0 0.0
    %4616 = vmatprep.subr.mxu0 0.0
    %4617 = vmatpush1.msra.mxu0 0.0
    %4618 = vmatprep.subr.mxu0 0.0
    %4619 = vmatpush1.msra.mxu0 0.0
    %4620 = vmatprep.subr.mxu0 0.0
    %4621 = vmatpush1.msra.mxu0 0.0
    %4622 = vmatprep.subr.mxu0 0.0
    %4623 = vmatpush1.msra.mxu0 0.0
    %4624 = vmatprep.subr.mxu0 0.0
    %4625 = vmatpush1.msra.mxu0 0.0
    %4626 = vmatprep.subr.mxu0 0.0
    %4627 = vmatpush1.msra.mxu0 0.0
    %4628 = vmatprep.subr.mxu0 0.0
    %4629 = vmatpush1.msra.mxu0 0.0
    %4630 = vmatprep.subr.mxu0 0.0
    %4631 = vmatpush1.msra.mxu0 0.0
    %4632 = vmatprep.subr.mxu0 0.0
    %4633 = vmatpush1.msra.mxu0 0.0
    %4634 = vmatprep.subr.mxu0 0.0
    %4635 = vmatpush1.msra.mxu0 0.0
    %4636 = vmatprep.subr.mxu0 0.0
    %4637 = vmatpush1.msra.mxu0 0.0
    %4638 = vmatprep.subr.mxu0 0.0
    %4639 = vmatpush1.msra.mxu0 0.0
    %4640 = vmatprep.subr.mxu0 0.0
    %4641 = vmatpush1.msra.mxu0 0.0
    %4642 = vmatprep.subr.mxu0 0.0
    %4643 = vmatpush1.msra.mxu0 0.0
    %4644 = vmatprep.subr.mxu0 0.0
    %4645 = vmatpush1.msra.mxu0 0.0
    %4646 = vmatprep.mubr.f32.mxu0 0.0
    %4647 = vmatmul.mubr.f32.gmra.mrb[0].mxu0 %v4544
    %v4648 = vpop.f32.mrb[0].mxu0
    %v4649 = vadd.f32 %v4581, %v4648
    %v4650 = vpop.f32.mrb[0].mxu0
    %4651 = vmatprep.mubr.f32.mxu0 0.0
    %4652 = vmatmul.mubr.f32.gmra.mrb[0].mxu0 %v4545
    %v4653 = vpop.f32.mrb[0].mxu0
    %v4654 = vadd.f32 %v4581, %v4653
    %v4655 = vpop.f32.mrb[0].mxu0
    %4656 = vmatprep.mubr.f32.mxu0 0.0
    %4657 = vmatmul.mubr.f32.gmra.mrb[0].mxu0 %v4546
    %v4658 = vpop.f32.mrb[0].mxu0
    %v4659 = vadd.f32 %v4581, %v4658
    %v4660 = vpop.f32.mrb[0].mxu0
    %4661 = vmatprep.mubr.f32.mxu0 0.0
    %4662 = vmatmul.mubr.f32.gmra.mrb[0].mxu0 %v4547
    %v4663 = vpop.f32.mrb[0].mxu0
    %v4664 = vadd.f32 %v4581, %v4663
    %v4665 = vpop.f32.mrb[0].mxu0
    %4666 = vmatprep.mubr.f32.mxu0 0.0
    %4667 = vmatmul.mubr.f32.gmra.mrb[0].mxu0 %v4548
    %v4668 = vpop.f32.mrb[0].mxu0
    %v4669 = vadd.f32 %v4581, %v4668
    %v4670 = vpop.f32.mrb[0].mxu0
    %4671 = vmatprep.mubr.f32.mxu0 0.0
    %4672 = vmatmul.mubr.f32.gmra.mrb[0].mxu0 %v4549
    %v4673 = vpop.f32.mrb[0].mxu0
    %v4674 = vadd.f32 %v4581, %v4673
    %v4675 = vpop.f32.mrb[0].mxu0
    %4676 = vmatprep.mubr.f32.mxu0 0.0
    %4677 = vmatmul.mubr.f32.gmra.mrb[0].mxu0 %v4550
    %v4678 = vpop.f32.mrb[0].mxu0
    %v4679 = vadd.f32 %v4581, %v4678
    %v4680 = vpop.f32.mrb[0].mxu0
    %4681 = vmatprep.mubr.f32.mxu0 0.0
    %4682 = vmatmul.mubr.f32.gmra.mrb[0].mxu0 %v4551
    %v4683 = vpop.f32.mrb[0].mxu0
    %v4684 = vadd.f32 %v4581, %v4683
    %v4685 = vpop.f32.mrb[0].mxu0
    %4686 = vmatprep.mubr.f32.mxu0 0.0
    %4687 = vmatmul.mubr.f32.gmra.mrb[0].mxu0 %v4552
    %v4688 = vpop.f32.mrb[0].mxu0
    %v4689 = vpop.f32.mrb[0].mxu0
    %4690 = vmatprep.mubr.f32.mxu0 0.0
    %4691 = vmatmul.mubr.f32.gmra.mrb[0].mxu0 %v4553
    %v4692 = vpop.f32.mrb[0].mxu0
    %v4693 = vadd.f32 %v4581, %v4692
    %v4694 = vpop.f32.mrb[0].mxu0
    %4695 = vmatprep.mubr.f32.mxu0 0.0
    %4696 = vmatmul.mubr.f32.gmra.mrb[0].mxu0 %v4554
    %v4697 = vpop.f32.mrb[0].mxu0
    %v4698 = vadd.f32 %v4581, %v4697
    %v4699 = vpop.f32.mrb[0].mxu0
    %4700 = vmatprep.mubr.f32.mxu0 0.0
    %4701 = vmatmul.mubr.f32.gmra.mrb[0].mxu0 %v4555
    %v4702 = vpop.f32.mrb[0].mxu0
    %v4703 = vadd.f32 %v4581, %v4702
    %v4704 = vpop.f32.mrb[0].mxu0
    %4705 = vmatprep.mubr.f32.mxu0 0.0
    %4706 = vmatmul.mubr.f32.gmra.mrb[0].mxu0 %v4556
    %v4707 = vpop.f32.mrb[0].mxu0
    %v4708 = vadd.f32 %v4581, %v4707
    %v4709 = vpop.f32.mrb[0].mxu0
    %4710 = vmatprep.mubr.f32.mxu0 0.0
    %4711 = vmatmul.mubr.f32.gmra.mrb[0].mxu0 %v4557
    %v4712 = vpop.f32.mrb[0].mxu0
    %v4713 = vadd.f32 %v4581, %v4712
    %v4714 = vpop.f32.mrb[0].mxu0
    %4715 = vmatprep.mubr.f32.mxu0 0.0
    %4716 = vmatmul.mubr.f32.gmra.mrb[0].mxu0 %v4558
    %v4717 = vpop.f32.mrb[0].mxu0
    %v4718 = vadd.f32 %v4581, %v4717
    %v4719 = vpop.f32.mrb[0].mxu0
    %4720 = vmatprep.mubr.f32.mxu0 0.0
    %4721 = vmatmul.mubr.f32.gmra.mrb[0].mxu0 %v4559
    %v4722 = vpop.f32.mrb[0].mxu0
    %v4723 = vadd.f32 %v4581, %v4722
    %v4724 = vpop.f32.mrb[0].mxu0
    %4725 = vmatprep.mubr.f32.mxu0 0.0
    %4726 = vmatmul.mubr.f32.gmra.mrb[0].mxu0 %v4560
    %v4727 = vpop.f32.mrb[0].mxu0
    %v4728 = vadd.f32 %v4581, %v4727
    %v4729 = vpop.f32.mrb[0].mxu0
    %4730 = vdwg.mxu0
    %4739 = vrot.lane.b32.xlu0 %v4649, 127
    %v4740 = vpop.permute.xlu0 %4739
    %4741 = vrot.lane.b32.xlu0 %v4654, 127
    %v4742 = vpop.permute.xlu0 %4741
    %4743 = vrot.lane.b32.xlu0 %v4659, 127
    %v4744 = vpop.permute.xlu0 %4743
    %4745 = vrot.lane.b32.xlu0 %v4664, 127
    %v4746 = vpop.permute.xlu0 %4745
    %4747 = vrot.lane.b32.xlu0 %v4669, 127
    %v4748 = vpop.permute.xlu0 %4747
    %4749 = vrot.lane.b32.xlu0 %v4674, 127
    %v4750 = vpop.permute.xlu0 %4749
    %4751 = vrot.lane.b32.xlu0 %v4679, 127
    %v4752 = vpop.permute.xlu0 %4751
    %4753 = vrot.lane.b32.xlu0 %v4684, 127
    %v4754 = vpop.permute.xlu0 %4753
    %v4763 = vmin.f32 %v4649, %v4740
    %v4764 = vmin.f32 %v4654, %v4742
    %v4765 = vmin.f32 %v4659, %v4744
    %v4766 = vmin.f32 %v4664, %v4746
    %v4767 = vmin.f32 %v4669, %v4748
    %v4768 = vmin.f32 %v4674, %v4750
    %v4769 = vmin.f32 %v4679, %v4752
    %v4770 = vmin.f32 %v4684, %v4754
    %v4771 = vsub.f32 %v3695, %v4763
    %v4772 = vsub.f32 %v3696, %v4764
    %v4773 = vsub.f32 %v3697, %v4765
    %v4774 = vsub.f32 %v3698, %v4766
    %v4775 = vsub.f32 %v3699, %v4767
    %v4776 = vsub.f32 %v3700, %v4768
    %v4777 = vsub.f32 %v3701, %v4769
    %v4778 = vsub.f32 %v3702, %v4770
    %4787 = vrot.lane.b32.xlu0 %v76, 111
    %v4788 = vpop.permute.xlu0 %4787
    %4789 = vrot.lane.b32.xlu0 %v77, 111
    %v4790 = vpop.permute.xlu0 %4789
    %4791 = vrot.lane.b32.xlu0 %v78, 111
    %v4792 = vpop.permute.xlu0 %4791
    %4793 = vrot.lane.b32.xlu0 %v79, 111
    %v4794 = vpop.permute.xlu0 %4793
    %4795 = vrot.lane.b32.xlu0 %v80, 111
    %v4796 = vpop.permute.xlu0 %4795
    %4797 = vrot.lane.b32.xlu0 %v81, 111
    %v4798 = vpop.permute.xlu0 %4797
    %4799 = vrot.lane.b32.xlu0 %v82, 111
    %v4800 = vpop.permute.xlu0 %4799
    %4801 = vrot.lane.b32.xlu0 %v83, 111
    %v4802 = vpop.permute.xlu0 %4801
    %vm4811 = vcmask 7168
    %v4812 = vsel %vm4811, %v4788, 0.0
    %v4813 = vsel %vm4811, %v4790, 0.0
    %v4814 = vadd.f32 %v4812, %v4813
    %v4815 = vsel %vm4811, %v4792, 0.0
    %v4816 = vadd.f32 %v4814, %v4815
    %v4817 = vsel %vm4811, %v4794, 0.0
    %v4818 = vadd.f32 %v4816, %v4817
    %v4819 = vsel %vm4811, %v4796, 0.0
    %v4820 = vadd.f32 %v4818, %v4819
    %v4821 = vsel %vm4811, %v4798, 0.0
    %v4822 = vadd.f32 %v4820, %v4821
    %v4823 = vsel %vm4811, %v4800, 0.0
    %v4824 = vadd.f32 %v4822, %v4823
    %v4825 = vsel %vm4811, %v4802, 0.0
    %v4826 = vadd.f32 %v4824, %v4825
    %4827 = vadd.xlane.f32.xlu0 %v4826
    %v4828 = vpop.xlane.xlu0 %4827
    %v4829 = vrot.slane %v4828, 4
    %v4830 = vadd.f32 %v4828, %v4829
    %v4831 = vrot.slane %v4830, 2
    %v4832 = vadd.f32 %v4830, %v4831
    %v4833 = vrot.slane %v4832, 1
    %v4834 = vadd.f32 %v4832, %v4833
    %s4835 = vtos %v4834
    %s4836 = smax.f32 %s4835, 1.0
    %4837 = vrot.lane.b32.xlu0 %v76, 115
    %v4838 = vpop.permute.xlu0 %4837
    %4839 = vrot.lane.b32.xlu0 %v77, 115
    %v4840 = vpop.permute.xlu0 %4839
    %4841 = vrot.lane.b32.xlu0 %v78, 115
    %v4842 = vpop.permute.xlu0 %4841
    %4843 = vrot.lane.b32.xlu0 %v79, 115
    %v4844 = vpop.permute.xlu0 %4843
    %4845 = vrot.lane.b32.xlu0 %v80, 115
    %v4846 = vpop.permute.xlu0 %4845
    %4847 = vrot.lane.b32.xlu0 %v81, 115
    %v4848 = vpop.permute.xlu0 %4847
    %4849 = vrot.lane.b32.xlu0 %v82, 115
    %v4850 = vpop.permute.xlu0 %4849
    %4851 = vrot.lane.b32.xlu0 %v83, 115
    %v4852 = vpop.permute.xlu0 %4851
    %v4861 = vmul.f32 %v3800, %v4838
    %v4862 = vmul.f32 %v3801, %v4840
    %v4863 = vmul.f32 %v3802, %v4842
    %v4864 = vmul.f32 %v3803, %v4844
    %v4865 = vmul.f32 %v3804, %v4846
    %v4866 = vmul.f32 %v3805, %v4848
    %v4867 = vmul.f32 %v3806, %v4850
    %v4868 = vmul.f32 %v3807, %v4852
    %v4869 = vmul.f32 %v4693, %v4788
    %v4870 = vmul.f32 %v4698, %v4790
    %v4871 = vmul.f32 %v4703, %v4792
    %v4872 = vmul.f32 %v4708, %v4794
    %v4873 = vmul.f32 %v4713, %v4796
    %v4874 = vmul.f32 %v4718, %v4798
    %v4875 = vmul.f32 %v4723, %v4800
    %v4876 = vmul.f32 %v4728, %v4802
    %4885 = vrot.lane.b32.xlu0 %v4861, 124
    %v4886 = vpop.permute.xlu0 %4885
    %4887 = vrot.lane.b32.xlu0 %v4862, 124
    %v4888 = vpop.permute.xlu0 %4887
    %4889 = vrot.lane.b32.xlu0 %v4863, 124
    %v4890 = vpop.permute.xlu0 %4889
    %4891 = vrot.lane.b32.xlu0 %v4864, 124
    %v4892 = vpop.permute.xlu0 %4891
    %4893 = vrot.lane.b32.xlu0 %v4865, 124
    %v4894 = vpop.permute.xlu0 %4893
    %4895 = vrot.lane.b32.xlu0 %v4866, 124
    %v4896 = vpop.permute.xlu0 %4895
    %4897 = vrot.lane.b32.xlu0 %v4867, 124
    %v4898 = vpop.permute.xlu0 %4897
    %4899 = vrot.lane.b32.xlu0 %v4868, 124
    %v4900 = vpop.permute.xlu0 %4899
    %v4909 = vsub.f32 %v4869, %v4886
    %v4910 = vsub.f32 %v4870, %v4888
    %v4911 = vsub.f32 %v4871, %v4890
    %v4912 = vsub.f32 %v4872, %v4892
    %v4913 = vsub.f32 %v4873, %v4894
    %v4914 = vsub.f32 %v4874, %v4896
    %v4915 = vsub.f32 %v4875, %v4898
    %v4916 = vsub.f32 %v4876, %v4900
    %4917 = vrot.lane.b32.xlu0 %v76, 112
    %v4918 = vpop.permute.xlu0 %4917
    %4919 = vrot.lane.b32.xlu0 %v77, 112
    %v4920 = vpop.permute.xlu0 %4919
    %4921 = vrot.lane.b32.xlu0 %v78, 112
    %v4922 = vpop.permute.xlu0 %4921
    %4923 = vrot.lane.b32.xlu0 %v79, 112
    %v4924 = vpop.permute.xlu0 %4923
    %4925 = vrot.lane.b32.xlu0 %v80, 112
    %v4926 = vpop.permute.xlu0 %4925
    %4927 = vrot.lane.b32.xlu0 %v81, 112
    %v4928 = vpop.permute.xlu0 %4927
    %4929 = vrot.lane.b32.xlu0 %v82, 112
    %v4930 = vpop.permute.xlu0 %4929
    %4931 = vrot.lane.b32.xlu0 %v83, 112
    %v4932 = vpop.permute.xlu0 %4931
    %v4941 = vmul.f32 %v4693, %v4918
    %v4942 = vmul.f32 %v4698, %v4920
    %v4943 = vmul.f32 %v4703, %v4922
    %v4944 = vmul.f32 %v4708, %v4924
    %v4945 = vmul.f32 %v4713, %v4926
    %v4946 = vmul.f32 %v4718, %v4928
    %v4947 = vmul.f32 %v4723, %v4930
    %v4948 = vmul.f32 %v4728, %v4932
    %4949 = vrot.lane.b32.xlu0 %v4861, 125
    %v4950 = vpop.permute.xlu0 %4949
    %4951 = vrot.lane.b32.xlu0 %v4862, 125
    %v4952 = vpop.permute.xlu0 %4951
    %4953 = vrot.lane.b32.xlu0 %v4863, 125
    %v4954 = vpop.permute.xlu0 %4953
    %4955 = vrot.lane.b32.xlu0 %v4864, 125
    %v4956 = vpop.permute.xlu0 %4955
    %4957 = vrot.lane.b32.xlu0 %v4865, 125
    %v4958 = vpop.permute.xlu0 %4957
    %4959 = vrot.lane.b32.xlu0 %v4866, 125
    %v4960 = vpop.permute.xlu0 %4959
    %4961 = vrot.lane.b32.xlu0 %v4867, 125
    %v4962 = vpop.permute.xlu0 %4961
    %4963 = vrot.lane.b32.xlu0 %v4868, 125
    %v4964 = vpop.permute.xlu0 %4963
    %v4973 = vsub.f32 %v4941, %v4950
    %v4974 = vsub.f32 %v4942, %v4952
    %v4975 = vsub.f32 %v4943, %v4954
    %v4976 = vsub.f32 %v4944, %v4956
    %v4977 = vsub.f32 %v4945, %v4958
    %v4978 = vsub.f32 %v4946, %v4960
    %v4979 = vsub.f32 %v4947, %v4962
    %v4980 = vsub.f32 %v4948, %v4964
    %v4981 = vmul.f32 %v4909, %v4909
    %v4982 = vmul.f32 %v4910, %v4910
    %v4983 = vmul.f32 %v4911, %v4911
    %v4984 = vmul.f32 %v4912, %v4912
    %v4985 = vmul.f32 %v4913, %v4913
    %v4986 = vmul.f32 %v4914, %v4914
    %v4987 = vmul.f32 %v4915, %v4915
    %v4988 = vmul.f32 %v4916, %v4916
    %v4989 = vsel %vm4811, %v4981, 0.0
    %v4990 = vsel %vm4811, %v4982, 0.0
    %v4991 = vadd.f32 %v4989, %v4990
    %v4992 = vsel %vm4811, %v4983, 0.0
    %v4993 = vadd.f32 %v4991, %v4992
    %v4994 = vsel %vm4811, %v4984, 0.0
    %v4995 = vadd.f32 %v4993, %v4994
    %v4996 = vsel %vm4811, %v4985, 0.0
    %v4997 = vadd.f32 %v4995, %v4996
    %v4998 = vsel %vm4811, %v4986, 0.0
    %v4999 = vadd.f32 %v4997, %v4998
    %v5000 = vsel %vm4811, %v4987, 0.0
    %v5001 = vadd.f32 %v4999, %v5000
    %v5002 = vsel %vm4811, %v4988, 0.0
    %v5003 = vadd.f32 %v5001, %v5002
    %5004 = vadd.xlane.f32.xlu0 %v5003
    %v5005 = vpop.xlane.xlu0 %5004
    %v5006 = vrot.slane %v5005, 4
    %v5007 = vadd.f32 %v5005, %v5006
    %v5008 = vrot.slane %v5007, 2
    %v5009 = vadd.f32 %v5007, %v5008
    %v5010 = vrot.slane %v5009, 1
    %v5011 = vadd.f32 %v5009, %v5010
    %s5012 = vtos %v5011
    %v5013 = vstv %s4836
    %v5014 = vrcp.pop %v5013
    %s5015 = vtos %v5014
    %s5016 = smul.f32 %s5012, %s5015
    %v5017 = vmul.f32 %v4973, %v4973
    %v5018 = vmul.f32 %v4974, %v4974
    %v5019 = vmul.f32 %v4975, %v4975
    %v5020 = vmul.f32 %v4976, %v4976
    %v5021 = vmul.f32 %v4977, %v4977
    %v5022 = vmul.f32 %v4978, %v4978
    %v5023 = vmul.f32 %v4979, %v4979
    %v5024 = vmul.f32 %v4980, %v4980
    %5033 = vrot.lane.b32.xlu0 %v5017, 127
    %v5034 = vpop.permute.xlu0 %5033
    %5035 = vrot.lane.b32.xlu0 %v5018, 127
    %v5036 = vpop.permute.xlu0 %5035
    %5037 = vrot.lane.b32.xlu0 %v5019, 127
    %v5038 = vpop.permute.xlu0 %5037
    %5039 = vrot.lane.b32.xlu0 %v5020, 127
    %v5040 = vpop.permute.xlu0 %5039
    %5041 = vrot.lane.b32.xlu0 %v5021, 127
    %v5042 = vpop.permute.xlu0 %5041
    %5043 = vrot.lane.b32.xlu0 %v5022, 127
    %v5044 = vpop.permute.xlu0 %5043
    %5045 = vrot.lane.b32.xlu0 %v5023, 127
    %v5046 = vpop.permute.xlu0 %5045
    %5047 = vrot.lane.b32.xlu0 %v5024, 127
    %v5048 = vpop.permute.xlu0 %5047
    %v5057 = vsel %vm4811, %v5034, 0.0
    %v5058 = vsel %vm4811, %v5036, 0.0
    %v5059 = vadd.f32 %v5057, %v5058
    %v5060 = vsel %vm4811, %v5038, 0.0
    %v5061 = vadd.f32 %v5059, %v5060
    %v5062 = vsel %vm4811, %v5040, 0.0
    %v5063 = vadd.f32 %v5061, %v5062
    %v5064 = vsel %vm4811, %v5042, 0.0
    %v5065 = vadd.f32 %v5063, %v5064
    %v5066 = vsel %vm4811, %v5044, 0.0
    %v5067 = vadd.f32 %v5065, %v5066
    %v5068 = vsel %vm4811, %v5046, 0.0
    %v5069 = vadd.f32 %v5067, %v5068
    %v5070 = vsel %vm4811, %v5048, 0.0
    %v5071 = vadd.f32 %v5069, %v5070
    %5072 = vadd.xlane.f32.xlu0 %v5071
    %v5073 = vpop.xlane.xlu0 %5072
    %v5074 = vrot.slane %v5073, 4
    %v5075 = vadd.f32 %v5073, %v5074
    %v5076 = vrot.slane %v5075, 2
    %v5077 = vadd.f32 %v5075, %v5076
    %v5078 = vrot.slane %v5077, 1
    %v5079 = vadd.f32 %v5077, %v5078
    %s5080 = vtos %v5079
    %v5081 = vstv %s4836
    %v5082 = vrcp.pop %v5081
    %s5083 = vtos %v5082
    %s5084 = smul.f32 %s5080, %s5083
    %v5085 = vmul.f32 %v4771, %v4788
    %v5086 = vmul.f32 %v4772, %v4790
    %v5087 = vmul.f32 %v4773, %v4792
    %v5088 = vmul.f32 %v4774, %v4794
    %v5089 = vmul.f32 %v4775, %v4796
    %v5090 = vmul.f32 %v4776, %v4798
    %v5091 = vmul.f32 %v4777, %v4800
    %v5092 = vmul.f32 %v4778, %v4802
    %v5093 = vsel %vm4811, %v5085, 0.0
    %v5094 = vsel %vm4811, %v5086, 0.0
    %v5095 = vadd.f32 %v5093, %v5094
    %v5096 = vsel %vm4811, %v5087, 0.0
    %v5097 = vadd.f32 %v5095, %v5096
    %v5098 = vsel %vm4811, %v5088, 0.0
    %v5099 = vadd.f32 %v5097, %v5098
    %v5100 = vsel %vm4811, %v5089, 0.0
    %v5101 = vadd.f32 %v5099, %v5100
    %v5102 = vsel %vm4811, %v5090, 0.0
    %v5103 = vadd.f32 %v5101, %v5102
    %v5104 = vsel %vm4811, %v5091, 0.0
    %v5105 = vadd.f32 %v5103, %v5104
    %v5106 = vsel %vm4811, %v5092, 0.0
    %v5107 = vadd.f32 %v5105, %v5106
    %5108 = vadd.xlane.f32.xlu0 %v5107
    %v5109 = vpop.xlane.xlu0 %5108
    %v5110 = vrot.slane %v5109, 4
    %v5111 = vadd.f32 %v5109, %v5110
    %v5112 = vrot.slane %v5111, 2
    %v5113 = vadd.f32 %v5111, %v5112
    %v5114 = vrot.slane %v5113, 1
    %v5115 = vadd.f32 %v5113, %v5114
    %s5116 = vtos %v5115
    %v5117 = vstv %s4836
    %v5118 = vrcp.pop %v5117
    %s5119 = vtos %v5118
    %s5120 = smul.f32 %s5116, %s5119
    %v5121 = vmul.f32 %v2695, %v76
    %v5122 = vmul.f32 %v2698, %v77
    %v5123 = vmul.f32 %v2701, %v78
    %v5124 = vmul.f32 %v2704, %v79
    %v5125 = vmul.f32 %v2707, %v80
    %v5126 = vmul.f32 %v2710, %v81
    %v5127 = vmul.f32 %v2713, %v82
    %v5128 = vmul.f32 %v2716, %v83
    %5137 = vrot.lane.b32.xlu0 %v5121, 111
    %v5138 = vpop.permute.xlu0 %5137
    %5139 = vrot.lane.b32.xlu0 %v5122, 111
    %v5140 = vpop.permute.xlu0 %5139
    %5141 = vrot.lane.b32.xlu0 %v5123, 111
    %v5142 = vpop.permute.xlu0 %5141
    %5143 = vrot.lane.b32.xlu0 %v5124, 111
    %v5144 = vpop.permute.xlu0 %5143
    %5145 = vrot.lane.b32.xlu0 %v5125, 111
    %v5146 = vpop.permute.xlu0 %5145
    %5147 = vrot.lane.b32.xlu0 %v5126, 111
    %v5148 = vpop.permute.xlu0 %5147
    %5149 = vrot.lane.b32.xlu0 %v5127, 111
    %v5150 = vpop.permute.xlu0 %5149
    %5151 = vrot.lane.b32.xlu0 %v5128, 111
    %v5152 = vpop.permute.xlu0 %5151
    %v5161 = vsel %vm4811, %v5138, 0.0
    %v5162 = vsel %vm4811, %v5140, 0.0
    %v5163 = vadd.f32 %v5161, %v5162
    %v5164 = vsel %vm4811, %v5142, 0.0
    %v5165 = vadd.f32 %v5163, %v5164
    %v5166 = vsel %vm4811, %v5144, 0.0
    %v5167 = vadd.f32 %v5165, %v5166
    %v5168 = vsel %vm4811, %v5146, 0.0
    %v5169 = vadd.f32 %v5167, %v5168
    %v5170 = vsel %vm4811, %v5148, 0.0
    %v5171 = vadd.f32 %v5169, %v5170
    %v5172 = vsel %vm4811, %v5150, 0.0
    %v5173 = vadd.f32 %v5171, %v5172
    %v5174 = vsel %vm4811, %v5152, 0.0
    %v5175 = vadd.f32 %v5173, %v5174
    %5176 = vadd.xlane.f32.xlu0 %v5175
    %v5177 = vpop.xlane.xlu0 %5176
    %v5178 = vrot.slane %v5177, 4
    %v5179 = vadd.f32 %v5177, %v5178
    %v5180 = vrot.slane %v5179, 2
    %v5181 = vadd.f32 %v5179, %v5180
    %v5182 = vrot.slane %v5181, 1
    %v5183 = vadd.f32 %v5181, %v5182
    %s5184 = vtos %v5183
    %v5185 = vstv %s4836
    %v5186 = vrcp.pop %v5185
    %s5187 = vtos %v5186
    %s5188 = smul.f32 %s5184, %s5187
    %v5189 = vand.u32 2147483647, %v4909
    %v5190 = vand.u32 2147483647, %v4910
    %v5191 = vand.u32 2147483647, %v4911
    %v5192 = vand.u32 2147483647, %v4912
    %v5193 = vand.u32 2147483647, %v4913
    %v5194 = vand.u32 2147483647, %v4914
    %v5195 = vand.u32 2147483647, %v4915
    %v5196 = vand.u32 2147483647, %v4916
    %v5197 = vand.u32 2147483647, %v4973
    %v5198 = vand.u32 2147483647, %v4974
    %v5199 = vand.u32 2147483647, %v4975
    %v5200 = vand.u32 2147483647, %v4976
    %v5201 = vand.u32 2147483647, %v4977
    %v5202 = vand.u32 2147483647, %v4978
    %v5203 = vand.u32 2147483647, %v4979
    %v5204 = vand.u32 2147483647, %v4980
    %5213 = vrot.lane.b32.xlu0 %v5197, 127
    %v5214 = vpop.permute.xlu0 %5213
    %5215 = vrot.lane.b32.xlu0 %v5198, 127
    %v5216 = vpop.permute.xlu0 %5215
    %5217 = vrot.lane.b32.xlu0 %v5199, 127
    %v5218 = vpop.permute.xlu0 %5217
    %5219 = vrot.lane.b32.xlu0 %v5200, 127
    %v5220 = vpop.permute.xlu0 %5219
    %5221 = vrot.lane.b32.xlu0 %v5201, 127
    %v5222 = vpop.permute.xlu0 %5221
    %5223 = vrot.lane.b32.xlu0 %v5202, 127
    %v5224 = vpop.permute.xlu0 %5223
    %5225 = vrot.lane.b32.xlu0 %v5203, 127
    %v5226 = vpop.permute.xlu0 %5225
    %5227 = vrot.lane.b32.xlu0 %v5204, 127
    %v5228 = vpop.permute.xlu0 %5227
    %v5237 = vadd.f32 %v5189, %v5214
    %v5238 = vadd.f32 %v5190, %v5216
    %v5239 = vadd.f32 %v5191, %v5218
    %v5240 = vadd.f32 %v5192, %v5220
    %v5241 = vadd.f32 %v5193, %v5222
    %v5242 = vadd.f32 %v5194, %v5224
    %v5243 = vadd.f32 %v5195, %v5226
    %v5244 = vadd.f32 %v5196, %v5228
    %v5245 = vmul.f32 %v5237, 0.5
    %v5246 = vmul.f32 %v5238, 0.5
    %v5247 = vmul.f32 %v5239, 0.5
    %v5248 = vmul.f32 %v5240, 0.5
    %v5249 = vmul.f32 %v5241, 0.5
    %v5250 = vmul.f32 %v5242, 0.5
    %v5251 = vmul.f32 %v5243, 0.5
    %v5252 = vmul.f32 %v5244, 0.5
    %v5253 = vsel %vm4811, %v5245, 0.0
    %v5254 = vsel %vm4811, %v5246, 0.0
    %v5255 = vadd.f32 %v5253, %v5254
    %v5256 = vsel %vm4811, %v5247, 0.0
    %v5257 = vadd.f32 %v5255, %v5256
    %v5258 = vsel %vm4811, %v5248, 0.0
    %v5259 = vadd.f32 %v5257, %v5258
    %v5260 = vsel %vm4811, %v5249, 0.0
    %v5261 = vadd.f32 %v5259, %v5260
    %v5262 = vsel %vm4811, %v5250, 0.0
    %v5263 = vadd.f32 %v5261, %v5262
    %v5264 = vsel %vm4811, %v5251, 0.0
    %v5265 = vadd.f32 %v5263, %v5264
    %v5266 = vsel %vm4811, %v5252, 0.0
    %v5267 = vadd.f32 %v5265, %v5266
    %v5268 = vrcp.pop 8.0
    %v5269 = vmul.f32 %v5267, %v5268
    %5270 = vst.msk [vmem:[%s5] sm:$0xff] %vm4811, %v5269
    %s5271 = scalar_lea.smem [#allocation13], 0
    %5272 = sst [smem:[%s5271]] %s5016
    %s5273 = scalar_lea.smem [#allocation13], 1
    %5274 = sst [smem:[%s5273]] %s5084
    %s5275 = scalar_lea.smem [#allocation13], 2
    %5276 = sst [smem:[%s5275]] %s5120
    %s5277 = scalar_lea.smem [#allocation13], 3
    %5278 = sst [smem:[%s5277]] %s5188
    // Predicated region
    $region34: #{tpu_custom_call.1} parent=1 // pred_check
      _
    $region35: #{tpu_custom_call.1} parent=1 // pred_check_branch
      %5280 = sbr.rel (0) target = $region37
    $region36: #{tpu_custom_call.1} parent=1 // pred_region
      %s5282 = ssub.s32 16, 16
      %5283 = vsyncadd [#allocation7], %s5282
      %5286 = dma.smem_to_hbm [#allocation13], 16, %s4, [#allocation7]
    $region37: #{tpu_custom_call.1} parent=1 // pred_fallthru
      _
    // Predicated region
    $region38: #{tpu_custom_call.1} parent=1 // pred_check
      _
    $region39: #{tpu_custom_call.1} parent=1 // pred_check_branch
      %5288 = sbr.rel (0) target = $region41
    $region40: #{tpu_custom_call.1} parent=1 // pred_region
      _
    $region41: #{tpu_custom_call.1} parent=1 // pred_fallthru
      _
    // Predicated region
    $region42: #{tpu_custom_call.1} parent=1 // pred_check
      _
    $region43: #{tpu_custom_call.1} parent=1 // pred_check_branch
      %5290 = sbr.rel (0) target = $region45
    $region44: #{tpu_custom_call.1} parent=1 // pred_region
      %5291 = dma.done [#allocation7], 16
    $region45: #{tpu_custom_call.1} parent=1 // pred_fallthru
      _
    // Predicated region
    $region46: #{tpu_custom_call.1} parent=1 // pred_check
      _
    $region47: #{tpu_custom_call.1} parent=1 // pred_check_branch
      %5293 = sbr.rel (0) target = $region49
    $region48: #{tpu_custom_call.1} parent=1 // pred_region
      _
    $region49: #{tpu_custom_call.1} parent=1 // pred_fallthru
      _
    %5294 = sfence
    %5295 = vsyncpa [#allocation6], 1
    %5296 = vsyncpa [#allocation9], 1
    %5297 = vsyncpa [#allocation12], 1
    %5298 = vsyncpa [#allocation7], 1

</llo_original>
